<compile_context>
chip_gen: v5e
topology: v5e:2x2
jax: 0.10.0
libtpu: 0.0.40
codegen_flags: <defaults>
</compile_context>

<pallas_src>
import math
from itertools import combinations

import numpy as np
import jax
import jax.numpy as jnp
from jax.experimental import pallas as pl
from jax.experimental.pallas import tpu as pltpu

# ----------------------- synthetic "args" -----------------------
SEQ_LEN = 8                # args.seq_len
IN_DIM = 32                # args.trans_linear_in_dim
OUT_DIM = 32               # args.trans_linear_out_dim
WAY = 5                    # args.way
SHOT = 1                   # support examples per class
N_QUERIES = 3
TEMPORAL_SET_SIZE = 3
PE_SCALE = 0.1
LN_EPS = 1e-5
# TODO(synk): nn.Dropout in PositionalEncoding is treated as identity (eval-mode semantics).


# ===================== fused Pallas kernel: projection + LN + attention + distance =====================
def _make_fused_kernel(n_total, n_q, T, Cin, D, way, shot):
    sT = shot * T
    n_sup_rows = way * sT
    inv_sqrt_d = 1.0 / math.sqrt(D)

    def kernel(x_ref, wkv_ref, bkv_ref, gk_ref, bek_ref, out_ref):
        # ---- fused K|V projection: one MXU pass over all (support + query) tuples ----
        x = x_ref[...].reshape(n_total * T, Cin)                     # [N*T, Cin]
        kv = jnp.dot(x, wkv_ref[...],
                     preferred_element_type=jnp.float32) + bkv_ref[...]   # [N*T, 2D]
        k = kv[:, :D]                                                # K half
        v = kv[:, D:]                                                # V half

        # LayerNorm on K only
        mu = jnp.mean(k, axis=-1, keepdims=True)
        var = jnp.mean((k - mu) ** 2, axis=-1, keepdims=True)
        k = (k - mu) * jax.lax.rsqrt(var + LN_EPS) * gk_ref[...] + bek_ref[...]

        # supports occupy the first way*shot*T rows (class-sorted), queries the rest
        s_k = k[:n_sup_rows]                                         # [way*sT, D]
        s_v = v[:n_sup_rows]
        q_k = k[n_sup_rows:] * inv_sqrt_d                            # scale applied once
        q_v = v[n_sup_rows:]                                         # [n_q*T, D]

        logits = jnp.zeros(out_ref.shape, jnp.float32)               # [n_q, way]
        col = jax.lax.broadcasted_iota(jnp.int32, out_ref.shape, 1)

        for c in range(way):                                         # static unroll (5)
            ck = s_k[c * sT:(c + 1) * sT]                            # [sT, D] (8-aligned rows)
            cv = s_v[c * sT:(c + 1) * sT]
            # scores[(q,t), (k,s)] = <q_k[q,t], ck[k,s]> / sqrt(D)
            sc = jax.lax.dot_general(q_k, ck, (((1,), (1,)), ((), ())),
                                     preferred_element_type=jnp.float32)   # [n_q*T, sT]
            # softmax over all support tuples of this class
            m = jnp.max(sc, axis=-1, keepdims=True)
            e = jnp.exp(sc - m)
            # exact reciprocal keeps the 1e-3 accuracy check robust; flip approx=True for EUP path
            p = e * pl.reciprocal(jnp.sum(e, axis=-1, keepdims=True), approx=False)
            proto = jnp.dot(p, cv, preferred_element_type=jnp.float32)     # [n_q*T, D]
            diff = (q_v - proto).reshape(n_q, T, D)
            sq = jnp.sum(diff * diff, axis=-1)                             # [n_q, T]
            dist = -jnp.sum(sq, axis=-1, keepdims=True) / T                # [n_q, 1]
            logits = logits + jnp.where(col == c, dist, 0.0)

        out_ref[...] = logits.astype(out_ref.dtype)

    return kernel


def fused_cross_transformer(x_tup, wkv, bkv, gk, bek, *, n_q, way, shot):
    """x_tup: [n_total, T, Cin] (class-sorted supports first, then queries) -> logits [n_q, way]."""
    n_total, T, Cin = x_tup.shape
    D = wkv.shape[1] // 2
    kernel = _make_fused_kernel(n_total, n_q, T, Cin, D, way, shot)

    def full(shape):
        return pl.BlockSpec(shape, lambda i: (0,) * len(shape))

    return pl.pallas_call(
        kernel,
        out_shape=jax.ShapeDtypeStruct((n_q, way), jnp.float32),
        grid=(1,),                                   # single step: everything fits in VMEM (<1 MiB)
        in_specs=[full((n_total, T, Cin)),
                  full(wkv.shape), full(bkv.shape), full(gk.shape), full(bek.shape)],
        out_specs=full((n_q, way)),
        compiler_params=pltpu.CompilerParams(dimension_semantics=("arbitrary",)),
    )(x_tup, wkv, bkv, gk, bek)


# ===================== glue (plain JAX): PE, tuple gather, class grouping =====================
def positional_encoding(max_len, d_model):
    pos = jnp.arange(max_len, dtype=jnp.float32)[:, None]
    div = jnp.exp(jnp.arange(0, d_model, 2, dtype=jnp.float32) * (-math.log(10000.0) / d_model))
    pe = jnp.zeros((max_len, d_model), jnp.float32)
    pe = pe.at[:, 0::2].set(jnp.sin(pos * div) * PE_SCALE)
    pe = pe.at[:, 1::2].set(jnp.cos(pos * div) * PE_SCALE)
    return pe


def gather_tuples(x, tuples):
    # x: [n, seq, d] -> [n, tuples_len, set_size*d] (frame-major concat == torch reshape)
    n = x.shape[0]
    g = x[:, tuples, :]                                  # [n, T, set, d]
    return g.reshape(n, tuples.shape[0], -1)


def temporal_cross_transformer_forward(params, support_set, support_labels, queries):
    tuples = jnp.array(list(combinations(range(SEQ_LEN), TEMPORAL_SET_SIZE)), dtype=jnp.int32)
    pe = positional_encoding(int(SEQ_LEN * 1.5), IN_DIM)[:SEQ_LEN]

    # sort supports by class so class c occupies rows [c*shot*T, (c+1)*shot*T) inside the kernel
    order = jnp.argsort(support_labels)
    x_all = jnp.concatenate([support_set[order], queries], axis=0) + pe[None, :, :]
    x_tup = gather_tuples(x_all, tuples)                 # [n_s + n_q, T, 3*in_dim]
    # TODO(synk): the tuple gather could also be folded into the kernel (static 56x3 table);
    # kept in XLA since the expanded tensor is only ~170 KB.

    # fuse K and V projections into one [Cin, 2*D] weight
    wkv = jnp.concatenate([params['wk'], params['wv']], axis=1)
    bkv = jnp.concatenate([params['bk'], params['bv']], axis=1)

    logits = fused_cross_transformer(x_tup, wkv, bkv, params['gk'], params['bek'],
                                     n_q=queries.shape[0], way=WAY, shot=SHOT)
    return {'logits': logits}


# ===================== pure-JAX reference (mirrors the PyTorch math) =====================
def reference_forward(params, support_set, support_labels, queries):
    hp = jax.lax.Precision.HIGHEST
    tuples = jnp.array(list(combinations(range(SEQ_LEN), TEMPORAL_SET_SIZE)), dtype=jnp.int32)
    T = tuples.shape[0]
    pe = positional_encoding(int(SEQ_LEN * 1.5), IN_DIM)[:SEQ_LEN]
    ss = support_set + pe[None]
    qq = queries + pe[None]
    s = gather_tuples(ss, tuples)
    q = gather_tuples(qq, tuples)

    def lin(x, w, b):
        return jnp.einsum('ntc,cd->ntd', x, w, precision=hp) + b

    def ln(x, g, bb):
        mu = x.mean(-1, keepdims=True)
        var = ((x - mu) ** 2).mean(-1, keepdims=True)
        return (x - mu) / jnp.sqrt(var + LN_EPS) * g + bb

    s_ks = ln(lin(s, params['wk'], params['bk'][0]), params['gk'][0], params['bek'][0])
    q_ks = ln(lin(q, params['wk'], params['bk'][0]), params['gk'][0], params['bek'][0])
    s_vs = lin(s, params['wv'], params['bv'][0])
    q_vs = lin(q, params['wv'], params['bv'][0])

    n_q = q.shape[0]
    logits = jnp.zeros((n_q, WAY), jnp.float32)
    for c in range(WAY):
        idx = jnp.nonzero(support_labels == c, size=SHOT)[0]
        ck = s_ks[idx]                                    # [shot, T, D]
        cv = s_vs[idx]
        scores = jnp.einsum('qtd,ksd->qkts', q_ks, ck, precision=hp) / math.sqrt(OUT_DIM)
        sc = jnp.transpose(scores, (0, 2, 1, 3)).reshape(n_q, T, -1)
        sc = jax.nn.softmax(sc, axis=-1)
        sc = sc.reshape(n_q, T, SHOT, T).transpose(0, 2, 1, 3)
        proto = jnp.einsum('qkts,ksd->qtd', sc, cv, precision=hp)
        diff = q_vs - proto
        dist = -jnp.sum(diff ** 2, axis=(1, 2)) / T
        logits = logits.at[:, c].set(dist)
    return logits


# ===================== main =====================
if __name__ == "__main__":
    key = jax.random.PRNGKey(0)
    k_wk, k_bk, k_wv, k_bv, k_sup, k_qry = jax.random.split(key, 6)

    params = {
        'wk': 0.05 * jax.random.normal(k_wk, (TEMPORAL_SET_SIZE * IN_DIM, OUT_DIM), jnp.float32),
        'bk': 0.05 * jax.random.normal(k_bk, (1, OUT_DIM), jnp.float32),
        'wv': 0.05 * jax.random.normal(k_wv, (TEMPORAL_SET_SIZE * IN_DIM, OUT_DIM), jnp.float32),
        'bv': 0.05 * jax.random.normal(k_bv, (1, OUT_DIM), jnp.float32),
        'gk': jnp.ones((1, OUT_DIM), jnp.float32),     # LayerNorm weight (default init)
        'bek': jnp.zeros((1, OUT_DIM), jnp.float32),   # LayerNorm bias   (default init)
    }

    n_support = WAY * SHOT
    support_set = jax.random.normal(k_sup, (n_support, SEQ_LEN, IN_DIM), jnp.float32)
    queries = jax.random.normal(k_qry, (N_QUERIES, SEQ_LEN, IN_DIM), jnp.float32)
    support_labels = jnp.array([1, 3, 0, 4, 2], dtype=jnp.int32)   # one example per class

    out = temporal_cross_transformer_forward(params, support_set, support_labels, queries)
    logits = jax.block_until_ready(out['logits'])

    ref = reference_forward(params, support_set, support_labels, queries)
    np.testing.assert_allclose(np.asarray(logits), np.asarray(ref), rtol=1e-3, atol=1e-3)

    print("KERNEL_OK")
</pallas_src>

<mosaic_0001>
module attributes {stable_mosaic.version = 11 : i64} {
  func.func @kernel(%arg0: i32, %arg1: memref<8x56x96xf32, #tpu.memory_space<vmem>>, %arg2: memref<96x64xf32, #tpu.memory_space<vmem>>, %arg3: memref<1x64xf32, #tpu.memory_space<vmem>>, %arg4: memref<1x32xf32, #tpu.memory_space<vmem>>, %arg5: memref<1x32xf32, #tpu.memory_space<vmem>>, %arg6: memref<3x5xf32, #tpu.memory_space<vmem>>) attributes {dimension_semantics = [#tpu.dimension_semantics<arbitrary>], iteration_bounds = array<i64: 1>, scalar_prefetch = 0 : i64, scratch_operands = 0 : i64, tpu.core_type = #tpu.core_type<tc>, window_params = [{pipeline_mode = #tpu.pipeline_mode<synchronous>, transform_indices = @transform_0, window_bounds = array<i64: 8, 56, 96>}, {pipeline_mode = #tpu.pipeline_mode<synchronous>, transform_indices = @transform_1, window_bounds = array<i64: 96, 64>}, {pipeline_mode = #tpu.pipeline_mode<synchronous>, transform_indices = @transform_2, window_bounds = array<i64: 1, 64>}, {pipeline_mode = #tpu.pipeline_mode<synchronous>, transform_indices = @transform_3, window_bounds = array<i64: 1, 32>}, {pipeline_mode = #tpu.pipeline_mode<synchronous>, transform_indices = @transform_4, window_bounds = array<i64: 1, 32>}, {pipeline_mode = #tpu.pipeline_mode<synchronous>, transform_indices = @transform_5, window_bounds = array<i64: 3, 5>}]} {
    %c0 = arith.constant 0 : index
    %c0_0 = arith.constant 0 : index
    %c0_1 = arith.constant 0 : index
    %0 = vector.load %arg1[%c0, %c0_0, %c0_1] : memref<8x56x96xf32, #tpu.memory_space<vmem>>, vector<8x56x96xf32>
    %1 = vector.shape_cast %0 : vector<8x56x96xf32> to vector<448x96xf32>
    %c0_2 = arith.constant 0 : index
    %c0_3 = arith.constant 0 : index
    %2 = vector.load %arg2[%c0_2, %c0_3] : memref<96x64xf32, #tpu.memory_space<vmem>>, vector<96x64xf32>
    %cst = arith.constant dense<0.000000e+00> : vector<448x64xf32>
    %3 = tpu.matmul %1, %2, %cst {dimension_numbers = #tpu.dot_dimension_numbers<[1], [0], [0], [1], [0, 0, 1, 1], [], []>} : vector<448x96xf32>, vector<96x64xf32>, vector<448x64xf32> -> vector<448x64xf32>
    %c0_4 = arith.constant 0 : index
    %c0_5 = arith.constant 0 : index
    %4 = vector.load %arg3[%c0_4, %c0_5] : memref<1x64xf32, #tpu.memory_space<vmem>>, vector<1x64xf32>
    %5 = vector.broadcast %4 : vector<1x64xf32> to vector<448x64xf32>
    %6 = arith.addf %3, %5 : vector<448x64xf32>
    %7 = vector.extract_strided_slice %6 {offsets = [0, 0], sizes = [448, 32], strides = [1, 1]} : vector<448x64xf32> to vector<448x32xf32>
    %8 = vector.extract_strided_slice %6 {offsets = [0, 32], sizes = [448, 32], strides = [1, 1]} : vector<448x64xf32> to vector<448x32xf32>
    %cst_6 = arith.constant dense<0.000000e+00> : vector<448xf32>
    %9 = vector.multi_reduction <add>, %7, %cst_6 [1] : vector<448x32xf32> to vector<448xf32>
    %10 = vector.shape_cast %9 : vector<448xf32> to vector<448x1xf32>
    %cst_7 = arith.constant 3.200000e+01 : f32
    %11 = vector.broadcast %cst_7 : f32 to vector<448x1xf32>
    %12 = arith.divf %10, %11 : vector<448x1xf32>
    %13 = vector.broadcast %12 : vector<448x1xf32> to vector<448x32xf32>
    %14 = arith.subf %7, %13 : vector<448x32xf32>
    %15 = arith.mulf %14, %14 : vector<448x32xf32>
    %cst_8 = arith.constant dense<0.000000e+00> : vector<448xf32>
    %16 = vector.multi_reduction <add>, %15, %cst_8 [1] : vector<448x32xf32> to vector<448xf32>
    %17 = vector.shape_cast %16 : vector<448xf32> to vector<448x1xf32>
    %cst_9 = arith.constant 3.200000e+01 : f32
    %18 = vector.broadcast %cst_9 : f32 to vector<448x1xf32>
    %19 = arith.divf %17, %18 : vector<448x1xf32>
    %20 = vector.broadcast %12 : vector<448x1xf32> to vector<448x32xf32>
    %21 = arith.subf %7, %20 : vector<448x32xf32>
    %cst_10 = arith.constant 9.99999974E-6 : f32
    %22 = vector.broadcast %cst_10 : f32 to vector<448x1xf32>
    %23 = arith.addf %19, %22 : vector<448x1xf32>
    %24 = math.rsqrt %23 : vector<448x1xf32>
    %25 = vector.broadcast %24 : vector<448x1xf32> to vector<448x32xf32>
    %26 = arith.mulf %21, %25 : vector<448x32xf32>
    %c0_11 = arith.constant 0 : index
    %c0_12 = arith.constant 0 : index
    %27 = vector.load %arg4[%c0_11, %c0_12] : memref<1x32xf32, #tpu.memory_space<vmem>>, vector<1x32xf32>
    %28 = vector.broadcast %27 : vector<1x32xf32> to vector<448x32xf32>
    %29 = arith.mulf %26, %28 : vector<448x32xf32>
    %c0_13 = arith.constant 0 : index
    %c0_14 = arith.constant 0 : index
    %30 = vector.load %arg5[%c0_13, %c0_14] : memref<1x32xf32, #tpu.memory_space<vmem>>, vector<1x32xf32>
    %31 = vector.broadcast %30 : vector<1x32xf32> to vector<448x32xf32>
    %32 = arith.addf %29, %31 : vector<448x32xf32>
    %33 = vector.extract_strided_slice %32 {offsets = [0, 0], sizes = [280, 32], strides = [1, 1]} : vector<448x32xf32> to vector<280x32xf32>
    %34 = vector.extract_strided_slice %8 {offsets = [0, 0], sizes = [280, 32], strides = [1, 1]} : vector<448x32xf32> to vector<280x32xf32>
    %35 = vector.extract_strided_slice %32 {offsets = [280, 0], sizes = [168, 32], strides = [1, 1]} : vector<448x32xf32> to vector<168x32xf32>
    %cst_15 = arith.constant 0.176776692 : f32
    %36 = vector.broadcast %cst_15 : f32 to vector<168x32xf32>
    %37 = arith.mulf %35, %36 : vector<168x32xf32>
    %38 = vector.extract_strided_slice %8 {offsets = [280, 0], sizes = [168, 32], strides = [1, 1]} : vector<448x32xf32> to vector<168x32xf32>
    %cst_16 = arith.constant 0.000000e+00 : f32
    %39 = vector.broadcast %cst_16 : f32 to vector<3x5xf32>
    %40 = tpu.iota {dimensions = array<i32: 1>} : vector<3x5xi32>
    %41 = vector.extract_strided_slice %33 {offsets = [0, 0], sizes = [56, 32], strides = [1, 1]} : vector<280x32xf32> to vector<56x32xf32>
    %42 = vector.extract_strided_slice %34 {offsets = [0, 0], sizes = [56, 32], strides = [1, 1]} : vector<280x32xf32> to vector<56x32xf32>
    %cst_17 = arith.constant dense<0.000000e+00> : vector<168x56xf32>
    %43 = tpu.matmul %37, %41, %cst_17 {dimension_numbers = #tpu.dot_dimension_numbers<[1], [1], [0], [0], [0, 0, 1, 0], [], []>} : vector<168x32xf32>, vector<56x32xf32>, vector<168x56xf32> -> vector<168x56xf32>
    %cst_18 = arith.constant dense<0xFF800000> : vector<168xf32>
    %44 = vector.multi_reduction <maximumf>, %43, %cst_18 [1] : vector<168x56xf32> to vector<168xf32>
    %45 = vector.shape_cast %44 : vector<168xf32> to vector<168x1xf32>
    %46 = vector.broadcast %45 : vector<168x1xf32> to vector<168x56xf32>
    %47 = arith.subf %43, %46 : vector<168x56xf32>
    %48 = math.exp %47 : vector<168x56xf32>
    %cst_19 = arith.constant dense<0.000000e+00> : vector<168xf32>
    %49 = vector.multi_reduction <add>, %48, %cst_19 [1] : vector<168x56xf32> to vector<168xf32>
    %50 = vector.shape_cast %49 : vector<168xf32> to vector<168x1xf32>
    %51 = tpu.reciprocal %50 : vector<168x1xf32> -> vector<168x1xf32>
    %52 = vector.broadcast %51 : vector<168x1xf32> to vector<168x56xf32>
    %53 = arith.mulf %48, %52 : vector<168x56xf32>
    %cst_20 = arith.constant dense<0.000000e+00> : vector<168x32xf32>
    %54 = tpu.matmul %53, %42, %cst_20 {dimension_numbers = #tpu.dot_dimension_numbers<[1], [0], [0], [1], [0, 0, 1, 1], [], []>} : vector<168x56xf32>, vector<56x32xf32>, vector<168x32xf32> -> vector<168x32xf32>
    %55 = arith.subf %38, %54 : vector<168x32xf32>
    %56 = vector.shape_cast %55 : vector<168x32xf32> to vector<3x56x32xf32>
    %57 = arith.mulf %56, %56 : vector<3x56x32xf32>
    %cst_21 = arith.constant dense<0.000000e+00> : vector<3x56xf32>
    %58 = vector.multi_reduction <add>, %57, %cst_21 [2] : vector<3x56x32xf32> to vector<3x56xf32>
    %cst_22 = arith.constant dense<0.000000e+00> : vector<3xf32>
    %59 = vector.multi_reduction <add>, %58, %cst_22 [1] : vector<3x56xf32> to vector<3xf32>
    %60 = vector.shape_cast %59 : vector<3xf32> to vector<3x1xf32>
    %cst_23 = arith.constant 0.000000e+00 : f32
    %61 = vector.broadcast %cst_23 : f32 to vector<3x1xf32>
    %62 = arith.subf %61, %60 : vector<3x1xf32>
    %cst_24 = arith.constant 5.600000e+01 : f32
    %63 = vector.broadcast %cst_24 : f32 to vector<3x1xf32>
    %64 = arith.divf %62, %63 : vector<3x1xf32>
    %c0_i32 = arith.constant 0 : i32
    %65 = vector.broadcast %c0_i32 : i32 to vector<3x5xi32>
    %66 = arith.cmpi eq, %40, %65 : vector<3x5xi32>
    %cst_25 = arith.constant 0.000000e+00 : f32
    %67 = vector.shape_cast %64 : vector<3x1xf32> to vector<3x1xf32>
    %68 = vector.broadcast %67 : vector<3x1xf32> to vector<3x5xf32>
    %69 = vector.broadcast %cst_25 : f32 to vector<3x5xf32>
    %70 = arith.select %66, %68, %69 : vector<3x5xi1>, vector<3x5xf32>
    %71 = arith.addf %39, %70 : vector<3x5xf32>
    %72 = vector.extract_strided_slice %33 {offsets = [56, 0], sizes = [56, 32], strides = [1, 1]} : vector<280x32xf32> to vector<56x32xf32>
    %73 = vector.extract_strided_slice %34 {offsets = [56, 0], sizes = [56, 32], strides = [1, 1]} : vector<280x32xf32> to vector<56x32xf32>
    %cst_26 = arith.constant dense<0.000000e+00> : vector<168x56xf32>
    %74 = tpu.matmul %37, %72, %cst_26 {dimension_numbers = #tpu.dot_dimension_numbers<[1], [1], [0], [0], [0, 0, 1, 0], [], []>} : vector<168x32xf32>, vector<56x32xf32>, vector<168x56xf32> -> vector<168x56xf32>
    %cst_27 = arith.constant dense<0xFF800000> : vector<168xf32>
    %75 = vector.multi_reduction <maximumf>, %74, %cst_27 [1] : vector<168x56xf32> to vector<168xf32>
    %76 = vector.shape_cast %75 : vector<168xf32> to vector<168x1xf32>
    %77 = vector.broadcast %76 : vector<168x1xf32> to vector<168x56xf32>
    %78 = arith.subf %74, %77 : vector<168x56xf32>
    %79 = math.exp %78 : vector<168x56xf32>
    %cst_28 = arith.constant dense<0.000000e+00> : vector<168xf32>
    %80 = vector.multi_reduction <add>, %79, %cst_28 [1] : vector<168x56xf32> to vector<168xf32>
    %81 = vector.shape_cast %80 : vector<168xf32> to vector<168x1xf32>
    %82 = tpu.reciprocal %81 : vector<168x1xf32> -> vector<168x1xf32>
    %83 = vector.broadcast %82 : vector<168x1xf32> to vector<168x56xf32>
    %84 = arith.mulf %79, %83 : vector<168x56xf32>
    %cst_29 = arith.constant dense<0.000000e+00> : vector<168x32xf32>
    %85 = tpu.matmul %84, %73, %cst_29 {dimension_numbers = #tpu.dot_dimension_numbers<[1], [0], [0], [1], [0, 0, 1, 1], [], []>} : vector<168x56xf32>, vector<56x32xf32>, vector<168x32xf32> -> vector<168x32xf32>
    %86 = arith.subf %38, %85 : vector<168x32xf32>
    %87 = vector.shape_cast %86 : vector<168x32xf32> to vector<3x56x32xf32>
    %88 = arith.mulf %87, %87 : vector<3x56x32xf32>
    %cst_30 = arith.constant dense<0.000000e+00> : vector<3x56xf32>
    %89 = vector.multi_reduction <add>, %88, %cst_30 [2] : vector<3x56x32xf32> to vector<3x56xf32>
    %cst_31 = arith.constant dense<0.000000e+00> : vector<3xf32>
    %90 = vector.multi_reduction <add>, %89, %cst_31 [1] : vector<3x56xf32> to vector<3xf32>
    %91 = vector.shape_cast %90 : vector<3xf32> to vector<3x1xf32>
    %cst_32 = arith.constant 0.000000e+00 : f32
    %92 = vector.broadcast %cst_32 : f32 to vector<3x1xf32>
    %93 = arith.subf %92, %91 : vector<3x1xf32>
    %cst_33 = arith.constant 5.600000e+01 : f32
    %94 = vector.broadcast %cst_33 : f32 to vector<3x1xf32>
    %95 = arith.divf %93, %94 : vector<3x1xf32>
    %c1_i32 = arith.constant 1 : i32
    %96 = vector.broadcast %c1_i32 : i32 to vector<3x5xi32>
    %97 = arith.cmpi eq, %40, %96 : vector<3x5xi32>
    %cst_34 = arith.constant 0.000000e+00 : f32
    %98 = vector.shape_cast %95 : vector<3x1xf32> to vector<3x1xf32>
    %99 = vector.broadcast %98 : vector<3x1xf32> to vector<3x5xf32>
    %100 = vector.broadcast %cst_34 : f32 to vector<3x5xf32>
    %101 = arith.select %97, %99, %100 : vector<3x5xi1>, vector<3x5xf32>
    %102 = arith.addf %71, %101 : vector<3x5xf32>
    %103 = vector.extract_strided_slice %33 {offsets = [112, 0], sizes = [56, 32], strides = [1, 1]} : vector<280x32xf32> to vector<56x32xf32>
    %104 = vector.extract_strided_slice %34 {offsets = [112, 0], sizes = [56, 32], strides = [1, 1]} : vector<280x32xf32> to vector<56x32xf32>
    %cst_35 = arith.constant dense<0.000000e+00> : vector<168x56xf32>
    %105 = tpu.matmul %37, %103, %cst_35 {dimension_numbers = #tpu.dot_dimension_numbers<[1], [1], [0], [0], [0, 0, 1, 0], [], []>} : vector<168x32xf32>, vector<56x32xf32>, vector<168x56xf32> -> vector<168x56xf32>
    %cst_36 = arith.constant dense<0xFF800000> : vector<168xf32>
    %106 = vector.multi_reduction <maximumf>, %105, %cst_36 [1] : vector<168x56xf32> to vector<168xf32>
    %107 = vector.shape_cast %106 : vector<168xf32> to vector<168x1xf32>
    %108 = vector.broadcast %107 : vector<168x1xf32> to vector<168x56xf32>
    %109 = arith.subf %105, %108 : vector<168x56xf32>
    %110 = math.exp %109 : vector<168x56xf32>
    %cst_37 = arith.constant dense<0.000000e+00> : vector<168xf32>
    %111 = vector.multi_reduction <add>, %110, %cst_37 [1] : vector<168x56xf32> to vector<168xf32>
    %112 = vector.shape_cast %111 : vector<168xf32> to vector<168x1xf32>
    %113 = tpu.reciprocal %112 : vector<168x1xf32> -> vector<168x1xf32>
    %114 = vector.broadcast %113 : vector<168x1xf32> to vector<168x56xf32>
    %115 = arith.mulf %110, %114 : vector<168x56xf32>
    %cst_38 = arith.constant dense<0.000000e+00> : vector<168x32xf32>
    %116 = tpu.matmul %115, %104, %cst_38 {dimension_numbers = #tpu.dot_dimension_numbers<[1], [0], [0], [1], [0, 0, 1, 1], [], []>} : vector<168x56xf32>, vector<56x32xf32>, vector<168x32xf32> -> vector<168x32xf32>
    %117 = arith.subf %38, %116 : vector<168x32xf32>
    %118 = vector.shape_cast %117 : vector<168x32xf32> to vector<3x56x32xf32>
    %119 = arith.mulf %118, %118 : vector<3x56x32xf32>
    %cst_39 = arith.constant dense<0.000000e+00> : vector<3x56xf32>
    %120 = vector.multi_reduction <add>, %119, %cst_39 [2] : vector<3x56x32xf32> to vector<3x56xf32>
    %cst_40 = arith.constant dense<0.000000e+00> : vector<3xf32>
    %121 = vector.multi_reduction <add>, %120, %cst_40 [1] : vector<3x56xf32> to vector<3xf32>
    %122 = vector.shape_cast %121 : vector<3xf32> to vector<3x1xf32>
    %cst_41 = arith.constant 0.000000e+00 : f32
    %123 = vector.broadcast %cst_41 : f32 to vector<3x1xf32>
    %124 = arith.subf %123, %122 : vector<3x1xf32>
    %cst_42 = arith.constant 5.600000e+01 : f32
    %125 = vector.broadcast %cst_42 : f32 to vector<3x1xf32>
    %126 = arith.divf %124, %125 : vector<3x1xf32>
    %c2_i32 = arith.constant 2 : i32
    %127 = vector.broadcast %c2_i32 : i32 to vector<3x5xi32>
    %128 = arith.cmpi eq, %40, %127 : vector<3x5xi32>
    %cst_43 = arith.constant 0.000000e+00 : f32
    %129 = vector.shape_cast %126 : vector<3x1xf32> to vector<3x1xf32>
    %130 = vector.broadcast %129 : vector<3x1xf32> to vector<3x5xf32>
    %131 = vector.broadcast %cst_43 : f32 to vector<3x5xf32>
    %132 = arith.select %128, %130, %131 : vector<3x5xi1>, vector<3x5xf32>
    %133 = arith.addf %102, %132 : vector<3x5xf32>
    %134 = vector.extract_strided_slice %33 {offsets = [168, 0], sizes = [56, 32], strides = [1, 1]} : vector<280x32xf32> to vector<56x32xf32>
    %135 = vector.extract_strided_slice %34 {offsets = [168, 0], sizes = [56, 32], strides = [1, 1]} : vector<280x32xf32> to vector<56x32xf32>
    %cst_44 = arith.constant dense<0.000000e+00> : vector<168x56xf32>
    %136 = tpu.matmul %37, %134, %cst_44 {dimension_numbers = #tpu.dot_dimension_numbers<[1], [1], [0], [0], [0, 0, 1, 0], [], []>} : vector<168x32xf32>, vector<56x32xf32>, vector<168x56xf32> -> vector<168x56xf32>
    %cst_45 = arith.constant dense<0xFF800000> : vector<168xf32>
    %137 = vector.multi_reduction <maximumf>, %136, %cst_45 [1] : vector<168x56xf32> to vector<168xf32>
    %138 = vector.shape_cast %137 : vector<168xf32> to vector<168x1xf32>
    %139 = vector.broadcast %138 : vector<168x1xf32> to vector<168x56xf32>
    %140 = arith.subf %136, %139 : vector<168x56xf32>
    %141 = math.exp %140 : vector<168x56xf32>
    %cst_46 = arith.constant dense<0.000000e+00> : vector<168xf32>
    %142 = vector.multi_reduction <add>, %141, %cst_46 [1] : vector<168x56xf32> to vector<168xf32>
    %143 = vector.shape_cast %142 : vector<168xf32> to vector<168x1xf32>
    %144 = tpu.reciprocal %143 : vector<168x1xf32> -> vector<168x1xf32>
    %145 = vector.broadcast %144 : vector<168x1xf32> to vector<168x56xf32>
    %146 = arith.mulf %141, %145 : vector<168x56xf32>
    %cst_47 = arith.constant dense<0.000000e+00> : vector<168x32xf32>
    %147 = tpu.matmul %146, %135, %cst_47 {dimension_numbers = #tpu.dot_dimension_numbers<[1], [0], [0], [1], [0, 0, 1, 1], [], []>} : vector<168x56xf32>, vector<56x32xf32>, vector<168x32xf32> -> vector<168x32xf32>
    %148 = arith.subf %38, %147 : vector<168x32xf32>
    %149 = vector.shape_cast %148 : vector<168x32xf32> to vector<3x56x32xf32>
    %150 = arith.mulf %149, %149 : vector<3x56x32xf32>
    %cst_48 = arith.constant dense<0.000000e+00> : vector<3x56xf32>
    %151 = vector.multi_reduction <add>, %150, %cst_48 [2] : vector<3x56x32xf32> to vector<3x56xf32>
    %cst_49 = arith.constant dense<0.000000e+00> : vector<3xf32>
    %152 = vector.multi_reduction <add>, %151, %cst_49 [1] : vector<3x56xf32> to vector<3xf32>
    %153 = vector.shape_cast %152 : vector<3xf32> to vector<3x1xf32>
    %cst_50 = arith.constant 0.000000e+00 : f32
    %154 = vector.broadcast %cst_50 : f32 to vector<3x1xf32>
    %155 = arith.subf %154, %153 : vector<3x1xf32>
    %cst_51 = arith.constant 5.600000e+01 : f32
    %156 = vector.broadcast %cst_51 : f32 to vector<3x1xf32>
    %157 = arith.divf %155, %156 : vector<3x1xf32>
    %c3_i32 = arith.constant 3 : i32
    %158 = vector.broadcast %c3_i32 : i32 to vector<3x5xi32>
    %159 = arith.cmpi eq, %40, %158 : vector<3x5xi32>
    %cst_52 = arith.constant 0.000000e+00 : f32
    %160 = vector.shape_cast %157 : vector<3x1xf32> to vector<3x1xf32>
    %161 = vector.broadcast %160 : vector<3x1xf32> to vector<3x5xf32>
    %162 = vector.broadcast %cst_52 : f32 to vector<3x5xf32>
    %163 = arith.select %159, %161, %162 : vector<3x5xi1>, vector<3x5xf32>
    %164 = arith.addf %133, %163 : vector<3x5xf32>
    %165 = vector.extract_strided_slice %33 {offsets = [224, 0], sizes = [56, 32], strides = [1, 1]} : vector<280x32xf32> to vector<56x32xf32>
    %166 = vector.extract_strided_slice %34 {offsets = [224, 0], sizes = [56, 32], strides = [1, 1]} : vector<280x32xf32> to vector<56x32xf32>
    %cst_53 = arith.constant dense<0.000000e+00> : vector<168x56xf32>
    %167 = tpu.matmul %37, %165, %cst_53 {dimension_numbers = #tpu.dot_dimension_numbers<[1], [1], [0], [0], [0, 0, 1, 0], [], []>} : vector<168x32xf32>, vector<56x32xf32>, vector<168x56xf32> -> vector<168x56xf32>
    %cst_54 = arith.constant dense<0xFF800000> : vector<168xf32>
    %168 = vector.multi_reduction <maximumf>, %167, %cst_54 [1] : vector<168x56xf32> to vector<168xf32>
    %169 = vector.shape_cast %168 : vector<168xf32> to vector<168x1xf32>
    %170 = vector.broadcast %169 : vector<168x1xf32> to vector<168x56xf32>
    %171 = arith.subf %167, %170 : vector<168x56xf32>
    %172 = math.exp %171 : vector<168x56xf32>
    %cst_55 = arith.constant dense<0.000000e+00> : vector<168xf32>
    %173 = vector.multi_reduction <add>, %172, %cst_55 [1] : vector<168x56xf32> to vector<168xf32>
    %174 = vector.shape_cast %173 : vector<168xf32> to vector<168x1xf32>
    %175 = tpu.reciprocal %174 : vector<168x1xf32> -> vector<168x1xf32>
    %176 = vector.broadcast %175 : vector<168x1xf32> to vector<168x56xf32>
    %177 = arith.mulf %172, %176 : vector<168x56xf32>
    %cst_56 = arith.constant dense<0.000000e+00> : vector<168x32xf32>
    %178 = tpu.matmul %177, %166, %cst_56 {dimension_numbers = #tpu.dot_dimension_numbers<[1], [0], [0], [1], [0, 0, 1, 1], [], []>} : vector<168x56xf32>, vector<56x32xf32>, vector<168x32xf32> -> vector<168x32xf32>
    %179 = arith.subf %38, %178 : vector<168x32xf32>
    %180 = vector.shape_cast %179 : vector<168x32xf32> to vector<3x56x32xf32>
    %181 = arith.mulf %180, %180 : vector<3x56x32xf32>
    %cst_57 = arith.constant dense<0.000000e+00> : vector<3x56xf32>
    %182 = vector.multi_reduction <add>, %181, %cst_57 [2] : vector<3x56x32xf32> to vector<3x56xf32>
    %cst_58 = arith.constant dense<0.000000e+00> : vector<3xf32>
    %183 = vector.multi_reduction <add>, %182, %cst_58 [1] : vector<3x56xf32> to vector<3xf32>
    %184 = vector.shape_cast %183 : vector<3xf32> to vector<3x1xf32>
    %cst_59 = arith.constant 0.000000e+00 : f32
    %185 = vector.broadcast %cst_59 : f32 to vector<3x1xf32>
    %186 = arith.subf %185, %184 : vector<3x1xf32>
    %cst_60 = arith.constant 5.600000e+01 : f32
    %187 = vector.broadcast %cst_60 : f32 to vector<3x1xf32>
    %188 = arith.divf %186, %187 : vector<3x1xf32>
    %c4_i32 = arith.constant 4 : i32
    %189 = vector.broadcast %c4_i32 : i32 to vector<3x5xi32>
    %190 = arith.cmpi eq, %40, %189 : vector<3x5xi32>
    %cst_61 = arith.constant 0.000000e+00 : f32
    %191 = vector.shape_cast %188 : vector<3x1xf32> to vector<3x1xf32>
    %192 = vector.broadcast %191 : vector<3x1xf32> to vector<3x5xf32>
    %193 = vector.broadcast %cst_61 : f32 to vector<3x5xf32>
    %194 = arith.select %190, %192, %193 : vector<3x5xi1>, vector<3x5xf32>
    %195 = arith.addf %164, %194 : vector<3x5xf32>
    %c0_62 = arith.constant 0 : index
    %c0_63 = arith.constant 0 : index
    %196 = vector.load %arg6[%c0_62, %c0_63] : memref<3x5xf32, #tpu.memory_space<vmem>>, vector<3x5xf32>
    tpu.vector_store %arg6[%c0_62, %c0_63], %195 {strides = array<i32>} : memref<3x5xf32, #tpu.memory_space<vmem>>, vector<3x5xf32>,
    return
  }
  func.func @transform_0(%arg0: i32) -> (i32, i32, i32) {
    %c0_i32 = arith.constant 0 : i32
    %c0_i32_0 = arith.constant 0 : i32
    %c0_i32_1 = arith.constant 0 : i32
    %c0_i32_2 = arith.constant 0 : i32
    return %c0_i32, %c0_i32_0, %c0_i32_1 : i32, i32, i32
  }
  func.func @transform_1(%arg0: i32) -> (i32, i32) {
    %c0_i32 = arith.constant 0 : i32
    %c0_i32_0 = arith.constant 0 : i32
    %c0_i32_1 = arith.constant 0 : i32
    return %c0_i32, %c0_i32_0 : i32, i32
  }
  func.func @transform_2(%arg0: i32) -> (i32, i32) {
    %c0_i32 = arith.constant 0 : i32
    %c0_i32_0 = arith.constant 0 : i32
    %c0_i32_1 = arith.constant 0 : i32
    return %c0_i32, %c0_i32_0 : i32, i32
  }
  func.func @transform_3(%arg0: i32) -> (i32, i32) {
    %c0_i32 = arith.constant 0 : i32
    %c0_i32_0 = arith.constant 0 : i32
    %c0_i32_1 = arith.constant 0 : i32
    return %c0_i32, %c0_i32_0 : i32, i32
  }
  func.func @transform_4(%arg0: i32) -> (i32, i32) {
    %c0_i32 = arith.constant 0 : i32
    %c0_i32_0 = arith.constant 0 : i32
    %c0_i32_1 = arith.constant 0 : i32
    return %c0_i32, %c0_i32_0 : i32, i32
  }
  func.func @transform_5(%arg0: i32) -> (i32, i32) {
    %c0_i32 = arith.constant 0 : i32
    %c0_i32_0 = arith.constant 0 : i32
    %c0_i32_1 = arith.constant 0 : i32
    return %c0_i32, %c0_i32_0 : i32, i32
  }
}

</mosaic_0001>

<llo_original>
// kernel: tpu_custom_call.1
$region0: #{tpu_custom_call.1}
  #allocation0 [shape = 'u32[]', space=smem, size = 0x4, offset = 0x4, fixed_abs, tag = 'smem constant byte address 0x4 - core index']
  #allocation1 [shape = 'u32[72,128]{1,0:T(1,128)}', space=vmem, size = 0x9000, scoped, tag = 'internal scratch']
  %s0 = inlined_call_operand.hbm [shape: f32[8,56,96], index: 0, kind: input, shape index: {}]
  %s1 = inlined_call_operand.vmem [shape: f32[96,64], index: 1, kind: input, shape index: {}]
  %s2 = inlined_call_operand.vmem [shape: f32[1,64], index: 2, kind: input, shape index: {}]
  %s3 = inlined_call_operand.vmem [shape: f32[1,32], index: 3, kind: input, shape index: {}]
  %s4 = inlined_call_operand.vmem [shape: f32[1,32], index: 4, kind: input, shape index: {}]
  %s5 = inlined_call_operand.hbm [shape: f32[3,5], index: 5, kind: output, shape index: {}]
  %s6 = sld [smem:[#allocation0]]
  $region34: #{tpu_custom_call.1} parent=0
    _
  %s8 = ssub.s32 1, %s6
  %s9 = scalar_select 0, %s8, %s6
  $region1: #{tpu_custom_call.1} parent=0
    #allocation2 [shape = 'u8[229376]{0}', space=vmem, size = 0x38000, scoped, tag = 'input window, operand 0, single buffered']
    #allocation3 [shape = 's32[1]{0}', space=sflag, size = 0x4, scoped, tag = 'scoped memory for tpu_custom_call.1']
    #allocation4 [shape = 's32[1]{0}', space=sflag, size = 0x4, scoped, tag = 'scoped memory for tpu_custom_call.1']
    #allocation5 [shape = 'u8[2048]{0}', space=vmem, size = 0x800, scoped, tag = 'output window, operand 0, single buffered']
    %10 = vsyncpa [#allocation3], 0
    %11 = vsyncpa [#allocation4], 0
    // Predicated region
    $region2: #{tpu_custom_call.1} parent=1 // pred_check
      _
    $region3: #{tpu_custom_call.1} parent=1 // pred_check_branch
      %13 = sbr.rel (0) target = $region5
    $region4: #{tpu_custom_call.1} parent=1 // pred_region
      %15 = vsyncadd [#allocation3], 0
      %s16 = sshll.u32 %s0, 4
      %s17 = int_to_ptr.hbm [resolvable:$true] %s16
      %s18 = sshll.u32 [#allocation2], 4
      %s19 = int_to_ptr.vmem [resolvable:$true] %s18
      %24 = dma.hbm_to_vmem [thread:$0]  %s17, 7168, %s19, [#allocation3], 128, 128, 8
    $region5: #{tpu_custom_call.1} parent=1 // pred_fallthru
      _
    // Predicated region
    $region6: #{tpu_custom_call.1} parent=1 // pred_check
      _
    $region7: #{tpu_custom_call.1} parent=1 // pred_check_branch
      %26 = sbr.rel (0) target = $region9
    $region8: #{tpu_custom_call.1} parent=1 // pred_region
      _
    $region9: #{tpu_custom_call.1} parent=1 // pred_fallthru
      _
    // Predicated region
    $region10: #{tpu_custom_call.1} parent=1 // pred_check
      _
    $region11: #{tpu_custom_call.1} parent=1 // pred_check_branch
      %28 = sbr.rel (0) target = $region13
    $region12: #{tpu_custom_call.1} parent=1 // pred_region
      _
    $region13: #{tpu_custom_call.1} parent=1 // pred_fallthru
      _
    // Predicated region
    $region14: #{tpu_custom_call.1} parent=1 // pred_check
      _
    $region15: #{tpu_custom_call.1} parent=1 // pred_check_branch
      %30 = sbr.rel (0) target = $region17
    $region16: #{tpu_custom_call.1} parent=1 // pred_region
      _
    $region17: #{tpu_custom_call.1} parent=1 // pred_fallthru
      _
    // Predicated region
    $region18: #{tpu_custom_call.1} parent=1 // pred_check
      _
    $region19: #{tpu_custom_call.1} parent=1 // pred_check_branch
      %32 = sbr.rel (0) target = $region21
    $region20: #{tpu_custom_call.1} parent=1 // pred_region
      _
    $region21: #{tpu_custom_call.1} parent=1 // pred_fallthru
      _
    // Predicated region
    $region22: #{tpu_custom_call.1} parent=1 // pred_check
      _
    $region23: #{tpu_custom_call.1} parent=1 // pred_check_branch
      %34 = sbr.rel (0) target = $region25
    $region24: #{tpu_custom_call.1} parent=1 // pred_region
      %36 = dma.done [#allocation3], 7168
    $region25: #{tpu_custom_call.1} parent=1 // pred_fallthru
      _
    %v37 = vld [vmem:[#allocation2] sm:$0xff]
    %v38 = vld [vmem:[#allocation2 + $0x8] sm:$0xff]
    %v39 = vld [vmem:[#allocation2 + $0x10] sm:$0xff]
    %v40 = vld [vmem:[#allocation2 + $0x18] sm:$0xff]
    %v41 = vld [vmem:[#allocation2 + $0x20] sm:$0xff]
    %v42 = vld [vmem:[#allocation2 + $0x28] sm:$0xff]
    %v43 = vld [vmem:[#allocation2 + $0x30] sm:$0xff]
    %v44 = vld [vmem:[#allocation2 + $0x38] sm:$0xff]
    %v45 = vld [vmem:[#allocation2 + $0x40] sm:$0xff]
    %v46 = vld [vmem:[#allocation2 + $0x48] sm:$0xff]
    %v47 = vld [vmem:[#allocation2 + $0x50] sm:$0xff]
    %v48 = vld [vmem:[#allocation2 + $0x58] sm:$0xff]
    %v49 = vld [vmem:[#allocation2 + $0x60] sm:$0xff]
    %v50 = vld [vmem:[#allocation2 + $0x68] sm:$0xff]
    %v51 = vld [vmem:[#allocation2 + $0x70] sm:$0xff]
    %v52 = vld [vmem:[#allocation2 + $0x78] sm:$0xff]
    %v53 = vld [vmem:[#allocation2 + $0x80] sm:$0xff]
    %v54 = vld [vmem:[#allocation2 + $0x88] sm:$0xff]
    %v55 = vld [vmem:[#allocation2 + $0x90] sm:$0xff]
    %v56 = vld [vmem:[#allocation2 + $0x98] sm:$0xff]
    %v57 = vld [vmem:[#allocation2 + $0xa0] sm:$0xff]
    %v58 = vld [vmem:[#allocation2 + $0xa8] sm:$0xff]
    %v59 = vld [vmem:[#allocation2 + $0xb0] sm:$0xff]
    %v60 = vld [vmem:[#allocation2 + $0xb8] sm:$0xff]
    %v61 = vld [vmem:[#allocation2 + $0xc0] sm:$0xff]
    %v62 = vld [vmem:[#allocation2 + $0xc8] sm:$0xff]
    %v63 = vld [vmem:[#allocation2 + $0xd0] sm:$0xff]
    %v64 = vld [vmem:[#allocation2 + $0xd8] sm:$0xff]
    %v65 = vld [vmem:[#allocation2 + $0xe0] sm:$0xff]
    %v66 = vld [vmem:[#allocation2 + $0xe8] sm:$0xff]
    %v67 = vld [vmem:[#allocation2 + $0xf0] sm:$0xff]
    %v68 = vld [vmem:[#allocation2 + $0xf8] sm:$0xff]
    %v69 = vld [vmem:[#allocation2 + $0x100] sm:$0xff]
    %v70 = vld [vmem:[#allocation2 + $0x108] sm:$0xff]
    %v71 = vld [vmem:[#allocation2 + $0x110] sm:$0xff]
    %v72 = vld [vmem:[#allocation2 + $0x118] sm:$0xff]
    %v73 = vld [vmem:[#allocation2 + $0x120] sm:$0xff]
    %v74 = vld [vmem:[#allocation2 + $0x128] sm:$0xff]
    %v75 = vld [vmem:[#allocation2 + $0x130] sm:$0xff]
    %v76 = vld [vmem:[#allocation2 + $0x138] sm:$0xff]
    %v77 = vld [vmem:[#allocation2 + $0x140] sm:$0xff]
    %v78 = vld [vmem:[#allocation2 + $0x148] sm:$0xff]
    %v79 = vld [vmem:[#allocation2 + $0x150] sm:$0xff]
    %v80 = vld [vmem:[#allocation2 + $0x158] sm:$0xff]
    %v81 = vld [vmem:[#allocation2 + $0x160] sm:$0xff]
    %v82 = vld [vmem:[#allocation2 + $0x168] sm:$0xff]
    %v83 = vld [vmem:[#allocation2 + $0x170] sm:$0xff]
    %v84 = vld [vmem:[#allocation2 + $0x178] sm:$0xff]
    %v85 = vld [vmem:[#allocation2 + $0x180] sm:$0xff]
    %v86 = vld [vmem:[#allocation2 + $0x188] sm:$0xff]
    %v87 = vld [vmem:[#allocation2 + $0x190] sm:$0xff]
    %v88 = vld [vmem:[#allocation2 + $0x198] sm:$0xff]
    %v89 = vld [vmem:[#allocation2 + $0x1a0] sm:$0xff]
    %v90 = vld [vmem:[#allocation2 + $0x1a8] sm:$0xff]
    %v91 = vld [vmem:[#allocation2 + $0x1b0] sm:$0xff]
    %v92 = vld [vmem:[#allocation2 + $0x1b8] sm:$0xff]
    %v93 = vld [vmem:[%s1] sm:$0xff]
    %v94 = vld [vmem:[%s1 + $0x8] sm:$0xff]
    %v95 = vld [vmem:[%s1 + $0x10] sm:$0xff]
    %v96 = vld [vmem:[%s1 + $0x18] sm:$0xff]
    %v97 = vld [vmem:[%s1 + $0x20] sm:$0xff]
    %v98 = vld [vmem:[%s1 + $0x28] sm:$0xff]
    %v99 = vld [vmem:[%s1 + $0x30] sm:$0xff]
    %v100 = vld [vmem:[%s1 + $0x38] sm:$0xff]
    %v101 = vld [vmem:[%s1 + $0x40] sm:$0xff]
    %v102 = vld [vmem:[%s1 + $0x48] sm:$0xff]
    %v103 = vld [vmem:[%s1 + $0x50] sm:$0xff]
    %v104 = vld [vmem:[%s1 + $0x58] sm:$0xff]
    %v105 = vld [vmem:[%s2] sm:$0x1]
    %v107 = vperm.slane %v105, 0
    %vm109 = vcmask 785408
    %v111 = vsel %vm109, %v37, 0
    %v114 = vsel %vm109, %v38, 0
    %v117 = vsel %vm109, %v39, 0
    %v120 = vsel %vm109, %v40, 0
    %v123 = vsel %vm109, %v41, 0
    %v126 = vsel %vm109, %v42, 0
    %v129 = vsel %vm109, %v43, 0
    %v132 = vsel %vm109, %v44, 0
    %v135 = vsel %vm109, %v45, 0
    %v138 = vsel %vm109, %v46, 0
    %v141 = vsel %vm109, %v47, 0
    %v144 = vsel %vm109, %v48, 0
    %v147 = vsel %vm109, %v49, 0
    %v150 = vsel %vm109, %v50, 0
    %v153 = vsel %vm109, %v51, 0
    %v156 = vsel %vm109, %v52, 0
    %v159 = vsel %vm109, %v53, 0
    %v162 = vsel %vm109, %v54, 0
    %v165 = vsel %vm109, %v55, 0
    %v168 = vsel %vm109, %v56, 0
    %v171 = vsel %vm109, %v57, 0
    %v174 = vsel %vm109, %v58, 0
    %v177 = vsel %vm109, %v59, 0
    %v180 = vsel %vm109, %v60, 0
    %v183 = vsel %vm109, %v61, 0
    %v186 = vsel %vm109, %v62, 0
    %v189 = vsel %vm109, %v63, 0
    %v192 = vsel %vm109, %v64, 0
    %v195 = vsel %vm109, %v65, 0
    %v198 = vsel %vm109, %v66, 0
    %v201 = vsel %vm109, %v67, 0
    %v204 = vsel %vm109, %v68, 0
    %v207 = vsel %vm109, %v69, 0
    %v210 = vsel %vm109, %v70, 0
    %v213 = vsel %vm109, %v71, 0
    %v216 = vsel %vm109, %v72, 0
    %v219 = vsel %vm109, %v73, 0
    %v222 = vsel %vm109, %v74, 0
    %v225 = vsel %vm109, %v75, 0
    %v228 = vsel %vm109, %v76, 0
    %v231 = vsel %vm109, %v77, 0
    %v234 = vsel %vm109, %v78, 0
    %v237 = vsel %vm109, %v79, 0
    %v240 = vsel %vm109, %v80, 0
    %v243 = vsel %vm109, %v81, 0
    %v246 = vsel %vm109, %v82, 0
    %v249 = vsel %vm109, %v83, 0
    %v252 = vsel %vm109, %v84, 0
    %v255 = vsel %vm109, %v85, 0
    %v258 = vsel %vm109, %v86, 0
    %v261 = vsel %vm109, %v87, 0
    %v264 = vsel %vm109, %v88, 0
    %v267 = vsel %vm109, %v89, 0
    %v270 = vsel %vm109, %v90, 0
    %v273 = vsel %vm109, %v91, 0
    %v276 = vsel %vm109, %v92, 0
    %278 = vmatpush.msra.mxu0 0.0
    %279 = vmatpush.msra.mxu0 0.0
    %280 = vmatpush.msra.mxu0 0.0
    %281 = vmatpush.msra.mxu0 0.0
    %282 = vmatpush.msra.mxu0 %v104
    %283 = vmatpush.msra.mxu0 %v103
    %284 = vmatpush.msra.mxu0 %v102
    %285 = vmatpush.msra.mxu0 %v101
    %286 = vmatpush.msra.mxu0 %v100
    %287 = vmatpush.msra.mxu0 %v99
    %288 = vmatpush.msra.mxu0 %v98
    %289 = vmatpush.msra.mxu0 %v97
    %290 = vmatpush.msra.mxu0 %v96
    %291 = vmatpush.msra.mxu0 %v95
    %292 = vmatpush.msra.mxu0 %v94
    %293 = vmatpush.msra.mxu0 %v93
    %294 = vmatmul.f32.gmra.mxu0 %v111
    %v295 = vpop.f32.mrf.mxu0
    %v296 = vadd.f32 %v107, %v295
    %297 = vmatmul.f32.gmra.mxu0 %v114
    %v298 = vpop.f32.mrf.mxu0
    %v299 = vadd.f32 %v107, %v298
    %300 = vmatmul.f32.gmra.mxu0 %v117
    %v301 = vpop.f32.mrf.mxu0
    %v302 = vadd.f32 %v107, %v301
    %303 = vmatmul.f32.gmra.mxu0 %v120
    %v304 = vpop.f32.mrf.mxu0
    %v305 = vadd.f32 %v107, %v304
    %306 = vmatmul.f32.gmra.mxu0 %v123
    %v307 = vpop.f32.mrf.mxu0
    %v308 = vadd.f32 %v107, %v307
    %309 = vmatmul.f32.gmra.mxu0 %v126
    %v310 = vpop.f32.mrf.mxu0
    %v311 = vadd.f32 %v107, %v310
    %312 = vmatmul.f32.gmra.mxu0 %v129
    %v313 = vpop.f32.mrf.mxu0
    %v314 = vadd.f32 %v107, %v313
    %315 = vmatmul.f32.gmra.mxu0 %v132
    %v316 = vpop.f32.mrf.mxu0
    %v317 = vadd.f32 %v107, %v316
    %318 = vmatmul.f32.gmra.mxu0 %v135
    %v319 = vpop.f32.mrf.mxu0
    %v320 = vadd.f32 %v107, %v319
    %321 = vmatmul.f32.gmra.mxu0 %v138
    %v322 = vpop.f32.mrf.mxu0
    %v323 = vadd.f32 %v107, %v322
    %324 = vmatmul.f32.gmra.mxu0 %v141
    %v325 = vpop.f32.mrf.mxu0
    %v326 = vadd.f32 %v107, %v325
    %327 = vmatmul.f32.gmra.mxu0 %v144
    %v328 = vpop.f32.mrf.mxu0
    %v329 = vadd.f32 %v107, %v328
    %330 = vmatmul.f32.gmra.mxu0 %v147
    %v331 = vpop.f32.mrf.mxu0
    %v332 = vadd.f32 %v107, %v331
    %333 = vmatmul.f32.gmra.mxu0 %v150
    %v334 = vpop.f32.mrf.mxu0
    %v335 = vadd.f32 %v107, %v334
    %336 = vmatmul.f32.gmra.mxu0 %v153
    %v337 = vpop.f32.mrf.mxu0
    %v338 = vadd.f32 %v107, %v337
    %339 = vmatmul.f32.gmra.mxu0 %v156
    %v340 = vpop.f32.mrf.mxu0
    %v341 = vadd.f32 %v107, %v340
    %342 = vmatmul.f32.gmra.mxu0 %v159
    %v343 = vpop.f32.mrf.mxu0
    %v344 = vadd.f32 %v107, %v343
    %345 = vmatmul.f32.gmra.mxu0 %v162
    %v346 = vpop.f32.mrf.mxu0
    %v347 = vadd.f32 %v107, %v346
    %348 = vmatmul.f32.gmra.mxu0 %v165
    %v349 = vpop.f32.mrf.mxu0
    %v350 = vadd.f32 %v107, %v349
    %351 = vmatmul.f32.gmra.mxu0 %v168
    %v352 = vpop.f32.mrf.mxu0
    %v353 = vadd.f32 %v107, %v352
    %354 = vmatmul.f32.gmra.mxu0 %v171
    %v355 = vpop.f32.mrf.mxu0
    %v356 = vadd.f32 %v107, %v355
    %357 = vmatmul.f32.gmra.mxu0 %v174
    %v358 = vpop.f32.mrf.mxu0
    %v359 = vadd.f32 %v107, %v358
    %360 = vmatmul.f32.gmra.mxu0 %v177
    %v361 = vpop.f32.mrf.mxu0
    %v362 = vadd.f32 %v107, %v361
    %363 = vmatmul.f32.gmra.mxu0 %v180
    %v364 = vpop.f32.mrf.mxu0
    %v365 = vadd.f32 %v107, %v364
    %366 = vmatmul.f32.gmra.mxu0 %v183
    %v367 = vpop.f32.mrf.mxu0
    %v368 = vadd.f32 %v107, %v367
    %369 = vmatmul.f32.gmra.mxu0 %v186
    %v370 = vpop.f32.mrf.mxu0
    %v371 = vadd.f32 %v107, %v370
    %372 = vmatmul.f32.gmra.mxu0 %v189
    %v373 = vpop.f32.mrf.mxu0
    %v374 = vadd.f32 %v107, %v373
    %375 = vmatmul.f32.gmra.mxu0 %v192
    %v376 = vpop.f32.mrf.mxu0
    %v377 = vadd.f32 %v107, %v376
    %378 = vmatmul.f32.gmra.mxu0 %v195
    %v379 = vpop.f32.mrf.mxu0
    %v380 = vadd.f32 %v107, %v379
    %381 = vmatmul.f32.gmra.mxu0 %v198
    %v382 = vpop.f32.mrf.mxu0
    %v383 = vadd.f32 %v107, %v382
    %384 = vmatmul.f32.gmra.mxu0 %v201
    %v385 = vpop.f32.mrf.mxu0
    %v386 = vadd.f32 %v107, %v385
    %387 = vmatmul.f32.gmra.mxu0 %v204
    %v388 = vpop.f32.mrf.mxu0
    %v389 = vadd.f32 %v107, %v388
    %390 = vmatmul.f32.gmra.mxu0 %v207
    %v391 = vpop.f32.mrf.mxu0
    %v392 = vadd.f32 %v107, %v391
    %393 = vmatmul.f32.gmra.mxu0 %v210
    %v394 = vpop.f32.mrf.mxu0
    %v395 = vadd.f32 %v107, %v394
    %396 = vmatmul.f32.gmra.mxu0 %v213
    %v397 = vpop.f32.mrf.mxu0
    %v398 = vadd.f32 %v107, %v397
    %399 = vmatmul.f32.gmra.mxu0 %v216
    %v400 = vpop.f32.mrf.mxu0
    %v401 = vadd.f32 %v107, %v400
    %402 = vmatmul.f32.gmra.mxu0 %v219
    %v403 = vpop.f32.mrf.mxu0
    %v404 = vadd.f32 %v107, %v403
    %405 = vmatmul.f32.gmra.mxu0 %v222
    %v406 = vpop.f32.mrf.mxu0
    %v407 = vadd.f32 %v107, %v406
    %408 = vmatmul.f32.gmra.mxu0 %v225
    %v409 = vpop.f32.mrf.mxu0
    %v410 = vadd.f32 %v107, %v409
    %411 = vmatmul.f32.gmra.mxu0 %v228
    %v412 = vpop.f32.mrf.mxu0
    %v413 = vadd.f32 %v107, %v412
    %414 = vmatmul.f32.gmra.mxu0 %v231
    %v415 = vpop.f32.mrf.mxu0
    %v416 = vadd.f32 %v107, %v415
    %417 = vmatmul.f32.gmra.mxu0 %v234
    %v418 = vpop.f32.mrf.mxu0
    %v419 = vadd.f32 %v107, %v418
    %420 = vmatmul.f32.gmra.mxu0 %v237
    %v421 = vpop.f32.mrf.mxu0
    %v422 = vadd.f32 %v107, %v421
    %423 = vmatmul.f32.gmra.mxu0 %v240
    %v424 = vpop.f32.mrf.mxu0
    %v425 = vadd.f32 %v107, %v424
    %426 = vmatmul.f32.gmra.mxu0 %v243
    %v427 = vpop.f32.mrf.mxu0
    %v428 = vadd.f32 %v107, %v427
    %429 = vmatmul.f32.gmra.mxu0 %v246
    %v430 = vpop.f32.mrf.mxu0
    %v431 = vadd.f32 %v107, %v430
    %432 = vmatmul.f32.gmra.mxu0 %v249
    %v433 = vpop.f32.mrf.mxu0
    %v434 = vadd.f32 %v107, %v433
    %435 = vmatmul.f32.gmra.mxu0 %v252
    %v436 = vpop.f32.mrf.mxu0
    %v437 = vadd.f32 %v107, %v436
    %438 = vmatmul.f32.gmra.mxu0 %v255
    %v439 = vpop.f32.mrf.mxu0
    %v440 = vadd.f32 %v107, %v439
    %441 = vmatmul.f32.gmra.mxu0 %v258
    %v442 = vpop.f32.mrf.mxu0
    %v443 = vadd.f32 %v107, %v442
    %444 = vmatmul.f32.gmra.mxu0 %v261
    %v445 = vpop.f32.mrf.mxu0
    %v446 = vadd.f32 %v107, %v445
    %447 = vmatmul.f32.gmra.mxu0 %v264
    %v448 = vpop.f32.mrf.mxu0
    %v449 = vadd.f32 %v107, %v448
    %450 = vmatmul.f32.gmra.mxu0 %v267
    %v451 = vpop.f32.mrf.mxu0
    %v452 = vadd.f32 %v107, %v451
    %453 = vmatmul.f32.gmra.mxu0 %v270
    %v454 = vpop.f32.mrf.mxu0
    %v455 = vadd.f32 %v107, %v454
    %456 = vmatmul.f32.gmra.mxu0 %v273
    %v457 = vpop.f32.mrf.mxu0
    %v458 = vadd.f32 %v107, %v457
    %459 = vmatmul.f32.gmra.mxu0 %v276
    %v460 = vpop.f32.mrf.mxu0
    %v461 = vadd.f32 %v107, %v460
    %462 = vdwg.mxu0
    %vm463 = vcmask 261120
    %v464 = vsel %vm463, %v296, 0.0
    %465 = vadd.xlane.f32.xlu0 %v464
    %v466 = vpop.xlane.xlu0 %465
    %v467 = vsel %vm463, %v299, 0.0
    %468 = vadd.xlane.f32.xlu0 %v467
    %v469 = vpop.xlane.xlu0 %468
    %v470 = vsel %vm463, %v302, 0.0
    %471 = vadd.xlane.f32.xlu0 %v470
    %v472 = vpop.xlane.xlu0 %471
    %v473 = vsel %vm463, %v305, 0.0
    %474 = vadd.xlane.f32.xlu0 %v473
    %v475 = vpop.xlane.xlu0 %474
    %v476 = vsel %vm463, %v308, 0.0
    %477 = vadd.xlane.f32.xlu0 %v476
    %v478 = vpop.xlane.xlu0 %477
    %v479 = vsel %vm463, %v311, 0.0
    %480 = vadd.xlane.f32.xlu0 %v479
    %v481 = vpop.xlane.xlu0 %480
    %v482 = vsel %vm463, %v314, 0.0
    %483 = vadd.xlane.f32.xlu0 %v482
    %v484 = vpop.xlane.xlu0 %483
    %v485 = vsel %vm463, %v317, 0.0
    %486 = vadd.xlane.f32.xlu0 %v485
    %v487 = vpop.xlane.xlu0 %486
    %v488 = vsel %vm463, %v320, 0.0
    %489 = vadd.xlane.f32.xlu0 %v488
    %v490 = vpop.xlane.xlu0 %489
    %v491 = vsel %vm463, %v323, 0.0
    %492 = vadd.xlane.f32.xlu0 %v491
    %v493 = vpop.xlane.xlu0 %492
    %v494 = vsel %vm463, %v326, 0.0
    %495 = vadd.xlane.f32.xlu0 %v494
    %v496 = vpop.xlane.xlu0 %495
    %v497 = vsel %vm463, %v329, 0.0
    %498 = vadd.xlane.f32.xlu0 %v497
    %v499 = vpop.xlane.xlu0 %498
    %v500 = vsel %vm463, %v332, 0.0
    %501 = vadd.xlane.f32.xlu0 %v500
    %v502 = vpop.xlane.xlu0 %501
    %v503 = vsel %vm463, %v335, 0.0
    %504 = vadd.xlane.f32.xlu0 %v503
    %v505 = vpop.xlane.xlu0 %504
    %v506 = vsel %vm463, %v338, 0.0
    %507 = vadd.xlane.f32.xlu0 %v506
    %v508 = vpop.xlane.xlu0 %507
    %v509 = vsel %vm463, %v341, 0.0
    %510 = vadd.xlane.f32.xlu0 %v509
    %v511 = vpop.xlane.xlu0 %510
    %v512 = vsel %vm463, %v344, 0.0
    %513 = vadd.xlane.f32.xlu0 %v512
    %v514 = vpop.xlane.xlu0 %513
    %v515 = vsel %vm463, %v347, 0.0
    %516 = vadd.xlane.f32.xlu0 %v515
    %v517 = vpop.xlane.xlu0 %516
    %v518 = vsel %vm463, %v350, 0.0
    %519 = vadd.xlane.f32.xlu0 %v518
    %v520 = vpop.xlane.xlu0 %519
    %v521 = vsel %vm463, %v353, 0.0
    %522 = vadd.xlane.f32.xlu0 %v521
    %v523 = vpop.xlane.xlu0 %522
    %v524 = vsel %vm463, %v356, 0.0
    %525 = vadd.xlane.f32.xlu0 %v524
    %v526 = vpop.xlane.xlu0 %525
    %v527 = vsel %vm463, %v359, 0.0
    %528 = vadd.xlane.f32.xlu0 %v527
    %v529 = vpop.xlane.xlu0 %528
    %v530 = vsel %vm463, %v362, 0.0
    %531 = vadd.xlane.f32.xlu0 %v530
    %v532 = vpop.xlane.xlu0 %531
    %v533 = vsel %vm463, %v365, 0.0
    %534 = vadd.xlane.f32.xlu0 %v533
    %v535 = vpop.xlane.xlu0 %534
    %v536 = vsel %vm463, %v368, 0.0
    %537 = vadd.xlane.f32.xlu0 %v536
    %v538 = vpop.xlane.xlu0 %537
    %v539 = vsel %vm463, %v371, 0.0
    %540 = vadd.xlane.f32.xlu0 %v539
    %v541 = vpop.xlane.xlu0 %540
    %v542 = vsel %vm463, %v374, 0.0
    %543 = vadd.xlane.f32.xlu0 %v542
    %v544 = vpop.xlane.xlu0 %543
    %v545 = vsel %vm463, %v377, 0.0
    %546 = vadd.xlane.f32.xlu0 %v545
    %v547 = vpop.xlane.xlu0 %546
    %v548 = vsel %vm463, %v380, 0.0
    %549 = vadd.xlane.f32.xlu0 %v548
    %v550 = vpop.xlane.xlu0 %549
    %v551 = vsel %vm463, %v383, 0.0
    %552 = vadd.xlane.f32.xlu0 %v551
    %v553 = vpop.xlane.xlu0 %552
    %v554 = vsel %vm463, %v386, 0.0
    %555 = vadd.xlane.f32.xlu0 %v554
    %v556 = vpop.xlane.xlu0 %555
    %v557 = vsel %vm463, %v389, 0.0
    %558 = vadd.xlane.f32.xlu0 %v557
    %v559 = vpop.xlane.xlu0 %558
    %v560 = vsel %vm463, %v392, 0.0
    %561 = vadd.xlane.f32.xlu0 %v560
    %v562 = vpop.xlane.xlu0 %561
    %v563 = vsel %vm463, %v395, 0.0
    %564 = vadd.xlane.f32.xlu0 %v563
    %v565 = vpop.xlane.xlu0 %564
    %v566 = vsel %vm463, %v398, 0.0
    %567 = vadd.xlane.f32.xlu0 %v566
    %v568 = vpop.xlane.xlu0 %567
    %v569 = vsel %vm463, %v401, 0.0
    %570 = vadd.xlane.f32.xlu0 %v569
    %v571 = vpop.xlane.xlu0 %570
    %v572 = vsel %vm463, %v404, 0.0
    %573 = vadd.xlane.f32.xlu0 %v572
    %v574 = vpop.xlane.xlu0 %573
    %v575 = vsel %vm463, %v407, 0.0
    %576 = vadd.xlane.f32.xlu0 %v575
    %v577 = vpop.xlane.xlu0 %576
    %v578 = vsel %vm463, %v410, 0.0
    %579 = vadd.xlane.f32.xlu0 %v578
    %v580 = vpop.xlane.xlu0 %579
    %v581 = vsel %vm463, %v413, 0.0
    %582 = vadd.xlane.f32.xlu0 %v581
    %v583 = vpop.xlane.xlu0 %582
    %v584 = vsel %vm463, %v416, 0.0
    %585 = vadd.xlane.f32.xlu0 %v584
    %v586 = vpop.xlane.xlu0 %585
    %v587 = vsel %vm463, %v419, 0.0
    %588 = vadd.xlane.f32.xlu0 %v587
    %v589 = vpop.xlane.xlu0 %588
    %v590 = vsel %vm463, %v422, 0.0
    %591 = vadd.xlane.f32.xlu0 %v590
    %v592 = vpop.xlane.xlu0 %591
    %v593 = vsel %vm463, %v425, 0.0
    %594 = vadd.xlane.f32.xlu0 %v593
    %v595 = vpop.xlane.xlu0 %594
    %v596 = vsel %vm463, %v428, 0.0
    %597 = vadd.xlane.f32.xlu0 %v596
    %v598 = vpop.xlane.xlu0 %597
    %v599 = vsel %vm463, %v431, 0.0
    %600 = vadd.xlane.f32.xlu0 %v599
    %v601 = vpop.xlane.xlu0 %600
    %v602 = vsel %vm463, %v434, 0.0
    %603 = vadd.xlane.f32.xlu0 %v602
    %v604 = vpop.xlane.xlu0 %603
    %v605 = vsel %vm463, %v437, 0.0
    %606 = vadd.xlane.f32.xlu0 %v605
    %v607 = vpop.xlane.xlu0 %606
    %v608 = vsel %vm463, %v440, 0.0
    %609 = vadd.xlane.f32.xlu0 %v608
    %v610 = vpop.xlane.xlu0 %609
    %v611 = vsel %vm463, %v443, 0.0
    %612 = vadd.xlane.f32.xlu0 %v611
    %v613 = vpop.xlane.xlu0 %612
    %v614 = vsel %vm463, %v446, 0.0
    %615 = vadd.xlane.f32.xlu0 %v614
    %v616 = vpop.xlane.xlu0 %615
    %v617 = vsel %vm463, %v449, 0.0
    %618 = vadd.xlane.f32.xlu0 %v617
    %v619 = vpop.xlane.xlu0 %618
    %v620 = vsel %vm463, %v452, 0.0
    %621 = vadd.xlane.f32.xlu0 %v620
    %v622 = vpop.xlane.xlu0 %621
    %v623 = vsel %vm463, %v455, 0.0
    %624 = vadd.xlane.f32.xlu0 %v623
    %v625 = vpop.xlane.xlu0 %624
    %v626 = vsel %vm463, %v458, 0.0
    %627 = vadd.xlane.f32.xlu0 %v626
    %v628 = vpop.xlane.xlu0 %627
    %v629 = vsel %vm463, %v461, 0.0
    %630 = vadd.xlane.f32.xlu0 %v629
    %v631 = vpop.xlane.xlu0 %630
    %v632 = vrcp.pop 32.0
    %v633 = vmul.f32 32.0, %v632
    %v634 = vsub.f32 1.0, %v633
    %v635 = vmul.f32 %v632, %v634
    %v636 = vadd.f32 %v632, %v635
    %vm637 = vweird.f32 %v632
    %v638 = vsel %vm637, %v632, %v636
    %v639 = vmul.f32 %v466, %v638
    %v640 = vmul.f32 %v469, %v638
    %v641 = vmul.f32 %v472, %v638
    %v642 = vmul.f32 %v475, %v638
    %v643 = vmul.f32 %v478, %v638
    %v644 = vmul.f32 %v481, %v638
    %v645 = vmul.f32 %v484, %v638
    %v646 = vmul.f32 %v487, %v638
    %v647 = vmul.f32 %v490, %v638
    %v648 = vmul.f32 %v493, %v638
    %v649 = vmul.f32 %v496, %v638
    %v650 = vmul.f32 %v499, %v638
    %v651 = vmul.f32 %v502, %v638
    %v652 = vmul.f32 %v505, %v638
    %v653 = vmul.f32 %v508, %v638
    %v654 = vmul.f32 %v511, %v638
    %v655 = vmul.f32 %v514, %v638
    %v656 = vmul.f32 %v517, %v638
    %v657 = vmul.f32 %v520, %v638
    %v658 = vmul.f32 %v523, %v638
    %v659 = vmul.f32 %v526, %v638
    %v660 = vmul.f32 %v529, %v638
    %v661 = vmul.f32 %v532, %v638
    %v662 = vmul.f32 %v535, %v638
    %v663 = vmul.f32 %v538, %v638
    %v664 = vmul.f32 %v541, %v638
    %v665 = vmul.f32 %v544, %v638
    %v666 = vmul.f32 %v547, %v638
    %v667 = vmul.f32 %v550, %v638
    %v668 = vmul.f32 %v553, %v638
    %v669 = vmul.f32 %v556, %v638
    %v670 = vmul.f32 %v559, %v638
    %v671 = vmul.f32 %v562, %v638
    %v672 = vmul.f32 %v565, %v638
    %v673 = vmul.f32 %v568, %v638
    %v674 = vmul.f32 %v571, %v638
    %v675 = vmul.f32 %v574, %v638
    %v676 = vmul.f32 %v577, %v638
    %v677 = vmul.f32 %v580, %v638
    %v678 = vmul.f32 %v583, %v638
    %v679 = vmul.f32 %v586, %v638
    %v680 = vmul.f32 %v589, %v638
    %v681 = vmul.f32 %v592, %v638
    %v682 = vmul.f32 %v595, %v638
    %v683 = vmul.f32 %v598, %v638
    %v684 = vmul.f32 %v601, %v638
    %v685 = vmul.f32 %v604, %v638
    %v686 = vmul.f32 %v607, %v638
    %v687 = vmul.f32 %v610, %v638
    %v688 = vmul.f32 %v613, %v638
    %v689 = vmul.f32 %v616, %v638
    %v690 = vmul.f32 %v619, %v638
    %v691 = vmul.f32 %v622, %v638
    %v692 = vmul.f32 %v625, %v638
    %v693 = vmul.f32 %v628, %v638
    %v694 = vmul.f32 %v631, %v638
    %v695 = vsub.f32 %v296, %v639
    %v696 = vsub.f32 %v299, %v640
    %v697 = vsub.f32 %v302, %v641
    %v698 = vsub.f32 %v305, %v642
    %v699 = vsub.f32 %v308, %v643
    %v700 = vsub.f32 %v311, %v644
    %v701 = vsub.f32 %v314, %v645
    %v702 = vsub.f32 %v317, %v646
    %v703 = vsub.f32 %v320, %v647
    %v704 = vsub.f32 %v323, %v648
    %v705 = vsub.f32 %v326, %v649
    %v706 = vsub.f32 %v329, %v650
    %v707 = vsub.f32 %v332, %v651
    %v708 = vsub.f32 %v335, %v652
    %v709 = vsub.f32 %v338, %v653
    %v710 = vsub.f32 %v341, %v654
    %v711 = vsub.f32 %v344, %v655
    %v712 = vsub.f32 %v347, %v656
    %v713 = vsub.f32 %v350, %v657
    %v714 = vsub.f32 %v353, %v658
    %v715 = vsub.f32 %v356, %v659
    %v716 = vsub.f32 %v359, %v660
    %v717 = vsub.f32 %v362, %v661
    %v718 = vsub.f32 %v365, %v662
    %v719 = vsub.f32 %v368, %v663
    %v720 = vsub.f32 %v371, %v664
    %v721 = vsub.f32 %v374, %v665
    %v722 = vsub.f32 %v377, %v666
    %v723 = vsub.f32 %v380, %v667
    %v724 = vsub.f32 %v383, %v668
    %v725 = vsub.f32 %v386, %v669
    %v726 = vsub.f32 %v389, %v670
    %v727 = vsub.f32 %v392, %v671
    %v728 = vsub.f32 %v395, %v672
    %v729 = vsub.f32 %v398, %v673
    %v730 = vsub.f32 %v401, %v674
    %v731 = vsub.f32 %v404, %v675
    %v732 = vsub.f32 %v407, %v676
    %v733 = vsub.f32 %v410, %v677
    %v734 = vsub.f32 %v413, %v678
    %v735 = vsub.f32 %v416, %v679
    %v736 = vsub.f32 %v419, %v680
    %v737 = vsub.f32 %v422, %v681
    %v738 = vsub.f32 %v425, %v682
    %v739 = vsub.f32 %v428, %v683
    %v740 = vsub.f32 %v431, %v684
    %v741 = vsub.f32 %v434, %v685
    %v742 = vsub.f32 %v437, %v686
    %v743 = vsub.f32 %v440, %v687
    %v744 = vsub.f32 %v443, %v688
    %v745 = vsub.f32 %v446, %v689
    %v746 = vsub.f32 %v449, %v690
    %v747 = vsub.f32 %v452, %v691
    %v748 = vsub.f32 %v455, %v692
    %v749 = vsub.f32 %v458, %v693
    %v750 = vsub.f32 %v461, %v694
    %v751 = vmul.f32 %v695, %v695
    %v752 = vmul.f32 %v696, %v696
    %v753 = vmul.f32 %v697, %v697
    %v754 = vmul.f32 %v698, %v698
    %v755 = vmul.f32 %v699, %v699
    %v756 = vmul.f32 %v700, %v700
    %v757 = vmul.f32 %v701, %v701
    %v758 = vmul.f32 %v702, %v702
    %v759 = vmul.f32 %v703, %v703
    %v760 = vmul.f32 %v704, %v704
    %v761 = vmul.f32 %v705, %v705
    %v762 = vmul.f32 %v706, %v706
    %v763 = vmul.f32 %v707, %v707
    %v764 = vmul.f32 %v708, %v708
    %v765 = vmul.f32 %v709, %v709
    %v766 = vmul.f32 %v710, %v710
    %v767 = vmul.f32 %v711, %v711
    %v768 = vmul.f32 %v712, %v712
    %v769 = vmul.f32 %v713, %v713
    %v770 = vmul.f32 %v714, %v714
    %v771 = vmul.f32 %v715, %v715
    %v772 = vmul.f32 %v716, %v716
    %v773 = vmul.f32 %v717, %v717
    %v774 = vmul.f32 %v718, %v718
    %v775 = vmul.f32 %v719, %v719
    %v776 = vmul.f32 %v720, %v720
    %v777 = vmul.f32 %v721, %v721
    %v778 = vmul.f32 %v722, %v722
    %v779 = vmul.f32 %v723, %v723
    %v780 = vmul.f32 %v724, %v724
    %v781 = vmul.f32 %v725, %v725
    %v782 = vmul.f32 %v726, %v726
    %v783 = vmul.f32 %v727, %v727
    %v784 = vmul.f32 %v728, %v728
    %v785 = vmul.f32 %v729, %v729
    %v786 = vmul.f32 %v730, %v730
    %v787 = vmul.f32 %v731, %v731
    %v788 = vmul.f32 %v732, %v732
    %v789 = vmul.f32 %v733, %v733
    %v790 = vmul.f32 %v734, %v734
    %v791 = vmul.f32 %v735, %v735
    %v792 = vmul.f32 %v736, %v736
    %v793 = vmul.f32 %v737, %v737
    %v794 = vmul.f32 %v738, %v738
    %v795 = vmul.f32 %v739, %v739
    %v796 = vmul.f32 %v740, %v740
    %v797 = vmul.f32 %v741, %v741
    %v798 = vmul.f32 %v742, %v742
    %v799 = vmul.f32 %v743, %v743
    %v800 = vmul.f32 %v744, %v744
    %v801 = vmul.f32 %v745, %v745
    %v802 = vmul.f32 %v746, %v746
    %v803 = vmul.f32 %v747, %v747
    %v804 = vmul.f32 %v748, %v748
    %v805 = vmul.f32 %v749, %v749
    %v806 = vmul.f32 %v750, %v750
    %v807 = vsel %vm463, %v751, 0.0
    %808 = vadd.xlane.f32.xlu0 %v807
    %v809 = vpop.xlane.xlu0 %808
    %v810 = vsel %vm463, %v752, 0.0
    %811 = vadd.xlane.f32.xlu0 %v810
    %v812 = vpop.xlane.xlu0 %811
    %v813 = vsel %vm463, %v753, 0.0
    %814 = vadd.xlane.f32.xlu0 %v813
    %v815 = vpop.xlane.xlu0 %814
    %v816 = vsel %vm463, %v754, 0.0
    %817 = vadd.xlane.f32.xlu0 %v816
    %v818 = vpop.xlane.xlu0 %817
    %v819 = vsel %vm463, %v755, 0.0
    %820 = vadd.xlane.f32.xlu0 %v819
    %v821 = vpop.xlane.xlu0 %820
    %v822 = vsel %vm463, %v756, 0.0
    %823 = vadd.xlane.f32.xlu0 %v822
    %v824 = vpop.xlane.xlu0 %823
    %v825 = vsel %vm463, %v757, 0.0
    %826 = vadd.xlane.f32.xlu0 %v825
    %v827 = vpop.xlane.xlu0 %826
    %v828 = vsel %vm463, %v758, 0.0
    %829 = vadd.xlane.f32.xlu0 %v828
    %v830 = vpop.xlane.xlu0 %829
    %v831 = vsel %vm463, %v759, 0.0
    %832 = vadd.xlane.f32.xlu0 %v831
    %v833 = vpop.xlane.xlu0 %832
    %v834 = vsel %vm463, %v760, 0.0
    %835 = vadd.xlane.f32.xlu0 %v834
    %v836 = vpop.xlane.xlu0 %835
    %v837 = vsel %vm463, %v761, 0.0
    %838 = vadd.xlane.f32.xlu0 %v837
    %v839 = vpop.xlane.xlu0 %838
    %v840 = vsel %vm463, %v762, 0.0
    %841 = vadd.xlane.f32.xlu0 %v840
    %v842 = vpop.xlane.xlu0 %841
    %v843 = vsel %vm463, %v763, 0.0
    %844 = vadd.xlane.f32.xlu0 %v843
    %v845 = vpop.xlane.xlu0 %844
    %v846 = vsel %vm463, %v764, 0.0
    %847 = vadd.xlane.f32.xlu0 %v846
    %v848 = vpop.xlane.xlu0 %847
    %v849 = vsel %vm463, %v765, 0.0
    %850 = vadd.xlane.f32.xlu0 %v849
    %v851 = vpop.xlane.xlu0 %850
    %v852 = vsel %vm463, %v766, 0.0
    %853 = vadd.xlane.f32.xlu0 %v852
    %v854 = vpop.xlane.xlu0 %853
    %v855 = vsel %vm463, %v767, 0.0
    %856 = vadd.xlane.f32.xlu0 %v855
    %v857 = vpop.xlane.xlu0 %856
    %v858 = vsel %vm463, %v768, 0.0
    %859 = vadd.xlane.f32.xlu0 %v858
    %v860 = vpop.xlane.xlu0 %859
    %v861 = vsel %vm463, %v769, 0.0
    %862 = vadd.xlane.f32.xlu0 %v861
    %v863 = vpop.xlane.xlu0 %862
    %v864 = vsel %vm463, %v770, 0.0
    %865 = vadd.xlane.f32.xlu0 %v864
    %v866 = vpop.xlane.xlu0 %865
    %v867 = vsel %vm463, %v771, 0.0
    %868 = vadd.xlane.f32.xlu0 %v867
    %v869 = vpop.xlane.xlu0 %868
    %v870 = vsel %vm463, %v772, 0.0
    %871 = vadd.xlane.f32.xlu0 %v870
    %v872 = vpop.xlane.xlu0 %871
    %v873 = vsel %vm463, %v773, 0.0
    %874 = vadd.xlane.f32.xlu0 %v873
    %v875 = vpop.xlane.xlu0 %874
    %v876 = vsel %vm463, %v774, 0.0
    %877 = vadd.xlane.f32.xlu0 %v876
    %v878 = vpop.xlane.xlu0 %877
    %v879 = vsel %vm463, %v775, 0.0
    %880 = vadd.xlane.f32.xlu0 %v879
    %v881 = vpop.xlane.xlu0 %880
    %v882 = vsel %vm463, %v776, 0.0
    %883 = vadd.xlane.f32.xlu0 %v882
    %v884 = vpop.xlane.xlu0 %883
    %v885 = vsel %vm463, %v777, 0.0
    %886 = vadd.xlane.f32.xlu0 %v885
    %v887 = vpop.xlane.xlu0 %886
    %v888 = vsel %vm463, %v778, 0.0
    %889 = vadd.xlane.f32.xlu0 %v888
    %v890 = vpop.xlane.xlu0 %889
    %v891 = vsel %vm463, %v779, 0.0
    %892 = vadd.xlane.f32.xlu0 %v891
    %v893 = vpop.xlane.xlu0 %892
    %v894 = vsel %vm463, %v780, 0.0
    %895 = vadd.xlane.f32.xlu0 %v894
    %v896 = vpop.xlane.xlu0 %895
    %v897 = vsel %vm463, %v781, 0.0
    %898 = vadd.xlane.f32.xlu0 %v897
    %v899 = vpop.xlane.xlu0 %898
    %v900 = vsel %vm463, %v782, 0.0
    %901 = vadd.xlane.f32.xlu0 %v900
    %v902 = vpop.xlane.xlu0 %901
    %v903 = vsel %vm463, %v783, 0.0
    %904 = vadd.xlane.f32.xlu0 %v903
    %v905 = vpop.xlane.xlu0 %904
    %v906 = vsel %vm463, %v784, 0.0
    %907 = vadd.xlane.f32.xlu0 %v906
    %v908 = vpop.xlane.xlu0 %907
    %v909 = vsel %vm463, %v785, 0.0
    %910 = vadd.xlane.f32.xlu0 %v909
    %v911 = vpop.xlane.xlu0 %910
    %v912 = vsel %vm463, %v786, 0.0
    %913 = vadd.xlane.f32.xlu0 %v912
    %v914 = vpop.xlane.xlu0 %913
    %v915 = vsel %vm463, %v787, 0.0
    %916 = vadd.xlane.f32.xlu0 %v915
    %v917 = vpop.xlane.xlu0 %916
    %v918 = vsel %vm463, %v788, 0.0
    %919 = vadd.xlane.f32.xlu0 %v918
    %v920 = vpop.xlane.xlu0 %919
    %v921 = vsel %vm463, %v789, 0.0
    %922 = vadd.xlane.f32.xlu0 %v921
    %v923 = vpop.xlane.xlu0 %922
    %v924 = vsel %vm463, %v790, 0.0
    %925 = vadd.xlane.f32.xlu0 %v924
    %v926 = vpop.xlane.xlu0 %925
    %v927 = vsel %vm463, %v791, 0.0
    %928 = vadd.xlane.f32.xlu0 %v927
    %v929 = vpop.xlane.xlu0 %928
    %v930 = vsel %vm463, %v792, 0.0
    %931 = vadd.xlane.f32.xlu0 %v930
    %v932 = vpop.xlane.xlu0 %931
    %v933 = vsel %vm463, %v793, 0.0
    %934 = vadd.xlane.f32.xlu0 %v933
    %v935 = vpop.xlane.xlu0 %934
    %v936 = vsel %vm463, %v794, 0.0
    %937 = vadd.xlane.f32.xlu0 %v936
    %v938 = vpop.xlane.xlu0 %937
    %v939 = vsel %vm463, %v795, 0.0
    %940 = vadd.xlane.f32.xlu0 %v939
    %v941 = vpop.xlane.xlu0 %940
    %v942 = vsel %vm463, %v796, 0.0
    %943 = vadd.xlane.f32.xlu0 %v942
    %v944 = vpop.xlane.xlu0 %943
    %v945 = vsel %vm463, %v797, 0.0
    %946 = vadd.xlane.f32.xlu0 %v945
    %v947 = vpop.xlane.xlu0 %946
    %v948 = vsel %vm463, %v798, 0.0
    %949 = vadd.xlane.f32.xlu0 %v948
    %v950 = vpop.xlane.xlu0 %949
    %v951 = vsel %vm463, %v799, 0.0
    %952 = vadd.xlane.f32.xlu0 %v951
    %v953 = vpop.xlane.xlu0 %952
    %v954 = vsel %vm463, %v800, 0.0
    %955 = vadd.xlane.f32.xlu0 %v954
    %v956 = vpop.xlane.xlu0 %955
    %v957 = vsel %vm463, %v801, 0.0
    %958 = vadd.xlane.f32.xlu0 %v957
    %v959 = vpop.xlane.xlu0 %958
    %v960 = vsel %vm463, %v802, 0.0
    %961 = vadd.xlane.f32.xlu0 %v960
    %v962 = vpop.xlane.xlu0 %961
    %v963 = vsel %vm463, %v803, 0.0
    %964 = vadd.xlane.f32.xlu0 %v963
    %v965 = vpop.xlane.xlu0 %964
    %v966 = vsel %vm463, %v804, 0.0
    %967 = vadd.xlane.f32.xlu0 %v966
    %v968 = vpop.xlane.xlu0 %967
    %v969 = vsel %vm463, %v805, 0.0
    %970 = vadd.xlane.f32.xlu0 %v969
    %v971 = vpop.xlane.xlu0 %970
    %v972 = vsel %vm463, %v806, 0.0
    %973 = vadd.xlane.f32.xlu0 %v972
    %v974 = vpop.xlane.xlu0 %973
    %v975 = vmul.f32 %v809, %v638
    %v976 = vmul.f32 %v812, %v638
    %v977 = vmul.f32 %v815, %v638
    %v978 = vmul.f32 %v818, %v638
    %v979 = vmul.f32 %v821, %v638
    %v980 = vmul.f32 %v824, %v638
    %v981 = vmul.f32 %v827, %v638
    %v982 = vmul.f32 %v830, %v638
    %v983 = vmul.f32 %v833, %v638
    %v984 = vmul.f32 %v836, %v638
    %v985 = vmul.f32 %v839, %v638
    %v986 = vmul.f32 %v842, %v638
    %v987 = vmul.f32 %v845, %v638
    %v988 = vmul.f32 %v848, %v638
    %v989 = vmul.f32 %v851, %v638
    %v990 = vmul.f32 %v854, %v638
    %v991 = vmul.f32 %v857, %v638
    %v992 = vmul.f32 %v860, %v638
    %v993 = vmul.f32 %v863, %v638
    %v994 = vmul.f32 %v866, %v638
    %v995 = vmul.f32 %v869, %v638
    %v996 = vmul.f32 %v872, %v638
    %v997 = vmul.f32 %v875, %v638
    %v998 = vmul.f32 %v878, %v638
    %v999 = vmul.f32 %v881, %v638
    %v1000 = vmul.f32 %v884, %v638
    %v1001 = vmul.f32 %v887, %v638
    %v1002 = vmul.f32 %v890, %v638
    %v1003 = vmul.f32 %v893, %v638
    %v1004 = vmul.f32 %v896, %v638
    %v1005 = vmul.f32 %v899, %v638
    %v1006 = vmul.f32 %v902, %v638
    %v1007 = vmul.f32 %v905, %v638
    %v1008 = vmul.f32 %v908, %v638
    %v1009 = vmul.f32 %v911, %v638
    %v1010 = vmul.f32 %v914, %v638
    %v1011 = vmul.f32 %v917, %v638
    %v1012 = vmul.f32 %v920, %v638
    %v1013 = vmul.f32 %v923, %v638
    %v1014 = vmul.f32 %v926, %v638
    %v1015 = vmul.f32 %v929, %v638
    %v1016 = vmul.f32 %v932, %v638
    %v1017 = vmul.f32 %v935, %v638
    %v1018 = vmul.f32 %v938, %v638
    %v1019 = vmul.f32 %v941, %v638
    %v1020 = vmul.f32 %v944, %v638
    %v1021 = vmul.f32 %v947, %v638
    %v1022 = vmul.f32 %v950, %v638
    %v1023 = vmul.f32 %v953, %v638
    %v1024 = vmul.f32 %v956, %v638
    %v1025 = vmul.f32 %v959, %v638
    %v1026 = vmul.f32 %v962, %v638
    %v1027 = vmul.f32 %v965, %v638
    %v1028 = vmul.f32 %v968, %v638
    %v1029 = vmul.f32 %v971, %v638
    %v1030 = vmul.f32 %v974, %v638
    %v1031 = vadd.f32 %v975, 1e-05
    %v1032 = vadd.f32 %v976, 1e-05
    %v1033 = vadd.f32 %v977, 1e-05
    %v1034 = vadd.f32 %v978, 1e-05
    %v1035 = vadd.f32 %v979, 1e-05
    %v1036 = vadd.f32 %v980, 1e-05
    %v1037 = vadd.f32 %v981, 1e-05
    %v1038 = vadd.f32 %v982, 1e-05
    %v1039 = vadd.f32 %v983, 1e-05
    %v1040 = vadd.f32 %v984, 1e-05
    %v1041 = vadd.f32 %v985, 1e-05
    %v1042 = vadd.f32 %v986, 1e-05
    %v1043 = vadd.f32 %v987, 1e-05
    %v1044 = vadd.f32 %v988, 1e-05
    %v1045 = vadd.f32 %v989, 1e-05
    %v1046 = vadd.f32 %v990, 1e-05
    %v1047 = vadd.f32 %v991, 1e-05
    %v1048 = vadd.f32 %v992, 1e-05
    %v1049 = vadd.f32 %v993, 1e-05
    %v1050 = vadd.f32 %v994, 1e-05
    %v1051 = vadd.f32 %v995, 1e-05
    %v1052 = vadd.f32 %v996, 1e-05
    %v1053 = vadd.f32 %v997, 1e-05
    %v1054 = vadd.f32 %v998, 1e-05
    %v1055 = vadd.f32 %v999, 1e-05
    %v1056 = vadd.f32 %v1000, 1e-05
    %v1057 = vadd.f32 %v1001, 1e-05
    %v1058 = vadd.f32 %v1002, 1e-05
    %v1059 = vadd.f32 %v1003, 1e-05
    %v1060 = vadd.f32 %v1004, 1e-05
    %v1061 = vadd.f32 %v1005, 1e-05
    %v1062 = vadd.f32 %v1006, 1e-05
    %v1063 = vadd.f32 %v1007, 1e-05
    %v1064 = vadd.f32 %v1008, 1e-05
    %v1065 = vadd.f32 %v1009, 1e-05
    %v1066 = vadd.f32 %v1010, 1e-05
    %v1067 = vadd.f32 %v1011, 1e-05
    %v1068 = vadd.f32 %v1012, 1e-05
    %v1069 = vadd.f32 %v1013, 1e-05
    %v1070 = vadd.f32 %v1014, 1e-05
    %v1071 = vadd.f32 %v1015, 1e-05
    %v1072 = vadd.f32 %v1016, 1e-05
    %v1073 = vadd.f32 %v1017, 1e-05
    %v1074 = vadd.f32 %v1018, 1e-05
    %v1075 = vadd.f32 %v1019, 1e-05
    %v1076 = vadd.f32 %v1020, 1e-05
    %v1077 = vadd.f32 %v1021, 1e-05
    %v1078 = vadd.f32 %v1022, 1e-05
    %v1079 = vadd.f32 %v1023, 1e-05
    %v1080 = vadd.f32 %v1024, 1e-05
    %v1081 = vadd.f32 %v1025, 1e-05
    %v1082 = vadd.f32 %v1026, 1e-05
    %v1083 = vadd.f32 %v1027, 1e-05
    %v1084 = vadd.f32 %v1028, 1e-05
    %v1085 = vadd.f32 %v1029, 1e-05
    %v1086 = vadd.f32 %v1030, 1e-05
    %v1087 = vrsqrt.pop %v1031
    %v1088 = vmul.f32 %v1087, %v1031
    %v1089 = vmul.f32 %v1088, %v1087
    %v1090 = vmul.f32 0.5, %v1089
    %v1091 = vsub.f32 1.5, %v1090
    %v1092 = vmul.f32 %v1087, %v1091
    %vm1093 = vweird.f32 %v1031
    %vm1094 = vweird.f32 %v1087
    %vm1095 = vmor %vm1093, %vm1094
    %v1096 = vsel %vm1095, %v1087, %v1092
    %v1097 = vrsqrt.pop %v1032
    %v1098 = vmul.f32 %v1097, %v1032
    %v1099 = vmul.f32 %v1098, %v1097
    %v1100 = vmul.f32 0.5, %v1099
    %v1101 = vsub.f32 1.5, %v1100
    %v1102 = vmul.f32 %v1097, %v1101
    %vm1103 = vweird.f32 %v1032
    %vm1104 = vweird.f32 %v1097
    %vm1105 = vmor %vm1103, %vm1104
    %v1106 = vsel %vm1105, %v1097, %v1102
    %v1107 = vrsqrt.pop %v1033
    %v1108 = vmul.f32 %v1107, %v1033
    %v1109 = vmul.f32 %v1108, %v1107
    %v1110 = vmul.f32 0.5, %v1109
    %v1111 = vsub.f32 1.5, %v1110
    %v1112 = vmul.f32 %v1107, %v1111
    %vm1113 = vweird.f32 %v1033
    %vm1114 = vweird.f32 %v1107
    %vm1115 = vmor %vm1113, %vm1114
    %v1116 = vsel %vm1115, %v1107, %v1112
    %v1117 = vrsqrt.pop %v1034
    %v1118 = vmul.f32 %v1117, %v1034
    %v1119 = vmul.f32 %v1118, %v1117
    %v1120 = vmul.f32 0.5, %v1119
    %v1121 = vsub.f32 1.5, %v1120
    %v1122 = vmul.f32 %v1117, %v1121
    %vm1123 = vweird.f32 %v1034
    %vm1124 = vweird.f32 %v1117
    %vm1125 = vmor %vm1123, %vm1124
    %v1126 = vsel %vm1125, %v1117, %v1122
    %v1127 = vrsqrt.pop %v1035
    %v1128 = vmul.f32 %v1127, %v1035
    %v1129 = vmul.f32 %v1128, %v1127
    %v1130 = vmul.f32 0.5, %v1129
    %v1131 = vsub.f32 1.5, %v1130
    %v1132 = vmul.f32 %v1127, %v1131
    %vm1133 = vweird.f32 %v1035
    %vm1134 = vweird.f32 %v1127
    %vm1135 = vmor %vm1133, %vm1134
    %v1136 = vsel %vm1135, %v1127, %v1132
    %v1137 = vrsqrt.pop %v1036
    %v1138 = vmul.f32 %v1137, %v1036
    %v1139 = vmul.f32 %v1138, %v1137
    %v1140 = vmul.f32 0.5, %v1139
    %v1141 = vsub.f32 1.5, %v1140
    %v1142 = vmul.f32 %v1137, %v1141
    %vm1143 = vweird.f32 %v1036
    %vm1144 = vweird.f32 %v1137
    %vm1145 = vmor %vm1143, %vm1144
    %v1146 = vsel %vm1145, %v1137, %v1142
    %v1147 = vrsqrt.pop %v1037
    %v1148 = vmul.f32 %v1147, %v1037
    %v1149 = vmul.f32 %v1148, %v1147
    %v1150 = vmul.f32 0.5, %v1149
    %v1151 = vsub.f32 1.5, %v1150
    %v1152 = vmul.f32 %v1147, %v1151
    %vm1153 = vweird.f32 %v1037
    %vm1154 = vweird.f32 %v1147
    %vm1155 = vmor %vm1153, %vm1154
    %v1156 = vsel %vm1155, %v1147, %v1152
    %v1157 = vrsqrt.pop %v1038
    %v1158 = vmul.f32 %v1157, %v1038
    %v1159 = vmul.f32 %v1158, %v1157
    %v1160 = vmul.f32 0.5, %v1159
    %v1161 = vsub.f32 1.5, %v1160
    %v1162 = vmul.f32 %v1157, %v1161
    %vm1163 = vweird.f32 %v1038
    %vm1164 = vweird.f32 %v1157
    %vm1165 = vmor %vm1163, %vm1164
    %v1166 = vsel %vm1165, %v1157, %v1162
    %v1167 = vrsqrt.pop %v1039
    %v1168 = vmul.f32 %v1167, %v1039
    %v1169 = vmul.f32 %v1168, %v1167
    %v1170 = vmul.f32 0.5, %v1169
    %v1171 = vsub.f32 1.5, %v1170
    %v1172 = vmul.f32 %v1167, %v1171
    %vm1173 = vweird.f32 %v1039
    %vm1174 = vweird.f32 %v1167
    %vm1175 = vmor %vm1173, %vm1174
    %v1176 = vsel %vm1175, %v1167, %v1172
    %v1177 = vrsqrt.pop %v1040
    %v1178 = vmul.f32 %v1177, %v1040
    %v1179 = vmul.f32 %v1178, %v1177
    %v1180 = vmul.f32 0.5, %v1179
    %v1181 = vsub.f32 1.5, %v1180
    %v1182 = vmul.f32 %v1177, %v1181
    %vm1183 = vweird.f32 %v1040
    %vm1184 = vweird.f32 %v1177
    %vm1185 = vmor %vm1183, %vm1184
    %v1186 = vsel %vm1185, %v1177, %v1182
    %v1187 = vrsqrt.pop %v1041
    %v1188 = vmul.f32 %v1187, %v1041
    %v1189 = vmul.f32 %v1188, %v1187
    %v1190 = vmul.f32 0.5, %v1189
    %v1191 = vsub.f32 1.5, %v1190
    %v1192 = vmul.f32 %v1187, %v1191
    %vm1193 = vweird.f32 %v1041
    %vm1194 = vweird.f32 %v1187
    %vm1195 = vmor %vm1193, %vm1194
    %v1196 = vsel %vm1195, %v1187, %v1192
    %v1197 = vrsqrt.pop %v1042
    %v1198 = vmul.f32 %v1197, %v1042
    %v1199 = vmul.f32 %v1198, %v1197
    %v1200 = vmul.f32 0.5, %v1199
    %v1201 = vsub.f32 1.5, %v1200
    %v1202 = vmul.f32 %v1197, %v1201
    %vm1203 = vweird.f32 %v1042
    %vm1204 = vweird.f32 %v1197
    %vm1205 = vmor %vm1203, %vm1204
    %v1206 = vsel %vm1205, %v1197, %v1202
    %v1207 = vrsqrt.pop %v1043
    %v1208 = vmul.f32 %v1207, %v1043
    %v1209 = vmul.f32 %v1208, %v1207
    %v1210 = vmul.f32 0.5, %v1209
    %v1211 = vsub.f32 1.5, %v1210
    %v1212 = vmul.f32 %v1207, %v1211
    %vm1213 = vweird.f32 %v1043
    %vm1214 = vweird.f32 %v1207
    %vm1215 = vmor %vm1213, %vm1214
    %v1216 = vsel %vm1215, %v1207, %v1212
    %v1217 = vrsqrt.pop %v1044
    %v1218 = vmul.f32 %v1217, %v1044
    %v1219 = vmul.f32 %v1218, %v1217
    %v1220 = vmul.f32 0.5, %v1219
    %v1221 = vsub.f32 1.5, %v1220
    %v1222 = vmul.f32 %v1217, %v1221
    %vm1223 = vweird.f32 %v1044
    %vm1224 = vweird.f32 %v1217
    %vm1225 = vmor %vm1223, %vm1224
    %v1226 = vsel %vm1225, %v1217, %v1222
    %v1227 = vrsqrt.pop %v1045
    %v1228 = vmul.f32 %v1227, %v1045
    %v1229 = vmul.f32 %v1228, %v1227
    %v1230 = vmul.f32 0.5, %v1229
    %v1231 = vsub.f32 1.5, %v1230
    %v1232 = vmul.f32 %v1227, %v1231
    %vm1233 = vweird.f32 %v1045
    %vm1234 = vweird.f32 %v1227
    %vm1235 = vmor %vm1233, %vm1234
    %v1236 = vsel %vm1235, %v1227, %v1232
    %v1237 = vrsqrt.pop %v1046
    %v1238 = vmul.f32 %v1237, %v1046
    %v1239 = vmul.f32 %v1238, %v1237
    %v1240 = vmul.f32 0.5, %v1239
    %v1241 = vsub.f32 1.5, %v1240
    %v1242 = vmul.f32 %v1237, %v1241
    %vm1243 = vweird.f32 %v1046
    %vm1244 = vweird.f32 %v1237
    %vm1245 = vmor %vm1243, %vm1244
    %v1246 = vsel %vm1245, %v1237, %v1242
    %v1247 = vrsqrt.pop %v1047
    %v1248 = vmul.f32 %v1247, %v1047
    %v1249 = vmul.f32 %v1248, %v1247
    %v1250 = vmul.f32 0.5, %v1249
    %v1251 = vsub.f32 1.5, %v1250
    %v1252 = vmul.f32 %v1247, %v1251
    %vm1253 = vweird.f32 %v1047
    %vm1254 = vweird.f32 %v1247
    %vm1255 = vmor %vm1253, %vm1254
    %v1256 = vsel %vm1255, %v1247, %v1252
    %v1257 = vrsqrt.pop %v1048
    %v1258 = vmul.f32 %v1257, %v1048
    %v1259 = vmul.f32 %v1258, %v1257
    %v1260 = vmul.f32 0.5, %v1259
    %v1261 = vsub.f32 1.5, %v1260
    %v1262 = vmul.f32 %v1257, %v1261
    %vm1263 = vweird.f32 %v1048
    %vm1264 = vweird.f32 %v1257
    %vm1265 = vmor %vm1263, %vm1264
    %v1266 = vsel %vm1265, %v1257, %v1262
    %v1267 = vrsqrt.pop %v1049
    %v1268 = vmul.f32 %v1267, %v1049
    %v1269 = vmul.f32 %v1268, %v1267
    %v1270 = vmul.f32 0.5, %v1269
    %v1271 = vsub.f32 1.5, %v1270
    %v1272 = vmul.f32 %v1267, %v1271
    %vm1273 = vweird.f32 %v1049
    %vm1274 = vweird.f32 %v1267
    %vm1275 = vmor %vm1273, %vm1274
    %v1276 = vsel %vm1275, %v1267, %v1272
    %v1277 = vrsqrt.pop %v1050
    %v1278 = vmul.f32 %v1277, %v1050
    %v1279 = vmul.f32 %v1278, %v1277
    %v1280 = vmul.f32 0.5, %v1279
    %v1281 = vsub.f32 1.5, %v1280
    %v1282 = vmul.f32 %v1277, %v1281
    %vm1283 = vweird.f32 %v1050
    %vm1284 = vweird.f32 %v1277
    %vm1285 = vmor %vm1283, %vm1284
    %v1286 = vsel %vm1285, %v1277, %v1282
    %v1287 = vrsqrt.pop %v1051
    %v1288 = vmul.f32 %v1287, %v1051
    %v1289 = vmul.f32 %v1288, %v1287
    %v1290 = vmul.f32 0.5, %v1289
    %v1291 = vsub.f32 1.5, %v1290
    %v1292 = vmul.f32 %v1287, %v1291
    %vm1293 = vweird.f32 %v1051
    %vm1294 = vweird.f32 %v1287
    %vm1295 = vmor %vm1293, %vm1294
    %v1296 = vsel %vm1295, %v1287, %v1292
    %v1297 = vrsqrt.pop %v1052
    %v1298 = vmul.f32 %v1297, %v1052
    %v1299 = vmul.f32 %v1298, %v1297
    %v1300 = vmul.f32 0.5, %v1299
    %v1301 = vsub.f32 1.5, %v1300
    %v1302 = vmul.f32 %v1297, %v1301
    %vm1303 = vweird.f32 %v1052
    %vm1304 = vweird.f32 %v1297
    %vm1305 = vmor %vm1303, %vm1304
    %v1306 = vsel %vm1305, %v1297, %v1302
    %v1307 = vrsqrt.pop %v1053
    %v1308 = vmul.f32 %v1307, %v1053
    %v1309 = vmul.f32 %v1308, %v1307
    %v1310 = vmul.f32 0.5, %v1309
    %v1311 = vsub.f32 1.5, %v1310
    %v1312 = vmul.f32 %v1307, %v1311
    %vm1313 = vweird.f32 %v1053
    %vm1314 = vweird.f32 %v1307
    %vm1315 = vmor %vm1313, %vm1314
    %v1316 = vsel %vm1315, %v1307, %v1312
    %v1317 = vrsqrt.pop %v1054
    %v1318 = vmul.f32 %v1317, %v1054
    %v1319 = vmul.f32 %v1318, %v1317
    %v1320 = vmul.f32 0.5, %v1319
    %v1321 = vsub.f32 1.5, %v1320
    %v1322 = vmul.f32 %v1317, %v1321
    %vm1323 = vweird.f32 %v1054
    %vm1324 = vweird.f32 %v1317
    %vm1325 = vmor %vm1323, %vm1324
    %v1326 = vsel %vm1325, %v1317, %v1322
    %v1327 = vrsqrt.pop %v1055
    %v1328 = vmul.f32 %v1327, %v1055
    %v1329 = vmul.f32 %v1328, %v1327
    %v1330 = vmul.f32 0.5, %v1329
    %v1331 = vsub.f32 1.5, %v1330
    %v1332 = vmul.f32 %v1327, %v1331
    %vm1333 = vweird.f32 %v1055
    %vm1334 = vweird.f32 %v1327
    %vm1335 = vmor %vm1333, %vm1334
    %v1336 = vsel %vm1335, %v1327, %v1332
    %v1337 = vrsqrt.pop %v1056
    %v1338 = vmul.f32 %v1337, %v1056
    %v1339 = vmul.f32 %v1338, %v1337
    %v1340 = vmul.f32 0.5, %v1339
    %v1341 = vsub.f32 1.5, %v1340
    %v1342 = vmul.f32 %v1337, %v1341
    %vm1343 = vweird.f32 %v1056
    %vm1344 = vweird.f32 %v1337
    %vm1345 = vmor %vm1343, %vm1344
    %v1346 = vsel %vm1345, %v1337, %v1342
    %v1347 = vrsqrt.pop %v1057
    %v1348 = vmul.f32 %v1347, %v1057
    %v1349 = vmul.f32 %v1348, %v1347
    %v1350 = vmul.f32 0.5, %v1349
    %v1351 = vsub.f32 1.5, %v1350
    %v1352 = vmul.f32 %v1347, %v1351
    %vm1353 = vweird.f32 %v1057
    %vm1354 = vweird.f32 %v1347
    %vm1355 = vmor %vm1353, %vm1354
    %v1356 = vsel %vm1355, %v1347, %v1352
    %v1357 = vrsqrt.pop %v1058
    %v1358 = vmul.f32 %v1357, %v1058
    %v1359 = vmul.f32 %v1358, %v1357
    %v1360 = vmul.f32 0.5, %v1359
    %v1361 = vsub.f32 1.5, %v1360
    %v1362 = vmul.f32 %v1357, %v1361
    %vm1363 = vweird.f32 %v1058
    %vm1364 = vweird.f32 %v1357
    %vm1365 = vmor %vm1363, %vm1364
    %v1366 = vsel %vm1365, %v1357, %v1362
    %v1367 = vrsqrt.pop %v1059
    %v1368 = vmul.f32 %v1367, %v1059
    %v1369 = vmul.f32 %v1368, %v1367
    %v1370 = vmul.f32 0.5, %v1369
    %v1371 = vsub.f32 1.5, %v1370
    %v1372 = vmul.f32 %v1367, %v1371
    %vm1373 = vweird.f32 %v1059
    %vm1374 = vweird.f32 %v1367
    %vm1375 = vmor %vm1373, %vm1374
    %v1376 = vsel %vm1375, %v1367, %v1372
    %v1377 = vrsqrt.pop %v1060
    %v1378 = vmul.f32 %v1377, %v1060
    %v1379 = vmul.f32 %v1378, %v1377
    %v1380 = vmul.f32 0.5, %v1379
    %v1381 = vsub.f32 1.5, %v1380
    %v1382 = vmul.f32 %v1377, %v1381
    %vm1383 = vweird.f32 %v1060
    %vm1384 = vweird.f32 %v1377
    %vm1385 = vmor %vm1383, %vm1384
    %v1386 = vsel %vm1385, %v1377, %v1382
    %v1387 = vrsqrt.pop %v1061
    %v1388 = vmul.f32 %v1387, %v1061
    %v1389 = vmul.f32 %v1388, %v1387
    %v1390 = vmul.f32 0.5, %v1389
    %v1391 = vsub.f32 1.5, %v1390
    %v1392 = vmul.f32 %v1387, %v1391
    %vm1393 = vweird.f32 %v1061
    %vm1394 = vweird.f32 %v1387
    %vm1395 = vmor %vm1393, %vm1394
    %v1396 = vsel %vm1395, %v1387, %v1392
    %v1397 = vrsqrt.pop %v1062
    %v1398 = vmul.f32 %v1397, %v1062
    %v1399 = vmul.f32 %v1398, %v1397
    %v1400 = vmul.f32 0.5, %v1399
    %v1401 = vsub.f32 1.5, %v1400
    %v1402 = vmul.f32 %v1397, %v1401
    %vm1403 = vweird.f32 %v1062
    %vm1404 = vweird.f32 %v1397
    %vm1405 = vmor %vm1403, %vm1404
    %v1406 = vsel %vm1405, %v1397, %v1402
    %v1407 = vrsqrt.pop %v1063
    %v1408 = vmul.f32 %v1407, %v1063
    %v1409 = vmul.f32 %v1408, %v1407
    %v1410 = vmul.f32 0.5, %v1409
    %v1411 = vsub.f32 1.5, %v1410
    %v1412 = vmul.f32 %v1407, %v1411
    %vm1413 = vweird.f32 %v1063
    %vm1414 = vweird.f32 %v1407
    %vm1415 = vmor %vm1413, %vm1414
    %v1416 = vsel %vm1415, %v1407, %v1412
    %v1417 = vrsqrt.pop %v1064
    %v1418 = vmul.f32 %v1417, %v1064
    %v1419 = vmul.f32 %v1418, %v1417
    %v1420 = vmul.f32 0.5, %v1419
    %v1421 = vsub.f32 1.5, %v1420
    %v1422 = vmul.f32 %v1417, %v1421
    %vm1423 = vweird.f32 %v1064
    %vm1424 = vweird.f32 %v1417
    %vm1425 = vmor %vm1423, %vm1424
    %v1426 = vsel %vm1425, %v1417, %v1422
    %v1427 = vrsqrt.pop %v1065
    %v1428 = vmul.f32 %v1427, %v1065
    %v1429 = vmul.f32 %v1428, %v1427
    %v1430 = vmul.f32 0.5, %v1429
    %v1431 = vsub.f32 1.5, %v1430
    %v1432 = vmul.f32 %v1427, %v1431
    %vm1433 = vweird.f32 %v1065
    %vm1434 = vweird.f32 %v1427
    %vm1435 = vmor %vm1433, %vm1434
    %v1436 = vsel %vm1435, %v1427, %v1432
    %v1437 = vrsqrt.pop %v1066
    %v1438 = vmul.f32 %v1437, %v1066
    %v1439 = vmul.f32 %v1438, %v1437
    %v1440 = vmul.f32 0.5, %v1439
    %v1441 = vsub.f32 1.5, %v1440
    %v1442 = vmul.f32 %v1437, %v1441
    %vm1443 = vweird.f32 %v1066
    %vm1444 = vweird.f32 %v1437
    %vm1445 = vmor %vm1443, %vm1444
    %v1446 = vsel %vm1445, %v1437, %v1442
    %v1447 = vrsqrt.pop %v1067
    %v1448 = vmul.f32 %v1447, %v1067
    %v1449 = vmul.f32 %v1448, %v1447
    %v1450 = vmul.f32 0.5, %v1449
    %v1451 = vsub.f32 1.5, %v1450
    %v1452 = vmul.f32 %v1447, %v1451
    %vm1453 = vweird.f32 %v1067
    %vm1454 = vweird.f32 %v1447
    %vm1455 = vmor %vm1453, %vm1454
    %v1456 = vsel %vm1455, %v1447, %v1452
    %v1457 = vrsqrt.pop %v1068
    %v1458 = vmul.f32 %v1457, %v1068
    %v1459 = vmul.f32 %v1458, %v1457
    %v1460 = vmul.f32 0.5, %v1459
    %v1461 = vsub.f32 1.5, %v1460
    %v1462 = vmul.f32 %v1457, %v1461
    %vm1463 = vweird.f32 %v1068
    %vm1464 = vweird.f32 %v1457
    %vm1465 = vmor %vm1463, %vm1464
    %v1466 = vsel %vm1465, %v1457, %v1462
    %v1467 = vrsqrt.pop %v1069
    %v1468 = vmul.f32 %v1467, %v1069
    %v1469 = vmul.f32 %v1468, %v1467
    %v1470 = vmul.f32 0.5, %v1469
    %v1471 = vsub.f32 1.5, %v1470
    %v1472 = vmul.f32 %v1467, %v1471
    %vm1473 = vweird.f32 %v1069
    %vm1474 = vweird.f32 %v1467
    %vm1475 = vmor %vm1473, %vm1474
    %v1476 = vsel %vm1475, %v1467, %v1472
    %v1477 = vrsqrt.pop %v1070
    %v1478 = vmul.f32 %v1477, %v1070
    %v1479 = vmul.f32 %v1478, %v1477
    %v1480 = vmul.f32 0.5, %v1479
    %v1481 = vsub.f32 1.5, %v1480
    %v1482 = vmul.f32 %v1477, %v1481
    %vm1483 = vweird.f32 %v1070
    %vm1484 = vweird.f32 %v1477
    %vm1485 = vmor %vm1483, %vm1484
    %v1486 = vsel %vm1485, %v1477, %v1482
    %v1487 = vrsqrt.pop %v1071
    %v1488 = vmul.f32 %v1487, %v1071
    %v1489 = vmul.f32 %v1488, %v1487
    %v1490 = vmul.f32 0.5, %v1489
    %v1491 = vsub.f32 1.5, %v1490
    %v1492 = vmul.f32 %v1487, %v1491
    %vm1493 = vweird.f32 %v1071
    %vm1494 = vweird.f32 %v1487
    %vm1495 = vmor %vm1493, %vm1494
    %v1496 = vsel %vm1495, %v1487, %v1492
    %v1497 = vrsqrt.pop %v1072
    %v1498 = vmul.f32 %v1497, %v1072
    %v1499 = vmul.f32 %v1498, %v1497
    %v1500 = vmul.f32 0.5, %v1499
    %v1501 = vsub.f32 1.5, %v1500
    %v1502 = vmul.f32 %v1497, %v1501
    %vm1503 = vweird.f32 %v1072
    %vm1504 = vweird.f32 %v1497
    %vm1505 = vmor %vm1503, %vm1504
    %v1506 = vsel %vm1505, %v1497, %v1502
    %v1507 = vrsqrt.pop %v1073
    %v1508 = vmul.f32 %v1507, %v1073
    %v1509 = vmul.f32 %v1508, %v1507
    %v1510 = vmul.f32 0.5, %v1509
    %v1511 = vsub.f32 1.5, %v1510
    %v1512 = vmul.f32 %v1507, %v1511
    %vm1513 = vweird.f32 %v1073
    %vm1514 = vweird.f32 %v1507
    %vm1515 = vmor %vm1513, %vm1514
    %v1516 = vsel %vm1515, %v1507, %v1512
    %v1517 = vrsqrt.pop %v1074
    %v1518 = vmul.f32 %v1517, %v1074
    %v1519 = vmul.f32 %v1518, %v1517
    %v1520 = vmul.f32 0.5, %v1519
    %v1521 = vsub.f32 1.5, %v1520
    %v1522 = vmul.f32 %v1517, %v1521
    %vm1523 = vweird.f32 %v1074
    %vm1524 = vweird.f32 %v1517
    %vm1525 = vmor %vm1523, %vm1524
    %v1526 = vsel %vm1525, %v1517, %v1522
    %v1527 = vrsqrt.pop %v1075
    %v1528 = vmul.f32 %v1527, %v1075
    %v1529 = vmul.f32 %v1528, %v1527
    %v1530 = vmul.f32 0.5, %v1529
    %v1531 = vsub.f32 1.5, %v1530
    %v1532 = vmul.f32 %v1527, %v1531
    %vm1533 = vweird.f32 %v1075
    %vm1534 = vweird.f32 %v1527
    %vm1535 = vmor %vm1533, %vm1534
    %v1536 = vsel %vm1535, %v1527, %v1532
    %v1537 = vrsqrt.pop %v1076
    %v1538 = vmul.f32 %v1537, %v1076
    %v1539 = vmul.f32 %v1538, %v1537
    %v1540 = vmul.f32 0.5, %v1539
    %v1541 = vsub.f32 1.5, %v1540
    %v1542 = vmul.f32 %v1537, %v1541
    %vm1543 = vweird.f32 %v1076
    %vm1544 = vweird.f32 %v1537
    %vm1545 = vmor %vm1543, %vm1544
    %v1546 = vsel %vm1545, %v1537, %v1542
    %v1547 = vrsqrt.pop %v1077
    %v1548 = vmul.f32 %v1547, %v1077
    %v1549 = vmul.f32 %v1548, %v1547
    %v1550 = vmul.f32 0.5, %v1549
    %v1551 = vsub.f32 1.5, %v1550
    %v1552 = vmul.f32 %v1547, %v1551
    %vm1553 = vweird.f32 %v1077
    %vm1554 = vweird.f32 %v1547
    %vm1555 = vmor %vm1553, %vm1554
    %v1556 = vsel %vm1555, %v1547, %v1552
    %v1557 = vrsqrt.pop %v1078
    %v1558 = vmul.f32 %v1557, %v1078
    %v1559 = vmul.f32 %v1558, %v1557
    %v1560 = vmul.f32 0.5, %v1559
    %v1561 = vsub.f32 1.5, %v1560
    %v1562 = vmul.f32 %v1557, %v1561
    %vm1563 = vweird.f32 %v1078
    %vm1564 = vweird.f32 %v1557
    %vm1565 = vmor %vm1563, %vm1564
    %v1566 = vsel %vm1565, %v1557, %v1562
    %v1567 = vrsqrt.pop %v1079
    %v1568 = vmul.f32 %v1567, %v1079
    %v1569 = vmul.f32 %v1568, %v1567
    %v1570 = vmul.f32 0.5, %v1569
    %v1571 = vsub.f32 1.5, %v1570
    %v1572 = vmul.f32 %v1567, %v1571
    %vm1573 = vweird.f32 %v1079
    %vm1574 = vweird.f32 %v1567
    %vm1575 = vmor %vm1573, %vm1574
    %v1576 = vsel %vm1575, %v1567, %v1572
    %v1577 = vrsqrt.pop %v1080
    %v1578 = vmul.f32 %v1577, %v1080
    %v1579 = vmul.f32 %v1578, %v1577
    %v1580 = vmul.f32 0.5, %v1579
    %v1581 = vsub.f32 1.5, %v1580
    %v1582 = vmul.f32 %v1577, %v1581
    %vm1583 = vweird.f32 %v1080
    %vm1584 = vweird.f32 %v1577
    %vm1585 = vmor %vm1583, %vm1584
    %v1586 = vsel %vm1585, %v1577, %v1582
    %v1587 = vrsqrt.pop %v1081
    %v1588 = vmul.f32 %v1587, %v1081
    %v1589 = vmul.f32 %v1588, %v1587
    %v1590 = vmul.f32 0.5, %v1589
    %v1591 = vsub.f32 1.5, %v1590
    %v1592 = vmul.f32 %v1587, %v1591
    %vm1593 = vweird.f32 %v1081
    %vm1594 = vweird.f32 %v1587
    %vm1595 = vmor %vm1593, %vm1594
    %v1596 = vsel %vm1595, %v1587, %v1592
    %v1597 = vrsqrt.pop %v1082
    %v1598 = vmul.f32 %v1597, %v1082
    %v1599 = vmul.f32 %v1598, %v1597
    %v1600 = vmul.f32 0.5, %v1599
    %v1601 = vsub.f32 1.5, %v1600
    %v1602 = vmul.f32 %v1597, %v1601
    %vm1603 = vweird.f32 %v1082
    %vm1604 = vweird.f32 %v1597
    %vm1605 = vmor %vm1603, %vm1604
    %v1606 = vsel %vm1605, %v1597, %v1602
    %v1607 = vrsqrt.pop %v1083
    %v1608 = vmul.f32 %v1607, %v1083
    %v1609 = vmul.f32 %v1608, %v1607
    %v1610 = vmul.f32 0.5, %v1609
    %v1611 = vsub.f32 1.5, %v1610
    %v1612 = vmul.f32 %v1607, %v1611
    %vm1613 = vweird.f32 %v1083
    %vm1614 = vweird.f32 %v1607
    %vm1615 = vmor %vm1613, %vm1614
    %v1616 = vsel %vm1615, %v1607, %v1612
    %v1617 = vrsqrt.pop %v1084
    %v1618 = vmul.f32 %v1617, %v1084
    %v1619 = vmul.f32 %v1618, %v1617
    %v1620 = vmul.f32 0.5, %v1619
    %v1621 = vsub.f32 1.5, %v1620
    %v1622 = vmul.f32 %v1617, %v1621
    %vm1623 = vweird.f32 %v1084
    %vm1624 = vweird.f32 %v1617
    %vm1625 = vmor %vm1623, %vm1624
    %v1626 = vsel %vm1625, %v1617, %v1622
    %v1627 = vrsqrt.pop %v1085
    %v1628 = vmul.f32 %v1627, %v1085
    %v1629 = vmul.f32 %v1628, %v1627
    %v1630 = vmul.f32 0.5, %v1629
    %v1631 = vsub.f32 1.5, %v1630
    %v1632 = vmul.f32 %v1627, %v1631
    %vm1633 = vweird.f32 %v1085
    %vm1634 = vweird.f32 %v1627
    %vm1635 = vmor %vm1633, %vm1634
    %v1636 = vsel %vm1635, %v1627, %v1632
    %v1637 = vrsqrt.pop %v1086
    %v1638 = vmul.f32 %v1637, %v1086
    %v1639 = vmul.f32 %v1638, %v1637
    %v1640 = vmul.f32 0.5, %v1639
    %v1641 = vsub.f32 1.5, %v1640
    %v1642 = vmul.f32 %v1637, %v1641
    %vm1643 = vweird.f32 %v1086
    %vm1644 = vweird.f32 %v1637
    %vm1645 = vmor %vm1643, %vm1644
    %v1646 = vsel %vm1645, %v1637, %v1642
    %v1647 = vmul.f32 %v695, %v1096
    %v1648 = vmul.f32 %v696, %v1106
    %v1649 = vmul.f32 %v697, %v1116
    %v1650 = vmul.f32 %v698, %v1126
    %v1651 = vmul.f32 %v699, %v1136
    %v1652 = vmul.f32 %v700, %v1146
    %v1653 = vmul.f32 %v701, %v1156
    %v1654 = vmul.f32 %v702, %v1166
    %v1655 = vmul.f32 %v703, %v1176
    %v1656 = vmul.f32 %v704, %v1186
    %v1657 = vmul.f32 %v705, %v1196
    %v1658 = vmul.f32 %v706, %v1206
    %v1659 = vmul.f32 %v707, %v1216
    %v1660 = vmul.f32 %v708, %v1226
    %v1661 = vmul.f32 %v709, %v1236
    %v1662 = vmul.f32 %v710, %v1246
    %v1663 = vmul.f32 %v711, %v1256
    %v1664 = vmul.f32 %v712, %v1266
    %v1665 = vmul.f32 %v713, %v1276
    %v1666 = vmul.f32 %v714, %v1286
    %v1667 = vmul.f32 %v715, %v1296
    %v1668 = vmul.f32 %v716, %v1306
    %v1669 = vmul.f32 %v717, %v1316
    %v1670 = vmul.f32 %v718, %v1326
    %v1671 = vmul.f32 %v719, %v1336
    %v1672 = vmul.f32 %v720, %v1346
    %v1673 = vmul.f32 %v721, %v1356
    %v1674 = vmul.f32 %v722, %v1366
    %v1675 = vmul.f32 %v723, %v1376
    %v1676 = vmul.f32 %v724, %v1386
    %v1677 = vmul.f32 %v725, %v1396
    %v1678 = vmul.f32 %v726, %v1406
    %v1679 = vmul.f32 %v727, %v1416
    %v1680 = vmul.f32 %v728, %v1426
    %v1681 = vmul.f32 %v729, %v1436
    %v1682 = vmul.f32 %v730, %v1446
    %v1683 = vmul.f32 %v731, %v1456
    %v1684 = vmul.f32 %v732, %v1466
    %v1685 = vmul.f32 %v733, %v1476
    %v1686 = vmul.f32 %v734, %v1486
    %v1687 = vmul.f32 %v735, %v1496
    %v1688 = vmul.f32 %v736, %v1506
    %v1689 = vmul.f32 %v737, %v1516
    %v1690 = vmul.f32 %v738, %v1526
    %v1691 = vmul.f32 %v739, %v1536
    %v1692 = vmul.f32 %v740, %v1546
    %v1693 = vmul.f32 %v741, %v1556
    %v1694 = vmul.f32 %v742, %v1566
    %v1695 = vmul.f32 %v743, %v1576
    %v1696 = vmul.f32 %v744, %v1586
    %v1697 = vmul.f32 %v745, %v1596
    %v1698 = vmul.f32 %v746, %v1606
    %v1699 = vmul.f32 %v747, %v1616
    %v1700 = vmul.f32 %v748, %v1626
    %v1701 = vmul.f32 %v749, %v1636
    %v1702 = vmul.f32 %v750, %v1646
    %v1703 = vld [vmem:[%s3] sm:$0x1]
    %v1705 = vperm.slane %v1703, 0
    %v1707 = vmul.f32 %v1647, %v1705
    %v1708 = vmul.f32 %v1648, %v1705
    %v1709 = vmul.f32 %v1649, %v1705
    %v1710 = vmul.f32 %v1650, %v1705
    %v1711 = vmul.f32 %v1651, %v1705
    %v1712 = vmul.f32 %v1652, %v1705
    %v1713 = vmul.f32 %v1653, %v1705
    %v1714 = vmul.f32 %v1654, %v1705
    %v1715 = vmul.f32 %v1655, %v1705
    %v1716 = vmul.f32 %v1656, %v1705
    %v1717 = vmul.f32 %v1657, %v1705
    %v1718 = vmul.f32 %v1658, %v1705
    %v1719 = vmul.f32 %v1659, %v1705
    %v1720 = vmul.f32 %v1660, %v1705
    %v1721 = vmul.f32 %v1661, %v1705
    %v1722 = vmul.f32 %v1662, %v1705
    %v1723 = vmul.f32 %v1663, %v1705
    %v1724 = vmul.f32 %v1664, %v1705
    %v1725 = vmul.f32 %v1665, %v1705
    %v1726 = vmul.f32 %v1666, %v1705
    %v1727 = vmul.f32 %v1667, %v1705
    %v1728 = vmul.f32 %v1668, %v1705
    %v1729 = vmul.f32 %v1669, %v1705
    %v1730 = vmul.f32 %v1670, %v1705
    %v1731 = vmul.f32 %v1671, %v1705
    %v1732 = vmul.f32 %v1672, %v1705
    %v1733 = vmul.f32 %v1673, %v1705
    %v1734 = vmul.f32 %v1674, %v1705
    %v1735 = vmul.f32 %v1675, %v1705
    %v1736 = vmul.f32 %v1676, %v1705
    %v1737 = vmul.f32 %v1677, %v1705
    %v1738 = vmul.f32 %v1678, %v1705
    %v1739 = vmul.f32 %v1679, %v1705
    %v1740 = vmul.f32 %v1680, %v1705
    %v1741 = vmul.f32 %v1681, %v1705
    %v1742 = vmul.f32 %v1682, %v1705
    %v1743 = vmul.f32 %v1683, %v1705
    %v1744 = vmul.f32 %v1684, %v1705
    %v1745 = vmul.f32 %v1685, %v1705
    %v1746 = vmul.f32 %v1686, %v1705
    %v1747 = vmul.f32 %v1687, %v1705
    %v1748 = vmul.f32 %v1688, %v1705
    %v1749 = vmul.f32 %v1689, %v1705
    %v1750 = vmul.f32 %v1690, %v1705
    %v1751 = vmul.f32 %v1691, %v1705
    %v1752 = vmul.f32 %v1692, %v1705
    %v1753 = vmul.f32 %v1693, %v1705
    %v1754 = vmul.f32 %v1694, %v1705
    %v1755 = vmul.f32 %v1695, %v1705
    %v1756 = vmul.f32 %v1696, %v1705
    %v1757 = vmul.f32 %v1697, %v1705
    %v1758 = vmul.f32 %v1698, %v1705
    %v1759 = vmul.f32 %v1699, %v1705
    %v1760 = vmul.f32 %v1700, %v1705
    %v1761 = vmul.f32 %v1701, %v1705
    %v1762 = vmul.f32 %v1702, %v1705
    %v1763 = vld [vmem:[%s4] sm:$0x1]
    %v1765 = vperm.slane %v1763, 0
    %v1767 = vadd.f32 %v1707, %v1765
    %v1768 = vadd.f32 %v1708, %v1765
    %v1769 = vadd.f32 %v1709, %v1765
    %v1770 = vadd.f32 %v1710, %v1765
    %v1771 = vadd.f32 %v1711, %v1765
    %v1772 = vadd.f32 %v1712, %v1765
    %v1773 = vadd.f32 %v1713, %v1765
    %v1774 = vadd.f32 %v1714, %v1765
    %v1775 = vadd.f32 %v1715, %v1765
    %v1776 = vadd.f32 %v1716, %v1765
    %v1777 = vadd.f32 %v1717, %v1765
    %v1778 = vadd.f32 %v1718, %v1765
    %v1779 = vadd.f32 %v1719, %v1765
    %v1780 = vadd.f32 %v1720, %v1765
    %v1781 = vadd.f32 %v1721, %v1765
    %v1782 = vadd.f32 %v1722, %v1765
    %v1783 = vadd.f32 %v1723, %v1765
    %v1784 = vadd.f32 %v1724, %v1765
    %v1785 = vadd.f32 %v1725, %v1765
    %v1786 = vadd.f32 %v1726, %v1765
    %v1787 = vadd.f32 %v1727, %v1765
    %v1788 = vadd.f32 %v1728, %v1765
    %v1789 = vadd.f32 %v1729, %v1765
    %v1790 = vadd.f32 %v1730, %v1765
    %v1791 = vadd.f32 %v1731, %v1765
    %v1792 = vadd.f32 %v1732, %v1765
    %v1793 = vadd.f32 %v1733, %v1765
    %v1794 = vadd.f32 %v1734, %v1765
    %v1795 = vadd.f32 %v1735, %v1765
    %v1796 = vadd.f32 %v1736, %v1765
    %v1797 = vadd.f32 %v1737, %v1765
    %v1798 = vadd.f32 %v1738, %v1765
    %v1799 = vadd.f32 %v1739, %v1765
    %v1800 = vadd.f32 %v1740, %v1765
    %v1801 = vadd.f32 %v1741, %v1765
    %v1802 = vadd.f32 %v1742, %v1765
    %v1803 = vadd.f32 %v1743, %v1765
    %v1804 = vadd.f32 %v1744, %v1765
    %v1805 = vadd.f32 %v1745, %v1765
    %v1806 = vadd.f32 %v1746, %v1765
    %v1807 = vadd.f32 %v1747, %v1765
    %v1808 = vadd.f32 %v1748, %v1765
    %v1809 = vadd.f32 %v1749, %v1765
    %v1810 = vadd.f32 %v1750, %v1765
    %v1811 = vadd.f32 %v1751, %v1765
    %v1812 = vadd.f32 %v1752, %v1765
    %v1813 = vadd.f32 %v1753, %v1765
    %v1814 = vadd.f32 %v1754, %v1765
    %v1815 = vadd.f32 %v1755, %v1765
    %v1816 = vadd.f32 %v1756, %v1765
    %v1817 = vadd.f32 %v1757, %v1765
    %v1818 = vadd.f32 %v1758, %v1765
    %v1819 = vadd.f32 %v1759, %v1765
    %v1820 = vadd.f32 %v1760, %v1765
    %v1821 = vadd.f32 %v1761, %v1765
    %v1822 = vadd.f32 %v1762, %v1765
    %v1823 = vmul.f32 %v1802, 0.17677669
    %v1824 = vmul.f32 %v1803, 0.17677669
    %v1825 = vmul.f32 %v1804, 0.17677669
    %v1826 = vmul.f32 %v1805, 0.17677669
    %v1827 = vmul.f32 %v1806, 0.17677669
    %v1828 = vmul.f32 %v1807, 0.17677669
    %v1829 = vmul.f32 %v1808, 0.17677669
    %v1830 = vmul.f32 %v1809, 0.17677669
    %v1831 = vmul.f32 %v1810, 0.17677669
    %v1832 = vmul.f32 %v1811, 0.17677669
    %v1833 = vmul.f32 %v1812, 0.17677669
    %v1834 = vmul.f32 %v1813, 0.17677669
    %v1835 = vmul.f32 %v1814, 0.17677669
    %v1836 = vmul.f32 %v1815, 0.17677669
    %v1837 = vmul.f32 %v1816, 0.17677669
    %v1838 = vmul.f32 %v1817, 0.17677669
    %v1839 = vmul.f32 %v1818, 0.17677669
    %v1840 = vmul.f32 %v1819, 0.17677669
    %v1841 = vmul.f32 %v1820, 0.17677669
    %v1842 = vmul.f32 %v1821, 0.17677669
    %v1843 = vmul.f32 %v1822, 0.17677669
    %v1844 = vlaneseq
    %v1845 = vand.u32 %v1844, 127
    %v1847 = vsel %vm463, %v1823, 0
    %v1850 = vsel %vm463, %v1824, 0
    %v1853 = vsel %vm463, %v1825, 0
    %v1856 = vsel %vm463, %v1826, 0
    %v1859 = vsel %vm463, %v1827, 0
    %v1862 = vsel %vm463, %v1828, 0
    %v1865 = vsel %vm463, %v1829, 0
    %v1868 = vsel %vm463, %v1830, 0
    %v1871 = vsel %vm463, %v1831, 0
    %v1874 = vsel %vm463, %v1832, 0
    %v1877 = vsel %vm463, %v1833, 0
    %v1880 = vsel %vm463, %v1834, 0
    %v1883 = vsel %vm463, %v1835, 0
    %v1886 = vsel %vm463, %v1836, 0
    %v1889 = vsel %vm463, %v1837, 0
    %v1892 = vsel %vm463, %v1838, 0
    %v1895 = vsel %vm463, %v1839, 0
    %v1898 = vsel %vm463, %v1840, 0
    %v1901 = vsel %vm463, %v1841, 0
    %v1904 = vsel %vm463, %v1842, 0
    %v1907 = vsel %vm463, %v1843, 0
    %v1910 = vsel %vm463, %v1767, 0
    %v1913 = vsel %vm463, %v1768, 0
    %v1916 = vsel %vm463, %v1769, 0
    %v1919 = vsel %vm463, %v1770, 0
    %v1922 = vsel %vm463, %v1771, 0
    %v1925 = vsel %vm463, %v1772, 0
    %v1928 = vsel %vm463, %v1773, 0
    %1930 = vmatpush.xpose.msra.mxu0 0.0
    %1931 = vmatpush.xpose.msra.mxu0 0.0
    %1932 = vmatpush.xpose.msra.mxu0 0.0
    %1933 = vmatpush.xpose.msra.mxu0 0.0
    %1934 = vmatpush.xpose.msra.mxu0 0.0
    %1935 = vmatpush.xpose.msra.mxu0 0.0
    %1936 = vmatpush.xpose.msra.mxu0 0.0
    %1937 = vmatpush.xpose.msra.mxu0 0.0
    %1938 = vmatpush.xpose.msra.mxu0 0.0
    %1939 = vmatpush.xpose.msra.mxu0 %v1928
    %1940 = vmatpush.xpose.msra.mxu0 %v1925
    %1941 = vmatpush.xpose.msra.mxu0 %v1922
    %1942 = vmatpush.xpose.msra.mxu0 %v1919
    %1943 = vmatpush.xpose.msra.mxu0 %v1916
    %1944 = vmatpush.xpose.msra.mxu0 %v1913
    %1945 = vmatpush.xpose.msra.mxu0 %v1910
    %1946 = vmatmul.f32.gmra.mxu0 %v1847
    %v1947 = vpop.f32.mrf.mxu0
    %v1948 = vadd.f32 0.0, %v1947
    %1949 = vmatmul.f32.gmra.mxu0 %v1850
    %v1950 = vpop.f32.mrf.mxu0
    %v1951 = vadd.f32 0.0, %v1950
    %1952 = vmatmul.f32.gmra.mxu0 %v1853
    %v1953 = vpop.f32.mrf.mxu0
    %v1954 = vadd.f32 0.0, %v1953
    %1955 = vmatmul.f32.gmra.mxu0 %v1856
    %v1956 = vpop.f32.mrf.mxu0
    %v1957 = vadd.f32 0.0, %v1956
    %1958 = vmatmul.f32.gmra.mxu0 %v1859
    %v1959 = vpop.f32.mrf.mxu0
    %v1960 = vadd.f32 0.0, %v1959
    %1961 = vmatmul.f32.gmra.mxu0 %v1862
    %v1962 = vpop.f32.mrf.mxu0
    %v1963 = vadd.f32 0.0, %v1962
    %1964 = vmatmul.f32.gmra.mxu0 %v1865
    %v1965 = vpop.f32.mrf.mxu0
    %v1966 = vadd.f32 0.0, %v1965
    %1967 = vmatmul.f32.gmra.mxu0 %v1868
    %v1968 = vpop.f32.mrf.mxu0
    %v1969 = vadd.f32 0.0, %v1968
    %1970 = vmatmul.f32.gmra.mxu0 %v1871
    %v1971 = vpop.f32.mrf.mxu0
    %v1972 = vadd.f32 0.0, %v1971
    %1973 = vmatmul.f32.gmra.mxu0 %v1874
    %v1974 = vpop.f32.mrf.mxu0
    %v1975 = vadd.f32 0.0, %v1974
    %1976 = vmatmul.f32.gmra.mxu0 %v1877
    %v1977 = vpop.f32.mrf.mxu0
    %v1978 = vadd.f32 0.0, %v1977
    %1979 = vmatmul.f32.gmra.mxu0 %v1880
    %v1980 = vpop.f32.mrf.mxu0
    %v1981 = vadd.f32 0.0, %v1980
    %1982 = vmatmul.f32.gmra.mxu0 %v1883
    %v1983 = vpop.f32.mrf.mxu0
    %v1984 = vadd.f32 0.0, %v1983
    %1985 = vmatmul.f32.gmra.mxu0 %v1886
    %v1986 = vpop.f32.mrf.mxu0
    %v1987 = vadd.f32 0.0, %v1986
    %1988 = vmatmul.f32.gmra.mxu0 %v1889
    %v1989 = vpop.f32.mrf.mxu0
    %v1990 = vadd.f32 0.0, %v1989
    %1991 = vmatmul.f32.gmra.mxu0 %v1892
    %v1992 = vpop.f32.mrf.mxu0
    %v1993 = vadd.f32 0.0, %v1992
    %1994 = vmatmul.f32.gmra.mxu0 %v1895
    %v1995 = vpop.f32.mrf.mxu0
    %v1996 = vadd.f32 0.0, %v1995
    %1997 = vmatmul.f32.gmra.mxu0 %v1898
    %v1998 = vpop.f32.mrf.mxu0
    %v1999 = vadd.f32 0.0, %v1998
    %2000 = vmatmul.f32.gmra.mxu0 %v1901
    %v2001 = vpop.f32.mrf.mxu0
    %v2002 = vadd.f32 0.0, %v2001
    %2003 = vmatmul.f32.gmra.mxu0 %v1904
    %v2004 = vpop.f32.mrf.mxu0
    %v2005 = vadd.f32 0.0, %v2004
    %2006 = vmatmul.f32.gmra.mxu0 %v1907
    %v2007 = vpop.f32.mrf.mxu0
    %v2008 = vadd.f32 0.0, %v2007
    %2009 = vdwg.mxu0
    %vm2010 = vcmask 457728
    %v2011 = vsel %vm2010, %v1948, -inf
    %2012 = vmax.xlane.f32.xlu0 %v2011
    %v2013 = vpop.xlane.xlu0 %2012
    %v2014 = vsel %vm2010, %v1951, -inf
    %2015 = vmax.xlane.f32.xlu0 %v2014
    %v2016 = vpop.xlane.xlu0 %2015
    %v2017 = vsel %vm2010, %v1954, -inf
    %2018 = vmax.xlane.f32.xlu0 %v2017
    %v2019 = vpop.xlane.xlu0 %2018
    %v2020 = vsel %vm2010, %v1957, -inf
    %2021 = vmax.xlane.f32.xlu0 %v2020
    %v2022 = vpop.xlane.xlu0 %2021
    %v2023 = vsel %vm2010, %v1960, -inf
    %2024 = vmax.xlane.f32.xlu0 %v2023
    %v2025 = vpop.xlane.xlu0 %2024
    %v2026 = vsel %vm2010, %v1963, -inf
    %2027 = vmax.xlane.f32.xlu0 %v2026
    %v2028 = vpop.xlane.xlu0 %2027
    %v2029 = vsel %vm2010, %v1966, -inf
    %2030 = vmax.xlane.f32.xlu0 %v2029
    %v2031 = vpop.xlane.xlu0 %2030
    %v2032 = vsel %vm2010, %v1969, -inf
    %2033 = vmax.xlane.f32.xlu0 %v2032
    %v2034 = vpop.xlane.xlu0 %2033
    %v2035 = vsel %vm2010, %v1972, -inf
    %2036 = vmax.xlane.f32.xlu0 %v2035
    %v2037 = vpop.xlane.xlu0 %2036
    %v2038 = vsel %vm2010, %v1975, -inf
    %2039 = vmax.xlane.f32.xlu0 %v2038
    %v2040 = vpop.xlane.xlu0 %2039
    %v2041 = vsel %vm2010, %v1978, -inf
    %2042 = vmax.xlane.f32.xlu0 %v2041
    %v2043 = vpop.xlane.xlu0 %2042
    %v2044 = vsel %vm2010, %v1981, -inf
    %2045 = vmax.xlane.f32.xlu0 %v2044
    %v2046 = vpop.xlane.xlu0 %2045
    %v2047 = vsel %vm2010, %v1984, -inf
    %2048 = vmax.xlane.f32.xlu0 %v2047
    %v2049 = vpop.xlane.xlu0 %2048
    %v2050 = vsel %vm2010, %v1987, -inf
    %2051 = vmax.xlane.f32.xlu0 %v2050
    %v2052 = vpop.xlane.xlu0 %2051
    %v2053 = vsel %vm2010, %v1990, -inf
    %2054 = vmax.xlane.f32.xlu0 %v2053
    %v2055 = vpop.xlane.xlu0 %2054
    %v2056 = vsel %vm2010, %v1993, -inf
    %2057 = vmax.xlane.f32.xlu0 %v2056
    %v2058 = vpop.xlane.xlu0 %2057
    %v2059 = vsel %vm2010, %v1996, -inf
    %2060 = vmax.xlane.f32.xlu0 %v2059
    %v2061 = vpop.xlane.xlu0 %2060
    %v2062 = vsel %vm2010, %v1999, -inf
    %2063 = vmax.xlane.f32.xlu0 %v2062
    %v2064 = vpop.xlane.xlu0 %2063
    %v2065 = vsel %vm2010, %v2002, -inf
    %2066 = vmax.xlane.f32.xlu0 %v2065
    %v2067 = vpop.xlane.xlu0 %2066
    %v2068 = vsel %vm2010, %v2005, -inf
    %2069 = vmax.xlane.f32.xlu0 %v2068
    %v2070 = vpop.xlane.xlu0 %2069
    %v2071 = vsel %vm2010, %v2008, -inf
    %2072 = vmax.xlane.f32.xlu0 %v2071
    %v2073 = vpop.xlane.xlu0 %2072
    %v2074 = vsub.f32 %v1948, %v2013
    %v2075 = vsub.f32 %v1951, %v2016
    %v2076 = vsub.f32 %v1954, %v2019
    %v2077 = vsub.f32 %v1957, %v2022
    %v2078 = vsub.f32 %v1960, %v2025
    %v2079 = vsub.f32 %v1963, %v2028
    %v2080 = vsub.f32 %v1966, %v2031
    %v2081 = vsub.f32 %v1969, %v2034
    %v2082 = vsub.f32 %v1972, %v2037
    %v2083 = vsub.f32 %v1975, %v2040
    %v2084 = vsub.f32 %v1978, %v2043
    %v2085 = vsub.f32 %v1981, %v2046
    %v2086 = vsub.f32 %v1984, %v2049
    %v2087 = vsub.f32 %v1987, %v2052
    %v2088 = vsub.f32 %v1990, %v2055
    %v2089 = vsub.f32 %v1993, %v2058
    %v2090 = vsub.f32 %v1996, %v2061
    %v2091 = vsub.f32 %v1999, %v2064
    %v2092 = vsub.f32 %v2002, %v2067
    %v2093 = vsub.f32 %v2005, %v2070
    %v2094 = vsub.f32 %v2008, %v2073
    %v2095 = vmul.f32 %v2074, 1.442695
    %v2096 = vpow.pop %v2095
    %v2097 = vmul.f32 %v2075, 1.442695
    %v2098 = vpow.pop %v2097
    %v2099 = vmul.f32 %v2076, 1.442695
    %v2100 = vpow.pop %v2099
    %v2101 = vmul.f32 %v2077, 1.442695
    %v2102 = vpow.pop %v2101
    %v2103 = vmul.f32 %v2078, 1.442695
    %v2104 = vpow.pop %v2103
    %v2105 = vmul.f32 %v2079, 1.442695
    %v2106 = vpow.pop %v2105
    %v2107 = vmul.f32 %v2080, 1.442695
    %v2108 = vpow.pop %v2107
    %v2109 = vmul.f32 %v2081, 1.442695
    %v2110 = vpow.pop %v2109
    %v2111 = vmul.f32 %v2082, 1.442695
    %v2112 = vpow.pop %v2111
    %v2113 = vmul.f32 %v2083, 1.442695
    %v2114 = vpow.pop %v2113
    %v2115 = vmul.f32 %v2084, 1.442695
    %v2116 = vpow.pop %v2115
    %v2117 = vmul.f32 %v2085, 1.442695
    %v2118 = vpow.pop %v2117
    %v2119 = vmul.f32 %v2086, 1.442695
    %v2120 = vpow.pop %v2119
    %v2121 = vmul.f32 %v2087, 1.442695
    %v2122 = vpow.pop %v2121
    %v2123 = vmul.f32 %v2088, 1.442695
    %v2124 = vpow.pop %v2123
    %v2125 = vmul.f32 %v2089, 1.442695
    %v2126 = vpow.pop %v2125
    %v2127 = vmul.f32 %v2090, 1.442695
    %v2128 = vpow.pop %v2127
    %v2129 = vmul.f32 %v2091, 1.442695
    %v2130 = vpow.pop %v2129
    %v2131 = vmul.f32 %v2092, 1.442695
    %v2132 = vpow.pop %v2131
    %v2133 = vmul.f32 %v2093, 1.442695
    %v2134 = vpow.pop %v2133
    %v2135 = vmul.f32 %v2094, 1.442695
    %v2136 = vpow.pop %v2135
    %v2137 = vsel %vm2010, %v2096, 0.0
    %2138 = vadd.xlane.f32.xlu0 %v2137
    %v2139 = vpop.xlane.xlu0 %2138
    %v2140 = vsel %vm2010, %v2098, 0.0
    %2141 = vadd.xlane.f32.xlu0 %v2140
    %v2142 = vpop.xlane.xlu0 %2141
    %v2143 = vsel %vm2010, %v2100, 0.0
    %2144 = vadd.xlane.f32.xlu0 %v2143
    %v2145 = vpop.xlane.xlu0 %2144
    %v2146 = vsel %vm2010, %v2102, 0.0
    %2147 = vadd.xlane.f32.xlu0 %v2146
    %v2148 = vpop.xlane.xlu0 %2147
    %v2149 = vsel %vm2010, %v2104, 0.0
    %2150 = vadd.xlane.f32.xlu0 %v2149
    %v2151 = vpop.xlane.xlu0 %2150
    %v2152 = vsel %vm2010, %v2106, 0.0
    %2153 = vadd.xlane.f32.xlu0 %v2152
    %v2154 = vpop.xlane.xlu0 %2153
    %v2155 = vsel %vm2010, %v2108, 0.0
    %2156 = vadd.xlane.f32.xlu0 %v2155
    %v2157 = vpop.xlane.xlu0 %2156
    %v2158 = vsel %vm2010, %v2110, 0.0
    %2159 = vadd.xlane.f32.xlu0 %v2158
    %v2160 = vpop.xlane.xlu0 %2159
    %v2161 = vsel %vm2010, %v2112, 0.0
    %2162 = vadd.xlane.f32.xlu0 %v2161
    %v2163 = vpop.xlane.xlu0 %2162
    %v2164 = vsel %vm2010, %v2114, 0.0
    %2165 = vadd.xlane.f32.xlu0 %v2164
    %v2166 = vpop.xlane.xlu0 %2165
    %v2167 = vsel %vm2010, %v2116, 0.0
    %2168 = vadd.xlane.f32.xlu0 %v2167
    %v2169 = vpop.xlane.xlu0 %2168
    %v2170 = vsel %vm2010, %v2118, 0.0
    %2171 = vadd.xlane.f32.xlu0 %v2170
    %v2172 = vpop.xlane.xlu0 %2171
    %v2173 = vsel %vm2010, %v2120, 0.0
    %2174 = vadd.xlane.f32.xlu0 %v2173
    %v2175 = vpop.xlane.xlu0 %2174
    %v2176 = vsel %vm2010, %v2122, 0.0
    %2177 = vadd.xlane.f32.xlu0 %v2176
    %v2178 = vpop.xlane.xlu0 %2177
    %v2179 = vsel %vm2010, %v2124, 0.0
    %2180 = vadd.xlane.f32.xlu0 %v2179
    %v2181 = vpop.xlane.xlu0 %2180
    %v2182 = vsel %vm2010, %v2126, 0.0
    %2183 = vadd.xlane.f32.xlu0 %v2182
    %v2184 = vpop.xlane.xlu0 %2183
    %v2185 = vsel %vm2010, %v2128, 0.0
    %2186 = vadd.xlane.f32.xlu0 %v2185
    %v2187 = vpop.xlane.xlu0 %2186
    %v2188 = vsel %vm2010, %v2130, 0.0
    %2189 = vadd.xlane.f32.xlu0 %v2188
    %v2190 = vpop.xlane.xlu0 %2189
    %v2191 = vsel %vm2010, %v2132, 0.0
    %2192 = vadd.xlane.f32.xlu0 %v2191
    %v2193 = vpop.xlane.xlu0 %2192
    %v2194 = vsel %vm2010, %v2134, 0.0
    %2195 = vadd.xlane.f32.xlu0 %v2194
    %v2196 = vpop.xlane.xlu0 %2195
    %v2197 = vsel %vm2010, %v2136, 0.0
    %2198 = vadd.xlane.f32.xlu0 %v2197
    %v2199 = vpop.xlane.xlu0 %2198
    %v2200 = vrcp.pop %v2139
    %v2201 = vmul.f32 %v2139, %v2200
    %v2202 = vsub.f32 1.0, %v2201
    %v2203 = vmul.f32 %v2200, %v2202
    %v2204 = vadd.f32 %v2200, %v2203
    %vm2205 = vweird.f32 %v2139
    %vm2206 = vweird.f32 %v2200
    %vm2207 = vmor %vm2205, %vm2206
    %v2208 = vsel %vm2207, %v2200, %v2204
    %v2209 = vand.u32 2147483647, %v2139
    %vm2210 = vcmp.eq.f32.partialorder %v2209, 8.507059e+37
    %v2211 = vand.u32 %v2139, 2147483648
    %v2212 = vor.u32 1.1754944e-38, %v2211
    %v2213 = vsel %vm2210, %v2212, %v2208
    %v2214 = vrcp.pop %v2142
    %v2215 = vmul.f32 %v2142, %v2214
    %v2216 = vsub.f32 1.0, %v2215
    %v2217 = vmul.f32 %v2214, %v2216
    %v2218 = vadd.f32 %v2214, %v2217
    %vm2219 = vweird.f32 %v2142
    %vm2220 = vweird.f32 %v2214
    %vm2221 = vmor %vm2219, %vm2220
    %v2222 = vsel %vm2221, %v2214, %v2218
    %v2223 = vand.u32 2147483647, %v2142
    %vm2224 = vcmp.eq.f32.partialorder %v2223, 8.507059e+37
    %v2225 = vand.u32 %v2142, 2147483648
    %v2226 = vor.u32 1.1754944e-38, %v2225
    %v2227 = vsel %vm2224, %v2226, %v2222
    %v2228 = vrcp.pop %v2145
    %v2229 = vmul.f32 %v2145, %v2228
    %v2230 = vsub.f32 1.0, %v2229
    %v2231 = vmul.f32 %v2228, %v2230
    %v2232 = vadd.f32 %v2228, %v2231
    %vm2233 = vweird.f32 %v2145
    %vm2234 = vweird.f32 %v2228
    %vm2235 = vmor %vm2233, %vm2234
    %v2236 = vsel %vm2235, %v2228, %v2232
    %v2237 = vand.u32 2147483647, %v2145
    %vm2238 = vcmp.eq.f32.partialorder %v2237, 8.507059e+37
    %v2239 = vand.u32 %v2145, 2147483648
    %v2240 = vor.u32 1.1754944e-38, %v2239
    %v2241 = vsel %vm2238, %v2240, %v2236
    %v2242 = vrcp.pop %v2148
    %v2243 = vmul.f32 %v2148, %v2242
    %v2244 = vsub.f32 1.0, %v2243
    %v2245 = vmul.f32 %v2242, %v2244
    %v2246 = vadd.f32 %v2242, %v2245
    %vm2247 = vweird.f32 %v2148
    %vm2248 = vweird.f32 %v2242
    %vm2249 = vmor %vm2247, %vm2248
    %v2250 = vsel %vm2249, %v2242, %v2246
    %v2251 = vand.u32 2147483647, %v2148
    %vm2252 = vcmp.eq.f32.partialorder %v2251, 8.507059e+37
    %v2253 = vand.u32 %v2148, 2147483648
    %v2254 = vor.u32 1.1754944e-38, %v2253
    %v2255 = vsel %vm2252, %v2254, %v2250
    %v2256 = vrcp.pop %v2151
    %v2257 = vmul.f32 %v2151, %v2256
    %v2258 = vsub.f32 1.0, %v2257
    %v2259 = vmul.f32 %v2256, %v2258
    %v2260 = vadd.f32 %v2256, %v2259
    %vm2261 = vweird.f32 %v2151
    %vm2262 = vweird.f32 %v2256
    %vm2263 = vmor %vm2261, %vm2262
    %v2264 = vsel %vm2263, %v2256, %v2260
    %v2265 = vand.u32 2147483647, %v2151
    %vm2266 = vcmp.eq.f32.partialorder %v2265, 8.507059e+37
    %v2267 = vand.u32 %v2151, 2147483648
    %v2268 = vor.u32 1.1754944e-38, %v2267
    %v2269 = vsel %vm2266, %v2268, %v2264
    %v2270 = vrcp.pop %v2154
    %v2271 = vmul.f32 %v2154, %v2270
    %v2272 = vsub.f32 1.0, %v2271
    %v2273 = vmul.f32 %v2270, %v2272
    %v2274 = vadd.f32 %v2270, %v2273
    %vm2275 = vweird.f32 %v2154
    %vm2276 = vweird.f32 %v2270
    %vm2277 = vmor %vm2275, %vm2276
    %v2278 = vsel %vm2277, %v2270, %v2274
    %v2279 = vand.u32 2147483647, %v2154
    %vm2280 = vcmp.eq.f32.partialorder %v2279, 8.507059e+37
    %v2281 = vand.u32 %v2154, 2147483648
    %v2282 = vor.u32 1.1754944e-38, %v2281
    %v2283 = vsel %vm2280, %v2282, %v2278
    %v2284 = vrcp.pop %v2157
    %v2285 = vmul.f32 %v2157, %v2284
    %v2286 = vsub.f32 1.0, %v2285
    %v2287 = vmul.f32 %v2284, %v2286
    %v2288 = vadd.f32 %v2284, %v2287
    %vm2289 = vweird.f32 %v2157
    %vm2290 = vweird.f32 %v2284
    %vm2291 = vmor %vm2289, %vm2290
    %v2292 = vsel %vm2291, %v2284, %v2288
    %v2293 = vand.u32 2147483647, %v2157
    %vm2294 = vcmp.eq.f32.partialorder %v2293, 8.507059e+37
    %v2295 = vand.u32 %v2157, 2147483648
    %v2296 = vor.u32 1.1754944e-38, %v2295
    %v2297 = vsel %vm2294, %v2296, %v2292
    %v2298 = vrcp.pop %v2160
    %v2299 = vmul.f32 %v2160, %v2298
    %v2300 = vsub.f32 1.0, %v2299
    %v2301 = vmul.f32 %v2298, %v2300
    %v2302 = vadd.f32 %v2298, %v2301
    %vm2303 = vweird.f32 %v2160
    %vm2304 = vweird.f32 %v2298
    %vm2305 = vmor %vm2303, %vm2304
    %v2306 = vsel %vm2305, %v2298, %v2302
    %v2307 = vand.u32 2147483647, %v2160
    %vm2308 = vcmp.eq.f32.partialorder %v2307, 8.507059e+37
    %v2309 = vand.u32 %v2160, 2147483648
    %v2310 = vor.u32 1.1754944e-38, %v2309
    %v2311 = vsel %vm2308, %v2310, %v2306
    %v2312 = vrcp.pop %v2163
    %v2313 = vmul.f32 %v2163, %v2312
    %v2314 = vsub.f32 1.0, %v2313
    %v2315 = vmul.f32 %v2312, %v2314
    %v2316 = vadd.f32 %v2312, %v2315
    %vm2317 = vweird.f32 %v2163
    %vm2318 = vweird.f32 %v2312
    %vm2319 = vmor %vm2317, %vm2318
    %v2320 = vsel %vm2319, %v2312, %v2316
    %v2321 = vand.u32 2147483647, %v2163
    %vm2322 = vcmp.eq.f32.partialorder %v2321, 8.507059e+37
    %v2323 = vand.u32 %v2163, 2147483648
    %v2324 = vor.u32 1.1754944e-38, %v2323
    %v2325 = vsel %vm2322, %v2324, %v2320
    %v2326 = vrcp.pop %v2166
    %v2327 = vmul.f32 %v2166, %v2326
    %v2328 = vsub.f32 1.0, %v2327
    %v2329 = vmul.f32 %v2326, %v2328
    %v2330 = vadd.f32 %v2326, %v2329
    %vm2331 = vweird.f32 %v2166
    %vm2332 = vweird.f32 %v2326
    %vm2333 = vmor %vm2331, %vm2332
    %v2334 = vsel %vm2333, %v2326, %v2330
    %v2335 = vand.u32 2147483647, %v2166
    %vm2336 = vcmp.eq.f32.partialorder %v2335, 8.507059e+37
    %v2337 = vand.u32 %v2166, 2147483648
    %v2338 = vor.u32 1.1754944e-38, %v2337
    %v2339 = vsel %vm2336, %v2338, %v2334
    %v2340 = vrcp.pop %v2169
    %v2341 = vmul.f32 %v2169, %v2340
    %v2342 = vsub.f32 1.0, %v2341
    %v2343 = vmul.f32 %v2340, %v2342
    %v2344 = vadd.f32 %v2340, %v2343
    %vm2345 = vweird.f32 %v2169
    %vm2346 = vweird.f32 %v2340
    %vm2347 = vmor %vm2345, %vm2346
    %v2348 = vsel %vm2347, %v2340, %v2344
    %v2349 = vand.u32 2147483647, %v2169
    %vm2350 = vcmp.eq.f32.partialorder %v2349, 8.507059e+37
    %v2351 = vand.u32 %v2169, 2147483648
    %v2352 = vor.u32 1.1754944e-38, %v2351
    %v2353 = vsel %vm2350, %v2352, %v2348
    %v2354 = vrcp.pop %v2172
    %v2355 = vmul.f32 %v2172, %v2354
    %v2356 = vsub.f32 1.0, %v2355
    %v2357 = vmul.f32 %v2354, %v2356
    %v2358 = vadd.f32 %v2354, %v2357
    %vm2359 = vweird.f32 %v2172
    %vm2360 = vweird.f32 %v2354
    %vm2361 = vmor %vm2359, %vm2360
    %v2362 = vsel %vm2361, %v2354, %v2358
    %v2363 = vand.u32 2147483647, %v2172
    %vm2364 = vcmp.eq.f32.partialorder %v2363, 8.507059e+37
    %v2365 = vand.u32 %v2172, 2147483648
    %v2366 = vor.u32 1.1754944e-38, %v2365
    %v2367 = vsel %vm2364, %v2366, %v2362
    %v2368 = vrcp.pop %v2175
    %v2369 = vmul.f32 %v2175, %v2368
    %v2370 = vsub.f32 1.0, %v2369
    %v2371 = vmul.f32 %v2368, %v2370
    %v2372 = vadd.f32 %v2368, %v2371
    %vm2373 = vweird.f32 %v2175
    %vm2374 = vweird.f32 %v2368
    %vm2375 = vmor %vm2373, %vm2374
    %v2376 = vsel %vm2375, %v2368, %v2372
    %v2377 = vand.u32 2147483647, %v2175
    %vm2378 = vcmp.eq.f32.partialorder %v2377, 8.507059e+37
    %v2379 = vand.u32 %v2175, 2147483648
    %v2380 = vor.u32 1.1754944e-38, %v2379
    %v2381 = vsel %vm2378, %v2380, %v2376
    %v2382 = vrcp.pop %v2178
    %v2383 = vmul.f32 %v2178, %v2382
    %v2384 = vsub.f32 1.0, %v2383
    %v2385 = vmul.f32 %v2382, %v2384
    %v2386 = vadd.f32 %v2382, %v2385
    %vm2387 = vweird.f32 %v2178
    %vm2388 = vweird.f32 %v2382
    %vm2389 = vmor %vm2387, %vm2388
    %v2390 = vsel %vm2389, %v2382, %v2386
    %v2391 = vand.u32 2147483647, %v2178
    %vm2392 = vcmp.eq.f32.partialorder %v2391, 8.507059e+37
    %v2393 = vand.u32 %v2178, 2147483648
    %v2394 = vor.u32 1.1754944e-38, %v2393
    %v2395 = vsel %vm2392, %v2394, %v2390
    %v2396 = vrcp.pop %v2181
    %v2397 = vmul.f32 %v2181, %v2396
    %v2398 = vsub.f32 1.0, %v2397
    %v2399 = vmul.f32 %v2396, %v2398
    %v2400 = vadd.f32 %v2396, %v2399
    %vm2401 = vweird.f32 %v2181
    %vm2402 = vweird.f32 %v2396
    %vm2403 = vmor %vm2401, %vm2402
    %v2404 = vsel %vm2403, %v2396, %v2400
    %v2405 = vand.u32 2147483647, %v2181
    %vm2406 = vcmp.eq.f32.partialorder %v2405, 8.507059e+37
    %v2407 = vand.u32 %v2181, 2147483648
    %v2408 = vor.u32 1.1754944e-38, %v2407
    %v2409 = vsel %vm2406, %v2408, %v2404
    %v2410 = vrcp.pop %v2184
    %v2411 = vmul.f32 %v2184, %v2410
    %v2412 = vsub.f32 1.0, %v2411
    %v2413 = vmul.f32 %v2410, %v2412
    %v2414 = vadd.f32 %v2410, %v2413
    %vm2415 = vweird.f32 %v2184
    %vm2416 = vweird.f32 %v2410
    %vm2417 = vmor %vm2415, %vm2416
    %v2418 = vsel %vm2417, %v2410, %v2414
    %v2419 = vand.u32 2147483647, %v2184
    %vm2420 = vcmp.eq.f32.partialorder %v2419, 8.507059e+37
    %v2421 = vand.u32 %v2184, 2147483648
    %v2422 = vor.u32 1.1754944e-38, %v2421
    %v2423 = vsel %vm2420, %v2422, %v2418
    %v2424 = vrcp.pop %v2187
    %v2425 = vmul.f32 %v2187, %v2424
    %v2426 = vsub.f32 1.0, %v2425
    %v2427 = vmul.f32 %v2424, %v2426
    %v2428 = vadd.f32 %v2424, %v2427
    %vm2429 = vweird.f32 %v2187
    %vm2430 = vweird.f32 %v2424
    %vm2431 = vmor %vm2429, %vm2430
    %v2432 = vsel %vm2431, %v2424, %v2428
    %v2433 = vand.u32 2147483647, %v2187
    %vm2434 = vcmp.eq.f32.partialorder %v2433, 8.507059e+37
    %v2435 = vand.u32 %v2187, 2147483648
    %v2436 = vor.u32 1.1754944e-38, %v2435
    %v2437 = vsel %vm2434, %v2436, %v2432
    %v2438 = vrcp.pop %v2190
    %v2439 = vmul.f32 %v2190, %v2438
    %v2440 = vsub.f32 1.0, %v2439
    %v2441 = vmul.f32 %v2438, %v2440
    %v2442 = vadd.f32 %v2438, %v2441
    %vm2443 = vweird.f32 %v2190
    %vm2444 = vweird.f32 %v2438
    %vm2445 = vmor %vm2443, %vm2444
    %v2446 = vsel %vm2445, %v2438, %v2442
    %v2447 = vand.u32 2147483647, %v2190
    %vm2448 = vcmp.eq.f32.partialorder %v2447, 8.507059e+37
    %v2449 = vand.u32 %v2190, 2147483648
    %v2450 = vor.u32 1.1754944e-38, %v2449
    %v2451 = vsel %vm2448, %v2450, %v2446
    %v2452 = vrcp.pop %v2193
    %v2453 = vmul.f32 %v2193, %v2452
    %v2454 = vsub.f32 1.0, %v2453
    %v2455 = vmul.f32 %v2452, %v2454
    %v2456 = vadd.f32 %v2452, %v2455
    %vm2457 = vweird.f32 %v2193
    %vm2458 = vweird.f32 %v2452
    %vm2459 = vmor %vm2457, %vm2458
    %v2460 = vsel %vm2459, %v2452, %v2456
    %v2461 = vand.u32 2147483647, %v2193
    %vm2462 = vcmp.eq.f32.partialorder %v2461, 8.507059e+37
    %v2463 = vand.u32 %v2193, 2147483648
    %v2464 = vor.u32 1.1754944e-38, %v2463
    %v2465 = vsel %vm2462, %v2464, %v2460
    %v2466 = vrcp.pop %v2196
    %v2467 = vmul.f32 %v2196, %v2466
    %v2468 = vsub.f32 1.0, %v2467
    %v2469 = vmul.f32 %v2466, %v2468
    %v2470 = vadd.f32 %v2466, %v2469
    %vm2471 = vweird.f32 %v2196
    %vm2472 = vweird.f32 %v2466
    %vm2473 = vmor %vm2471, %vm2472
    %v2474 = vsel %vm2473, %v2466, %v2470
    %v2475 = vand.u32 2147483647, %v2196
    %vm2476 = vcmp.eq.f32.partialorder %v2475, 8.507059e+37
    %v2477 = vand.u32 %v2196, 2147483648
    %v2478 = vor.u32 1.1754944e-38, %v2477
    %v2479 = vsel %vm2476, %v2478, %v2474
    %v2480 = vrcp.pop %v2199
    %v2481 = vmul.f32 %v2199, %v2480
    %v2482 = vsub.f32 1.0, %v2481
    %v2483 = vmul.f32 %v2480, %v2482
    %v2484 = vadd.f32 %v2480, %v2483
    %vm2485 = vweird.f32 %v2199
    %vm2486 = vweird.f32 %v2480
    %vm2487 = vmor %vm2485, %vm2486
    %v2488 = vsel %vm2487, %v2480, %v2484
    %v2489 = vand.u32 2147483647, %v2199
    %vm2490 = vcmp.eq.f32.partialorder %v2489, 8.507059e+37
    %v2491 = vand.u32 %v2199, 2147483648
    %v2492 = vor.u32 1.1754944e-38, %v2491
    %v2493 = vsel %vm2490, %v2492, %v2488
    %v2494 = vmul.f32 %v2096, %v2213
    %v2495 = vmul.f32 %v2098, %v2227
    %v2496 = vmul.f32 %v2100, %v2241
    %v2497 = vmul.f32 %v2102, %v2255
    %v2498 = vmul.f32 %v2104, %v2269
    %v2499 = vmul.f32 %v2106, %v2283
    %v2500 = vmul.f32 %v2108, %v2297
    %v2501 = vmul.f32 %v2110, %v2311
    %v2502 = vmul.f32 %v2112, %v2325
    %v2503 = vmul.f32 %v2114, %v2339
    %v2504 = vmul.f32 %v2116, %v2353
    %v2505 = vmul.f32 %v2118, %v2367
    %v2506 = vmul.f32 %v2120, %v2381
    %v2507 = vmul.f32 %v2122, %v2395
    %v2508 = vmul.f32 %v2124, %v2409
    %v2509 = vmul.f32 %v2126, %v2423
    %v2510 = vmul.f32 %v2128, %v2437
    %v2511 = vmul.f32 %v2130, %v2451
    %v2512 = vmul.f32 %v2132, %v2465
    %v2513 = vmul.f32 %v2134, %v2479
    %v2514 = vmul.f32 %v2136, %v2493
    %2522 = vrot.lane.b32.xlu0 %v296, 96
    %v2523 = vpop.permute.xlu0 %2522
    %2524 = vrot.lane.b32.xlu0 %v299, 96
    %v2525 = vpop.permute.xlu0 %2524
    %2526 = vrot.lane.b32.xlu0 %v302, 96
    %v2527 = vpop.permute.xlu0 %2526
    %2528 = vrot.lane.b32.xlu0 %v305, 96
    %v2529 = vpop.permute.xlu0 %2528
    %2530 = vrot.lane.b32.xlu0 %v308, 96
    %v2531 = vpop.permute.xlu0 %2530
    %2532 = vrot.lane.b32.xlu0 %v311, 96
    %v2533 = vpop.permute.xlu0 %2532
    %2534 = vrot.lane.b32.xlu0 %v314, 96
    %v2535 = vpop.permute.xlu0 %2534
    %v2544 = vsel %vm2010, %v2494, 0
    %v2547 = vsel %vm2010, %v2495, 0
    %v2550 = vsel %vm2010, %v2496, 0
    %v2553 = vsel %vm2010, %v2497, 0
    %v2556 = vsel %vm2010, %v2498, 0
    %v2559 = vsel %vm2010, %v2499, 0
    %v2562 = vsel %vm2010, %v2500, 0
    %v2565 = vsel %vm2010, %v2501, 0
    %v2568 = vsel %vm2010, %v2502, 0
    %v2571 = vsel %vm2010, %v2503, 0
    %v2574 = vsel %vm2010, %v2504, 0
    %v2577 = vsel %vm2010, %v2505, 0
    %v2580 = vsel %vm2010, %v2506, 0
    %v2583 = vsel %vm2010, %v2507, 0
    %v2586 = vsel %vm2010, %v2508, 0
    %v2589 = vsel %vm2010, %v2509, 0
    %v2592 = vsel %vm2010, %v2510, 0
    %v2595 = vsel %vm2010, %v2511, 0
    %v2598 = vsel %vm2010, %v2512, 0
    %v2601 = vsel %vm2010, %v2513, 0
    %v2604 = vsel %vm2010, %v2514, 0
    %2606 = vmatpush.msra.mxu0 0.0
    %2607 = vmatpush.msra.mxu0 0.0
    %2608 = vmatpush.msra.mxu0 0.0
    %2609 = vmatpush.msra.mxu0 0.0
    %2610 = vmatpush.msra.mxu0 0.0
    %2611 = vmatpush.msra.mxu0 0.0
    %2612 = vmatpush.msra.mxu0 0.0
    %2613 = vmatpush.msra.mxu0 0.0
    %2614 = vmatpush.msra.mxu0 0.0
    %2615 = vmatpush.msra.mxu0 %v2535
    %2616 = vmatpush.msra.mxu0 %v2533
    %2617 = vmatpush.msra.mxu0 %v2531
    %2618 = vmatpush.msra.mxu0 %v2529
    %2619 = vmatpush.msra.mxu0 %v2527
    %2620 = vmatpush.msra.mxu0 %v2525
    %2621 = vmatpush.msra.mxu0 %v2523
    %2622 = vmatmul.f32.gmra.mxu0 %v2544
    %v2623 = vpop.f32.mrf.mxu0
    %v2624 = vadd.f32 0.0, %v2623
    %2625 = vmatmul.f32.gmra.mxu0 %v2547
    %v2626 = vpop.f32.mrf.mxu0
    %v2627 = vadd.f32 0.0, %v2626
    %2628 = vmatmul.f32.gmra.mxu0 %v2550
    %v2629 = vpop.f32.mrf.mxu0
    %v2630 = vadd.f32 0.0, %v2629
    %2631 = vmatmul.f32.gmra.mxu0 %v2553
    %v2632 = vpop.f32.mrf.mxu0
    %v2633 = vadd.f32 0.0, %v2632
    %2634 = vmatmul.f32.gmra.mxu0 %v2556
    %v2635 = vpop.f32.mrf.mxu0
    %v2636 = vadd.f32 0.0, %v2635
    %2637 = vmatmul.f32.gmra.mxu0 %v2559
    %v2638 = vpop.f32.mrf.mxu0
    %v2639 = vadd.f32 0.0, %v2638
    %2640 = vmatmul.f32.gmra.mxu0 %v2562
    %v2641 = vpop.f32.mrf.mxu0
    %v2642 = vadd.f32 0.0, %v2641
    %2643 = vmatmul.f32.gmra.mxu0 %v2565
    %v2644 = vpop.f32.mrf.mxu0
    %v2645 = vadd.f32 0.0, %v2644
    %2646 = vmatmul.f32.gmra.mxu0 %v2568
    %v2647 = vpop.f32.mrf.mxu0
    %v2648 = vadd.f32 0.0, %v2647
    %2649 = vmatmul.f32.gmra.mxu0 %v2571
    %v2650 = vpop.f32.mrf.mxu0
    %v2651 = vadd.f32 0.0, %v2650
    %2652 = vmatmul.f32.gmra.mxu0 %v2574
    %v2653 = vpop.f32.mrf.mxu0
    %v2654 = vadd.f32 0.0, %v2653
    %2655 = vmatmul.f32.gmra.mxu0 %v2577
    %v2656 = vpop.f32.mrf.mxu0
    %v2657 = vadd.f32 0.0, %v2656
    %2658 = vmatmul.f32.gmra.mxu0 %v2580
    %v2659 = vpop.f32.mrf.mxu0
    %v2660 = vadd.f32 0.0, %v2659
    %2661 = vmatmul.f32.gmra.mxu0 %v2583
    %v2662 = vpop.f32.mrf.mxu0
    %v2663 = vadd.f32 0.0, %v2662
    %2664 = vmatmul.f32.gmra.mxu0 %v2586
    %v2665 = vpop.f32.mrf.mxu0
    %v2666 = vadd.f32 0.0, %v2665
    %2667 = vmatmul.f32.gmra.mxu0 %v2589
    %v2668 = vpop.f32.mrf.mxu0
    %v2669 = vadd.f32 0.0, %v2668
    %2670 = vmatmul.f32.gmra.mxu0 %v2592
    %v2671 = vpop.f32.mrf.mxu0
    %v2672 = vadd.f32 0.0, %v2671
    %2673 = vmatmul.f32.gmra.mxu0 %v2595
    %v2674 = vpop.f32.mrf.mxu0
    %v2675 = vadd.f32 0.0, %v2674
    %2676 = vmatmul.f32.gmra.mxu0 %v2598
    %v2677 = vpop.f32.mrf.mxu0
    %v2678 = vadd.f32 0.0, %v2677
    %2679 = vmatmul.f32.gmra.mxu0 %v2601
    %v2680 = vpop.f32.mrf.mxu0
    %v2681 = vadd.f32 0.0, %v2680
    %2682 = vmatmul.f32.gmra.mxu0 %v2604
    %v2683 = vpop.f32.mrf.mxu0
    %v2684 = vadd.f32 0.0, %v2683
    %2685 = vdwg.mxu0
    %2707 = vrot.lane.b32.xlu0 %v2624, 32
    %v2708 = vpop.permute.xlu0 %2707
    %2709 = vrot.lane.b32.xlu0 %v2627, 32
    %v2710 = vpop.permute.xlu0 %2709
    %2711 = vrot.lane.b32.xlu0 %v2630, 32
    %v2712 = vpop.permute.xlu0 %2711
    %2713 = vrot.lane.b32.xlu0 %v2633, 32
    %v2714 = vpop.permute.xlu0 %2713
    %2715 = vrot.lane.b32.xlu0 %v2636, 32
    %v2716 = vpop.permute.xlu0 %2715
    %2717 = vrot.lane.b32.xlu0 %v2639, 32
    %v2718 = vpop.permute.xlu0 %2717
    %2719 = vrot.lane.b32.xlu0 %v2642, 32
    %v2720 = vpop.permute.xlu0 %2719
    %2721 = vrot.lane.b32.xlu0 %v2645, 32
    %v2722 = vpop.permute.xlu0 %2721
    %2723 = vrot.lane.b32.xlu0 %v2648, 32
    %v2724 = vpop.permute.xlu0 %2723
    %2725 = vrot.lane.b32.xlu0 %v2651, 32
    %v2726 = vpop.permute.xlu0 %2725
    %2727 = vrot.lane.b32.xlu0 %v2654, 32
    %v2728 = vpop.permute.xlu0 %2727
    %2729 = vrot.lane.b32.xlu0 %v2657, 32
    %v2730 = vpop.permute.xlu0 %2729
    %2731 = vrot.lane.b32.xlu0 %v2660, 32
    %v2732 = vpop.permute.xlu0 %2731
    %2733 = vrot.lane.b32.xlu0 %v2663, 32
    %v2734 = vpop.permute.xlu0 %2733
    %2735 = vrot.lane.b32.xlu0 %v2666, 32
    %v2736 = vpop.permute.xlu0 %2735
    %2737 = vrot.lane.b32.xlu0 %v2669, 32
    %v2738 = vpop.permute.xlu0 %2737
    %2739 = vrot.lane.b32.xlu0 %v2672, 32
    %v2740 = vpop.permute.xlu0 %2739
    %2741 = vrot.lane.b32.xlu0 %v2675, 32
    %v2742 = vpop.permute.xlu0 %2741
    %2743 = vrot.lane.b32.xlu0 %v2678, 32
    %v2744 = vpop.permute.xlu0 %2743
    %2745 = vrot.lane.b32.xlu0 %v2681, 32
    %v2746 = vpop.permute.xlu0 %2745
    %2747 = vrot.lane.b32.xlu0 %v2684, 32
    %v2748 = vpop.permute.xlu0 %2747
    %v2770 = vsub.f32 %v401, %v2708
    %v2771 = vsub.f32 %v404, %v2710
    %v2772 = vsub.f32 %v407, %v2712
    %v2773 = vsub.f32 %v410, %v2714
    %v2774 = vsub.f32 %v413, %v2716
    %v2775 = vsub.f32 %v416, %v2718
    %v2776 = vsub.f32 %v419, %v2720
    %v2777 = vsub.f32 %v422, %v2722
    %v2778 = vsub.f32 %v425, %v2724
    %v2779 = vsub.f32 %v428, %v2726
    %v2780 = vsub.f32 %v431, %v2728
    %v2781 = vsub.f32 %v434, %v2730
    %v2782 = vsub.f32 %v437, %v2732
    %v2783 = vsub.f32 %v440, %v2734
    %v2784 = vsub.f32 %v443, %v2736
    %v2785 = vsub.f32 %v446, %v2738
    %v2786 = vsub.f32 %v449, %v2740
    %v2787 = vsub.f32 %v452, %v2742
    %v2788 = vsub.f32 %v455, %v2744
    %v2789 = vsub.f32 %v458, %v2746
    %v2790 = vsub.f32 %v461, %v2748
    %v2791 = vmul.f32 %v2770, %v2770
    %v2792 = vmul.f32 %v2771, %v2771
    %v2793 = vmul.f32 %v2772, %v2772
    %v2794 = vmul.f32 %v2773, %v2773
    %v2795 = vmul.f32 %v2774, %v2774
    %v2796 = vmul.f32 %v2775, %v2775
    %v2797 = vmul.f32 %v2776, %v2776
    %v2798 = vmul.f32 %v2777, %v2777
    %v2799 = vmul.f32 %v2778, %v2778
    %v2800 = vmul.f32 %v2779, %v2779
    %v2801 = vmul.f32 %v2780, %v2780
    %v2802 = vmul.f32 %v2781, %v2781
    %v2803 = vmul.f32 %v2782, %v2782
    %v2804 = vmul.f32 %v2783, %v2783
    %v2805 = vmul.f32 %v2784, %v2784
    %v2806 = vmul.f32 %v2785, %v2785
    %v2807 = vmul.f32 %v2786, %v2786
    %v2808 = vmul.f32 %v2787, %v2787
    %v2809 = vmul.f32 %v2788, %v2788
    %v2810 = vmul.f32 %v2789, %v2789
    %v2811 = vmul.f32 %v2790, %v2790
    %2833 = vrot.lane.b32.xlu0 %v2791, 96
    %v2834 = vpop.permute.xlu0 %2833
    %2835 = vrot.lane.b32.xlu0 %v2792, 96
    %v2836 = vpop.permute.xlu0 %2835
    %2837 = vrot.lane.b32.xlu0 %v2793, 96
    %v2838 = vpop.permute.xlu0 %2837
    %2839 = vrot.lane.b32.xlu0 %v2794, 96
    %v2840 = vpop.permute.xlu0 %2839
    %2841 = vrot.lane.b32.xlu0 %v2795, 96
    %v2842 = vpop.permute.xlu0 %2841
    %2843 = vrot.lane.b32.xlu0 %v2796, 96
    %v2844 = vpop.permute.xlu0 %2843
    %2845 = vrot.lane.b32.xlu0 %v2797, 96
    %v2846 = vpop.permute.xlu0 %2845
    %2847 = vrot.lane.b32.xlu0 %v2798, 96
    %v2848 = vpop.permute.xlu0 %2847
    %2849 = vrot.lane.b32.xlu0 %v2799, 96
    %v2850 = vpop.permute.xlu0 %2849
    %2851 = vrot.lane.b32.xlu0 %v2800, 96
    %v2852 = vpop.permute.xlu0 %2851
    %2853 = vrot.lane.b32.xlu0 %v2801, 96
    %v2854 = vpop.permute.xlu0 %2853
    %2855 = vrot.lane.b32.xlu0 %v2802, 96
    %v2856 = vpop.permute.xlu0 %2855
    %2857 = vrot.lane.b32.xlu0 %v2803, 96
    %v2858 = vpop.permute.xlu0 %2857
    %2859 = vrot.lane.b32.xlu0 %v2804, 96
    %v2860 = vpop.permute.xlu0 %2859
    %2861 = vrot.lane.b32.xlu0 %v2805, 96
    %v2862 = vpop.permute.xlu0 %2861
    %2863 = vrot.lane.b32.xlu0 %v2806, 96
    %v2864 = vpop.permute.xlu0 %2863
    %2865 = vrot.lane.b32.xlu0 %v2807, 96
    %v2866 = vpop.permute.xlu0 %2865
    %2867 = vrot.lane.b32.xlu0 %v2808, 96
    %v2868 = vpop.permute.xlu0 %2867
    %2869 = vrot.lane.b32.xlu0 %v2809, 96
    %v2870 = vpop.permute.xlu0 %2869
    %2871 = vrot.lane.b32.xlu0 %v2810, 96
    %v2872 = vpop.permute.xlu0 %2871
    %2873 = vrot.lane.b32.xlu0 %v2811, 96
    %v2874 = vpop.permute.xlu0 %2873
    %v2896 = vsel %vm463, %v2834, 0.0
    %2897 = vadd.xlane.f32.xlu0 %v2896
    %v2898 = vpop.xlane.xlu0 %2897
    %v2899 = vsel %vm463, %v2836, 0.0
    %2900 = vadd.xlane.f32.xlu0 %v2899
    %v2901 = vpop.xlane.xlu0 %2900
    %v2902 = vsel %vm463, %v2838, 0.0
    %2903 = vadd.xlane.f32.xlu0 %v2902
    %v2904 = vpop.xlane.xlu0 %2903
    %v2905 = vsel %vm463, %v2840, 0.0
    %2906 = vadd.xlane.f32.xlu0 %v2905
    %v2907 = vpop.xlane.xlu0 %2906
    %v2908 = vsel %vm463, %v2842, 0.0
    %2909 = vadd.xlane.f32.xlu0 %v2908
    %v2910 = vpop.xlane.xlu0 %2909
    %v2911 = vsel %vm463, %v2844, 0.0
    %2912 = vadd.xlane.f32.xlu0 %v2911
    %v2913 = vpop.xlane.xlu0 %2912
    %v2914 = vsel %vm463, %v2846, 0.0
    %2915 = vadd.xlane.f32.xlu0 %v2914
    %v2916 = vpop.xlane.xlu0 %2915
    %v2917 = vsel %vm463, %v2848, 0.0
    %2918 = vadd.xlane.f32.xlu0 %v2917
    %v2919 = vpop.xlane.xlu0 %2918
    %v2920 = vsel %vm463, %v2850, 0.0
    %2921 = vadd.xlane.f32.xlu0 %v2920
    %v2922 = vpop.xlane.xlu0 %2921
    %v2923 = vsel %vm463, %v2852, 0.0
    %2924 = vadd.xlane.f32.xlu0 %v2923
    %v2925 = vpop.xlane.xlu0 %2924
    %v2926 = vsel %vm463, %v2854, 0.0
    %2927 = vadd.xlane.f32.xlu0 %v2926
    %v2928 = vpop.xlane.xlu0 %2927
    %v2929 = vsel %vm463, %v2856, 0.0
    %2930 = vadd.xlane.f32.xlu0 %v2929
    %v2931 = vpop.xlane.xlu0 %2930
    %v2932 = vsel %vm463, %v2858, 0.0
    %2933 = vadd.xlane.f32.xlu0 %v2932
    %v2934 = vpop.xlane.xlu0 %2933
    %v2935 = vsel %vm463, %v2860, 0.0
    %2936 = vadd.xlane.f32.xlu0 %v2935
    %v2937 = vpop.xlane.xlu0 %2936
    %v2938 = vsel %vm463, %v2862, 0.0
    %2939 = vadd.xlane.f32.xlu0 %v2938
    %v2940 = vpop.xlane.xlu0 %2939
    %v2941 = vsel %vm463, %v2864, 0.0
    %2942 = vadd.xlane.f32.xlu0 %v2941
    %v2943 = vpop.xlane.xlu0 %2942
    %v2944 = vsel %vm463, %v2866, 0.0
    %2945 = vadd.xlane.f32.xlu0 %v2944
    %v2946 = vpop.xlane.xlu0 %2945
    %v2947 = vsel %vm463, %v2868, 0.0
    %2948 = vadd.xlane.f32.xlu0 %v2947
    %v2949 = vpop.xlane.xlu0 %2948
    %v2950 = vsel %vm463, %v2870, 0.0
    %2951 = vadd.xlane.f32.xlu0 %v2950
    %v2952 = vpop.xlane.xlu0 %2951
    %v2953 = vsel %vm463, %v2872, 0.0
    %2954 = vadd.xlane.f32.xlu0 %v2953
    %v2955 = vpop.xlane.xlu0 %2954
    %v2956 = vsel %vm463, %v2874, 0.0
    %2957 = vadd.xlane.f32.xlu0 %v2956
    %v2958 = vpop.xlane.xlu0 %2957
    %v2980 = vperm.slane %v2898, %v1845
    %v2981 = vadd.s32 %v1845, 4294967288
    %v2982 = vperm.slane %v2901, %v2981
    %vm2983 = vcmask 130112
    %v2984 = vsel %vm2983, %v2982, %v2980
    %v2985 = vadd.s32 %v1845, 4294967280
    %v2986 = vperm.slane %v2904, %v2985
    %vm2987 = vcmask 195712
    %v2988 = vsel %vm2987, %v2986, %v2984
    %v2989 = vadd.s32 %v1845, 4294967272
    %v2990 = vperm.slane %v2907, %v2989
    %vm2991 = vcmask 261312
    %v2992 = vsel %vm2991, %v2990, %v2988
    %v2993 = vadd.s32 %v1845, 4294967264
    %v2994 = vperm.slane %v2910, %v2993
    %vm2995 = vcmask 326912
    %v2996 = vsel %vm2995, %v2994, %v2992
    %v2997 = vadd.s32 %v1845, 4294967256
    %v2998 = vperm.slane %v2913, %v2997
    %vm2999 = vcmask 392512
    %v3000 = vsel %vm2999, %v2998, %v2996
    %v3001 = vadd.s32 %v1845, 4294967248
    %v3002 = vperm.slane %v2916, %v3001
    %vm3003 = vcmask 458112
    %v3004 = vsel %vm3003, %v3002, %v3000
    %v3005 = vperm.slane %v2919, %v1845
    %v3006 = vperm.slane %v2922, %v2981
    %v3007 = vsel %vm2983, %v3006, %v3005
    %v3008 = vperm.slane %v2925, %v2985
    %v3009 = vsel %vm2987, %v3008, %v3007
    %v3010 = vperm.slane %v2928, %v2989
    %v3011 = vsel %vm2991, %v3010, %v3009
    %v3012 = vperm.slane %v2931, %v2993
    %v3013 = vsel %vm2995, %v3012, %v3011
    %v3014 = vperm.slane %v2934, %v2997
    %v3015 = vsel %vm2999, %v3014, %v3013
    %v3016 = vperm.slane %v2937, %v3001
    %v3017 = vsel %vm3003, %v3016, %v3015
    %v3018 = vperm.slane %v2940, %v1845
    %v3019 = vperm.slane %v2943, %v2981
    %v3020 = vsel %vm2983, %v3019, %v3018
    %v3021 = vperm.slane %v2946, %v2985
    %v3022 = vsel %vm2987, %v3021, %v3020
    %v3023 = vperm.slane %v2949, %v2989
    %v3024 = vsel %vm2991, %v3023, %v3022
    %v3025 = vperm.slane %v2952, %v2993
    %v3026 = vsel %vm2995, %v3025, %v3024
    %v3027 = vperm.slane %v2955, %v2997
    %v3028 = vsel %vm2999, %v3027, %v3026
    %v3029 = vperm.slane %v2958, %v3001
    %v3030 = vsel %vm3003, %v3029, %v3028
    %vm3031 = vcmask 1041409
    %v3032 = vsel %vm3031, %v3017, %v3004
    %vm3033 = vcmask 1042434
    %v3034 = vsel %vm3033, %v3030, %v3032
    %vm3036 = vcmask 452608
    %v3037 = vsel %vm3036, %v3034, 0.0
    %3038 = vadd.xlane.f32.xlu0 %v3037
    %v3039 = vpop.xlane.xlu0 %3038
    %v3040 = vsub.f32 0.0, %v3039
    %v3041 = vrcp.pop 56.0
    %v3042 = vmul.f32 56.0, %v3041
    %v3043 = vsub.f32 1.0, %v3042
    %v3044 = vmul.f32 %v3041, %v3043
    %v3045 = vadd.f32 %v3041, %v3044
    %vm3046 = vweird.f32 %v3041
    %v3047 = vsel %vm3046, %v3041, %v3045
    %v3048 = vmul.f32 %v3040, %v3047
    %vm3049 = vcmp.eq.s32.totalorder %v1845, 0
    %v3050 = vsel %vm3049, %v3048, 0.0
    %v3051 = vadd.f32 %v3050, 0.0
    %v3053 = vsel %vm463, %v1774, 0
    %v3056 = vsel %vm463, %v1775, 0
    %v3059 = vsel %vm463, %v1776, 0
    %v3062 = vsel %vm463, %v1777, 0
    %v3065 = vsel %vm463, %v1778, 0
    %v3068 = vsel %vm463, %v1779, 0
    %v3071 = vsel %vm463, %v1780, 0
    %3073 = vmatpush.xpose.msra.mxu0 0.0
    %3074 = vmatpush.xpose.msra.mxu0 0.0
    %3075 = vmatpush.xpose.msra.mxu0 0.0
    %3076 = vmatpush.xpose.msra.mxu0 0.0
    %3077 = vmatpush.xpose.msra.mxu0 0.0
    %3078 = vmatpush.xpose.msra.mxu0 0.0
    %3079 = vmatpush.xpose.msra.mxu0 0.0
    %3080 = vmatpush.xpose.msra.mxu0 0.0
    %3081 = vmatpush.xpose.msra.mxu0 0.0
    %3082 = vmatpush.xpose.msra.mxu0 %v3071
    %3083 = vmatpush.xpose.msra.mxu0 %v3068
    %3084 = vmatpush.xpose.msra.mxu0 %v3065
    %3085 = vmatpush.xpose.msra.mxu0 %v3062
    %3086 = vmatpush.xpose.msra.mxu0 %v3059
    %3087 = vmatpush.xpose.msra.mxu0 %v3056
    %3088 = vmatpush.xpose.msra.mxu0 %v3053
    %3089 = vmatmul.f32.gmra.mxu0 %v1847
    %v3090 = vpop.f32.mrf.mxu0
    %v3091 = vadd.f32 0.0, %v3090
    %3092 = vmatmul.f32.gmra.mxu0 %v1850
    %v3093 = vpop.f32.mrf.mxu0
    %v3094 = vadd.f32 0.0, %v3093
    %3095 = vmatmul.f32.gmra.mxu0 %v1853
    %v3096 = vpop.f32.mrf.mxu0
    %v3097 = vadd.f32 0.0, %v3096
    %3098 = vmatmul.f32.gmra.mxu0 %v1856
    %v3099 = vpop.f32.mrf.mxu0
    %v3100 = vadd.f32 0.0, %v3099
    %3101 = vmatmul.f32.gmra.mxu0 %v1859
    %v3102 = vpop.f32.mrf.mxu0
    %v3103 = vadd.f32 0.0, %v3102
    %3104 = vmatmul.f32.gmra.mxu0 %v1862
    %v3105 = vpop.f32.mrf.mxu0
    %v3106 = vadd.f32 0.0, %v3105
    %3107 = vmatmul.f32.gmra.mxu0 %v1865
    %v3108 = vpop.f32.mrf.mxu0
    %v3109 = vadd.f32 0.0, %v3108
    %3110 = vmatmul.f32.gmra.mxu0 %v1868
    %v3111 = vpop.f32.mrf.mxu0
    %v3112 = vadd.f32 0.0, %v3111
    %3113 = vmatmul.f32.gmra.mxu0 %v1871
    %v3114 = vpop.f32.mrf.mxu0
    %v3115 = vadd.f32 0.0, %v3114
    %3116 = vmatmul.f32.gmra.mxu0 %v1874
    %v3117 = vpop.f32.mrf.mxu0
    %v3118 = vadd.f32 0.0, %v3117
    %3119 = vmatmul.f32.gmra.mxu0 %v1877
    %v3120 = vpop.f32.mrf.mxu0
    %v3121 = vadd.f32 0.0, %v3120
    %3122 = vmatmul.f32.gmra.mxu0 %v1880
    %v3123 = vpop.f32.mrf.mxu0
    %v3124 = vadd.f32 0.0, %v3123
    %3125 = vmatmul.f32.gmra.mxu0 %v1883
    %v3126 = vpop.f32.mrf.mxu0
    %v3127 = vadd.f32 0.0, %v3126
    %3128 = vmatmul.f32.gmra.mxu0 %v1886
    %v3129 = vpop.f32.mrf.mxu0
    %v3130 = vadd.f32 0.0, %v3129
    %3131 = vmatmul.f32.gmra.mxu0 %v1889
    %v3132 = vpop.f32.mrf.mxu0
    %v3133 = vadd.f32 0.0, %v3132
    %3134 = vmatmul.f32.gmra.mxu0 %v1892
    %v3135 = vpop.f32.mrf.mxu0
    %v3136 = vadd.f32 0.0, %v3135
    %3137 = vmatmul.f32.gmra.mxu0 %v1895
    %v3138 = vpop.f32.mrf.mxu0
    %v3139 = vadd.f32 0.0, %v3138
    %3140 = vmatmul.f32.gmra.mxu0 %v1898
    %v3141 = vpop.f32.mrf.mxu0
    %v3142 = vadd.f32 0.0, %v3141
    %3143 = vmatmul.f32.gmra.mxu0 %v1901
    %v3144 = vpop.f32.mrf.mxu0
    %v3145 = vadd.f32 0.0, %v3144
    %3146 = vmatmul.f32.gmra.mxu0 %v1904
    %v3147 = vpop.f32.mrf.mxu0
    %v3148 = vadd.f32 0.0, %v3147
    %3149 = vmatmul.f32.gmra.mxu0 %v1907
    %v3150 = vpop.f32.mrf.mxu0
    %v3151 = vadd.f32 0.0, %v3150
    %3152 = vdwg.mxu0
    %v3153 = vsel %vm2010, %v3091, -inf
    %3154 = vmax.xlane.f32.xlu0 %v3153
    %v3155 = vpop.xlane.xlu0 %3154
    %v3156 = vsel %vm2010, %v3094, -inf
    %3157 = vmax.xlane.f32.xlu0 %v3156
    %v3158 = vpop.xlane.xlu0 %3157
    %v3159 = vsel %vm2010, %v3097, -inf
    %3160 = vmax.xlane.f32.xlu0 %v3159
    %v3161 = vpop.xlane.xlu0 %3160
    %v3162 = vsel %vm2010, %v3100, -inf
    %3163 = vmax.xlane.f32.xlu0 %v3162
    %v3164 = vpop.xlane.xlu0 %3163
    %v3165 = vsel %vm2010, %v3103, -inf
    %3166 = vmax.xlane.f32.xlu0 %v3165
    %v3167 = vpop.xlane.xlu0 %3166
    %v3168 = vsel %vm2010, %v3106, -inf
    %3169 = vmax.xlane.f32.xlu0 %v3168
    %v3170 = vpop.xlane.xlu0 %3169
    %v3171 = vsel %vm2010, %v3109, -inf
    %3172 = vmax.xlane.f32.xlu0 %v3171
    %v3173 = vpop.xlane.xlu0 %3172
    %v3174 = vsel %vm2010, %v3112, -inf
    %3175 = vmax.xlane.f32.xlu0 %v3174
    %v3176 = vpop.xlane.xlu0 %3175
    %v3177 = vsel %vm2010, %v3115, -inf
    %3178 = vmax.xlane.f32.xlu0 %v3177
    %v3179 = vpop.xlane.xlu0 %3178
    %v3180 = vsel %vm2010, %v3118, -inf
    %3181 = vmax.xlane.f32.xlu0 %v3180
    %v3182 = vpop.xlane.xlu0 %3181
    %v3183 = vsel %vm2010, %v3121, -inf
    %3184 = vmax.xlane.f32.xlu0 %v3183
    %v3185 = vpop.xlane.xlu0 %3184
    %v3186 = vsel %vm2010, %v3124, -inf
    %3187 = vmax.xlane.f32.xlu0 %v3186
    %v3188 = vpop.xlane.xlu0 %3187
    %v3189 = vsel %vm2010, %v3127, -inf
    %3190 = vmax.xlane.f32.xlu0 %v3189
    %v3191 = vpop.xlane.xlu0 %3190
    %v3192 = vsel %vm2010, %v3130, -inf
    %3193 = vmax.xlane.f32.xlu0 %v3192
    %v3194 = vpop.xlane.xlu0 %3193
    %v3195 = vsel %vm2010, %v3133, -inf
    %3196 = vmax.xlane.f32.xlu0 %v3195
    %v3197 = vpop.xlane.xlu0 %3196
    %v3198 = vsel %vm2010, %v3136, -inf
    %3199 = vmax.xlane.f32.xlu0 %v3198
    %v3200 = vpop.xlane.xlu0 %3199
    %v3201 = vsel %vm2010, %v3139, -inf
    %3202 = vmax.xlane.f32.xlu0 %v3201
    %v3203 = vpop.xlane.xlu0 %3202
    %v3204 = vsel %vm2010, %v3142, -inf
    %3205 = vmax.xlane.f32.xlu0 %v3204
    %v3206 = vpop.xlane.xlu0 %3205
    %v3207 = vsel %vm2010, %v3145, -inf
    %3208 = vmax.xlane.f32.xlu0 %v3207
    %v3209 = vpop.xlane.xlu0 %3208
    %v3210 = vsel %vm2010, %v3148, -inf
    %3211 = vmax.xlane.f32.xlu0 %v3210
    %v3212 = vpop.xlane.xlu0 %3211
    %v3213 = vsel %vm2010, %v3151, -inf
    %3214 = vmax.xlane.f32.xlu0 %v3213
    %v3215 = vpop.xlane.xlu0 %3214
    %v3216 = vsub.f32 %v3091, %v3155
    %v3217 = vsub.f32 %v3094, %v3158
    %v3218 = vsub.f32 %v3097, %v3161
    %v3219 = vsub.f32 %v3100, %v3164
    %v3220 = vsub.f32 %v3103, %v3167
    %v3221 = vsub.f32 %v3106, %v3170
    %v3222 = vsub.f32 %v3109, %v3173
    %v3223 = vsub.f32 %v3112, %v3176
    %v3224 = vsub.f32 %v3115, %v3179
    %v3225 = vsub.f32 %v3118, %v3182
    %v3226 = vsub.f32 %v3121, %v3185
    %v3227 = vsub.f32 %v3124, %v3188
    %v3228 = vsub.f32 %v3127, %v3191
    %v3229 = vsub.f32 %v3130, %v3194
    %v3230 = vsub.f32 %v3133, %v3197
    %v3231 = vsub.f32 %v3136, %v3200
    %v3232 = vsub.f32 %v3139, %v3203
    %v3233 = vsub.f32 %v3142, %v3206
    %v3234 = vsub.f32 %v3145, %v3209
    %v3235 = vsub.f32 %v3148, %v3212
    %v3236 = vsub.f32 %v3151, %v3215
    %v3237 = vmul.f32 %v3216, 1.442695
    %v3238 = vpow.pop %v3237
    %v3239 = vmul.f32 %v3217, 1.442695
    %v3240 = vpow.pop %v3239
    %v3241 = vmul.f32 %v3218, 1.442695
    %v3242 = vpow.pop %v3241
    %v3243 = vmul.f32 %v3219, 1.442695
    %v3244 = vpow.pop %v3243
    %v3245 = vmul.f32 %v3220, 1.442695
    %v3246 = vpow.pop %v3245
    %v3247 = vmul.f32 %v3221, 1.442695
    %v3248 = vpow.pop %v3247
    %v3249 = vmul.f32 %v3222, 1.442695
    %v3250 = vpow.pop %v3249
    %v3251 = vmul.f32 %v3223, 1.442695
    %v3252 = vpow.pop %v3251
    %v3253 = vmul.f32 %v3224, 1.442695
    %v3254 = vpow.pop %v3253
    %v3255 = vmul.f32 %v3225, 1.442695
    %v3256 = vpow.pop %v3255
    %v3257 = vmul.f32 %v3226, 1.442695
    %v3258 = vpow.pop %v3257
    %v3259 = vmul.f32 %v3227, 1.442695
    %v3260 = vpow.pop %v3259
    %v3261 = vmul.f32 %v3228, 1.442695
    %v3262 = vpow.pop %v3261
    %v3263 = vmul.f32 %v3229, 1.442695
    %v3264 = vpow.pop %v3263
    %v3265 = vmul.f32 %v3230, 1.442695
    %v3266 = vpow.pop %v3265
    %v3267 = vmul.f32 %v3231, 1.442695
    %v3268 = vpow.pop %v3267
    %v3269 = vmul.f32 %v3232, 1.442695
    %v3270 = vpow.pop %v3269
    %v3271 = vmul.f32 %v3233, 1.442695
    %v3272 = vpow.pop %v3271
    %v3273 = vmul.f32 %v3234, 1.442695
    %v3274 = vpow.pop %v3273
    %v3275 = vmul.f32 %v3235, 1.442695
    %v3276 = vpow.pop %v3275
    %v3277 = vmul.f32 %v3236, 1.442695
    %v3278 = vpow.pop %v3277
    %v3279 = vsel %vm2010, %v3238, 0.0
    %3280 = vadd.xlane.f32.xlu0 %v3279
    %v3281 = vpop.xlane.xlu0 %3280
    %v3282 = vsel %vm2010, %v3240, 0.0
    %3283 = vadd.xlane.f32.xlu0 %v3282
    %v3284 = vpop.xlane.xlu0 %3283
    %v3285 = vsel %vm2010, %v3242, 0.0
    %3286 = vadd.xlane.f32.xlu0 %v3285
    %v3287 = vpop.xlane.xlu0 %3286
    %v3288 = vsel %vm2010, %v3244, 0.0
    %3289 = vadd.xlane.f32.xlu0 %v3288
    %v3290 = vpop.xlane.xlu0 %3289
    %v3291 = vsel %vm2010, %v3246, 0.0
    %3292 = vadd.xlane.f32.xlu0 %v3291
    %v3293 = vpop.xlane.xlu0 %3292
    %v3294 = vsel %vm2010, %v3248, 0.0
    %3295 = vadd.xlane.f32.xlu0 %v3294
    %v3296 = vpop.xlane.xlu0 %3295
    %v3297 = vsel %vm2010, %v3250, 0.0
    %3298 = vadd.xlane.f32.xlu0 %v3297
    %v3299 = vpop.xlane.xlu0 %3298
    %v3300 = vsel %vm2010, %v3252, 0.0
    %3301 = vadd.xlane.f32.xlu0 %v3300
    %v3302 = vpop.xlane.xlu0 %3301
    %v3303 = vsel %vm2010, %v3254, 0.0
    %3304 = vadd.xlane.f32.xlu0 %v3303
    %v3305 = vpop.xlane.xlu0 %3304
    %v3306 = vsel %vm2010, %v3256, 0.0
    %3307 = vadd.xlane.f32.xlu0 %v3306
    %v3308 = vpop.xlane.xlu0 %3307
    %v3309 = vsel %vm2010, %v3258, 0.0
    %3310 = vadd.xlane.f32.xlu0 %v3309
    %v3311 = vpop.xlane.xlu0 %3310
    %v3312 = vsel %vm2010, %v3260, 0.0
    %3313 = vadd.xlane.f32.xlu0 %v3312
    %v3314 = vpop.xlane.xlu0 %3313
    %v3315 = vsel %vm2010, %v3262, 0.0
    %3316 = vadd.xlane.f32.xlu0 %v3315
    %v3317 = vpop.xlane.xlu0 %3316
    %v3318 = vsel %vm2010, %v3264, 0.0
    %3319 = vadd.xlane.f32.xlu0 %v3318
    %v3320 = vpop.xlane.xlu0 %3319
    %v3321 = vsel %vm2010, %v3266, 0.0
    %3322 = vadd.xlane.f32.xlu0 %v3321
    %v3323 = vpop.xlane.xlu0 %3322
    %v3324 = vsel %vm2010, %v3268, 0.0
    %3325 = vadd.xlane.f32.xlu0 %v3324
    %v3326 = vpop.xlane.xlu0 %3325
    %v3327 = vsel %vm2010, %v3270, 0.0
    %3328 = vadd.xlane.f32.xlu0 %v3327
    %v3329 = vpop.xlane.xlu0 %3328
    %v3330 = vsel %vm2010, %v3272, 0.0
    %3331 = vadd.xlane.f32.xlu0 %v3330
    %v3332 = vpop.xlane.xlu0 %3331
    %v3333 = vsel %vm2010, %v3274, 0.0
    %3334 = vadd.xlane.f32.xlu0 %v3333
    %v3335 = vpop.xlane.xlu0 %3334
    %v3336 = vsel %vm2010, %v3276, 0.0
    %3337 = vadd.xlane.f32.xlu0 %v3336
    %v3338 = vpop.xlane.xlu0 %3337
    %v3339 = vsel %vm2010, %v3278, 0.0
    %3340 = vadd.xlane.f32.xlu0 %v3339
    %v3341 = vpop.xlane.xlu0 %3340
    %v3342 = vrcp.pop %v3281
    %v3343 = vmul.f32 %v3281, %v3342
    %v3344 = vsub.f32 1.0, %v3343
    %v3345 = vmul.f32 %v3342, %v3344
    %v3346 = vadd.f32 %v3342, %v3345
    %vm3347 = vweird.f32 %v3281
    %vm3348 = vweird.f32 %v3342
    %vm3349 = vmor %vm3347, %vm3348
    %v3350 = vsel %vm3349, %v3342, %v3346
    %v3351 = vand.u32 2147483647, %v3281
    %vm3352 = vcmp.eq.f32.partialorder %v3351, 8.507059e+37
    %v3353 = vand.u32 %v3281, 2147483648
    %v3354 = vor.u32 1.1754944e-38, %v3353
    %v3355 = vsel %vm3352, %v3354, %v3350
    %v3356 = vrcp.pop %v3284
    %v3357 = vmul.f32 %v3284, %v3356
    %v3358 = vsub.f32 1.0, %v3357
    %v3359 = vmul.f32 %v3356, %v3358
    %v3360 = vadd.f32 %v3356, %v3359
    %vm3361 = vweird.f32 %v3284
    %vm3362 = vweird.f32 %v3356
    %vm3363 = vmor %vm3361, %vm3362
    %v3364 = vsel %vm3363, %v3356, %v3360
    %v3365 = vand.u32 2147483647, %v3284
    %vm3366 = vcmp.eq.f32.partialorder %v3365, 8.507059e+37
    %v3367 = vand.u32 %v3284, 2147483648
    %v3368 = vor.u32 1.1754944e-38, %v3367
    %v3369 = vsel %vm3366, %v3368, %v3364
    %v3370 = vrcp.pop %v3287
    %v3371 = vmul.f32 %v3287, %v3370
    %v3372 = vsub.f32 1.0, %v3371
    %v3373 = vmul.f32 %v3370, %v3372
    %v3374 = vadd.f32 %v3370, %v3373
    %vm3375 = vweird.f32 %v3287
    %vm3376 = vweird.f32 %v3370
    %vm3377 = vmor %vm3375, %vm3376
    %v3378 = vsel %vm3377, %v3370, %v3374
    %v3379 = vand.u32 2147483647, %v3287
    %vm3380 = vcmp.eq.f32.partialorder %v3379, 8.507059e+37
    %v3381 = vand.u32 %v3287, 2147483648
    %v3382 = vor.u32 1.1754944e-38, %v3381
    %v3383 = vsel %vm3380, %v3382, %v3378
    %v3384 = vrcp.pop %v3290
    %v3385 = vmul.f32 %v3290, %v3384
    %v3386 = vsub.f32 1.0, %v3385
    %v3387 = vmul.f32 %v3384, %v3386
    %v3388 = vadd.f32 %v3384, %v3387
    %vm3389 = vweird.f32 %v3290
    %vm3390 = vweird.f32 %v3384
    %vm3391 = vmor %vm3389, %vm3390
    %v3392 = vsel %vm3391, %v3384, %v3388
    %v3393 = vand.u32 2147483647, %v3290
    %vm3394 = vcmp.eq.f32.partialorder %v3393, 8.507059e+37
    %v3395 = vand.u32 %v3290, 2147483648
    %v3396 = vor.u32 1.1754944e-38, %v3395
    %v3397 = vsel %vm3394, %v3396, %v3392
    %v3398 = vrcp.pop %v3293
    %v3399 = vmul.f32 %v3293, %v3398
    %v3400 = vsub.f32 1.0, %v3399
    %v3401 = vmul.f32 %v3398, %v3400
    %v3402 = vadd.f32 %v3398, %v3401
    %vm3403 = vweird.f32 %v3293
    %vm3404 = vweird.f32 %v3398
    %vm3405 = vmor %vm3403, %vm3404
    %v3406 = vsel %vm3405, %v3398, %v3402
    %v3407 = vand.u32 2147483647, %v3293
    %vm3408 = vcmp.eq.f32.partialorder %v3407, 8.507059e+37
    %v3409 = vand.u32 %v3293, 2147483648
    %v3410 = vor.u32 1.1754944e-38, %v3409
    %v3411 = vsel %vm3408, %v3410, %v3406
    %v3412 = vrcp.pop %v3296
    %v3413 = vmul.f32 %v3296, %v3412
    %v3414 = vsub.f32 1.0, %v3413
    %v3415 = vmul.f32 %v3412, %v3414
    %v3416 = vadd.f32 %v3412, %v3415
    %vm3417 = vweird.f32 %v3296
    %vm3418 = vweird.f32 %v3412
    %vm3419 = vmor %vm3417, %vm3418
    %v3420 = vsel %vm3419, %v3412, %v3416
    %v3421 = vand.u32 2147483647, %v3296
    %vm3422 = vcmp.eq.f32.partialorder %v3421, 8.507059e+37
    %v3423 = vand.u32 %v3296, 2147483648
    %v3424 = vor.u32 1.1754944e-38, %v3423
    %v3425 = vsel %vm3422, %v3424, %v3420
    %v3426 = vrcp.pop %v3299
    %v3427 = vmul.f32 %v3299, %v3426
    %v3428 = vsub.f32 1.0, %v3427
    %v3429 = vmul.f32 %v3426, %v3428
    %v3430 = vadd.f32 %v3426, %v3429
    %vm3431 = vweird.f32 %v3299
    %vm3432 = vweird.f32 %v3426
    %vm3433 = vmor %vm3431, %vm3432
    %v3434 = vsel %vm3433, %v3426, %v3430
    %v3435 = vand.u32 2147483647, %v3299
    %vm3436 = vcmp.eq.f32.partialorder %v3435, 8.507059e+37
    %v3437 = vand.u32 %v3299, 2147483648
    %v3438 = vor.u32 1.1754944e-38, %v3437
    %v3439 = vsel %vm3436, %v3438, %v3434
    %v3440 = vrcp.pop %v3302
    %v3441 = vmul.f32 %v3302, %v3440
    %v3442 = vsub.f32 1.0, %v3441
    %v3443 = vmul.f32 %v3440, %v3442
    %v3444 = vadd.f32 %v3440, %v3443
    %vm3445 = vweird.f32 %v3302
    %vm3446 = vweird.f32 %v3440
    %vm3447 = vmor %vm3445, %vm3446
    %v3448 = vsel %vm3447, %v3440, %v3444
    %v3449 = vand.u32 2147483647, %v3302
    %vm3450 = vcmp.eq.f32.partialorder %v3449, 8.507059e+37
    %v3451 = vand.u32 %v3302, 2147483648
    %v3452 = vor.u32 1.1754944e-38, %v3451
    %v3453 = vsel %vm3450, %v3452, %v3448
    %v3454 = vrcp.pop %v3305
    %v3455 = vmul.f32 %v3305, %v3454
    %v3456 = vsub.f32 1.0, %v3455
    %v3457 = vmul.f32 %v3454, %v3456
    %v3458 = vadd.f32 %v3454, %v3457
    %vm3459 = vweird.f32 %v3305
    %vm3460 = vweird.f32 %v3454
    %vm3461 = vmor %vm3459, %vm3460
    %v3462 = vsel %vm3461, %v3454, %v3458
    %v3463 = vand.u32 2147483647, %v3305
    %vm3464 = vcmp.eq.f32.partialorder %v3463, 8.507059e+37
    %v3465 = vand.u32 %v3305, 2147483648
    %v3466 = vor.u32 1.1754944e-38, %v3465
    %v3467 = vsel %vm3464, %v3466, %v3462
    %v3468 = vrcp.pop %v3308
    %v3469 = vmul.f32 %v3308, %v3468
    %v3470 = vsub.f32 1.0, %v3469
    %v3471 = vmul.f32 %v3468, %v3470
    %v3472 = vadd.f32 %v3468, %v3471
    %vm3473 = vweird.f32 %v3308
    %vm3474 = vweird.f32 %v3468
    %vm3475 = vmor %vm3473, %vm3474
    %v3476 = vsel %vm3475, %v3468, %v3472
    %v3477 = vand.u32 2147483647, %v3308
    %vm3478 = vcmp.eq.f32.partialorder %v3477, 8.507059e+37
    %v3479 = vand.u32 %v3308, 2147483648
    %v3480 = vor.u32 1.1754944e-38, %v3479
    %v3481 = vsel %vm3478, %v3480, %v3476
    %v3482 = vrcp.pop %v3311
    %v3483 = vmul.f32 %v3311, %v3482
    %v3484 = vsub.f32 1.0, %v3483
    %v3485 = vmul.f32 %v3482, %v3484
    %v3486 = vadd.f32 %v3482, %v3485
    %vm3487 = vweird.f32 %v3311
    %vm3488 = vweird.f32 %v3482
    %vm3489 = vmor %vm3487, %vm3488
    %v3490 = vsel %vm3489, %v3482, %v3486
    %v3491 = vand.u32 2147483647, %v3311
    %vm3492 = vcmp.eq.f32.partialorder %v3491, 8.507059e+37
    %v3493 = vand.u32 %v3311, 2147483648
    %v3494 = vor.u32 1.1754944e-38, %v3493
    %v3495 = vsel %vm3492, %v3494, %v3490
    %v3496 = vrcp.pop %v3314
    %v3497 = vmul.f32 %v3314, %v3496
    %v3498 = vsub.f32 1.0, %v3497
    %v3499 = vmul.f32 %v3496, %v3498
    %v3500 = vadd.f32 %v3496, %v3499
    %vm3501 = vweird.f32 %v3314
    %vm3502 = vweird.f32 %v3496
    %vm3503 = vmor %vm3501, %vm3502
    %v3504 = vsel %vm3503, %v3496, %v3500
    %v3505 = vand.u32 2147483647, %v3314
    %vm3506 = vcmp.eq.f32.partialorder %v3505, 8.507059e+37
    %v3507 = vand.u32 %v3314, 2147483648
    %v3508 = vor.u32 1.1754944e-38, %v3507
    %v3509 = vsel %vm3506, %v3508, %v3504
    %v3510 = vrcp.pop %v3317
    %v3511 = vmul.f32 %v3317, %v3510
    %v3512 = vsub.f32 1.0, %v3511
    %v3513 = vmul.f32 %v3510, %v3512
    %v3514 = vadd.f32 %v3510, %v3513
    %vm3515 = vweird.f32 %v3317
    %vm3516 = vweird.f32 %v3510
    %vm3517 = vmor %vm3515, %vm3516
    %v3518 = vsel %vm3517, %v3510, %v3514
    %v3519 = vand.u32 2147483647, %v3317
    %vm3520 = vcmp.eq.f32.partialorder %v3519, 8.507059e+37
    %v3521 = vand.u32 %v3317, 2147483648
    %v3522 = vor.u32 1.1754944e-38, %v3521
    %v3523 = vsel %vm3520, %v3522, %v3518
    %v3524 = vrcp.pop %v3320
    %v3525 = vmul.f32 %v3320, %v3524
    %v3526 = vsub.f32 1.0, %v3525
    %v3527 = vmul.f32 %v3524, %v3526
    %v3528 = vadd.f32 %v3524, %v3527
    %vm3529 = vweird.f32 %v3320
    %vm3530 = vweird.f32 %v3524
    %vm3531 = vmor %vm3529, %vm3530
    %v3532 = vsel %vm3531, %v3524, %v3528
    %v3533 = vand.u32 2147483647, %v3320
    %vm3534 = vcmp.eq.f32.partialorder %v3533, 8.507059e+37
    %v3535 = vand.u32 %v3320, 2147483648
    %v3536 = vor.u32 1.1754944e-38, %v3535
    %v3537 = vsel %vm3534, %v3536, %v3532
    %v3538 = vrcp.pop %v3323
    %v3539 = vmul.f32 %v3323, %v3538
    %v3540 = vsub.f32 1.0, %v3539
    %v3541 = vmul.f32 %v3538, %v3540
    %v3542 = vadd.f32 %v3538, %v3541
    %vm3543 = vweird.f32 %v3323
    %vm3544 = vweird.f32 %v3538
    %vm3545 = vmor %vm3543, %vm3544
    %v3546 = vsel %vm3545, %v3538, %v3542
    %v3547 = vand.u32 2147483647, %v3323
    %vm3548 = vcmp.eq.f32.partialorder %v3547, 8.507059e+37
    %v3549 = vand.u32 %v3323, 2147483648
    %v3550 = vor.u32 1.1754944e-38, %v3549
    %v3551 = vsel %vm3548, %v3550, %v3546
    %v3552 = vrcp.pop %v3326
    %v3553 = vmul.f32 %v3326, %v3552
    %v3554 = vsub.f32 1.0, %v3553
    %v3555 = vmul.f32 %v3552, %v3554
    %v3556 = vadd.f32 %v3552, %v3555
    %vm3557 = vweird.f32 %v3326
    %vm3558 = vweird.f32 %v3552
    %vm3559 = vmor %vm3557, %vm3558
    %v3560 = vsel %vm3559, %v3552, %v3556
    %v3561 = vand.u32 2147483647, %v3326
    %vm3562 = vcmp.eq.f32.partialorder %v3561, 8.507059e+37
    %v3563 = vand.u32 %v3326, 2147483648
    %v3564 = vor.u32 1.1754944e-38, %v3563
    %v3565 = vsel %vm3562, %v3564, %v3560
    %v3566 = vrcp.pop %v3329
    %v3567 = vmul.f32 %v3329, %v3566
    %v3568 = vsub.f32 1.0, %v3567
    %v3569 = vmul.f32 %v3566, %v3568
    %v3570 = vadd.f32 %v3566, %v3569
    %vm3571 = vweird.f32 %v3329
    %vm3572 = vweird.f32 %v3566
    %vm3573 = vmor %vm3571, %vm3572
    %v3574 = vsel %vm3573, %v3566, %v3570
    %v3575 = vand.u32 2147483647, %v3329
    %vm3576 = vcmp.eq.f32.partialorder %v3575, 8.507059e+37
    %v3577 = vand.u32 %v3329, 2147483648
    %v3578 = vor.u32 1.1754944e-38, %v3577
    %v3579 = vsel %vm3576, %v3578, %v3574
    %v3580 = vrcp.pop %v3332
    %v3581 = vmul.f32 %v3332, %v3580
    %v3582 = vsub.f32 1.0, %v3581
    %v3583 = vmul.f32 %v3580, %v3582
    %v3584 = vadd.f32 %v3580, %v3583
    %vm3585 = vweird.f32 %v3332
    %vm3586 = vweird.f32 %v3580
    %vm3587 = vmor %vm3585, %vm3586
    %v3588 = vsel %vm3587, %v3580, %v3584
    %v3589 = vand.u32 2147483647, %v3332
    %vm3590 = vcmp.eq.f32.partialorder %v3589, 8.507059e+37
    %v3591 = vand.u32 %v3332, 2147483648
    %v3592 = vor.u32 1.1754944e-38, %v3591
    %v3593 = vsel %vm3590, %v3592, %v3588
    %v3594 = vrcp.pop %v3335
    %v3595 = vmul.f32 %v3335, %v3594
    %v3596 = vsub.f32 1.0, %v3595
    %v3597 = vmul.f32 %v3594, %v3596
    %v3598 = vadd.f32 %v3594, %v3597
    %vm3599 = vweird.f32 %v3335
    %vm3600 = vweird.f32 %v3594
    %vm3601 = vmor %vm3599, %vm3600
    %v3602 = vsel %vm3601, %v3594, %v3598
    %v3603 = vand.u32 2147483647, %v3335
    %vm3604 = vcmp.eq.f32.partialorder %v3603, 8.507059e+37
    %v3605 = vand.u32 %v3335, 2147483648
    %v3606 = vor.u32 1.1754944e-38, %v3605
    %v3607 = vsel %vm3604, %v3606, %v3602
    %v3608 = vrcp.pop %v3338
    %v3609 = vmul.f32 %v3338, %v3608
    %v3610 = vsub.f32 1.0, %v3609
    %v3611 = vmul.f32 %v3608, %v3610
    %v3612 = vadd.f32 %v3608, %v3611
    %vm3613 = vweird.f32 %v3338
    %vm3614 = vweird.f32 %v3608
    %vm3615 = vmor %vm3613, %vm3614
    %v3616 = vsel %vm3615, %v3608, %v3612
    %v3617 = vand.u32 2147483647, %v3338
    %vm3618 = vcmp.eq.f32.partialorder %v3617, 8.507059e+37
    %v3619 = vand.u32 %v3338, 2147483648
    %v3620 = vor.u32 1.1754944e-38, %v3619
    %v3621 = vsel %vm3618, %v3620, %v3616
    %v3622 = vrcp.pop %v3341
    %v3623 = vmul.f32 %v3341, %v3622
    %v3624 = vsub.f32 1.0, %v3623
    %v3625 = vmul.f32 %v3622, %v3624
    %v3626 = vadd.f32 %v3622, %v3625
    %vm3627 = vweird.f32 %v3341
    %vm3628 = vweird.f32 %v3622
    %vm3629 = vmor %vm3627, %vm3628
    %v3630 = vsel %vm3629, %v3622, %v3626
    %v3631 = vand.u32 2147483647, %v3341
    %vm3632 = vcmp.eq.f32.partialorder %v3631, 8.507059e+37
    %v3633 = vand.u32 %v3341, 2147483648
    %v3634 = vor.u32 1.1754944e-38, %v3633
    %v3635 = vsel %vm3632, %v3634, %v3630
    %v3636 = vmul.f32 %v3238, %v3355
    %v3637 = vmul.f32 %v3240, %v3369
    %v3638 = vmul.f32 %v3242, %v3383
    %v3639 = vmul.f32 %v3244, %v3397
    %v3640 = vmul.f32 %v3246, %v3411
    %v3641 = vmul.f32 %v3248, %v3425
    %v3642 = vmul.f32 %v3250, %v3439
    %v3643 = vmul.f32 %v3252, %v3453
    %v3644 = vmul.f32 %v3254, %v3467
    %v3645 = vmul.f32 %v3256, %v3481
    %v3646 = vmul.f32 %v3258, %v3495
    %v3647 = vmul.f32 %v3260, %v3509
    %v3648 = vmul.f32 %v3262, %v3523
    %v3649 = vmul.f32 %v3264, %v3537
    %v3650 = vmul.f32 %v3266, %v3551
    %v3651 = vmul.f32 %v3268, %v3565
    %v3652 = vmul.f32 %v3270, %v3579
    %v3653 = vmul.f32 %v3272, %v3593
    %v3654 = vmul.f32 %v3274, %v3607
    %v3655 = vmul.f32 %v3276, %v3621
    %v3656 = vmul.f32 %v3278, %v3635
    %3664 = vrot.lane.b32.xlu0 %v317, 96
    %v3665 = vpop.permute.xlu0 %3664
    %3666 = vrot.lane.b32.xlu0 %v320, 96
    %v3667 = vpop.permute.xlu0 %3666
    %3668 = vrot.lane.b32.xlu0 %v323, 96
    %v3669 = vpop.permute.xlu0 %3668
    %3670 = vrot.lane.b32.xlu0 %v326, 96
    %v3671 = vpop.permute.xlu0 %3670
    %3672 = vrot.lane.b32.xlu0 %v329, 96
    %v3673 = vpop.permute.xlu0 %3672
    %3674 = vrot.lane.b32.xlu0 %v332, 96
    %v3675 = vpop.permute.xlu0 %3674
    %3676 = vrot.lane.b32.xlu0 %v335, 96
    %v3677 = vpop.permute.xlu0 %3676
    %v3686 = vsel %vm2010, %v3636, 0
    %v3689 = vsel %vm2010, %v3637, 0
    %v3692 = vsel %vm2010, %v3638, 0
    %v3695 = vsel %vm2010, %v3639, 0
    %v3698 = vsel %vm2010, %v3640, 0
    %v3701 = vsel %vm2010, %v3641, 0
    %v3704 = vsel %vm2010, %v3642, 0
    %v3707 = vsel %vm2010, %v3643, 0
    %v3710 = vsel %vm2010, %v3644, 0
    %v3713 = vsel %vm2010, %v3645, 0
    %v3716 = vsel %vm2010, %v3646, 0
    %v3719 = vsel %vm2010, %v3647, 0
    %v3722 = vsel %vm2010, %v3648, 0
    %v3725 = vsel %vm2010, %v3649, 0
    %v3728 = vsel %vm2010, %v3650, 0
    %v3731 = vsel %vm2010, %v3651, 0
    %v3734 = vsel %vm2010, %v3652, 0
    %v3737 = vsel %vm2010, %v3653, 0
    %v3740 = vsel %vm2010, %v3654, 0
    %v3743 = vsel %vm2010, %v3655, 0
    %v3746 = vsel %vm2010, %v3656, 0
    %3748 = vmatpush.msra.mxu0 0.0
    %3749 = vmatpush.msra.mxu0 0.0
    %3750 = vmatpush.msra.mxu0 0.0
    %3751 = vmatpush.msra.mxu0 0.0
    %3752 = vmatpush.msra.mxu0 0.0
    %3753 = vmatpush.msra.mxu0 0.0
    %3754 = vmatpush.msra.mxu0 0.0
    %3755 = vmatpush.msra.mxu0 0.0
    %3756 = vmatpush.msra.mxu0 0.0
    %3757 = vmatpush.msra.mxu0 %v3677
    %3758 = vmatpush.msra.mxu0 %v3675
    %3759 = vmatpush.msra.mxu0 %v3673
    %3760 = vmatpush.msra.mxu0 %v3671
    %3761 = vmatpush.msra.mxu0 %v3669
    %3762 = vmatpush.msra.mxu0 %v3667
    %3763 = vmatpush.msra.mxu0 %v3665
    %3764 = vmatmul.f32.gmra.mxu0 %v3686
    %v3765 = vpop.f32.mrf.mxu0
    %v3766 = vadd.f32 0.0, %v3765
    %3767 = vmatmul.f32.gmra.mxu0 %v3689
    %v3768 = vpop.f32.mrf.mxu0
    %v3769 = vadd.f32 0.0, %v3768
    %3770 = vmatmul.f32.gmra.mxu0 %v3692
    %v3771 = vpop.f32.mrf.mxu0
    %v3772 = vadd.f32 0.0, %v3771
    %3773 = vmatmul.f32.gmra.mxu0 %v3695
    %v3774 = vpop.f32.mrf.mxu0
    %v3775 = vadd.f32 0.0, %v3774
    %3776 = vmatmul.f32.gmra.mxu0 %v3698
    %v3777 = vpop.f32.mrf.mxu0
    %v3778 = vadd.f32 0.0, %v3777
    %3779 = vmatmul.f32.gmra.mxu0 %v3701
    %v3780 = vpop.f32.mrf.mxu0
    %v3781 = vadd.f32 0.0, %v3780
    %3782 = vmatmul.f32.gmra.mxu0 %v3704
    %v3783 = vpop.f32.mrf.mxu0
    %v3784 = vadd.f32 0.0, %v3783
    %3785 = vmatmul.f32.gmra.mxu0 %v3707
    %v3786 = vpop.f32.mrf.mxu0
    %v3787 = vadd.f32 0.0, %v3786
    %3788 = vmatmul.f32.gmra.mxu0 %v3710
    %v3789 = vpop.f32.mrf.mxu0
    %v3790 = vadd.f32 0.0, %v3789
    %3791 = vmatmul.f32.gmra.mxu0 %v3713
    %v3792 = vpop.f32.mrf.mxu0
    %v3793 = vadd.f32 0.0, %v3792
    %3794 = vmatmul.f32.gmra.mxu0 %v3716
    %v3795 = vpop.f32.mrf.mxu0
    %v3796 = vadd.f32 0.0, %v3795
    %3797 = vmatmul.f32.gmra.mxu0 %v3719
    %v3798 = vpop.f32.mrf.mxu0
    %v3799 = vadd.f32 0.0, %v3798
    %3800 = vmatmul.f32.gmra.mxu0 %v3722
    %v3801 = vpop.f32.mrf.mxu0
    %v3802 = vadd.f32 0.0, %v3801
    %3803 = vmatmul.f32.gmra.mxu0 %v3725
    %v3804 = vpop.f32.mrf.mxu0
    %v3805 = vadd.f32 0.0, %v3804
    %3806 = vmatmul.f32.gmra.mxu0 %v3728
    %v3807 = vpop.f32.mrf.mxu0
    %v3808 = vadd.f32 0.0, %v3807
    %3809 = vmatmul.f32.gmra.mxu0 %v3731
    %v3810 = vpop.f32.mrf.mxu0
    %v3811 = vadd.f32 0.0, %v3810
    %3812 = vmatmul.f32.gmra.mxu0 %v3734
    %v3813 = vpop.f32.mrf.mxu0
    %v3814 = vadd.f32 0.0, %v3813
    %3815 = vmatmul.f32.gmra.mxu0 %v3737
    %v3816 = vpop.f32.mrf.mxu0
    %v3817 = vadd.f32 0.0, %v3816
    %3818 = vmatmul.f32.gmra.mxu0 %v3740
    %v3819 = vpop.f32.mrf.mxu0
    %v3820 = vadd.f32 0.0, %v3819
    %3821 = vmatmul.f32.gmra.mxu0 %v3743
    %v3822 = vpop.f32.mrf.mxu0
    %v3823 = vadd.f32 0.0, %v3822
    %3824 = vmatmul.f32.gmra.mxu0 %v3746
    %v3825 = vpop.f32.mrf.mxu0
    %v3826 = vadd.f32 0.0, %v3825
    %3827 = vdwg.mxu0
    %3849 = vrot.lane.b32.xlu0 %v3766, 32
    %v3850 = vpop.permute.xlu0 %3849
    %3851 = vrot.lane.b32.xlu0 %v3769, 32
    %v3852 = vpop.permute.xlu0 %3851
    %3853 = vrot.lane.b32.xlu0 %v3772, 32
    %v3854 = vpop.permute.xlu0 %3853
    %3855 = vrot.lane.b32.xlu0 %v3775, 32
    %v3856 = vpop.permute.xlu0 %3855
    %3857 = vrot.lane.b32.xlu0 %v3778, 32
    %v3858 = vpop.permute.xlu0 %3857
    %3859 = vrot.lane.b32.xlu0 %v3781, 32
    %v3860 = vpop.permute.xlu0 %3859
    %3861 = vrot.lane.b32.xlu0 %v3784, 32
    %v3862 = vpop.permute.xlu0 %3861
    %3863 = vrot.lane.b32.xlu0 %v3787, 32
    %v3864 = vpop.permute.xlu0 %3863
    %3865 = vrot.lane.b32.xlu0 %v3790, 32
    %v3866 = vpop.permute.xlu0 %3865
    %3867 = vrot.lane.b32.xlu0 %v3793, 32
    %v3868 = vpop.permute.xlu0 %3867
    %3869 = vrot.lane.b32.xlu0 %v3796, 32
    %v3870 = vpop.permute.xlu0 %3869
    %3871 = vrot.lane.b32.xlu0 %v3799, 32
    %v3872 = vpop.permute.xlu0 %3871
    %3873 = vrot.lane.b32.xlu0 %v3802, 32
    %v3874 = vpop.permute.xlu0 %3873
    %3875 = vrot.lane.b32.xlu0 %v3805, 32
    %v3876 = vpop.permute.xlu0 %3875
    %3877 = vrot.lane.b32.xlu0 %v3808, 32
    %v3878 = vpop.permute.xlu0 %3877
    %3879 = vrot.lane.b32.xlu0 %v3811, 32
    %v3880 = vpop.permute.xlu0 %3879
    %3881 = vrot.lane.b32.xlu0 %v3814, 32
    %v3882 = vpop.permute.xlu0 %3881
    %3883 = vrot.lane.b32.xlu0 %v3817, 32
    %v3884 = vpop.permute.xlu0 %3883
    %3885 = vrot.lane.b32.xlu0 %v3820, 32
    %v3886 = vpop.permute.xlu0 %3885
    %3887 = vrot.lane.b32.xlu0 %v3823, 32
    %v3888 = vpop.permute.xlu0 %3887
    %3889 = vrot.lane.b32.xlu0 %v3826, 32
    %v3890 = vpop.permute.xlu0 %3889
    %v3912 = vsub.f32 %v401, %v3850
    %v3913 = vsub.f32 %v404, %v3852
    %v3914 = vsub.f32 %v407, %v3854
    %v3915 = vsub.f32 %v410, %v3856
    %v3916 = vsub.f32 %v413, %v3858
    %v3917 = vsub.f32 %v416, %v3860
    %v3918 = vsub.f32 %v419, %v3862
    %v3919 = vsub.f32 %v422, %v3864
    %v3920 = vsub.f32 %v425, %v3866
    %v3921 = vsub.f32 %v428, %v3868
    %v3922 = vsub.f32 %v431, %v3870
    %v3923 = vsub.f32 %v434, %v3872
    %v3924 = vsub.f32 %v437, %v3874
    %v3925 = vsub.f32 %v440, %v3876
    %v3926 = vsub.f32 %v443, %v3878
    %v3927 = vsub.f32 %v446, %v3880
    %v3928 = vsub.f32 %v449, %v3882
    %v3929 = vsub.f32 %v452, %v3884
    %v3930 = vsub.f32 %v455, %v3886
    %v3931 = vsub.f32 %v458, %v3888
    %v3932 = vsub.f32 %v461, %v3890
    %v3933 = vmul.f32 %v3912, %v3912
    %v3934 = vmul.f32 %v3913, %v3913
    %v3935 = vmul.f32 %v3914, %v3914
    %v3936 = vmul.f32 %v3915, %v3915
    %v3937 = vmul.f32 %v3916, %v3916
    %v3938 = vmul.f32 %v3917, %v3917
    %v3939 = vmul.f32 %v3918, %v3918
    %v3940 = vmul.f32 %v3919, %v3919
    %v3941 = vmul.f32 %v3920, %v3920
    %v3942 = vmul.f32 %v3921, %v3921
    %v3943 = vmul.f32 %v3922, %v3922
    %v3944 = vmul.f32 %v3923, %v3923
    %v3945 = vmul.f32 %v3924, %v3924
    %v3946 = vmul.f32 %v3925, %v3925
    %v3947 = vmul.f32 %v3926, %v3926
    %v3948 = vmul.f32 %v3927, %v3927
    %v3949 = vmul.f32 %v3928, %v3928
    %v3950 = vmul.f32 %v3929, %v3929
    %v3951 = vmul.f32 %v3930, %v3930
    %v3952 = vmul.f32 %v3931, %v3931
    %v3953 = vmul.f32 %v3932, %v3932
    %3975 = vrot.lane.b32.xlu0 %v3933, 96
    %v3976 = vpop.permute.xlu0 %3975
    %3977 = vrot.lane.b32.xlu0 %v3934, 96
    %v3978 = vpop.permute.xlu0 %3977
    %3979 = vrot.lane.b32.xlu0 %v3935, 96
    %v3980 = vpop.permute.xlu0 %3979
    %3981 = vrot.lane.b32.xlu0 %v3936, 96
    %v3982 = vpop.permute.xlu0 %3981
    %3983 = vrot.lane.b32.xlu0 %v3937, 96
    %v3984 = vpop.permute.xlu0 %3983
    %3985 = vrot.lane.b32.xlu0 %v3938, 96
    %v3986 = vpop.permute.xlu0 %3985
    %3987 = vrot.lane.b32.xlu0 %v3939, 96
    %v3988 = vpop.permute.xlu0 %3987
    %3989 = vrot.lane.b32.xlu0 %v3940, 96
    %v3990 = vpop.permute.xlu0 %3989
    %3991 = vrot.lane.b32.xlu0 %v3941, 96
    %v3992 = vpop.permute.xlu0 %3991
    %3993 = vrot.lane.b32.xlu0 %v3942, 96
    %v3994 = vpop.permute.xlu0 %3993
    %3995 = vrot.lane.b32.xlu0 %v3943, 96
    %v3996 = vpop.permute.xlu0 %3995
    %3997 = vrot.lane.b32.xlu0 %v3944, 96
    %v3998 = vpop.permute.xlu0 %3997
    %3999 = vrot.lane.b32.xlu0 %v3945, 96
    %v4000 = vpop.permute.xlu0 %3999
    %4001 = vrot.lane.b32.xlu0 %v3946, 96
    %v4002 = vpop.permute.xlu0 %4001
    %4003 = vrot.lane.b32.xlu0 %v3947, 96
    %v4004 = vpop.permute.xlu0 %4003
    %4005 = vrot.lane.b32.xlu0 %v3948, 96
    %v4006 = vpop.permute.xlu0 %4005
    %4007 = vrot.lane.b32.xlu0 %v3949, 96
    %v4008 = vpop.permute.xlu0 %4007
    %4009 = vrot.lane.b32.xlu0 %v3950, 96
    %v4010 = vpop.permute.xlu0 %4009
    %4011 = vrot.lane.b32.xlu0 %v3951, 96
    %v4012 = vpop.permute.xlu0 %4011
    %4013 = vrot.lane.b32.xlu0 %v3952, 96
    %v4014 = vpop.permute.xlu0 %4013
    %4015 = vrot.lane.b32.xlu0 %v3953, 96
    %v4016 = vpop.permute.xlu0 %4015
    %v4038 = vsel %vm463, %v3976, 0.0
    %4039 = vadd.xlane.f32.xlu0 %v4038
    %v4040 = vpop.xlane.xlu0 %4039
    %v4041 = vsel %vm463, %v3978, 0.0
    %4042 = vadd.xlane.f32.xlu0 %v4041
    %v4043 = vpop.xlane.xlu0 %4042
    %v4044 = vsel %vm463, %v3980, 0.0
    %4045 = vadd.xlane.f32.xlu0 %v4044
    %v4046 = vpop.xlane.xlu0 %4045
    %v4047 = vsel %vm463, %v3982, 0.0
    %4048 = vadd.xlane.f32.xlu0 %v4047
    %v4049 = vpop.xlane.xlu0 %4048
    %v4050 = vsel %vm463, %v3984, 0.0
    %4051 = vadd.xlane.f32.xlu0 %v4050
    %v4052 = vpop.xlane.xlu0 %4051
    %v4053 = vsel %vm463, %v3986, 0.0
    %4054 = vadd.xlane.f32.xlu0 %v4053
    %v4055 = vpop.xlane.xlu0 %4054
    %v4056 = vsel %vm463, %v3988, 0.0
    %4057 = vadd.xlane.f32.xlu0 %v4056
    %v4058 = vpop.xlane.xlu0 %4057
    %v4059 = vsel %vm463, %v3990, 0.0
    %4060 = vadd.xlane.f32.xlu0 %v4059
    %v4061 = vpop.xlane.xlu0 %4060
    %v4062 = vsel %vm463, %v3992, 0.0
    %4063 = vadd.xlane.f32.xlu0 %v4062
    %v4064 = vpop.xlane.xlu0 %4063
    %v4065 = vsel %vm463, %v3994, 0.0
    %4066 = vadd.xlane.f32.xlu0 %v4065
    %v4067 = vpop.xlane.xlu0 %4066
    %v4068 = vsel %vm463, %v3996, 0.0
    %4069 = vadd.xlane.f32.xlu0 %v4068
    %v4070 = vpop.xlane.xlu0 %4069
    %v4071 = vsel %vm463, %v3998, 0.0
    %4072 = vadd.xlane.f32.xlu0 %v4071
    %v4073 = vpop.xlane.xlu0 %4072
    %v4074 = vsel %vm463, %v4000, 0.0
    %4075 = vadd.xlane.f32.xlu0 %v4074
    %v4076 = vpop.xlane.xlu0 %4075
    %v4077 = vsel %vm463, %v4002, 0.0
    %4078 = vadd.xlane.f32.xlu0 %v4077
    %v4079 = vpop.xlane.xlu0 %4078
    %v4080 = vsel %vm463, %v4004, 0.0
    %4081 = vadd.xlane.f32.xlu0 %v4080
    %v4082 = vpop.xlane.xlu0 %4081
    %v4083 = vsel %vm463, %v4006, 0.0
    %4084 = vadd.xlane.f32.xlu0 %v4083
    %v4085 = vpop.xlane.xlu0 %4084
    %v4086 = vsel %vm463, %v4008, 0.0
    %4087 = vadd.xlane.f32.xlu0 %v4086
    %v4088 = vpop.xlane.xlu0 %4087
    %v4089 = vsel %vm463, %v4010, 0.0
    %4090 = vadd.xlane.f32.xlu0 %v4089
    %v4091 = vpop.xlane.xlu0 %4090
    %v4092 = vsel %vm463, %v4012, 0.0
    %4093 = vadd.xlane.f32.xlu0 %v4092
    %v4094 = vpop.xlane.xlu0 %4093
    %v4095 = vsel %vm463, %v4014, 0.0
    %4096 = vadd.xlane.f32.xlu0 %v4095
    %v4097 = vpop.xlane.xlu0 %4096
    %v4098 = vsel %vm463, %v4016, 0.0
    %4099 = vadd.xlane.f32.xlu0 %v4098
    %v4100 = vpop.xlane.xlu0 %4099
    %v4122 = vperm.slane %v4040, %v1845
    %v4123 = vperm.slane %v4043, %v2981
    %v4124 = vsel %vm2983, %v4123, %v4122
    %v4125 = vperm.slane %v4046, %v2985
    %v4126 = vsel %vm2987, %v4125, %v4124
    %v4127 = vperm.slane %v4049, %v2989
    %v4128 = vsel %vm2991, %v4127, %v4126
    %v4129 = vperm.slane %v4052, %v2993
    %v4130 = vsel %vm2995, %v4129, %v4128
    %v4131 = vperm.slane %v4055, %v2997
    %v4132 = vsel %vm2999, %v4131, %v4130
    %v4133 = vperm.slane %v4058, %v3001
    %v4134 = vsel %vm3003, %v4133, %v4132
    %v4135 = vperm.slane %v4061, %v1845
    %v4136 = vperm.slane %v4064, %v2981
    %v4137 = vsel %vm2983, %v4136, %v4135
    %v4138 = vperm.slane %v4067, %v2985
    %v4139 = vsel %vm2987, %v4138, %v4137
    %v4140 = vperm.slane %v4070, %v2989
    %v4141 = vsel %vm2991, %v4140, %v4139
    %v4142 = vperm.slane %v4073, %v2993
    %v4143 = vsel %vm2995, %v4142, %v4141
    %v4144 = vperm.slane %v4076, %v2997
    %v4145 = vsel %vm2999, %v4144, %v4143
    %v4146 = vperm.slane %v4079, %v3001
    %v4147 = vsel %vm3003, %v4146, %v4145
    %v4148 = vperm.slane %v4082, %v1845
    %v4149 = vperm.slane %v4085, %v2981
    %v4150 = vsel %vm2983, %v4149, %v4148
    %v4151 = vperm.slane %v4088, %v2985
    %v4152 = vsel %vm2987, %v4151, %v4150
    %v4153 = vperm.slane %v4091, %v2989
    %v4154 = vsel %vm2991, %v4153, %v4152
    %v4155 = vperm.slane %v4094, %v2993
    %v4156 = vsel %vm2995, %v4155, %v4154
    %v4157 = vperm.slane %v4097, %v2997
    %v4158 = vsel %vm2999, %v4157, %v4156
    %v4159 = vperm.slane %v4100, %v3001
    %v4160 = vsel %vm3003, %v4159, %v4158
    %v4161 = vsel %vm3031, %v4147, %v4134
    %v4162 = vsel %vm3033, %v4160, %v4161
    %v4164 = vsel %vm3036, %v4162, 0.0
    %4165 = vadd.xlane.f32.xlu0 %v4164
    %v4166 = vpop.xlane.xlu0 %4165
    %v4167 = vsub.f32 0.0, %v4166
    %v4168 = vmul.f32 %v4167, %v3047
    %vm4169 = vcmp.eq.s32.totalorder %v1845, 1
    %v4170 = vsel %vm4169, %v4168, 0.0
    %v4171 = vadd.f32 %v3051, %v4170
    %v4173 = vsel %vm463, %v1781, 0
    %v4176 = vsel %vm463, %v1782, 0
    %v4179 = vsel %vm463, %v1783, 0
    %v4182 = vsel %vm463, %v1784, 0
    %v4185 = vsel %vm463, %v1785, 0
    %v4188 = vsel %vm463, %v1786, 0
    %v4191 = vsel %vm463, %v1787, 0
    %4193 = vmatpush.xpose.msra.mxu0 0.0
    %4194 = vmatpush.xpose.msra.mxu0 0.0
    %4195 = vmatpush.xpose.msra.mxu0 0.0
    %4196 = vmatpush.xpose.msra.mxu0 0.0
    %4197 = vmatpush.xpose.msra.mxu0 0.0
    %4198 = vmatpush.xpose.msra.mxu0 0.0
    %4199 = vmatpush.xpose.msra.mxu0 0.0
    %4200 = vmatpush.xpose.msra.mxu0 0.0
    %4201 = vmatpush.xpose.msra.mxu0 0.0
    %4202 = vmatpush.xpose.msra.mxu0 %v4191
    %4203 = vmatpush.xpose.msra.mxu0 %v4188
    %4204 = vmatpush.xpose.msra.mxu0 %v4185
    %4205 = vmatpush.xpose.msra.mxu0 %v4182
    %4206 = vmatpush.xpose.msra.mxu0 %v4179
    %4207 = vmatpush.xpose.msra.mxu0 %v4176
    %4208 = vmatpush.xpose.msra.mxu0 %v4173
    %4209 = vmatmul.f32.gmra.mxu0 %v1847
    %v4210 = vpop.f32.mrf.mxu0
    %v4211 = vadd.f32 0.0, %v4210
    %4212 = vmatmul.f32.gmra.mxu0 %v1850
    %v4213 = vpop.f32.mrf.mxu0
    %v4214 = vadd.f32 0.0, %v4213
    %4215 = vmatmul.f32.gmra.mxu0 %v1853
    %v4216 = vpop.f32.mrf.mxu0
    %v4217 = vadd.f32 0.0, %v4216
    %4218 = vmatmul.f32.gmra.mxu0 %v1856
    %v4219 = vpop.f32.mrf.mxu0
    %v4220 = vadd.f32 0.0, %v4219
    %4221 = vmatmul.f32.gmra.mxu0 %v1859
    %v4222 = vpop.f32.mrf.mxu0
    %v4223 = vadd.f32 0.0, %v4222
    %4224 = vmatmul.f32.gmra.mxu0 %v1862
    %v4225 = vpop.f32.mrf.mxu0
    %v4226 = vadd.f32 0.0, %v4225
    %4227 = vmatmul.f32.gmra.mxu0 %v1865
    %v4228 = vpop.f32.mrf.mxu0
    %v4229 = vadd.f32 0.0, %v4228
    %4230 = vmatmul.f32.gmra.mxu0 %v1868
    %v4231 = vpop.f32.mrf.mxu0
    %v4232 = vadd.f32 0.0, %v4231
    %4233 = vmatmul.f32.gmra.mxu0 %v1871
    %v4234 = vpop.f32.mrf.mxu0
    %v4235 = vadd.f32 0.0, %v4234
    %4236 = vmatmul.f32.gmra.mxu0 %v1874
    %v4237 = vpop.f32.mrf.mxu0
    %v4238 = vadd.f32 0.0, %v4237
    %4239 = vmatmul.f32.gmra.mxu0 %v1877
    %v4240 = vpop.f32.mrf.mxu0
    %v4241 = vadd.f32 0.0, %v4240
    %4242 = vmatmul.f32.gmra.mxu0 %v1880
    %v4243 = vpop.f32.mrf.mxu0
    %v4244 = vadd.f32 0.0, %v4243
    %4245 = vmatmul.f32.gmra.mxu0 %v1883
    %v4246 = vpop.f32.mrf.mxu0
    %v4247 = vadd.f32 0.0, %v4246
    %4248 = vmatmul.f32.gmra.mxu0 %v1886
    %v4249 = vpop.f32.mrf.mxu0
    %v4250 = vadd.f32 0.0, %v4249
    %4251 = vmatmul.f32.gmra.mxu0 %v1889
    %v4252 = vpop.f32.mrf.mxu0
    %v4253 = vadd.f32 0.0, %v4252
    %4254 = vmatmul.f32.gmra.mxu0 %v1892
    %v4255 = vpop.f32.mrf.mxu0
    %v4256 = vadd.f32 0.0, %v4255
    %4257 = vmatmul.f32.gmra.mxu0 %v1895
    %v4258 = vpop.f32.mrf.mxu0
    %v4259 = vadd.f32 0.0, %v4258
    %4260 = vmatmul.f32.gmra.mxu0 %v1898
    %v4261 = vpop.f32.mrf.mxu0
    %v4262 = vadd.f32 0.0, %v4261
    %4263 = vmatmul.f32.gmra.mxu0 %v1901
    %v4264 = vpop.f32.mrf.mxu0
    %v4265 = vadd.f32 0.0, %v4264
    %4266 = vmatmul.f32.gmra.mxu0 %v1904
    %v4267 = vpop.f32.mrf.mxu0
    %v4268 = vadd.f32 0.0, %v4267
    %4269 = vmatmul.f32.gmra.mxu0 %v1907
    %v4270 = vpop.f32.mrf.mxu0
    %v4271 = vadd.f32 0.0, %v4270
    %4272 = vdwg.mxu0
    %v4273 = vsel %vm2010, %v4211, -inf
    %4274 = vmax.xlane.f32.xlu0 %v4273
    %v4275 = vpop.xlane.xlu0 %4274
    %v4276 = vsel %vm2010, %v4214, -inf
    %4277 = vmax.xlane.f32.xlu0 %v4276
    %v4278 = vpop.xlane.xlu0 %4277
    %v4279 = vsel %vm2010, %v4217, -inf
    %4280 = vmax.xlane.f32.xlu0 %v4279
    %v4281 = vpop.xlane.xlu0 %4280
    %v4282 = vsel %vm2010, %v4220, -inf
    %4283 = vmax.xlane.f32.xlu0 %v4282
    %v4284 = vpop.xlane.xlu0 %4283
    %v4285 = vsel %vm2010, %v4223, -inf
    %4286 = vmax.xlane.f32.xlu0 %v4285
    %v4287 = vpop.xlane.xlu0 %4286
    %v4288 = vsel %vm2010, %v4226, -inf
    %4289 = vmax.xlane.f32.xlu0 %v4288
    %v4290 = vpop.xlane.xlu0 %4289
    %v4291 = vsel %vm2010, %v4229, -inf
    %4292 = vmax.xlane.f32.xlu0 %v4291
    %v4293 = vpop.xlane.xlu0 %4292
    %v4294 = vsel %vm2010, %v4232, -inf
    %4295 = vmax.xlane.f32.xlu0 %v4294
    %v4296 = vpop.xlane.xlu0 %4295
    %v4297 = vsel %vm2010, %v4235, -inf
    %4298 = vmax.xlane.f32.xlu0 %v4297
    %v4299 = vpop.xlane.xlu0 %4298
    %v4300 = vsel %vm2010, %v4238, -inf
    %4301 = vmax.xlane.f32.xlu0 %v4300
    %v4302 = vpop.xlane.xlu0 %4301
    %v4303 = vsel %vm2010, %v4241, -inf
    %4304 = vmax.xlane.f32.xlu0 %v4303
    %v4305 = vpop.xlane.xlu0 %4304
    %v4306 = vsel %vm2010, %v4244, -inf
    %4307 = vmax.xlane.f32.xlu0 %v4306
    %v4308 = vpop.xlane.xlu0 %4307
    %v4309 = vsel %vm2010, %v4247, -inf
    %4310 = vmax.xlane.f32.xlu0 %v4309
    %v4311 = vpop.xlane.xlu0 %4310
    %v4312 = vsel %vm2010, %v4250, -inf
    %4313 = vmax.xlane.f32.xlu0 %v4312
    %v4314 = vpop.xlane.xlu0 %4313
    %v4315 = vsel %vm2010, %v4253, -inf
    %4316 = vmax.xlane.f32.xlu0 %v4315
    %v4317 = vpop.xlane.xlu0 %4316
    %v4318 = vsel %vm2010, %v4256, -inf
    %4319 = vmax.xlane.f32.xlu0 %v4318
    %v4320 = vpop.xlane.xlu0 %4319
    %v4321 = vsel %vm2010, %v4259, -inf
    %4322 = vmax.xlane.f32.xlu0 %v4321
    %v4323 = vpop.xlane.xlu0 %4322
    %v4324 = vsel %vm2010, %v4262, -inf
    %4325 = vmax.xlane.f32.xlu0 %v4324
    %v4326 = vpop.xlane.xlu0 %4325
    %v4327 = vsel %vm2010, %v4265, -inf
    %4328 = vmax.xlane.f32.xlu0 %v4327
    %v4329 = vpop.xlane.xlu0 %4328
    %v4330 = vsel %vm2010, %v4268, -inf
    %4331 = vmax.xlane.f32.xlu0 %v4330
    %v4332 = vpop.xlane.xlu0 %4331
    %v4333 = vsel %vm2010, %v4271, -inf
    %4334 = vmax.xlane.f32.xlu0 %v4333
    %v4335 = vpop.xlane.xlu0 %4334
    %v4336 = vsub.f32 %v4211, %v4275
    %v4337 = vsub.f32 %v4214, %v4278
    %v4338 = vsub.f32 %v4217, %v4281
    %v4339 = vsub.f32 %v4220, %v4284
    %v4340 = vsub.f32 %v4223, %v4287
    %v4341 = vsub.f32 %v4226, %v4290
    %v4342 = vsub.f32 %v4229, %v4293
    %v4343 = vsub.f32 %v4232, %v4296
    %v4344 = vsub.f32 %v4235, %v4299
    %v4345 = vsub.f32 %v4238, %v4302
    %v4346 = vsub.f32 %v4241, %v4305
    %v4347 = vsub.f32 %v4244, %v4308
    %v4348 = vsub.f32 %v4247, %v4311
    %v4349 = vsub.f32 %v4250, %v4314
    %v4350 = vsub.f32 %v4253, %v4317
    %v4351 = vsub.f32 %v4256, %v4320
    %v4352 = vsub.f32 %v4259, %v4323
    %v4353 = vsub.f32 %v4262, %v4326
    %v4354 = vsub.f32 %v4265, %v4329
    %v4355 = vsub.f32 %v4268, %v4332
    %v4356 = vsub.f32 %v4271, %v4335
    %v4357 = vmul.f32 %v4336, 1.442695
    %v4358 = vpow.pop %v4357
    %v4359 = vmul.f32 %v4337, 1.442695
    %v4360 = vpow.pop %v4359
    %v4361 = vmul.f32 %v4338, 1.442695
    %v4362 = vpow.pop %v4361
    %v4363 = vmul.f32 %v4339, 1.442695
    %v4364 = vpow.pop %v4363
    %v4365 = vmul.f32 %v4340, 1.442695
    %v4366 = vpow.pop %v4365
    %v4367 = vmul.f32 %v4341, 1.442695
    %v4368 = vpow.pop %v4367
    %v4369 = vmul.f32 %v4342, 1.442695
    %v4370 = vpow.pop %v4369
    %v4371 = vmul.f32 %v4343, 1.442695
    %v4372 = vpow.pop %v4371
    %v4373 = vmul.f32 %v4344, 1.442695
    %v4374 = vpow.pop %v4373
    %v4375 = vmul.f32 %v4345, 1.442695
    %v4376 = vpow.pop %v4375
    %v4377 = vmul.f32 %v4346, 1.442695
    %v4378 = vpow.pop %v4377
    %v4379 = vmul.f32 %v4347, 1.442695
    %v4380 = vpow.pop %v4379
    %v4381 = vmul.f32 %v4348, 1.442695
    %v4382 = vpow.pop %v4381
    %v4383 = vmul.f32 %v4349, 1.442695
    %v4384 = vpow.pop %v4383
    %v4385 = vmul.f32 %v4350, 1.442695
    %v4386 = vpow.pop %v4385
    %v4387 = vmul.f32 %v4351, 1.442695
    %v4388 = vpow.pop %v4387
    %v4389 = vmul.f32 %v4352, 1.442695
    %v4390 = vpow.pop %v4389
    %v4391 = vmul.f32 %v4353, 1.442695
    %v4392 = vpow.pop %v4391
    %v4393 = vmul.f32 %v4354, 1.442695
    %v4394 = vpow.pop %v4393
    %v4395 = vmul.f32 %v4355, 1.442695
    %v4396 = vpow.pop %v4395
    %v4397 = vmul.f32 %v4356, 1.442695
    %v4398 = vpow.pop %v4397
    %v4399 = vsel %vm2010, %v4358, 0.0
    %4400 = vadd.xlane.f32.xlu0 %v4399
    %v4401 = vpop.xlane.xlu0 %4400
    %v4402 = vsel %vm2010, %v4360, 0.0
    %4403 = vadd.xlane.f32.xlu0 %v4402
    %v4404 = vpop.xlane.xlu0 %4403
    %v4405 = vsel %vm2010, %v4362, 0.0
    %4406 = vadd.xlane.f32.xlu0 %v4405
    %v4407 = vpop.xlane.xlu0 %4406
    %v4408 = vsel %vm2010, %v4364, 0.0
    %4409 = vadd.xlane.f32.xlu0 %v4408
    %v4410 = vpop.xlane.xlu0 %4409
    %v4411 = vsel %vm2010, %v4366, 0.0
    %4412 = vadd.xlane.f32.xlu0 %v4411
    %v4413 = vpop.xlane.xlu0 %4412
    %v4414 = vsel %vm2010, %v4368, 0.0
    %4415 = vadd.xlane.f32.xlu0 %v4414
    %v4416 = vpop.xlane.xlu0 %4415
    %v4417 = vsel %vm2010, %v4370, 0.0
    %4418 = vadd.xlane.f32.xlu0 %v4417
    %v4419 = vpop.xlane.xlu0 %4418
    %v4420 = vsel %vm2010, %v4372, 0.0
    %4421 = vadd.xlane.f32.xlu0 %v4420
    %v4422 = vpop.xlane.xlu0 %4421
    %v4423 = vsel %vm2010, %v4374, 0.0
    %4424 = vadd.xlane.f32.xlu0 %v4423
    %v4425 = vpop.xlane.xlu0 %4424
    %v4426 = vsel %vm2010, %v4376, 0.0
    %4427 = vadd.xlane.f32.xlu0 %v4426
    %v4428 = vpop.xlane.xlu0 %4427
    %v4429 = vsel %vm2010, %v4378, 0.0
    %4430 = vadd.xlane.f32.xlu0 %v4429
    %v4431 = vpop.xlane.xlu0 %4430
    %v4432 = vsel %vm2010, %v4380, 0.0
    %4433 = vadd.xlane.f32.xlu0 %v4432
    %v4434 = vpop.xlane.xlu0 %4433
    %v4435 = vsel %vm2010, %v4382, 0.0
    %4436 = vadd.xlane.f32.xlu0 %v4435
    %v4437 = vpop.xlane.xlu0 %4436
    %v4438 = vsel %vm2010, %v4384, 0.0
    %4439 = vadd.xlane.f32.xlu0 %v4438
    %v4440 = vpop.xlane.xlu0 %4439
    %v4441 = vsel %vm2010, %v4386, 0.0
    %4442 = vadd.xlane.f32.xlu0 %v4441
    %v4443 = vpop.xlane.xlu0 %4442
    %v4444 = vsel %vm2010, %v4388, 0.0
    %4445 = vadd.xlane.f32.xlu0 %v4444
    %v4446 = vpop.xlane.xlu0 %4445
    %v4447 = vsel %vm2010, %v4390, 0.0
    %4448 = vadd.xlane.f32.xlu0 %v4447
    %v4449 = vpop.xlane.xlu0 %4448
    %v4450 = vsel %vm2010, %v4392, 0.0
    %4451 = vadd.xlane.f32.xlu0 %v4450
    %v4452 = vpop.xlane.xlu0 %4451
    %v4453 = vsel %vm2010, %v4394, 0.0
    %4454 = vadd.xlane.f32.xlu0 %v4453
    %v4455 = vpop.xlane.xlu0 %4454
    %v4456 = vsel %vm2010, %v4396, 0.0
    %4457 = vadd.xlane.f32.xlu0 %v4456
    %v4458 = vpop.xlane.xlu0 %4457
    %v4459 = vsel %vm2010, %v4398, 0.0
    %4460 = vadd.xlane.f32.xlu0 %v4459
    %v4461 = vpop.xlane.xlu0 %4460
    %v4462 = vrcp.pop %v4401
    %v4463 = vmul.f32 %v4401, %v4462
    %v4464 = vsub.f32 1.0, %v4463
    %v4465 = vmul.f32 %v4462, %v4464
    %v4466 = vadd.f32 %v4462, %v4465
    %vm4467 = vweird.f32 %v4401
    %vm4468 = vweird.f32 %v4462
    %vm4469 = vmor %vm4467, %vm4468
    %v4470 = vsel %vm4469, %v4462, %v4466
    %v4471 = vand.u32 2147483647, %v4401
    %vm4472 = vcmp.eq.f32.partialorder %v4471, 8.507059e+37
    %v4473 = vand.u32 %v4401, 2147483648
    %v4474 = vor.u32 1.1754944e-38, %v4473
    %v4475 = vsel %vm4472, %v4474, %v4470
    %v4476 = vrcp.pop %v4404
    %v4477 = vmul.f32 %v4404, %v4476
    %v4478 = vsub.f32 1.0, %v4477
    %v4479 = vmul.f32 %v4476, %v4478
    %v4480 = vadd.f32 %v4476, %v4479
    %vm4481 = vweird.f32 %v4404
    %vm4482 = vweird.f32 %v4476
    %vm4483 = vmor %vm4481, %vm4482
    %v4484 = vsel %vm4483, %v4476, %v4480
    %v4485 = vand.u32 2147483647, %v4404
    %vm4486 = vcmp.eq.f32.partialorder %v4485, 8.507059e+37
    %v4487 = vand.u32 %v4404, 2147483648
    %v4488 = vor.u32 1.1754944e-38, %v4487
    %v4489 = vsel %vm4486, %v4488, %v4484
    %v4490 = vrcp.pop %v4407
    %v4491 = vmul.f32 %v4407, %v4490
    %v4492 = vsub.f32 1.0, %v4491
    %v4493 = vmul.f32 %v4490, %v4492
    %v4494 = vadd.f32 %v4490, %v4493
    %vm4495 = vweird.f32 %v4407
    %vm4496 = vweird.f32 %v4490
    %vm4497 = vmor %vm4495, %vm4496
    %v4498 = vsel %vm4497, %v4490, %v4494
    %v4499 = vand.u32 2147483647, %v4407
    %vm4500 = vcmp.eq.f32.partialorder %v4499, 8.507059e+37
    %v4501 = vand.u32 %v4407, 2147483648
    %v4502 = vor.u32 1.1754944e-38, %v4501
    %v4503 = vsel %vm4500, %v4502, %v4498
    %v4504 = vrcp.pop %v4410
    %v4505 = vmul.f32 %v4410, %v4504
    %v4506 = vsub.f32 1.0, %v4505
    %v4507 = vmul.f32 %v4504, %v4506
    %v4508 = vadd.f32 %v4504, %v4507
    %vm4509 = vweird.f32 %v4410
    %vm4510 = vweird.f32 %v4504
    %vm4511 = vmor %vm4509, %vm4510
    %v4512 = vsel %vm4511, %v4504, %v4508
    %v4513 = vand.u32 2147483647, %v4410
    %vm4514 = vcmp.eq.f32.partialorder %v4513, 8.507059e+37
    %v4515 = vand.u32 %v4410, 2147483648
    %v4516 = vor.u32 1.1754944e-38, %v4515
    %v4517 = vsel %vm4514, %v4516, %v4512
    %v4518 = vrcp.pop %v4413
    %v4519 = vmul.f32 %v4413, %v4518
    %v4520 = vsub.f32 1.0, %v4519
    %v4521 = vmul.f32 %v4518, %v4520
    %v4522 = vadd.f32 %v4518, %v4521
    %vm4523 = vweird.f32 %v4413
    %vm4524 = vweird.f32 %v4518
    %vm4525 = vmor %vm4523, %vm4524
    %v4526 = vsel %vm4525, %v4518, %v4522
    %v4527 = vand.u32 2147483647, %v4413
    %vm4528 = vcmp.eq.f32.partialorder %v4527, 8.507059e+37
    %v4529 = vand.u32 %v4413, 2147483648
    %v4530 = vor.u32 1.1754944e-38, %v4529
    %v4531 = vsel %vm4528, %v4530, %v4526
    %v4532 = vrcp.pop %v4416
    %v4533 = vmul.f32 %v4416, %v4532
    %v4534 = vsub.f32 1.0, %v4533
    %v4535 = vmul.f32 %v4532, %v4534
    %v4536 = vadd.f32 %v4532, %v4535
    %vm4537 = vweird.f32 %v4416
    %vm4538 = vweird.f32 %v4532
    %vm4539 = vmor %vm4537, %vm4538
    %v4540 = vsel %vm4539, %v4532, %v4536
    %v4541 = vand.u32 2147483647, %v4416
    %vm4542 = vcmp.eq.f32.partialorder %v4541, 8.507059e+37
    %v4543 = vand.u32 %v4416, 2147483648
    %v4544 = vor.u32 1.1754944e-38, %v4543
    %v4545 = vsel %vm4542, %v4544, %v4540
    %v4546 = vrcp.pop %v4419
    %v4547 = vmul.f32 %v4419, %v4546
    %v4548 = vsub.f32 1.0, %v4547
    %v4549 = vmul.f32 %v4546, %v4548
    %v4550 = vadd.f32 %v4546, %v4549
    %vm4551 = vweird.f32 %v4419
    %vm4552 = vweird.f32 %v4546
    %vm4553 = vmor %vm4551, %vm4552
    %v4554 = vsel %vm4553, %v4546, %v4550
    %v4555 = vand.u32 2147483647, %v4419
    %vm4556 = vcmp.eq.f32.partialorder %v4555, 8.507059e+37
    %v4557 = vand.u32 %v4419, 2147483648
    %v4558 = vor.u32 1.1754944e-38, %v4557
    %v4559 = vsel %vm4556, %v4558, %v4554
    %v4560 = vrcp.pop %v4422
    %v4561 = vmul.f32 %v4422, %v4560
    %v4562 = vsub.f32 1.0, %v4561
    %v4563 = vmul.f32 %v4560, %v4562
    %v4564 = vadd.f32 %v4560, %v4563
    %vm4565 = vweird.f32 %v4422
    %vm4566 = vweird.f32 %v4560
    %vm4567 = vmor %vm4565, %vm4566
    %v4568 = vsel %vm4567, %v4560, %v4564
    %v4569 = vand.u32 2147483647, %v4422
    %vm4570 = vcmp.eq.f32.partialorder %v4569, 8.507059e+37
    %v4571 = vand.u32 %v4422, 2147483648
    %v4572 = vor.u32 1.1754944e-38, %v4571
    %v4573 = vsel %vm4570, %v4572, %v4568
    %v4574 = vrcp.pop %v4425
    %v4575 = vmul.f32 %v4425, %v4574
    %v4576 = vsub.f32 1.0, %v4575
    %v4577 = vmul.f32 %v4574, %v4576
    %v4578 = vadd.f32 %v4574, %v4577
    %vm4579 = vweird.f32 %v4425
    %vm4580 = vweird.f32 %v4574
    %vm4581 = vmor %vm4579, %vm4580
    %v4582 = vsel %vm4581, %v4574, %v4578
    %v4583 = vand.u32 2147483647, %v4425
    %vm4584 = vcmp.eq.f32.partialorder %v4583, 8.507059e+37
    %v4585 = vand.u32 %v4425, 2147483648
    %v4586 = vor.u32 1.1754944e-38, %v4585
    %v4587 = vsel %vm4584, %v4586, %v4582
    %v4588 = vrcp.pop %v4428
    %v4589 = vmul.f32 %v4428, %v4588
    %v4590 = vsub.f32 1.0, %v4589
    %v4591 = vmul.f32 %v4588, %v4590
    %v4592 = vadd.f32 %v4588, %v4591
    %vm4593 = vweird.f32 %v4428
    %vm4594 = vweird.f32 %v4588
    %vm4595 = vmor %vm4593, %vm4594
    %v4596 = vsel %vm4595, %v4588, %v4592
    %v4597 = vand.u32 2147483647, %v4428
    %vm4598 = vcmp.eq.f32.partialorder %v4597, 8.507059e+37
    %v4599 = vand.u32 %v4428, 2147483648
    %v4600 = vor.u32 1.1754944e-38, %v4599
    %v4601 = vsel %vm4598, %v4600, %v4596
    %v4602 = vrcp.pop %v4431
    %v4603 = vmul.f32 %v4431, %v4602
    %v4604 = vsub.f32 1.0, %v4603
    %v4605 = vmul.f32 %v4602, %v4604
    %v4606 = vadd.f32 %v4602, %v4605
    %vm4607 = vweird.f32 %v4431
    %vm4608 = vweird.f32 %v4602
    %vm4609 = vmor %vm4607, %vm4608
    %v4610 = vsel %vm4609, %v4602, %v4606
    %v4611 = vand.u32 2147483647, %v4431
    %vm4612 = vcmp.eq.f32.partialorder %v4611, 8.507059e+37
    %v4613 = vand.u32 %v4431, 2147483648
    %v4614 = vor.u32 1.1754944e-38, %v4613
    %v4615 = vsel %vm4612, %v4614, %v4610
    %v4616 = vrcp.pop %v4434
    %v4617 = vmul.f32 %v4434, %v4616
    %v4618 = vsub.f32 1.0, %v4617
    %v4619 = vmul.f32 %v4616, %v4618
    %v4620 = vadd.f32 %v4616, %v4619
    %vm4621 = vweird.f32 %v4434
    %vm4622 = vweird.f32 %v4616
    %vm4623 = vmor %vm4621, %vm4622
    %v4624 = vsel %vm4623, %v4616, %v4620
    %v4625 = vand.u32 2147483647, %v4434
    %vm4626 = vcmp.eq.f32.partialorder %v4625, 8.507059e+37
    %v4627 = vand.u32 %v4434, 2147483648
    %v4628 = vor.u32 1.1754944e-38, %v4627
    %v4629 = vsel %vm4626, %v4628, %v4624
    %v4630 = vrcp.pop %v4437
    %v4631 = vmul.f32 %v4437, %v4630
    %v4632 = vsub.f32 1.0, %v4631
    %v4633 = vmul.f32 %v4630, %v4632
    %v4634 = vadd.f32 %v4630, %v4633
    %vm4635 = vweird.f32 %v4437
    %vm4636 = vweird.f32 %v4630
    %vm4637 = vmor %vm4635, %vm4636
    %v4638 = vsel %vm4637, %v4630, %v4634
    %v4639 = vand.u32 2147483647, %v4437
    %vm4640 = vcmp.eq.f32.partialorder %v4639, 8.507059e+37
    %v4641 = vand.u32 %v4437, 2147483648
    %v4642 = vor.u32 1.1754944e-38, %v4641
    %v4643 = vsel %vm4640, %v4642, %v4638
    %v4644 = vrcp.pop %v4440
    %v4645 = vmul.f32 %v4440, %v4644
    %v4646 = vsub.f32 1.0, %v4645
    %v4647 = vmul.f32 %v4644, %v4646
    %v4648 = vadd.f32 %v4644, %v4647
    %vm4649 = vweird.f32 %v4440
    %vm4650 = vweird.f32 %v4644
    %vm4651 = vmor %vm4649, %vm4650
    %v4652 = vsel %vm4651, %v4644, %v4648
    %v4653 = vand.u32 2147483647, %v4440
    %vm4654 = vcmp.eq.f32.partialorder %v4653, 8.507059e+37
    %v4655 = vand.u32 %v4440, 2147483648
    %v4656 = vor.u32 1.1754944e-38, %v4655
    %v4657 = vsel %vm4654, %v4656, %v4652
    %v4658 = vrcp.pop %v4443
    %v4659 = vmul.f32 %v4443, %v4658
    %v4660 = vsub.f32 1.0, %v4659
    %v4661 = vmul.f32 %v4658, %v4660
    %v4662 = vadd.f32 %v4658, %v4661
    %vm4663 = vweird.f32 %v4443
    %vm4664 = vweird.f32 %v4658
    %vm4665 = vmor %vm4663, %vm4664
    %v4666 = vsel %vm4665, %v4658, %v4662
    %v4667 = vand.u32 2147483647, %v4443
    %vm4668 = vcmp.eq.f32.partialorder %v4667, 8.507059e+37
    %v4669 = vand.u32 %v4443, 2147483648
    %v4670 = vor.u32 1.1754944e-38, %v4669
    %v4671 = vsel %vm4668, %v4670, %v4666
    %v4672 = vrcp.pop %v4446
    %v4673 = vmul.f32 %v4446, %v4672
    %v4674 = vsub.f32 1.0, %v4673
    %v4675 = vmul.f32 %v4672, %v4674
    %v4676 = vadd.f32 %v4672, %v4675
    %vm4677 = vweird.f32 %v4446
    %vm4678 = vweird.f32 %v4672
    %vm4679 = vmor %vm4677, %vm4678
    %v4680 = vsel %vm4679, %v4672, %v4676
    %v4681 = vand.u32 2147483647, %v4446
    %vm4682 = vcmp.eq.f32.partialorder %v4681, 8.507059e+37
    %v4683 = vand.u32 %v4446, 2147483648
    %v4684 = vor.u32 1.1754944e-38, %v4683
    %v4685 = vsel %vm4682, %v4684, %v4680
    %v4686 = vrcp.pop %v4449
    %v4687 = vmul.f32 %v4449, %v4686
    %v4688 = vsub.f32 1.0, %v4687
    %v4689 = vmul.f32 %v4686, %v4688
    %v4690 = vadd.f32 %v4686, %v4689
    %vm4691 = vweird.f32 %v4449
    %vm4692 = vweird.f32 %v4686
    %vm4693 = vmor %vm4691, %vm4692
    %v4694 = vsel %vm4693, %v4686, %v4690
    %v4695 = vand.u32 2147483647, %v4449
    %vm4696 = vcmp.eq.f32.partialorder %v4695, 8.507059e+37
    %v4697 = vand.u32 %v4449, 2147483648
    %v4698 = vor.u32 1.1754944e-38, %v4697
    %v4699 = vsel %vm4696, %v4698, %v4694
    %v4700 = vrcp.pop %v4452
    %v4701 = vmul.f32 %v4452, %v4700
    %v4702 = vsub.f32 1.0, %v4701
    %v4703 = vmul.f32 %v4700, %v4702
    %v4704 = vadd.f32 %v4700, %v4703
    %vm4705 = vweird.f32 %v4452
    %vm4706 = vweird.f32 %v4700
    %vm4707 = vmor %vm4705, %vm4706
    %v4708 = vsel %vm4707, %v4700, %v4704
    %v4709 = vand.u32 2147483647, %v4452
    %vm4710 = vcmp.eq.f32.partialorder %v4709, 8.507059e+37
    %v4711 = vand.u32 %v4452, 2147483648
    %v4712 = vor.u32 1.1754944e-38, %v4711
    %v4713 = vsel %vm4710, %v4712, %v4708
    %v4714 = vrcp.pop %v4455
    %v4715 = vmul.f32 %v4455, %v4714
    %v4716 = vsub.f32 1.0, %v4715
    %v4717 = vmul.f32 %v4714, %v4716
    %v4718 = vadd.f32 %v4714, %v4717
    %vm4719 = vweird.f32 %v4455
    %vm4720 = vweird.f32 %v4714
    %vm4721 = vmor %vm4719, %vm4720
    %v4722 = vsel %vm4721, %v4714, %v4718
    %v4723 = vand.u32 2147483647, %v4455
    %vm4724 = vcmp.eq.f32.partialorder %v4723, 8.507059e+37
    %v4725 = vand.u32 %v4455, 2147483648
    %v4726 = vor.u32 1.1754944e-38, %v4725
    %v4727 = vsel %vm4724, %v4726, %v4722
    %v4728 = vrcp.pop %v4458
    %v4729 = vmul.f32 %v4458, %v4728
    %v4730 = vsub.f32 1.0, %v4729
    %v4731 = vmul.f32 %v4728, %v4730
    %v4732 = vadd.f32 %v4728, %v4731
    %vm4733 = vweird.f32 %v4458
    %vm4734 = vweird.f32 %v4728
    %vm4735 = vmor %vm4733, %vm4734
    %v4736 = vsel %vm4735, %v4728, %v4732
    %v4737 = vand.u32 2147483647, %v4458
    %vm4738 = vcmp.eq.f32.partialorder %v4737, 8.507059e+37
    %v4739 = vand.u32 %v4458, 2147483648
    %v4740 = vor.u32 1.1754944e-38, %v4739
    %v4741 = vsel %vm4738, %v4740, %v4736
    %v4742 = vrcp.pop %v4461
    %v4743 = vmul.f32 %v4461, %v4742
    %v4744 = vsub.f32 1.0, %v4743
    %v4745 = vmul.f32 %v4742, %v4744
    %v4746 = vadd.f32 %v4742, %v4745
    %vm4747 = vweird.f32 %v4461
    %vm4748 = vweird.f32 %v4742
    %vm4749 = vmor %vm4747, %vm4748
    %v4750 = vsel %vm4749, %v4742, %v4746
    %v4751 = vand.u32 2147483647, %v4461
    %vm4752 = vcmp.eq.f32.partialorder %v4751, 8.507059e+37
    %v4753 = vand.u32 %v4461, 2147483648
    %v4754 = vor.u32 1.1754944e-38, %v4753
    %v4755 = vsel %vm4752, %v4754, %v4750
    %v4756 = vmul.f32 %v4358, %v4475
    %v4757 = vmul.f32 %v4360, %v4489
    %v4758 = vmul.f32 %v4362, %v4503
    %v4759 = vmul.f32 %v4364, %v4517
    %v4760 = vmul.f32 %v4366, %v4531
    %v4761 = vmul.f32 %v4368, %v4545
    %v4762 = vmul.f32 %v4370, %v4559
    %v4763 = vmul.f32 %v4372, %v4573
    %v4764 = vmul.f32 %v4374, %v4587
    %v4765 = vmul.f32 %v4376, %v4601
    %v4766 = vmul.f32 %v4378, %v4615
    %v4767 = vmul.f32 %v4380, %v4629
    %v4768 = vmul.f32 %v4382, %v4643
    %v4769 = vmul.f32 %v4384, %v4657
    %v4770 = vmul.f32 %v4386, %v4671
    %v4771 = vmul.f32 %v4388, %v4685
    %v4772 = vmul.f32 %v4390, %v4699
    %v4773 = vmul.f32 %v4392, %v4713
    %v4774 = vmul.f32 %v4394, %v4727
    %v4775 = vmul.f32 %v4396, %v4741
    %v4776 = vmul.f32 %v4398, %v4755
    %4784 = vrot.lane.b32.xlu0 %v338, 96
    %v4785 = vpop.permute.xlu0 %4784
    %4786 = vrot.lane.b32.xlu0 %v341, 96
    %v4787 = vpop.permute.xlu0 %4786
    %4788 = vrot.lane.b32.xlu0 %v344, 96
    %v4789 = vpop.permute.xlu0 %4788
    %4790 = vrot.lane.b32.xlu0 %v347, 96
    %v4791 = vpop.permute.xlu0 %4790
    %4792 = vrot.lane.b32.xlu0 %v350, 96
    %v4793 = vpop.permute.xlu0 %4792
    %4794 = vrot.lane.b32.xlu0 %v353, 96
    %v4795 = vpop.permute.xlu0 %4794
    %4796 = vrot.lane.b32.xlu0 %v356, 96
    %v4797 = vpop.permute.xlu0 %4796
    %v4806 = vsel %vm2010, %v4756, 0
    %v4809 = vsel %vm2010, %v4757, 0
    %v4812 = vsel %vm2010, %v4758, 0
    %v4815 = vsel %vm2010, %v4759, 0
    %v4818 = vsel %vm2010, %v4760, 0
    %v4821 = vsel %vm2010, %v4761, 0
    %v4824 = vsel %vm2010, %v4762, 0
    %v4827 = vsel %vm2010, %v4763, 0
    %v4830 = vsel %vm2010, %v4764, 0
    %v4833 = vsel %vm2010, %v4765, 0
    %v4836 = vsel %vm2010, %v4766, 0
    %v4839 = vsel %vm2010, %v4767, 0
    %v4842 = vsel %vm2010, %v4768, 0
    %v4845 = vsel %vm2010, %v4769, 0
    %v4848 = vsel %vm2010, %v4770, 0
    %v4851 = vsel %vm2010, %v4771, 0
    %v4854 = vsel %vm2010, %v4772, 0
    %v4857 = vsel %vm2010, %v4773, 0
    %v4860 = vsel %vm2010, %v4774, 0
    %v4863 = vsel %vm2010, %v4775, 0
    %v4866 = vsel %vm2010, %v4776, 0
    %4868 = vmatpush.msra.mxu0 0.0
    %4869 = vmatpush.msra.mxu0 0.0
    %4870 = vmatpush.msra.mxu0 0.0
    %4871 = vmatpush.msra.mxu0 0.0
    %4872 = vmatpush.msra.mxu0 0.0
    %4873 = vmatpush.msra.mxu0 0.0
    %4874 = vmatpush.msra.mxu0 0.0
    %4875 = vmatpush.msra.mxu0 0.0
    %4876 = vmatpush.msra.mxu0 0.0
    %4877 = vmatpush.msra.mxu0 %v4797
    %4878 = vmatpush.msra.mxu0 %v4795
    %4879 = vmatpush.msra.mxu0 %v4793
    %4880 = vmatpush.msra.mxu0 %v4791
    %4881 = vmatpush.msra.mxu0 %v4789
    %4882 = vmatpush.msra.mxu0 %v4787
    %4883 = vmatpush.msra.mxu0 %v4785
    %4884 = vmatmul.f32.gmra.mxu0 %v4806
    %v4885 = vpop.f32.mrf.mxu0
    %v4886 = vadd.f32 0.0, %v4885
    %4887 = vmatmul.f32.gmra.mxu0 %v4809
    %v4888 = vpop.f32.mrf.mxu0
    %v4889 = vadd.f32 0.0, %v4888
    %4890 = vmatmul.f32.gmra.mxu0 %v4812
    %v4891 = vpop.f32.mrf.mxu0
    %v4892 = vadd.f32 0.0, %v4891
    %4893 = vmatmul.f32.gmra.mxu0 %v4815
    %v4894 = vpop.f32.mrf.mxu0
    %v4895 = vadd.f32 0.0, %v4894
    %4896 = vmatmul.f32.gmra.mxu0 %v4818
    %v4897 = vpop.f32.mrf.mxu0
    %v4898 = vadd.f32 0.0, %v4897
    %4899 = vmatmul.f32.gmra.mxu0 %v4821
    %v4900 = vpop.f32.mrf.mxu0
    %v4901 = vadd.f32 0.0, %v4900
    %4902 = vmatmul.f32.gmra.mxu0 %v4824
    %v4903 = vpop.f32.mrf.mxu0
    %v4904 = vadd.f32 0.0, %v4903
    %4905 = vmatmul.f32.gmra.mxu0 %v4827
    %v4906 = vpop.f32.mrf.mxu0
    %v4907 = vadd.f32 0.0, %v4906
    %4908 = vmatmul.f32.gmra.mxu0 %v4830
    %v4909 = vpop.f32.mrf.mxu0
    %v4910 = vadd.f32 0.0, %v4909
    %4911 = vmatmul.f32.gmra.mxu0 %v4833
    %v4912 = vpop.f32.mrf.mxu0
    %v4913 = vadd.f32 0.0, %v4912
    %4914 = vmatmul.f32.gmra.mxu0 %v4836
    %v4915 = vpop.f32.mrf.mxu0
    %v4916 = vadd.f32 0.0, %v4915
    %4917 = vmatmul.f32.gmra.mxu0 %v4839
    %v4918 = vpop.f32.mrf.mxu0
    %v4919 = vadd.f32 0.0, %v4918
    %4920 = vmatmul.f32.gmra.mxu0 %v4842
    %v4921 = vpop.f32.mrf.mxu0
    %v4922 = vadd.f32 0.0, %v4921
    %4923 = vmatmul.f32.gmra.mxu0 %v4845
    %v4924 = vpop.f32.mrf.mxu0
    %v4925 = vadd.f32 0.0, %v4924
    %4926 = vmatmul.f32.gmra.mxu0 %v4848
    %v4927 = vpop.f32.mrf.mxu0
    %v4928 = vadd.f32 0.0, %v4927
    %4929 = vmatmul.f32.gmra.mxu0 %v4851
    %v4930 = vpop.f32.mrf.mxu0
    %v4931 = vadd.f32 0.0, %v4930
    %4932 = vmatmul.f32.gmra.mxu0 %v4854
    %v4933 = vpop.f32.mrf.mxu0
    %v4934 = vadd.f32 0.0, %v4933
    %4935 = vmatmul.f32.gmra.mxu0 %v4857
    %v4936 = vpop.f32.mrf.mxu0
    %v4937 = vadd.f32 0.0, %v4936
    %4938 = vmatmul.f32.gmra.mxu0 %v4860
    %v4939 = vpop.f32.mrf.mxu0
    %v4940 = vadd.f32 0.0, %v4939
    %4941 = vmatmul.f32.gmra.mxu0 %v4863
    %v4942 = vpop.f32.mrf.mxu0
    %v4943 = vadd.f32 0.0, %v4942
    %4944 = vmatmul.f32.gmra.mxu0 %v4866
    %v4945 = vpop.f32.mrf.mxu0
    %v4946 = vadd.f32 0.0, %v4945
    %4947 = vdwg.mxu0
    %4969 = vrot.lane.b32.xlu0 %v4886, 32
    %v4970 = vpop.permute.xlu0 %4969
    %4971 = vrot.lane.b32.xlu0 %v4889, 32
    %v4972 = vpop.permute.xlu0 %4971
    %4973 = vrot.lane.b32.xlu0 %v4892, 32
    %v4974 = vpop.permute.xlu0 %4973
    %4975 = vrot.lane.b32.xlu0 %v4895, 32
    %v4976 = vpop.permute.xlu0 %4975
    %4977 = vrot.lane.b32.xlu0 %v4898, 32
    %v4978 = vpop.permute.xlu0 %4977
    %4979 = vrot.lane.b32.xlu0 %v4901, 32
    %v4980 = vpop.permute.xlu0 %4979
    %4981 = vrot.lane.b32.xlu0 %v4904, 32
    %v4982 = vpop.permute.xlu0 %4981
    %4983 = vrot.lane.b32.xlu0 %v4907, 32
    %v4984 = vpop.permute.xlu0 %4983
    %4985 = vrot.lane.b32.xlu0 %v4910, 32
    %v4986 = vpop.permute.xlu0 %4985
    %4987 = vrot.lane.b32.xlu0 %v4913, 32
    %v4988 = vpop.permute.xlu0 %4987
    %4989 = vrot.lane.b32.xlu0 %v4916, 32
    %v4990 = vpop.permute.xlu0 %4989
    %4991 = vrot.lane.b32.xlu0 %v4919, 32
    %v4992 = vpop.permute.xlu0 %4991
    %4993 = vrot.lane.b32.xlu0 %v4922, 32
    %v4994 = vpop.permute.xlu0 %4993
    %4995 = vrot.lane.b32.xlu0 %v4925, 32
    %v4996 = vpop.permute.xlu0 %4995
    %4997 = vrot.lane.b32.xlu0 %v4928, 32
    %v4998 = vpop.permute.xlu0 %4997
    %4999 = vrot.lane.b32.xlu0 %v4931, 32
    %v5000 = vpop.permute.xlu0 %4999
    %5001 = vrot.lane.b32.xlu0 %v4934, 32
    %v5002 = vpop.permute.xlu0 %5001
    %5003 = vrot.lane.b32.xlu0 %v4937, 32
    %v5004 = vpop.permute.xlu0 %5003
    %5005 = vrot.lane.b32.xlu0 %v4940, 32
    %v5006 = vpop.permute.xlu0 %5005
    %5007 = vrot.lane.b32.xlu0 %v4943, 32
    %v5008 = vpop.permute.xlu0 %5007
    %5009 = vrot.lane.b32.xlu0 %v4946, 32
    %v5010 = vpop.permute.xlu0 %5009
    %v5032 = vsub.f32 %v401, %v4970
    %v5033 = vsub.f32 %v404, %v4972
    %v5034 = vsub.f32 %v407, %v4974
    %v5035 = vsub.f32 %v410, %v4976
    %v5036 = vsub.f32 %v413, %v4978
    %v5037 = vsub.f32 %v416, %v4980
    %v5038 = vsub.f32 %v419, %v4982
    %v5039 = vsub.f32 %v422, %v4984
    %v5040 = vsub.f32 %v425, %v4986
    %v5041 = vsub.f32 %v428, %v4988
    %v5042 = vsub.f32 %v431, %v4990
    %v5043 = vsub.f32 %v434, %v4992
    %v5044 = vsub.f32 %v437, %v4994
    %v5045 = vsub.f32 %v440, %v4996
    %v5046 = vsub.f32 %v443, %v4998
    %v5047 = vsub.f32 %v446, %v5000
    %v5048 = vsub.f32 %v449, %v5002
    %v5049 = vsub.f32 %v452, %v5004
    %v5050 = vsub.f32 %v455, %v5006
    %v5051 = vsub.f32 %v458, %v5008
    %v5052 = vsub.f32 %v461, %v5010
    %v5053 = vmul.f32 %v5032, %v5032
    %v5054 = vmul.f32 %v5033, %v5033
    %v5055 = vmul.f32 %v5034, %v5034
    %v5056 = vmul.f32 %v5035, %v5035
    %v5057 = vmul.f32 %v5036, %v5036
    %v5058 = vmul.f32 %v5037, %v5037
    %v5059 = vmul.f32 %v5038, %v5038
    %v5060 = vmul.f32 %v5039, %v5039
    %v5061 = vmul.f32 %v5040, %v5040
    %v5062 = vmul.f32 %v5041, %v5041
    %v5063 = vmul.f32 %v5042, %v5042
    %v5064 = vmul.f32 %v5043, %v5043
    %v5065 = vmul.f32 %v5044, %v5044
    %v5066 = vmul.f32 %v5045, %v5045
    %v5067 = vmul.f32 %v5046, %v5046
    %v5068 = vmul.f32 %v5047, %v5047
    %v5069 = vmul.f32 %v5048, %v5048
    %v5070 = vmul.f32 %v5049, %v5049
    %v5071 = vmul.f32 %v5050, %v5050
    %v5072 = vmul.f32 %v5051, %v5051
    %v5073 = vmul.f32 %v5052, %v5052
    %5095 = vrot.lane.b32.xlu0 %v5053, 96
    %v5096 = vpop.permute.xlu0 %5095
    %5097 = vrot.lane.b32.xlu0 %v5054, 96
    %v5098 = vpop.permute.xlu0 %5097
    %5099 = vrot.lane.b32.xlu0 %v5055, 96
    %v5100 = vpop.permute.xlu0 %5099
    %5101 = vrot.lane.b32.xlu0 %v5056, 96
    %v5102 = vpop.permute.xlu0 %5101
    %5103 = vrot.lane.b32.xlu0 %v5057, 96
    %v5104 = vpop.permute.xlu0 %5103
    %5105 = vrot.lane.b32.xlu0 %v5058, 96
    %v5106 = vpop.permute.xlu0 %5105
    %5107 = vrot.lane.b32.xlu0 %v5059, 96
    %v5108 = vpop.permute.xlu0 %5107
    %5109 = vrot.lane.b32.xlu0 %v5060, 96
    %v5110 = vpop.permute.xlu0 %5109
    %5111 = vrot.lane.b32.xlu0 %v5061, 96
    %v5112 = vpop.permute.xlu0 %5111
    %5113 = vrot.lane.b32.xlu0 %v5062, 96
    %v5114 = vpop.permute.xlu0 %5113
    %5115 = vrot.lane.b32.xlu0 %v5063, 96
    %v5116 = vpop.permute.xlu0 %5115
    %5117 = vrot.lane.b32.xlu0 %v5064, 96
    %v5118 = vpop.permute.xlu0 %5117
    %5119 = vrot.lane.b32.xlu0 %v5065, 96
    %v5120 = vpop.permute.xlu0 %5119
    %5121 = vrot.lane.b32.xlu0 %v5066, 96
    %v5122 = vpop.permute.xlu0 %5121
    %5123 = vrot.lane.b32.xlu0 %v5067, 96
    %v5124 = vpop.permute.xlu0 %5123
    %5125 = vrot.lane.b32.xlu0 %v5068, 96
    %v5126 = vpop.permute.xlu0 %5125
    %5127 = vrot.lane.b32.xlu0 %v5069, 96
    %v5128 = vpop.permute.xlu0 %5127
    %5129 = vrot.lane.b32.xlu0 %v5070, 96
    %v5130 = vpop.permute.xlu0 %5129
    %5131 = vrot.lane.b32.xlu0 %v5071, 96
    %v5132 = vpop.permute.xlu0 %5131
    %5133 = vrot.lane.b32.xlu0 %v5072, 96
    %v5134 = vpop.permute.xlu0 %5133
    %5135 = vrot.lane.b32.xlu0 %v5073, 96
    %v5136 = vpop.permute.xlu0 %5135
    %v5158 = vsel %vm463, %v5096, 0.0
    %5159 = vadd.xlane.f32.xlu0 %v5158
    %v5160 = vpop.xlane.xlu0 %5159
    %v5161 = vsel %vm463, %v5098, 0.0
    %5162 = vadd.xlane.f32.xlu0 %v5161
    %v5163 = vpop.xlane.xlu0 %5162
    %v5164 = vsel %vm463, %v5100, 0.0
    %5165 = vadd.xlane.f32.xlu0 %v5164
    %v5166 = vpop.xlane.xlu0 %5165
    %v5167 = vsel %vm463, %v5102, 0.0
    %5168 = vadd.xlane.f32.xlu0 %v5167
    %v5169 = vpop.xlane.xlu0 %5168
    %v5170 = vsel %vm463, %v5104, 0.0
    %5171 = vadd.xlane.f32.xlu0 %v5170
    %v5172 = vpop.xlane.xlu0 %5171
    %v5173 = vsel %vm463, %v5106, 0.0
    %5174 = vadd.xlane.f32.xlu0 %v5173
    %v5175 = vpop.xlane.xlu0 %5174
    %v5176 = vsel %vm463, %v5108, 0.0
    %5177 = vadd.xlane.f32.xlu0 %v5176
    %v5178 = vpop.xlane.xlu0 %5177
    %v5179 = vsel %vm463, %v5110, 0.0
    %5180 = vadd.xlane.f32.xlu0 %v5179
    %v5181 = vpop.xlane.xlu0 %5180
    %v5182 = vsel %vm463, %v5112, 0.0
    %5183 = vadd.xlane.f32.xlu0 %v5182
    %v5184 = vpop.xlane.xlu0 %5183
    %v5185 = vsel %vm463, %v5114, 0.0
    %5186 = vadd.xlane.f32.xlu0 %v5185
    %v5187 = vpop.xlane.xlu0 %5186
    %v5188 = vsel %vm463, %v5116, 0.0
    %5189 = vadd.xlane.f32.xlu0 %v5188
    %v5190 = vpop.xlane.xlu0 %5189
    %v5191 = vsel %vm463, %v5118, 0.0
    %5192 = vadd.xlane.f32.xlu0 %v5191
    %v5193 = vpop.xlane.xlu0 %5192
    %v5194 = vsel %vm463, %v5120, 0.0
    %5195 = vadd.xlane.f32.xlu0 %v5194
    %v5196 = vpop.xlane.xlu0 %5195
    %v5197 = vsel %vm463, %v5122, 0.0
    %5198 = vadd.xlane.f32.xlu0 %v5197
    %v5199 = vpop.xlane.xlu0 %5198
    %v5200 = vsel %vm463, %v5124, 0.0
    %5201 = vadd.xlane.f32.xlu0 %v5200
    %v5202 = vpop.xlane.xlu0 %5201
    %v5203 = vsel %vm463, %v5126, 0.0
    %5204 = vadd.xlane.f32.xlu0 %v5203
    %v5205 = vpop.xlane.xlu0 %5204
    %v5206 = vsel %vm463, %v5128, 0.0
    %5207 = vadd.xlane.f32.xlu0 %v5206
    %v5208 = vpop.xlane.xlu0 %5207
    %v5209 = vsel %vm463, %v5130, 0.0
    %5210 = vadd.xlane.f32.xlu0 %v5209
    %v5211 = vpop.xlane.xlu0 %5210
    %v5212 = vsel %vm463, %v5132, 0.0
    %5213 = vadd.xlane.f32.xlu0 %v5212
    %v5214 = vpop.xlane.xlu0 %5213
    %v5215 = vsel %vm463, %v5134, 0.0
    %5216 = vadd.xlane.f32.xlu0 %v5215
    %v5217 = vpop.xlane.xlu0 %5216
    %v5218 = vsel %vm463, %v5136, 0.0
    %5219 = vadd.xlane.f32.xlu0 %v5218
    %v5220 = vpop.xlane.xlu0 %5219
    %v5242 = vperm.slane %v5160, %v1845
    %v5243 = vperm.slane %v5163, %v2981
    %v5244 = vsel %vm2983, %v5243, %v5242
    %v5245 = vperm.slane %v5166, %v2985
    %v5246 = vsel %vm2987, %v5245, %v5244
    %v5247 = vperm.slane %v5169, %v2989
    %v5248 = vsel %vm2991, %v5247, %v5246
    %v5249 = vperm.slane %v5172, %v2993
    %v5250 = vsel %vm2995, %v5249, %v5248
    %v5251 = vperm.slane %v5175, %v2997
    %v5252 = vsel %vm2999, %v5251, %v5250
    %v5253 = vperm.slane %v5178, %v3001
    %v5254 = vsel %vm3003, %v5253, %v5252
    %v5255 = vperm.slane %v5181, %v1845
    %v5256 = vperm.slane %v5184, %v2981
    %v5257 = vsel %vm2983, %v5256, %v5255
    %v5258 = vperm.slane %v5187, %v2985
    %v5259 = vsel %vm2987, %v5258, %v5257
    %v5260 = vperm.slane %v5190, %v2989
    %v5261 = vsel %vm2991, %v5260, %v5259
    %v5262 = vperm.slane %v5193, %v2993
    %v5263 = vsel %vm2995, %v5262, %v5261
    %v5264 = vperm.slane %v5196, %v2997
    %v5265 = vsel %vm2999, %v5264, %v5263
    %v5266 = vperm.slane %v5199, %v3001
    %v5267 = vsel %vm3003, %v5266, %v5265
    %v5268 = vperm.slane %v5202, %v1845
    %v5269 = vperm.slane %v5205, %v2981
    %v5270 = vsel %vm2983, %v5269, %v5268
    %v5271 = vperm.slane %v5208, %v2985
    %v5272 = vsel %vm2987, %v5271, %v5270
    %v5273 = vperm.slane %v5211, %v2989
    %v5274 = vsel %vm2991, %v5273, %v5272
    %v5275 = vperm.slane %v5214, %v2993
    %v5276 = vsel %vm2995, %v5275, %v5274
    %v5277 = vperm.slane %v5217, %v2997
    %v5278 = vsel %vm2999, %v5277, %v5276
    %v5279 = vperm.slane %v5220, %v3001
    %v5280 = vsel %vm3003, %v5279, %v5278
    %v5281 = vsel %vm3031, %v5267, %v5254
    %v5282 = vsel %vm3033, %v5280, %v5281
    %v5284 = vsel %vm3036, %v5282, 0.0
    %5285 = vadd.xlane.f32.xlu0 %v5284
    %v5286 = vpop.xlane.xlu0 %5285
    %v5287 = vsub.f32 0.0, %v5286
    %v5288 = vmul.f32 %v5287, %v3047
    %vm5289 = vcmp.eq.s32.totalorder %v1845, 2
    %v5290 = vsel %vm5289, %v5288, 0.0
    %v5291 = vadd.f32 %v4171, %v5290
    %v5293 = vsel %vm463, %v1788, 0
    %v5296 = vsel %vm463, %v1789, 0
    %v5299 = vsel %vm463, %v1790, 0
    %v5302 = vsel %vm463, %v1791, 0
    %v5305 = vsel %vm463, %v1792, 0
    %v5308 = vsel %vm463, %v1793, 0
    %v5311 = vsel %vm463, %v1794, 0
    %5313 = vmatpush.xpose.msra.mxu0 0.0
    %5314 = vmatpush.xpose.msra.mxu0 0.0
    %5315 = vmatpush.xpose.msra.mxu0 0.0
    %5316 = vmatpush.xpose.msra.mxu0 0.0
    %5317 = vmatpush.xpose.msra.mxu0 0.0
    %5318 = vmatpush.xpose.msra.mxu0 0.0
    %5319 = vmatpush.xpose.msra.mxu0 0.0
    %5320 = vmatpush.xpose.msra.mxu0 0.0
    %5321 = vmatpush.xpose.msra.mxu0 0.0
    %5322 = vmatpush.xpose.msra.mxu0 %v5311
    %5323 = vmatpush.xpose.msra.mxu0 %v5308
    %5324 = vmatpush.xpose.msra.mxu0 %v5305
    %5325 = vmatpush.xpose.msra.mxu0 %v5302
    %5326 = vmatpush.xpose.msra.mxu0 %v5299
    %5327 = vmatpush.xpose.msra.mxu0 %v5296
    %5328 = vmatpush.xpose.msra.mxu0 %v5293
    %5329 = vmatmul.f32.gmra.mxu0 %v1847
    %v5330 = vpop.f32.mrf.mxu0
    %v5331 = vadd.f32 0.0, %v5330
    %5332 = vmatmul.f32.gmra.mxu0 %v1850
    %v5333 = vpop.f32.mrf.mxu0
    %v5334 = vadd.f32 0.0, %v5333
    %5335 = vmatmul.f32.gmra.mxu0 %v1853
    %v5336 = vpop.f32.mrf.mxu0
    %v5337 = vadd.f32 0.0, %v5336
    %5338 = vmatmul.f32.gmra.mxu0 %v1856
    %v5339 = vpop.f32.mrf.mxu0
    %v5340 = vadd.f32 0.0, %v5339
    %5341 = vmatmul.f32.gmra.mxu0 %v1859
    %v5342 = vpop.f32.mrf.mxu0
    %v5343 = vadd.f32 0.0, %v5342
    %5344 = vmatmul.f32.gmra.mxu0 %v1862
    %v5345 = vpop.f32.mrf.mxu0
    %v5346 = vadd.f32 0.0, %v5345
    %5347 = vmatmul.f32.gmra.mxu0 %v1865
    %v5348 = vpop.f32.mrf.mxu0
    %v5349 = vadd.f32 0.0, %v5348
    %5350 = vmatmul.f32.gmra.mxu0 %v1868
    %v5351 = vpop.f32.mrf.mxu0
    %v5352 = vadd.f32 0.0, %v5351
    %5353 = vmatmul.f32.gmra.mxu0 %v1871
    %v5354 = vpop.f32.mrf.mxu0
    %v5355 = vadd.f32 0.0, %v5354
    %5356 = vmatmul.f32.gmra.mxu0 %v1874
    %v5357 = vpop.f32.mrf.mxu0
    %v5358 = vadd.f32 0.0, %v5357
    %5359 = vmatmul.f32.gmra.mxu0 %v1877
    %v5360 = vpop.f32.mrf.mxu0
    %v5361 = vadd.f32 0.0, %v5360
    %5362 = vmatmul.f32.gmra.mxu0 %v1880
    %v5363 = vpop.f32.mrf.mxu0
    %v5364 = vadd.f32 0.0, %v5363
    %5365 = vmatmul.f32.gmra.mxu0 %v1883
    %v5366 = vpop.f32.mrf.mxu0
    %v5367 = vadd.f32 0.0, %v5366
    %5368 = vmatmul.f32.gmra.mxu0 %v1886
    %v5369 = vpop.f32.mrf.mxu0
    %v5370 = vadd.f32 0.0, %v5369
    %5371 = vmatmul.f32.gmra.mxu0 %v1889
    %v5372 = vpop.f32.mrf.mxu0
    %v5373 = vadd.f32 0.0, %v5372
    %5374 = vmatmul.f32.gmra.mxu0 %v1892
    %v5375 = vpop.f32.mrf.mxu0
    %v5376 = vadd.f32 0.0, %v5375
    %5377 = vmatmul.f32.gmra.mxu0 %v1895
    %v5378 = vpop.f32.mrf.mxu0
    %v5379 = vadd.f32 0.0, %v5378
    %5380 = vmatmul.f32.gmra.mxu0 %v1898
    %v5381 = vpop.f32.mrf.mxu0
    %v5382 = vadd.f32 0.0, %v5381
    %5383 = vmatmul.f32.gmra.mxu0 %v1901
    %v5384 = vpop.f32.mrf.mxu0
    %v5385 = vadd.f32 0.0, %v5384
    %5386 = vmatmul.f32.gmra.mxu0 %v1904
    %v5387 = vpop.f32.mrf.mxu0
    %v5388 = vadd.f32 0.0, %v5387
    %5389 = vmatmul.f32.gmra.mxu0 %v1907
    %v5390 = vpop.f32.mrf.mxu0
    %v5391 = vadd.f32 0.0, %v5390
    %5392 = vdwg.mxu0
    %v5393 = vsel %vm2010, %v5331, -inf
    %5394 = vmax.xlane.f32.xlu0 %v5393
    %v5395 = vpop.xlane.xlu0 %5394
    %v5396 = vsel %vm2010, %v5334, -inf
    %5397 = vmax.xlane.f32.xlu0 %v5396
    %v5398 = vpop.xlane.xlu0 %5397
    %v5399 = vsel %vm2010, %v5337, -inf
    %5400 = vmax.xlane.f32.xlu0 %v5399
    %v5401 = vpop.xlane.xlu0 %5400
    %v5402 = vsel %vm2010, %v5340, -inf
    %5403 = vmax.xlane.f32.xlu0 %v5402
    %v5404 = vpop.xlane.xlu0 %5403
    %v5405 = vsel %vm2010, %v5343, -inf
    %5406 = vmax.xlane.f32.xlu0 %v5405
    %v5407 = vpop.xlane.xlu0 %5406
    %v5408 = vsel %vm2010, %v5346, -inf
    %5409 = vmax.xlane.f32.xlu0 %v5408
    %v5410 = vpop.xlane.xlu0 %5409
    %v5411 = vsel %vm2010, %v5349, -inf
    %5412 = vmax.xlane.f32.xlu0 %v5411
    %v5413 = vpop.xlane.xlu0 %5412
    %v5414 = vsel %vm2010, %v5352, -inf
    %5415 = vmax.xlane.f32.xlu0 %v5414
    %v5416 = vpop.xlane.xlu0 %5415
    %v5417 = vsel %vm2010, %v5355, -inf
    %5418 = vmax.xlane.f32.xlu0 %v5417
    %v5419 = vpop.xlane.xlu0 %5418
    %v5420 = vsel %vm2010, %v5358, -inf
    %5421 = vmax.xlane.f32.xlu0 %v5420
    %v5422 = vpop.xlane.xlu0 %5421
    %v5423 = vsel %vm2010, %v5361, -inf
    %5424 = vmax.xlane.f32.xlu0 %v5423
    %v5425 = vpop.xlane.xlu0 %5424
    %v5426 = vsel %vm2010, %v5364, -inf
    %5427 = vmax.xlane.f32.xlu0 %v5426
    %v5428 = vpop.xlane.xlu0 %5427
    %v5429 = vsel %vm2010, %v5367, -inf
    %5430 = vmax.xlane.f32.xlu0 %v5429
    %v5431 = vpop.xlane.xlu0 %5430
    %v5432 = vsel %vm2010, %v5370, -inf
    %5433 = vmax.xlane.f32.xlu0 %v5432
    %v5434 = vpop.xlane.xlu0 %5433
    %v5435 = vsel %vm2010, %v5373, -inf
    %5436 = vmax.xlane.f32.xlu0 %v5435
    %v5437 = vpop.xlane.xlu0 %5436
    %v5438 = vsel %vm2010, %v5376, -inf
    %5439 = vmax.xlane.f32.xlu0 %v5438
    %v5440 = vpop.xlane.xlu0 %5439
    %v5441 = vsel %vm2010, %v5379, -inf
    %5442 = vmax.xlane.f32.xlu0 %v5441
    %v5443 = vpop.xlane.xlu0 %5442
    %v5444 = vsel %vm2010, %v5382, -inf
    %5445 = vmax.xlane.f32.xlu0 %v5444
    %v5446 = vpop.xlane.xlu0 %5445
    %v5447 = vsel %vm2010, %v5385, -inf
    %5448 = vmax.xlane.f32.xlu0 %v5447
    %v5449 = vpop.xlane.xlu0 %5448
    %v5450 = vsel %vm2010, %v5388, -inf
    %5451 = vmax.xlane.f32.xlu0 %v5450
    %v5452 = vpop.xlane.xlu0 %5451
    %v5453 = vsel %vm2010, %v5391, -inf
    %5454 = vmax.xlane.f32.xlu0 %v5453
    %v5455 = vpop.xlane.xlu0 %5454
    %v5456 = vsub.f32 %v5331, %v5395
    %v5457 = vsub.f32 %v5334, %v5398
    %v5458 = vsub.f32 %v5337, %v5401
    %v5459 = vsub.f32 %v5340, %v5404
    %v5460 = vsub.f32 %v5343, %v5407
    %v5461 = vsub.f32 %v5346, %v5410
    %v5462 = vsub.f32 %v5349, %v5413
    %v5463 = vsub.f32 %v5352, %v5416
    %v5464 = vsub.f32 %v5355, %v5419
    %v5465 = vsub.f32 %v5358, %v5422
    %v5466 = vsub.f32 %v5361, %v5425
    %v5467 = vsub.f32 %v5364, %v5428
    %v5468 = vsub.f32 %v5367, %v5431
    %v5469 = vsub.f32 %v5370, %v5434
    %v5470 = vsub.f32 %v5373, %v5437
    %v5471 = vsub.f32 %v5376, %v5440
    %v5472 = vsub.f32 %v5379, %v5443
    %v5473 = vsub.f32 %v5382, %v5446
    %v5474 = vsub.f32 %v5385, %v5449
    %v5475 = vsub.f32 %v5388, %v5452
    %v5476 = vsub.f32 %v5391, %v5455
    %v5477 = vmul.f32 %v5456, 1.442695
    %v5478 = vpow.pop %v5477
    %v5479 = vmul.f32 %v5457, 1.442695
    %v5480 = vpow.pop %v5479
    %v5481 = vmul.f32 %v5458, 1.442695
    %v5482 = vpow.pop %v5481
    %v5483 = vmul.f32 %v5459, 1.442695
    %v5484 = vpow.pop %v5483
    %v5485 = vmul.f32 %v5460, 1.442695
    %v5486 = vpow.pop %v5485
    %v5487 = vmul.f32 %v5461, 1.442695
    %v5488 = vpow.pop %v5487
    %v5489 = vmul.f32 %v5462, 1.442695
    %v5490 = vpow.pop %v5489
    %v5491 = vmul.f32 %v5463, 1.442695
    %v5492 = vpow.pop %v5491
    %v5493 = vmul.f32 %v5464, 1.442695
    %v5494 = vpow.pop %v5493
    %v5495 = vmul.f32 %v5465, 1.442695
    %v5496 = vpow.pop %v5495
    %v5497 = vmul.f32 %v5466, 1.442695
    %v5498 = vpow.pop %v5497
    %v5499 = vmul.f32 %v5467, 1.442695
    %v5500 = vpow.pop %v5499
    %v5501 = vmul.f32 %v5468, 1.442695
    %v5502 = vpow.pop %v5501
    %v5503 = vmul.f32 %v5469, 1.442695
    %v5504 = vpow.pop %v5503
    %v5505 = vmul.f32 %v5470, 1.442695
    %v5506 = vpow.pop %v5505
    %v5507 = vmul.f32 %v5471, 1.442695
    %v5508 = vpow.pop %v5507
    %v5509 = vmul.f32 %v5472, 1.442695
    %v5510 = vpow.pop %v5509
    %v5511 = vmul.f32 %v5473, 1.442695
    %v5512 = vpow.pop %v5511
    %v5513 = vmul.f32 %v5474, 1.442695
    %v5514 = vpow.pop %v5513
    %v5515 = vmul.f32 %v5475, 1.442695
    %v5516 = vpow.pop %v5515
    %v5517 = vmul.f32 %v5476, 1.442695
    %v5518 = vpow.pop %v5517
    %v5519 = vsel %vm2010, %v5478, 0.0
    %5520 = vadd.xlane.f32.xlu0 %v5519
    %v5521 = vpop.xlane.xlu0 %5520
    %v5522 = vsel %vm2010, %v5480, 0.0
    %5523 = vadd.xlane.f32.xlu0 %v5522
    %v5524 = vpop.xlane.xlu0 %5523
    %v5525 = vsel %vm2010, %v5482, 0.0
    %5526 = vadd.xlane.f32.xlu0 %v5525
    %v5527 = vpop.xlane.xlu0 %5526
    %v5528 = vsel %vm2010, %v5484, 0.0
    %5529 = vadd.xlane.f32.xlu0 %v5528
    %v5530 = vpop.xlane.xlu0 %5529
    %v5531 = vsel %vm2010, %v5486, 0.0
    %5532 = vadd.xlane.f32.xlu0 %v5531
    %v5533 = vpop.xlane.xlu0 %5532
    %v5534 = vsel %vm2010, %v5488, 0.0
    %5535 = vadd.xlane.f32.xlu0 %v5534
    %v5536 = vpop.xlane.xlu0 %5535
    %v5537 = vsel %vm2010, %v5490, 0.0
    %5538 = vadd.xlane.f32.xlu0 %v5537
    %v5539 = vpop.xlane.xlu0 %5538
    %v5540 = vsel %vm2010, %v5492, 0.0
    %5541 = vadd.xlane.f32.xlu0 %v5540
    %v5542 = vpop.xlane.xlu0 %5541
    %v5543 = vsel %vm2010, %v5494, 0.0
    %5544 = vadd.xlane.f32.xlu0 %v5543
    %v5545 = vpop.xlane.xlu0 %5544
    %v5546 = vsel %vm2010, %v5496, 0.0
    %5547 = vadd.xlane.f32.xlu0 %v5546
    %v5548 = vpop.xlane.xlu0 %5547
    %v5549 = vsel %vm2010, %v5498, 0.0
    %5550 = vadd.xlane.f32.xlu0 %v5549
    %v5551 = vpop.xlane.xlu0 %5550
    %v5552 = vsel %vm2010, %v5500, 0.0
    %5553 = vadd.xlane.f32.xlu0 %v5552
    %v5554 = vpop.xlane.xlu0 %5553
    %v5555 = vsel %vm2010, %v5502, 0.0
    %5556 = vadd.xlane.f32.xlu0 %v5555
    %v5557 = vpop.xlane.xlu0 %5556
    %v5558 = vsel %vm2010, %v5504, 0.0
    %5559 = vadd.xlane.f32.xlu0 %v5558
    %v5560 = vpop.xlane.xlu0 %5559
    %v5561 = vsel %vm2010, %v5506, 0.0
    %5562 = vadd.xlane.f32.xlu0 %v5561
    %v5563 = vpop.xlane.xlu0 %5562
    %v5564 = vsel %vm2010, %v5508, 0.0
    %5565 = vadd.xlane.f32.xlu0 %v5564
    %v5566 = vpop.xlane.xlu0 %5565
    %v5567 = vsel %vm2010, %v5510, 0.0
    %5568 = vadd.xlane.f32.xlu0 %v5567
    %v5569 = vpop.xlane.xlu0 %5568
    %v5570 = vsel %vm2010, %v5512, 0.0
    %5571 = vadd.xlane.f32.xlu0 %v5570
    %v5572 = vpop.xlane.xlu0 %5571
    %v5573 = vsel %vm2010, %v5514, 0.0
    %5574 = vadd.xlane.f32.xlu0 %v5573
    %v5575 = vpop.xlane.xlu0 %5574
    %v5576 = vsel %vm2010, %v5516, 0.0
    %5577 = vadd.xlane.f32.xlu0 %v5576
    %v5578 = vpop.xlane.xlu0 %5577
    %v5579 = vsel %vm2010, %v5518, 0.0
    %5580 = vadd.xlane.f32.xlu0 %v5579
    %v5581 = vpop.xlane.xlu0 %5580
    %v5582 = vrcp.pop %v5521
    %v5583 = vmul.f32 %v5521, %v5582
    %v5584 = vsub.f32 1.0, %v5583
    %v5585 = vmul.f32 %v5582, %v5584
    %v5586 = vadd.f32 %v5582, %v5585
    %vm5587 = vweird.f32 %v5521
    %vm5588 = vweird.f32 %v5582
    %vm5589 = vmor %vm5587, %vm5588
    %v5590 = vsel %vm5589, %v5582, %v5586
    %v5591 = vand.u32 2147483647, %v5521
    %vm5592 = vcmp.eq.f32.partialorder %v5591, 8.507059e+37
    %v5593 = vand.u32 %v5521, 2147483648
    %v5594 = vor.u32 1.1754944e-38, %v5593
    %v5595 = vsel %vm5592, %v5594, %v5590
    %v5596 = vrcp.pop %v5524
    %v5597 = vmul.f32 %v5524, %v5596
    %v5598 = vsub.f32 1.0, %v5597
    %v5599 = vmul.f32 %v5596, %v5598
    %v5600 = vadd.f32 %v5596, %v5599
    %vm5601 = vweird.f32 %v5524
    %vm5602 = vweird.f32 %v5596
    %vm5603 = vmor %vm5601, %vm5602
    %v5604 = vsel %vm5603, %v5596, %v5600
    %v5605 = vand.u32 2147483647, %v5524
    %vm5606 = vcmp.eq.f32.partialorder %v5605, 8.507059e+37
    %v5607 = vand.u32 %v5524, 2147483648
    %v5608 = vor.u32 1.1754944e-38, %v5607
    %v5609 = vsel %vm5606, %v5608, %v5604
    %v5610 = vrcp.pop %v5527
    %v5611 = vmul.f32 %v5527, %v5610
    %v5612 = vsub.f32 1.0, %v5611
    %v5613 = vmul.f32 %v5610, %v5612
    %v5614 = vadd.f32 %v5610, %v5613
    %vm5615 = vweird.f32 %v5527
    %vm5616 = vweird.f32 %v5610
    %vm5617 = vmor %vm5615, %vm5616
    %v5618 = vsel %vm5617, %v5610, %v5614
    %v5619 = vand.u32 2147483647, %v5527
    %vm5620 = vcmp.eq.f32.partialorder %v5619, 8.507059e+37
    %v5621 = vand.u32 %v5527, 2147483648
    %v5622 = vor.u32 1.1754944e-38, %v5621
    %v5623 = vsel %vm5620, %v5622, %v5618
    %v5624 = vrcp.pop %v5530
    %v5625 = vmul.f32 %v5530, %v5624
    %v5626 = vsub.f32 1.0, %v5625
    %v5627 = vmul.f32 %v5624, %v5626
    %v5628 = vadd.f32 %v5624, %v5627
    %vm5629 = vweird.f32 %v5530
    %vm5630 = vweird.f32 %v5624
    %vm5631 = vmor %vm5629, %vm5630
    %v5632 = vsel %vm5631, %v5624, %v5628
    %v5633 = vand.u32 2147483647, %v5530
    %vm5634 = vcmp.eq.f32.partialorder %v5633, 8.507059e+37
    %v5635 = vand.u32 %v5530, 2147483648
    %v5636 = vor.u32 1.1754944e-38, %v5635
    %v5637 = vsel %vm5634, %v5636, %v5632
    %v5638 = vrcp.pop %v5533
    %v5639 = vmul.f32 %v5533, %v5638
    %v5640 = vsub.f32 1.0, %v5639
    %v5641 = vmul.f32 %v5638, %v5640
    %v5642 = vadd.f32 %v5638, %v5641
    %vm5643 = vweird.f32 %v5533
    %vm5644 = vweird.f32 %v5638
    %vm5645 = vmor %vm5643, %vm5644
    %v5646 = vsel %vm5645, %v5638, %v5642
    %v5647 = vand.u32 2147483647, %v5533
    %vm5648 = vcmp.eq.f32.partialorder %v5647, 8.507059e+37
    %v5649 = vand.u32 %v5533, 2147483648
    %v5650 = vor.u32 1.1754944e-38, %v5649
    %v5651 = vsel %vm5648, %v5650, %v5646
    %v5652 = vrcp.pop %v5536
    %v5653 = vmul.f32 %v5536, %v5652
    %v5654 = vsub.f32 1.0, %v5653
    %v5655 = vmul.f32 %v5652, %v5654
    %v5656 = vadd.f32 %v5652, %v5655
    %vm5657 = vweird.f32 %v5536
    %vm5658 = vweird.f32 %v5652
    %vm5659 = vmor %vm5657, %vm5658
    %v5660 = vsel %vm5659, %v5652, %v5656
    %v5661 = vand.u32 2147483647, %v5536
    %vm5662 = vcmp.eq.f32.partialorder %v5661, 8.507059e+37
    %v5663 = vand.u32 %v5536, 2147483648
    %v5664 = vor.u32 1.1754944e-38, %v5663
    %v5665 = vsel %vm5662, %v5664, %v5660
    %v5666 = vrcp.pop %v5539
    %v5667 = vmul.f32 %v5539, %v5666
    %v5668 = vsub.f32 1.0, %v5667
    %v5669 = vmul.f32 %v5666, %v5668
    %v5670 = vadd.f32 %v5666, %v5669
    %vm5671 = vweird.f32 %v5539
    %vm5672 = vweird.f32 %v5666
    %vm5673 = vmor %vm5671, %vm5672
    %v5674 = vsel %vm5673, %v5666, %v5670
    %v5675 = vand.u32 2147483647, %v5539
    %vm5676 = vcmp.eq.f32.partialorder %v5675, 8.507059e+37
    %v5677 = vand.u32 %v5539, 2147483648
    %v5678 = vor.u32 1.1754944e-38, %v5677
    %v5679 = vsel %vm5676, %v5678, %v5674
    %v5680 = vrcp.pop %v5542
    %v5681 = vmul.f32 %v5542, %v5680
    %v5682 = vsub.f32 1.0, %v5681
    %v5683 = vmul.f32 %v5680, %v5682
    %v5684 = vadd.f32 %v5680, %v5683
    %vm5685 = vweird.f32 %v5542
    %vm5686 = vweird.f32 %v5680
    %vm5687 = vmor %vm5685, %vm5686
    %v5688 = vsel %vm5687, %v5680, %v5684
    %v5689 = vand.u32 2147483647, %v5542
    %vm5690 = vcmp.eq.f32.partialorder %v5689, 8.507059e+37
    %v5691 = vand.u32 %v5542, 2147483648
    %v5692 = vor.u32 1.1754944e-38, %v5691
    %v5693 = vsel %vm5690, %v5692, %v5688
    %v5694 = vrcp.pop %v5545
    %v5695 = vmul.f32 %v5545, %v5694
    %v5696 = vsub.f32 1.0, %v5695
    %v5697 = vmul.f32 %v5694, %v5696
    %v5698 = vadd.f32 %v5694, %v5697
    %vm5699 = vweird.f32 %v5545
    %vm5700 = vweird.f32 %v5694
    %vm5701 = vmor %vm5699, %vm5700
    %v5702 = vsel %vm5701, %v5694, %v5698
    %v5703 = vand.u32 2147483647, %v5545
    %vm5704 = vcmp.eq.f32.partialorder %v5703, 8.507059e+37
    %v5705 = vand.u32 %v5545, 2147483648
    %v5706 = vor.u32 1.1754944e-38, %v5705
    %v5707 = vsel %vm5704, %v5706, %v5702
    %v5708 = vrcp.pop %v5548
    %v5709 = vmul.f32 %v5548, %v5708
    %v5710 = vsub.f32 1.0, %v5709
    %v5711 = vmul.f32 %v5708, %v5710
    %v5712 = vadd.f32 %v5708, %v5711
    %vm5713 = vweird.f32 %v5548
    %vm5714 = vweird.f32 %v5708
    %vm5715 = vmor %vm5713, %vm5714
    %v5716 = vsel %vm5715, %v5708, %v5712
    %v5717 = vand.u32 2147483647, %v5548
    %vm5718 = vcmp.eq.f32.partialorder %v5717, 8.507059e+37
    %v5719 = vand.u32 %v5548, 2147483648
    %v5720 = vor.u32 1.1754944e-38, %v5719
    %v5721 = vsel %vm5718, %v5720, %v5716
    %v5722 = vrcp.pop %v5551
    %v5723 = vmul.f32 %v5551, %v5722
    %v5724 = vsub.f32 1.0, %v5723
    %v5725 = vmul.f32 %v5722, %v5724
    %v5726 = vadd.f32 %v5722, %v5725
    %vm5727 = vweird.f32 %v5551
    %vm5728 = vweird.f32 %v5722
    %vm5729 = vmor %vm5727, %vm5728
    %v5730 = vsel %vm5729, %v5722, %v5726
    %v5731 = vand.u32 2147483647, %v5551
    %vm5732 = vcmp.eq.f32.partialorder %v5731, 8.507059e+37
    %v5733 = vand.u32 %v5551, 2147483648
    %v5734 = vor.u32 1.1754944e-38, %v5733
    %v5735 = vsel %vm5732, %v5734, %v5730
    %v5736 = vrcp.pop %v5554
    %v5737 = vmul.f32 %v5554, %v5736
    %v5738 = vsub.f32 1.0, %v5737
    %v5739 = vmul.f32 %v5736, %v5738
    %v5740 = vadd.f32 %v5736, %v5739
    %vm5741 = vweird.f32 %v5554
    %vm5742 = vweird.f32 %v5736
    %vm5743 = vmor %vm5741, %vm5742
    %v5744 = vsel %vm5743, %v5736, %v5740
    %v5745 = vand.u32 2147483647, %v5554
    %vm5746 = vcmp.eq.f32.partialorder %v5745, 8.507059e+37
    %v5747 = vand.u32 %v5554, 2147483648
    %v5748 = vor.u32 1.1754944e-38, %v5747
    %v5749 = vsel %vm5746, %v5748, %v5744
    %v5750 = vrcp.pop %v5557
    %v5751 = vmul.f32 %v5557, %v5750
    %v5752 = vsub.f32 1.0, %v5751
    %v5753 = vmul.f32 %v5750, %v5752
    %v5754 = vadd.f32 %v5750, %v5753
    %vm5755 = vweird.f32 %v5557
    %vm5756 = vweird.f32 %v5750
    %vm5757 = vmor %vm5755, %vm5756
    %v5758 = vsel %vm5757, %v5750, %v5754
    %v5759 = vand.u32 2147483647, %v5557
    %vm5760 = vcmp.eq.f32.partialorder %v5759, 8.507059e+37
    %v5761 = vand.u32 %v5557, 2147483648
    %v5762 = vor.u32 1.1754944e-38, %v5761
    %v5763 = vsel %vm5760, %v5762, %v5758
    %v5764 = vrcp.pop %v5560
    %v5765 = vmul.f32 %v5560, %v5764
    %v5766 = vsub.f32 1.0, %v5765
    %v5767 = vmul.f32 %v5764, %v5766
    %v5768 = vadd.f32 %v5764, %v5767
    %vm5769 = vweird.f32 %v5560
    %vm5770 = vweird.f32 %v5764
    %vm5771 = vmor %vm5769, %vm5770
    %v5772 = vsel %vm5771, %v5764, %v5768
    %v5773 = vand.u32 2147483647, %v5560
    %vm5774 = vcmp.eq.f32.partialorder %v5773, 8.507059e+37
    %v5775 = vand.u32 %v5560, 2147483648
    %v5776 = vor.u32 1.1754944e-38, %v5775
    %v5777 = vsel %vm5774, %v5776, %v5772
    %v5778 = vrcp.pop %v5563
    %v5779 = vmul.f32 %v5563, %v5778
    %v5780 = vsub.f32 1.0, %v5779
    %v5781 = vmul.f32 %v5778, %v5780
    %v5782 = vadd.f32 %v5778, %v5781
    %vm5783 = vweird.f32 %v5563
    %vm5784 = vweird.f32 %v5778
    %vm5785 = vmor %vm5783, %vm5784
    %v5786 = vsel %vm5785, %v5778, %v5782
    %v5787 = vand.u32 2147483647, %v5563
    %vm5788 = vcmp.eq.f32.partialorder %v5787, 8.507059e+37
    %v5789 = vand.u32 %v5563, 2147483648
    %v5790 = vor.u32 1.1754944e-38, %v5789
    %v5791 = vsel %vm5788, %v5790, %v5786
    %v5792 = vrcp.pop %v5566
    %v5793 = vmul.f32 %v5566, %v5792
    %v5794 = vsub.f32 1.0, %v5793
    %v5795 = vmul.f32 %v5792, %v5794
    %v5796 = vadd.f32 %v5792, %v5795
    %vm5797 = vweird.f32 %v5566
    %vm5798 = vweird.f32 %v5792
    %vm5799 = vmor %vm5797, %vm5798
    %v5800 = vsel %vm5799, %v5792, %v5796
    %v5801 = vand.u32 2147483647, %v5566
    %vm5802 = vcmp.eq.f32.partialorder %v5801, 8.507059e+37
    %v5803 = vand.u32 %v5566, 2147483648
    %v5804 = vor.u32 1.1754944e-38, %v5803
    %v5805 = vsel %vm5802, %v5804, %v5800
    %v5806 = vrcp.pop %v5569
    %v5807 = vmul.f32 %v5569, %v5806
    %v5808 = vsub.f32 1.0, %v5807
    %v5809 = vmul.f32 %v5806, %v5808
    %v5810 = vadd.f32 %v5806, %v5809
    %vm5811 = vweird.f32 %v5569
    %vm5812 = vweird.f32 %v5806
    %vm5813 = vmor %vm5811, %vm5812
    %v5814 = vsel %vm5813, %v5806, %v5810
    %v5815 = vand.u32 2147483647, %v5569
    %vm5816 = vcmp.eq.f32.partialorder %v5815, 8.507059e+37
    %v5817 = vand.u32 %v5569, 2147483648
    %v5818 = vor.u32 1.1754944e-38, %v5817
    %v5819 = vsel %vm5816, %v5818, %v5814
    %v5820 = vrcp.pop %v5572
    %v5821 = vmul.f32 %v5572, %v5820
    %v5822 = vsub.f32 1.0, %v5821
    %v5823 = vmul.f32 %v5820, %v5822
    %v5824 = vadd.f32 %v5820, %v5823
    %vm5825 = vweird.f32 %v5572
    %vm5826 = vweird.f32 %v5820
    %vm5827 = vmor %vm5825, %vm5826
    %v5828 = vsel %vm5827, %v5820, %v5824
    %v5829 = vand.u32 2147483647, %v5572
    %vm5830 = vcmp.eq.f32.partialorder %v5829, 8.507059e+37
    %v5831 = vand.u32 %v5572, 2147483648
    %v5832 = vor.u32 1.1754944e-38, %v5831
    %v5833 = vsel %vm5830, %v5832, %v5828
    %v5834 = vrcp.pop %v5575
    %v5835 = vmul.f32 %v5575, %v5834
    %v5836 = vsub.f32 1.0, %v5835
    %v5837 = vmul.f32 %v5834, %v5836
    %v5838 = vadd.f32 %v5834, %v5837
    %vm5839 = vweird.f32 %v5575
    %vm5840 = vweird.f32 %v5834
    %vm5841 = vmor %vm5839, %vm5840
    %v5842 = vsel %vm5841, %v5834, %v5838
    %v5843 = vand.u32 2147483647, %v5575
    %vm5844 = vcmp.eq.f32.partialorder %v5843, 8.507059e+37
    %v5845 = vand.u32 %v5575, 2147483648
    %v5846 = vor.u32 1.1754944e-38, %v5845
    %v5847 = vsel %vm5844, %v5846, %v5842
    %v5848 = vrcp.pop %v5578
    %v5849 = vmul.f32 %v5578, %v5848
    %v5850 = vsub.f32 1.0, %v5849
    %v5851 = vmul.f32 %v5848, %v5850
    %v5852 = vadd.f32 %v5848, %v5851
    %vm5853 = vweird.f32 %v5578
    %vm5854 = vweird.f32 %v5848
    %vm5855 = vmor %vm5853, %vm5854
    %v5856 = vsel %vm5855, %v5848, %v5852
    %v5857 = vand.u32 2147483647, %v5578
    %vm5858 = vcmp.eq.f32.partialorder %v5857, 8.507059e+37
    %v5859 = vand.u32 %v5578, 2147483648
    %v5860 = vor.u32 1.1754944e-38, %v5859
    %v5861 = vsel %vm5858, %v5860, %v5856
    %v5862 = vrcp.pop %v5581
    %v5863 = vmul.f32 %v5581, %v5862
    %v5864 = vsub.f32 1.0, %v5863
    %v5865 = vmul.f32 %v5862, %v5864
    %v5866 = vadd.f32 %v5862, %v5865
    %vm5867 = vweird.f32 %v5581
    %vm5868 = vweird.f32 %v5862
    %vm5869 = vmor %vm5867, %vm5868
    %v5870 = vsel %vm5869, %v5862, %v5866
    %v5871 = vand.u32 2147483647, %v5581
    %vm5872 = vcmp.eq.f32.partialorder %v5871, 8.507059e+37
    %v5873 = vand.u32 %v5581, 2147483648
    %v5874 = vor.u32 1.1754944e-38, %v5873
    %v5875 = vsel %vm5872, %v5874, %v5870
    %v5876 = vmul.f32 %v5478, %v5595
    %v5877 = vmul.f32 %v5480, %v5609
    %v5878 = vmul.f32 %v5482, %v5623
    %v5879 = vmul.f32 %v5484, %v5637
    %v5880 = vmul.f32 %v5486, %v5651
    %v5881 = vmul.f32 %v5488, %v5665
    %v5882 = vmul.f32 %v5490, %v5679
    %v5883 = vmul.f32 %v5492, %v5693
    %v5884 = vmul.f32 %v5494, %v5707
    %v5885 = vmul.f32 %v5496, %v5721
    %v5886 = vmul.f32 %v5498, %v5735
    %v5887 = vmul.f32 %v5500, %v5749
    %v5888 = vmul.f32 %v5502, %v5763
    %v5889 = vmul.f32 %v5504, %v5777
    %v5890 = vmul.f32 %v5506, %v5791
    %v5891 = vmul.f32 %v5508, %v5805
    %v5892 = vmul.f32 %v5510, %v5819
    %v5893 = vmul.f32 %v5512, %v5833
    %v5894 = vmul.f32 %v5514, %v5847
    %v5895 = vmul.f32 %v5516, %v5861
    %v5896 = vmul.f32 %v5518, %v5875
    %5904 = vrot.lane.b32.xlu0 %v359, 96
    %v5905 = vpop.permute.xlu0 %5904
    %5906 = vrot.lane.b32.xlu0 %v362, 96
    %v5907 = vpop.permute.xlu0 %5906
    %5908 = vrot.lane.b32.xlu0 %v365, 96
    %v5909 = vpop.permute.xlu0 %5908
    %5910 = vrot.lane.b32.xlu0 %v368, 96
    %v5911 = vpop.permute.xlu0 %5910
    %5912 = vrot.lane.b32.xlu0 %v371, 96
    %v5913 = vpop.permute.xlu0 %5912
    %5914 = vrot.lane.b32.xlu0 %v374, 96
    %v5915 = vpop.permute.xlu0 %5914
    %5916 = vrot.lane.b32.xlu0 %v377, 96
    %v5917 = vpop.permute.xlu0 %5916
    %v5926 = vsel %vm2010, %v5876, 0
    %v5929 = vsel %vm2010, %v5877, 0
    %v5932 = vsel %vm2010, %v5878, 0
    %v5935 = vsel %vm2010, %v5879, 0
    %v5938 = vsel %vm2010, %v5880, 0
    %v5941 = vsel %vm2010, %v5881, 0
    %v5944 = vsel %vm2010, %v5882, 0
    %v5947 = vsel %vm2010, %v5883, 0
    %v5950 = vsel %vm2010, %v5884, 0
    %v5953 = vsel %vm2010, %v5885, 0
    %v5956 = vsel %vm2010, %v5886, 0
    %v5959 = vsel %vm2010, %v5887, 0
    %v5962 = vsel %vm2010, %v5888, 0
    %v5965 = vsel %vm2010, %v5889, 0
    %v5968 = vsel %vm2010, %v5890, 0
    %v5971 = vsel %vm2010, %v5891, 0
    %v5974 = vsel %vm2010, %v5892, 0
    %v5977 = vsel %vm2010, %v5893, 0
    %v5980 = vsel %vm2010, %v5894, 0
    %v5983 = vsel %vm2010, %v5895, 0
    %v5986 = vsel %vm2010, %v5896, 0
    %5988 = vmatpush.msra.mxu0 0.0
    %5989 = vmatpush.msra.mxu0 0.0
    %5990 = vmatpush.msra.mxu0 0.0
    %5991 = vmatpush.msra.mxu0 0.0
    %5992 = vmatpush.msra.mxu0 0.0
    %5993 = vmatpush.msra.mxu0 0.0
    %5994 = vmatpush.msra.mxu0 0.0
    %5995 = vmatpush.msra.mxu0 0.0
    %5996 = vmatpush.msra.mxu0 0.0
    %5997 = vmatpush.msra.mxu0 %v5917
    %5998 = vmatpush.msra.mxu0 %v5915
    %5999 = vmatpush.msra.mxu0 %v5913
    %6000 = vmatpush.msra.mxu0 %v5911
    %6001 = vmatpush.msra.mxu0 %v5909
    %6002 = vmatpush.msra.mxu0 %v5907
    %6003 = vmatpush.msra.mxu0 %v5905
    %6004 = vmatmul.f32.gmra.mxu0 %v5926
    %v6005 = vpop.f32.mrf.mxu0
    %v6006 = vadd.f32 0.0, %v6005
    %6007 = vmatmul.f32.gmra.mxu0 %v5929
    %v6008 = vpop.f32.mrf.mxu0
    %v6009 = vadd.f32 0.0, %v6008
    %6010 = vmatmul.f32.gmra.mxu0 %v5932
    %v6011 = vpop.f32.mrf.mxu0
    %v6012 = vadd.f32 0.0, %v6011
    %6013 = vmatmul.f32.gmra.mxu0 %v5935
    %v6014 = vpop.f32.mrf.mxu0
    %v6015 = vadd.f32 0.0, %v6014
    %6016 = vmatmul.f32.gmra.mxu0 %v5938
    %v6017 = vpop.f32.mrf.mxu0
    %v6018 = vadd.f32 0.0, %v6017
    %6019 = vmatmul.f32.gmra.mxu0 %v5941
    %v6020 = vpop.f32.mrf.mxu0
    %v6021 = vadd.f32 0.0, %v6020
    %6022 = vmatmul.f32.gmra.mxu0 %v5944
    %v6023 = vpop.f32.mrf.mxu0
    %v6024 = vadd.f32 0.0, %v6023
    %6025 = vmatmul.f32.gmra.mxu0 %v5947
    %v6026 = vpop.f32.mrf.mxu0
    %v6027 = vadd.f32 0.0, %v6026
    %6028 = vmatmul.f32.gmra.mxu0 %v5950
    %v6029 = vpop.f32.mrf.mxu0
    %v6030 = vadd.f32 0.0, %v6029
    %6031 = vmatmul.f32.gmra.mxu0 %v5953
    %v6032 = vpop.f32.mrf.mxu0
    %v6033 = vadd.f32 0.0, %v6032
    %6034 = vmatmul.f32.gmra.mxu0 %v5956
    %v6035 = vpop.f32.mrf.mxu0
    %v6036 = vadd.f32 0.0, %v6035
    %6037 = vmatmul.f32.gmra.mxu0 %v5959
    %v6038 = vpop.f32.mrf.mxu0
    %v6039 = vadd.f32 0.0, %v6038
    %6040 = vmatmul.f32.gmra.mxu0 %v5962
    %v6041 = vpop.f32.mrf.mxu0
    %v6042 = vadd.f32 0.0, %v6041
    %6043 = vmatmul.f32.gmra.mxu0 %v5965
    %v6044 = vpop.f32.mrf.mxu0
    %v6045 = vadd.f32 0.0, %v6044
    %6046 = vmatmul.f32.gmra.mxu0 %v5968
    %v6047 = vpop.f32.mrf.mxu0
    %v6048 = vadd.f32 0.0, %v6047
    %6049 = vmatmul.f32.gmra.mxu0 %v5971
    %v6050 = vpop.f32.mrf.mxu0
    %v6051 = vadd.f32 0.0, %v6050
    %6052 = vmatmul.f32.gmra.mxu0 %v5974
    %v6053 = vpop.f32.mrf.mxu0
    %v6054 = vadd.f32 0.0, %v6053
    %6055 = vmatmul.f32.gmra.mxu0 %v5977
    %v6056 = vpop.f32.mrf.mxu0
    %v6057 = vadd.f32 0.0, %v6056
    %6058 = vmatmul.f32.gmra.mxu0 %v5980
    %v6059 = vpop.f32.mrf.mxu0
    %v6060 = vadd.f32 0.0, %v6059
    %6061 = vmatmul.f32.gmra.mxu0 %v5983
    %v6062 = vpop.f32.mrf.mxu0
    %v6063 = vadd.f32 0.0, %v6062
    %6064 = vmatmul.f32.gmra.mxu0 %v5986
    %v6065 = vpop.f32.mrf.mxu0
    %v6066 = vadd.f32 0.0, %v6065
    %6067 = vdwg.mxu0
    %6089 = vrot.lane.b32.xlu0 %v6006, 32
    %v6090 = vpop.permute.xlu0 %6089
    %6091 = vrot.lane.b32.xlu0 %v6009, 32
    %v6092 = vpop.permute.xlu0 %6091
    %6093 = vrot.lane.b32.xlu0 %v6012, 32
    %v6094 = vpop.permute.xlu0 %6093
    %6095 = vrot.lane.b32.xlu0 %v6015, 32
    %v6096 = vpop.permute.xlu0 %6095
    %6097 = vrot.lane.b32.xlu0 %v6018, 32
    %v6098 = vpop.permute.xlu0 %6097
    %6099 = vrot.lane.b32.xlu0 %v6021, 32
    %v6100 = vpop.permute.xlu0 %6099
    %6101 = vrot.lane.b32.xlu0 %v6024, 32
    %v6102 = vpop.permute.xlu0 %6101
    %6103 = vrot.lane.b32.xlu0 %v6027, 32
    %v6104 = vpop.permute.xlu0 %6103
    %6105 = vrot.lane.b32.xlu0 %v6030, 32
    %v6106 = vpop.permute.xlu0 %6105
    %6107 = vrot.lane.b32.xlu0 %v6033, 32
    %v6108 = vpop.permute.xlu0 %6107
    %6109 = vrot.lane.b32.xlu0 %v6036, 32
    %v6110 = vpop.permute.xlu0 %6109
    %6111 = vrot.lane.b32.xlu0 %v6039, 32
    %v6112 = vpop.permute.xlu0 %6111
    %6113 = vrot.lane.b32.xlu0 %v6042, 32
    %v6114 = vpop.permute.xlu0 %6113
    %6115 = vrot.lane.b32.xlu0 %v6045, 32
    %v6116 = vpop.permute.xlu0 %6115
    %6117 = vrot.lane.b32.xlu0 %v6048, 32
    %v6118 = vpop.permute.xlu0 %6117
    %6119 = vrot.lane.b32.xlu0 %v6051, 32
    %v6120 = vpop.permute.xlu0 %6119
    %6121 = vrot.lane.b32.xlu0 %v6054, 32
    %v6122 = vpop.permute.xlu0 %6121
    %6123 = vrot.lane.b32.xlu0 %v6057, 32
    %v6124 = vpop.permute.xlu0 %6123
    %6125 = vrot.lane.b32.xlu0 %v6060, 32
    %v6126 = vpop.permute.xlu0 %6125
    %6127 = vrot.lane.b32.xlu0 %v6063, 32
    %v6128 = vpop.permute.xlu0 %6127
    %6129 = vrot.lane.b32.xlu0 %v6066, 32
    %v6130 = vpop.permute.xlu0 %6129
    %v6152 = vsub.f32 %v401, %v6090
    %v6153 = vsub.f32 %v404, %v6092
    %v6154 = vsub.f32 %v407, %v6094
    %v6155 = vsub.f32 %v410, %v6096
    %v6156 = vsub.f32 %v413, %v6098
    %v6157 = vsub.f32 %v416, %v6100
    %v6158 = vsub.f32 %v419, %v6102
    %v6159 = vsub.f32 %v422, %v6104
    %v6160 = vsub.f32 %v425, %v6106
    %v6161 = vsub.f32 %v428, %v6108
    %v6162 = vsub.f32 %v431, %v6110
    %v6163 = vsub.f32 %v434, %v6112
    %v6164 = vsub.f32 %v437, %v6114
    %v6165 = vsub.f32 %v440, %v6116
    %v6166 = vsub.f32 %v443, %v6118
    %v6167 = vsub.f32 %v446, %v6120
    %v6168 = vsub.f32 %v449, %v6122
    %v6169 = vsub.f32 %v452, %v6124
    %v6170 = vsub.f32 %v455, %v6126
    %v6171 = vsub.f32 %v458, %v6128
    %v6172 = vsub.f32 %v461, %v6130
    %v6173 = vmul.f32 %v6152, %v6152
    %v6174 = vmul.f32 %v6153, %v6153
    %v6175 = vmul.f32 %v6154, %v6154
    %v6176 = vmul.f32 %v6155, %v6155
    %v6177 = vmul.f32 %v6156, %v6156
    %v6178 = vmul.f32 %v6157, %v6157
    %v6179 = vmul.f32 %v6158, %v6158
    %v6180 = vmul.f32 %v6159, %v6159
    %v6181 = vmul.f32 %v6160, %v6160
    %v6182 = vmul.f32 %v6161, %v6161
    %v6183 = vmul.f32 %v6162, %v6162
    %v6184 = vmul.f32 %v6163, %v6163
    %v6185 = vmul.f32 %v6164, %v6164
    %v6186 = vmul.f32 %v6165, %v6165
    %v6187 = vmul.f32 %v6166, %v6166
    %v6188 = vmul.f32 %v6167, %v6167
    %v6189 = vmul.f32 %v6168, %v6168
    %v6190 = vmul.f32 %v6169, %v6169
    %v6191 = vmul.f32 %v6170, %v6170
    %v6192 = vmul.f32 %v6171, %v6171
    %v6193 = vmul.f32 %v6172, %v6172
    %6215 = vrot.lane.b32.xlu0 %v6173, 96
    %v6216 = vpop.permute.xlu0 %6215
    %6217 = vrot.lane.b32.xlu0 %v6174, 96
    %v6218 = vpop.permute.xlu0 %6217
    %6219 = vrot.lane.b32.xlu0 %v6175, 96
    %v6220 = vpop.permute.xlu0 %6219
    %6221 = vrot.lane.b32.xlu0 %v6176, 96
    %v6222 = vpop.permute.xlu0 %6221
    %6223 = vrot.lane.b32.xlu0 %v6177, 96
    %v6224 = vpop.permute.xlu0 %6223
    %6225 = vrot.lane.b32.xlu0 %v6178, 96
    %v6226 = vpop.permute.xlu0 %6225
    %6227 = vrot.lane.b32.xlu0 %v6179, 96
    %v6228 = vpop.permute.xlu0 %6227
    %6229 = vrot.lane.b32.xlu0 %v6180, 96
    %v6230 = vpop.permute.xlu0 %6229
    %6231 = vrot.lane.b32.xlu0 %v6181, 96
    %v6232 = vpop.permute.xlu0 %6231
    %6233 = vrot.lane.b32.xlu0 %v6182, 96
    %v6234 = vpop.permute.xlu0 %6233
    %6235 = vrot.lane.b32.xlu0 %v6183, 96
    %v6236 = vpop.permute.xlu0 %6235
    %6237 = vrot.lane.b32.xlu0 %v6184, 96
    %v6238 = vpop.permute.xlu0 %6237
    %6239 = vrot.lane.b32.xlu0 %v6185, 96
    %v6240 = vpop.permute.xlu0 %6239
    %6241 = vrot.lane.b32.xlu0 %v6186, 96
    %v6242 = vpop.permute.xlu0 %6241
    %6243 = vrot.lane.b32.xlu0 %v6187, 96
    %v6244 = vpop.permute.xlu0 %6243
    %6245 = vrot.lane.b32.xlu0 %v6188, 96
    %v6246 = vpop.permute.xlu0 %6245
    %6247 = vrot.lane.b32.xlu0 %v6189, 96
    %v6248 = vpop.permute.xlu0 %6247
    %6249 = vrot.lane.b32.xlu0 %v6190, 96
    %v6250 = vpop.permute.xlu0 %6249
    %6251 = vrot.lane.b32.xlu0 %v6191, 96
    %v6252 = vpop.permute.xlu0 %6251
    %6253 = vrot.lane.b32.xlu0 %v6192, 96
    %v6254 = vpop.permute.xlu0 %6253
    %6255 = vrot.lane.b32.xlu0 %v6193, 96
    %v6256 = vpop.permute.xlu0 %6255
    %v6278 = vsel %vm463, %v6216, 0.0
    %6279 = vadd.xlane.f32.xlu0 %v6278
    %v6280 = vpop.xlane.xlu0 %6279
    %v6281 = vsel %vm463, %v6218, 0.0
    %6282 = vadd.xlane.f32.xlu0 %v6281
    %v6283 = vpop.xlane.xlu0 %6282
    %v6284 = vsel %vm463, %v6220, 0.0
    %6285 = vadd.xlane.f32.xlu0 %v6284
    %v6286 = vpop.xlane.xlu0 %6285
    %v6287 = vsel %vm463, %v6222, 0.0
    %6288 = vadd.xlane.f32.xlu0 %v6287
    %v6289 = vpop.xlane.xlu0 %6288
    %v6290 = vsel %vm463, %v6224, 0.0
    %6291 = vadd.xlane.f32.xlu0 %v6290
    %v6292 = vpop.xlane.xlu0 %6291
    %v6293 = vsel %vm463, %v6226, 0.0
    %6294 = vadd.xlane.f32.xlu0 %v6293
    %v6295 = vpop.xlane.xlu0 %6294
    %v6296 = vsel %vm463, %v6228, 0.0
    %6297 = vadd.xlane.f32.xlu0 %v6296
    %v6298 = vpop.xlane.xlu0 %6297
    %v6299 = vsel %vm463, %v6230, 0.0
    %6300 = vadd.xlane.f32.xlu0 %v6299
    %v6301 = vpop.xlane.xlu0 %6300
    %v6302 = vsel %vm463, %v6232, 0.0
    %6303 = vadd.xlane.f32.xlu0 %v6302
    %v6304 = vpop.xlane.xlu0 %6303
    %v6305 = vsel %vm463, %v6234, 0.0
    %6306 = vadd.xlane.f32.xlu0 %v6305
    %v6307 = vpop.xlane.xlu0 %6306
    %v6308 = vsel %vm463, %v6236, 0.0
    %6309 = vadd.xlane.f32.xlu0 %v6308
    %v6310 = vpop.xlane.xlu0 %6309
    %v6311 = vsel %vm463, %v6238, 0.0
    %6312 = vadd.xlane.f32.xlu0 %v6311
    %v6313 = vpop.xlane.xlu0 %6312
    %v6314 = vsel %vm463, %v6240, 0.0
    %6315 = vadd.xlane.f32.xlu0 %v6314
    %v6316 = vpop.xlane.xlu0 %6315
    %v6317 = vsel %vm463, %v6242, 0.0
    %6318 = vadd.xlane.f32.xlu0 %v6317
    %v6319 = vpop.xlane.xlu0 %6318
    %v6320 = vsel %vm463, %v6244, 0.0
    %6321 = vadd.xlane.f32.xlu0 %v6320
    %v6322 = vpop.xlane.xlu0 %6321
    %v6323 = vsel %vm463, %v6246, 0.0
    %6324 = vadd.xlane.f32.xlu0 %v6323
    %v6325 = vpop.xlane.xlu0 %6324
    %v6326 = vsel %vm463, %v6248, 0.0
    %6327 = vadd.xlane.f32.xlu0 %v6326
    %v6328 = vpop.xlane.xlu0 %6327
    %v6329 = vsel %vm463, %v6250, 0.0
    %6330 = vadd.xlane.f32.xlu0 %v6329
    %v6331 = vpop.xlane.xlu0 %6330
    %v6332 = vsel %vm463, %v6252, 0.0
    %6333 = vadd.xlane.f32.xlu0 %v6332
    %v6334 = vpop.xlane.xlu0 %6333
    %v6335 = vsel %vm463, %v6254, 0.0
    %6336 = vadd.xlane.f32.xlu0 %v6335
    %v6337 = vpop.xlane.xlu0 %6336
    %v6338 = vsel %vm463, %v6256, 0.0
    %6339 = vadd.xlane.f32.xlu0 %v6338
    %v6340 = vpop.xlane.xlu0 %6339
    %v6362 = vperm.slane %v6280, %v1845
    %v6363 = vperm.slane %v6283, %v2981
    %v6364 = vsel %vm2983, %v6363, %v6362
    %v6365 = vperm.slane %v6286, %v2985
    %v6366 = vsel %vm2987, %v6365, %v6364
    %v6367 = vperm.slane %v6289, %v2989
    %v6368 = vsel %vm2991, %v6367, %v6366
    %v6369 = vperm.slane %v6292, %v2993
    %v6370 = vsel %vm2995, %v6369, %v6368
    %v6371 = vperm.slane %v6295, %v2997
    %v6372 = vsel %vm2999, %v6371, %v6370
    %v6373 = vperm.slane %v6298, %v3001
    %v6374 = vsel %vm3003, %v6373, %v6372
    %v6375 = vperm.slane %v6301, %v1845
    %v6376 = vperm.slane %v6304, %v2981
    %v6377 = vsel %vm2983, %v6376, %v6375
    %v6378 = vperm.slane %v6307, %v2985
    %v6379 = vsel %vm2987, %v6378, %v6377
    %v6380 = vperm.slane %v6310, %v2989
    %v6381 = vsel %vm2991, %v6380, %v6379
    %v6382 = vperm.slane %v6313, %v2993
    %v6383 = vsel %vm2995, %v6382, %v6381
    %v6384 = vperm.slane %v6316, %v2997
    %v6385 = vsel %vm2999, %v6384, %v6383
    %v6386 = vperm.slane %v6319, %v3001
    %v6387 = vsel %vm3003, %v6386, %v6385
    %v6388 = vperm.slane %v6322, %v1845
    %v6389 = vperm.slane %v6325, %v2981
    %v6390 = vsel %vm2983, %v6389, %v6388
    %v6391 = vperm.slane %v6328, %v2985
    %v6392 = vsel %vm2987, %v6391, %v6390
    %v6393 = vperm.slane %v6331, %v2989
    %v6394 = vsel %vm2991, %v6393, %v6392
    %v6395 = vperm.slane %v6334, %v2993
    %v6396 = vsel %vm2995, %v6395, %v6394
    %v6397 = vperm.slane %v6337, %v2997
    %v6398 = vsel %vm2999, %v6397, %v6396
    %v6399 = vperm.slane %v6340, %v3001
    %v6400 = vsel %vm3003, %v6399, %v6398
    %v6401 = vsel %vm3031, %v6387, %v6374
    %v6402 = vsel %vm3033, %v6400, %v6401
    %v6404 = vsel %vm3036, %v6402, 0.0
    %6405 = vadd.xlane.f32.xlu0 %v6404
    %v6406 = vpop.xlane.xlu0 %6405
    %v6407 = vsub.f32 0.0, %v6406
    %v6408 = vmul.f32 %v6407, %v3047
    %vm6409 = vcmp.eq.s32.totalorder %v1845, 3
    %v6410 = vsel %vm6409, %v6408, 0.0
    %v6411 = vadd.f32 %v5291, %v6410
    %v6413 = vsel %vm463, %v1795, 0
    %v6416 = vsel %vm463, %v1796, 0
    %v6419 = vsel %vm463, %v1797, 0
    %v6422 = vsel %vm463, %v1798, 0
    %v6425 = vsel %vm463, %v1799, 0
    %v6428 = vsel %vm463, %v1800, 0
    %v6431 = vsel %vm463, %v1801, 0
    %6433 = vmatpush.xpose.msra.mxu0 0.0
    %6434 = vmatpush.xpose.msra.mxu0 0.0
    %6435 = vmatpush.xpose.msra.mxu0 0.0
    %6436 = vmatpush.xpose.msra.mxu0 0.0
    %6437 = vmatpush.xpose.msra.mxu0 0.0
    %6438 = vmatpush.xpose.msra.mxu0 0.0
    %6439 = vmatpush.xpose.msra.mxu0 0.0
    %6440 = vmatpush.xpose.msra.mxu0 0.0
    %6441 = vmatpush.xpose.msra.mxu0 0.0
    %6442 = vmatpush.xpose.msra.mxu0 %v6431
    %6443 = vmatpush.xpose.msra.mxu0 %v6428
    %6444 = vmatpush.xpose.msra.mxu0 %v6425
    %6445 = vmatpush.xpose.msra.mxu0 %v6422
    %6446 = vmatpush.xpose.msra.mxu0 %v6419
    %6447 = vmatpush.xpose.msra.mxu0 %v6416
    %6448 = vmatpush.xpose.msra.mxu0 %v6413
    %6449 = vmatmul.f32.gmra.mxu0 %v1847
    %v6450 = vpop.f32.mrf.mxu0
    %v6451 = vadd.f32 0.0, %v6450
    %6452 = vmatmul.f32.gmra.mxu0 %v1850
    %v6453 = vpop.f32.mrf.mxu0
    %v6454 = vadd.f32 0.0, %v6453
    %6455 = vmatmul.f32.gmra.mxu0 %v1853
    %v6456 = vpop.f32.mrf.mxu0
    %v6457 = vadd.f32 0.0, %v6456
    %6458 = vmatmul.f32.gmra.mxu0 %v1856
    %v6459 = vpop.f32.mrf.mxu0
    %v6460 = vadd.f32 0.0, %v6459
    %6461 = vmatmul.f32.gmra.mxu0 %v1859
    %v6462 = vpop.f32.mrf.mxu0
    %v6463 = vadd.f32 0.0, %v6462
    %6464 = vmatmul.f32.gmra.mxu0 %v1862
    %v6465 = vpop.f32.mrf.mxu0
    %v6466 = vadd.f32 0.0, %v6465
    %6467 = vmatmul.f32.gmra.mxu0 %v1865
    %v6468 = vpop.f32.mrf.mxu0
    %v6469 = vadd.f32 0.0, %v6468
    %6470 = vmatmul.f32.gmra.mxu0 %v1868
    %v6471 = vpop.f32.mrf.mxu0
    %v6472 = vadd.f32 0.0, %v6471
    %6473 = vmatmul.f32.gmra.mxu0 %v1871
    %v6474 = vpop.f32.mrf.mxu0
    %v6475 = vadd.f32 0.0, %v6474
    %6476 = vmatmul.f32.gmra.mxu0 %v1874
    %v6477 = vpop.f32.mrf.mxu0
    %v6478 = vadd.f32 0.0, %v6477
    %6479 = vmatmul.f32.gmra.mxu0 %v1877
    %v6480 = vpop.f32.mrf.mxu0
    %v6481 = vadd.f32 0.0, %v6480
    %6482 = vmatmul.f32.gmra.mxu0 %v1880
    %v6483 = vpop.f32.mrf.mxu0
    %v6484 = vadd.f32 0.0, %v6483
    %6485 = vmatmul.f32.gmra.mxu0 %v1883
    %v6486 = vpop.f32.mrf.mxu0
    %v6487 = vadd.f32 0.0, %v6486
    %6488 = vmatmul.f32.gmra.mxu0 %v1886
    %v6489 = vpop.f32.mrf.mxu0
    %v6490 = vadd.f32 0.0, %v6489
    %6491 = vmatmul.f32.gmra.mxu0 %v1889
    %v6492 = vpop.f32.mrf.mxu0
    %v6493 = vadd.f32 0.0, %v6492
    %6494 = vmatmul.f32.gmra.mxu0 %v1892
    %v6495 = vpop.f32.mrf.mxu0
    %v6496 = vadd.f32 0.0, %v6495
    %6497 = vmatmul.f32.gmra.mxu0 %v1895
    %v6498 = vpop.f32.mrf.mxu0
    %v6499 = vadd.f32 0.0, %v6498
    %6500 = vmatmul.f32.gmra.mxu0 %v1898
    %v6501 = vpop.f32.mrf.mxu0
    %v6502 = vadd.f32 0.0, %v6501
    %6503 = vmatmul.f32.gmra.mxu0 %v1901
    %v6504 = vpop.f32.mrf.mxu0
    %v6505 = vadd.f32 0.0, %v6504
    %6506 = vmatmul.f32.gmra.mxu0 %v1904
    %v6507 = vpop.f32.mrf.mxu0
    %v6508 = vadd.f32 0.0, %v6507
    %6509 = vmatmul.f32.gmra.mxu0 %v1907
    %v6510 = vpop.f32.mrf.mxu0
    %v6511 = vadd.f32 0.0, %v6510
    %6512 = vdwg.mxu0
    %v6513 = vsel %vm2010, %v6451, -inf
    %6514 = vmax.xlane.f32.xlu0 %v6513
    %v6515 = vpop.xlane.xlu0 %6514
    %v6516 = vsel %vm2010, %v6454, -inf
    %6517 = vmax.xlane.f32.xlu0 %v6516
    %v6518 = vpop.xlane.xlu0 %6517
    %v6519 = vsel %vm2010, %v6457, -inf
    %6520 = vmax.xlane.f32.xlu0 %v6519
    %v6521 = vpop.xlane.xlu0 %6520
    %v6522 = vsel %vm2010, %v6460, -inf
    %6523 = vmax.xlane.f32.xlu0 %v6522
    %v6524 = vpop.xlane.xlu0 %6523
    %v6525 = vsel %vm2010, %v6463, -inf
    %6526 = vmax.xlane.f32.xlu0 %v6525
    %v6527 = vpop.xlane.xlu0 %6526
    %v6528 = vsel %vm2010, %v6466, -inf
    %6529 = vmax.xlane.f32.xlu0 %v6528
    %v6530 = vpop.xlane.xlu0 %6529
    %v6531 = vsel %vm2010, %v6469, -inf
    %6532 = vmax.xlane.f32.xlu0 %v6531
    %v6533 = vpop.xlane.xlu0 %6532
    %v6534 = vsel %vm2010, %v6472, -inf
    %6535 = vmax.xlane.f32.xlu0 %v6534
    %v6536 = vpop.xlane.xlu0 %6535
    %v6537 = vsel %vm2010, %v6475, -inf
    %6538 = vmax.xlane.f32.xlu0 %v6537
    %v6539 = vpop.xlane.xlu0 %6538
    %v6540 = vsel %vm2010, %v6478, -inf
    %6541 = vmax.xlane.f32.xlu0 %v6540
    %v6542 = vpop.xlane.xlu0 %6541
    %v6543 = vsel %vm2010, %v6481, -inf
    %6544 = vmax.xlane.f32.xlu0 %v6543
    %v6545 = vpop.xlane.xlu0 %6544
    %v6546 = vsel %vm2010, %v6484, -inf
    %6547 = vmax.xlane.f32.xlu0 %v6546
    %v6548 = vpop.xlane.xlu0 %6547
    %v6549 = vsel %vm2010, %v6487, -inf
    %6550 = vmax.xlane.f32.xlu0 %v6549
    %v6551 = vpop.xlane.xlu0 %6550
    %v6552 = vsel %vm2010, %v6490, -inf
    %6553 = vmax.xlane.f32.xlu0 %v6552
    %v6554 = vpop.xlane.xlu0 %6553
    %v6555 = vsel %vm2010, %v6493, -inf
    %6556 = vmax.xlane.f32.xlu0 %v6555
    %v6557 = vpop.xlane.xlu0 %6556
    %v6558 = vsel %vm2010, %v6496, -inf
    %6559 = vmax.xlane.f32.xlu0 %v6558
    %v6560 = vpop.xlane.xlu0 %6559
    %v6561 = vsel %vm2010, %v6499, -inf
    %6562 = vmax.xlane.f32.xlu0 %v6561
    %v6563 = vpop.xlane.xlu0 %6562
    %v6564 = vsel %vm2010, %v6502, -inf
    %6565 = vmax.xlane.f32.xlu0 %v6564
    %v6566 = vpop.xlane.xlu0 %6565
    %v6567 = vsel %vm2010, %v6505, -inf
    %6568 = vmax.xlane.f32.xlu0 %v6567
    %v6569 = vpop.xlane.xlu0 %6568
    %v6570 = vsel %vm2010, %v6508, -inf
    %6571 = vmax.xlane.f32.xlu0 %v6570
    %v6572 = vpop.xlane.xlu0 %6571
    %v6573 = vsel %vm2010, %v6511, -inf
    %6574 = vmax.xlane.f32.xlu0 %v6573
    %v6575 = vpop.xlane.xlu0 %6574
    %v6576 = vsub.f32 %v6451, %v6515
    %v6577 = vsub.f32 %v6454, %v6518
    %v6578 = vsub.f32 %v6457, %v6521
    %v6579 = vsub.f32 %v6460, %v6524
    %v6580 = vsub.f32 %v6463, %v6527
    %v6581 = vsub.f32 %v6466, %v6530
    %v6582 = vsub.f32 %v6469, %v6533
    %v6583 = vsub.f32 %v6472, %v6536
    %v6584 = vsub.f32 %v6475, %v6539
    %v6585 = vsub.f32 %v6478, %v6542
    %v6586 = vsub.f32 %v6481, %v6545
    %v6587 = vsub.f32 %v6484, %v6548
    %v6588 = vsub.f32 %v6487, %v6551
    %v6589 = vsub.f32 %v6490, %v6554
    %v6590 = vsub.f32 %v6493, %v6557
    %v6591 = vsub.f32 %v6496, %v6560
    %v6592 = vsub.f32 %v6499, %v6563
    %v6593 = vsub.f32 %v6502, %v6566
    %v6594 = vsub.f32 %v6505, %v6569
    %v6595 = vsub.f32 %v6508, %v6572
    %v6596 = vsub.f32 %v6511, %v6575
    %v6597 = vmul.f32 %v6576, 1.442695
    %v6598 = vpow.pop %v6597
    %v6599 = vmul.f32 %v6577, 1.442695
    %v6600 = vpow.pop %v6599
    %v6601 = vmul.f32 %v6578, 1.442695
    %v6602 = vpow.pop %v6601
    %v6603 = vmul.f32 %v6579, 1.442695
    %v6604 = vpow.pop %v6603
    %v6605 = vmul.f32 %v6580, 1.442695
    %v6606 = vpow.pop %v6605
    %v6607 = vmul.f32 %v6581, 1.442695
    %v6608 = vpow.pop %v6607
    %v6609 = vmul.f32 %v6582, 1.442695
    %v6610 = vpow.pop %v6609
    %v6611 = vmul.f32 %v6583, 1.442695
    %v6612 = vpow.pop %v6611
    %v6613 = vmul.f32 %v6584, 1.442695
    %v6614 = vpow.pop %v6613
    %v6615 = vmul.f32 %v6585, 1.442695
    %v6616 = vpow.pop %v6615
    %v6617 = vmul.f32 %v6586, 1.442695
    %v6618 = vpow.pop %v6617
    %v6619 = vmul.f32 %v6587, 1.442695
    %v6620 = vpow.pop %v6619
    %v6621 = vmul.f32 %v6588, 1.442695
    %v6622 = vpow.pop %v6621
    %v6623 = vmul.f32 %v6589, 1.442695
    %v6624 = vpow.pop %v6623
    %v6625 = vmul.f32 %v6590, 1.442695
    %v6626 = vpow.pop %v6625
    %v6627 = vmul.f32 %v6591, 1.442695
    %v6628 = vpow.pop %v6627
    %v6629 = vmul.f32 %v6592, 1.442695
    %v6630 = vpow.pop %v6629
    %v6631 = vmul.f32 %v6593, 1.442695
    %v6632 = vpow.pop %v6631
    %v6633 = vmul.f32 %v6594, 1.442695
    %v6634 = vpow.pop %v6633
    %v6635 = vmul.f32 %v6595, 1.442695
    %v6636 = vpow.pop %v6635
    %v6637 = vmul.f32 %v6596, 1.442695
    %v6638 = vpow.pop %v6637
    %v6639 = vsel %vm2010, %v6598, 0.0
    %6640 = vadd.xlane.f32.xlu0 %v6639
    %v6641 = vpop.xlane.xlu0 %6640
    %v6642 = vsel %vm2010, %v6600, 0.0
    %6643 = vadd.xlane.f32.xlu0 %v6642
    %v6644 = vpop.xlane.xlu0 %6643
    %v6645 = vsel %vm2010, %v6602, 0.0
    %6646 = vadd.xlane.f32.xlu0 %v6645
    %v6647 = vpop.xlane.xlu0 %6646
    %v6648 = vsel %vm2010, %v6604, 0.0
    %6649 = vadd.xlane.f32.xlu0 %v6648
    %v6650 = vpop.xlane.xlu0 %6649
    %v6651 = vsel %vm2010, %v6606, 0.0
    %6652 = vadd.xlane.f32.xlu0 %v6651
    %v6653 = vpop.xlane.xlu0 %6652
    %v6654 = vsel %vm2010, %v6608, 0.0
    %6655 = vadd.xlane.f32.xlu0 %v6654
    %v6656 = vpop.xlane.xlu0 %6655
    %v6657 = vsel %vm2010, %v6610, 0.0
    %6658 = vadd.xlane.f32.xlu0 %v6657
    %v6659 = vpop.xlane.xlu0 %6658
    %v6660 = vsel %vm2010, %v6612, 0.0
    %6661 = vadd.xlane.f32.xlu0 %v6660
    %v6662 = vpop.xlane.xlu0 %6661
    %v6663 = vsel %vm2010, %v6614, 0.0
    %6664 = vadd.xlane.f32.xlu0 %v6663
    %v6665 = vpop.xlane.xlu0 %6664
    %v6666 = vsel %vm2010, %v6616, 0.0
    %6667 = vadd.xlane.f32.xlu0 %v6666
    %v6668 = vpop.xlane.xlu0 %6667
    %v6669 = vsel %vm2010, %v6618, 0.0
    %6670 = vadd.xlane.f32.xlu0 %v6669
    %v6671 = vpop.xlane.xlu0 %6670
    %v6672 = vsel %vm2010, %v6620, 0.0
    %6673 = vadd.xlane.f32.xlu0 %v6672
    %v6674 = vpop.xlane.xlu0 %6673
    %v6675 = vsel %vm2010, %v6622, 0.0
    %6676 = vadd.xlane.f32.xlu0 %v6675
    %v6677 = vpop.xlane.xlu0 %6676
    %v6678 = vsel %vm2010, %v6624, 0.0
    %6679 = vadd.xlane.f32.xlu0 %v6678
    %v6680 = vpop.xlane.xlu0 %6679
    %v6681 = vsel %vm2010, %v6626, 0.0
    %6682 = vadd.xlane.f32.xlu0 %v6681
    %v6683 = vpop.xlane.xlu0 %6682
    %v6684 = vsel %vm2010, %v6628, 0.0
    %6685 = vadd.xlane.f32.xlu0 %v6684
    %v6686 = vpop.xlane.xlu0 %6685
    %v6687 = vsel %vm2010, %v6630, 0.0
    %6688 = vadd.xlane.f32.xlu0 %v6687
    %v6689 = vpop.xlane.xlu0 %6688
    %v6690 = vsel %vm2010, %v6632, 0.0
    %6691 = vadd.xlane.f32.xlu0 %v6690
    %v6692 = vpop.xlane.xlu0 %6691
    %v6693 = vsel %vm2010, %v6634, 0.0
    %6694 = vadd.xlane.f32.xlu0 %v6693
    %v6695 = vpop.xlane.xlu0 %6694
    %v6696 = vsel %vm2010, %v6636, 0.0
    %6697 = vadd.xlane.f32.xlu0 %v6696
    %v6698 = vpop.xlane.xlu0 %6697
    %v6699 = vsel %vm2010, %v6638, 0.0
    %6700 = vadd.xlane.f32.xlu0 %v6699
    %v6701 = vpop.xlane.xlu0 %6700
    %v6702 = vrcp.pop %v6641
    %v6703 = vmul.f32 %v6641, %v6702
    %v6704 = vsub.f32 1.0, %v6703
    %v6705 = vmul.f32 %v6702, %v6704
    %v6706 = vadd.f32 %v6702, %v6705
    %vm6707 = vweird.f32 %v6641
    %vm6708 = vweird.f32 %v6702
    %vm6709 = vmor %vm6707, %vm6708
    %v6710 = vsel %vm6709, %v6702, %v6706
    %v6711 = vand.u32 2147483647, %v6641
    %vm6712 = vcmp.eq.f32.partialorder %v6711, 8.507059e+37
    %v6713 = vand.u32 %v6641, 2147483648
    %v6714 = vor.u32 1.1754944e-38, %v6713
    %v6715 = vsel %vm6712, %v6714, %v6710
    %v6716 = vrcp.pop %v6644
    %v6717 = vmul.f32 %v6644, %v6716
    %v6718 = vsub.f32 1.0, %v6717
    %v6719 = vmul.f32 %v6716, %v6718
    %v6720 = vadd.f32 %v6716, %v6719
    %vm6721 = vweird.f32 %v6644
    %vm6722 = vweird.f32 %v6716
    %vm6723 = vmor %vm6721, %vm6722
    %v6724 = vsel %vm6723, %v6716, %v6720
    %v6725 = vand.u32 2147483647, %v6644
    %vm6726 = vcmp.eq.f32.partialorder %v6725, 8.507059e+37
    %v6727 = vand.u32 %v6644, 2147483648
    %v6728 = vor.u32 1.1754944e-38, %v6727
    %v6729 = vsel %vm6726, %v6728, %v6724
    %v6730 = vrcp.pop %v6647
    %v6731 = vmul.f32 %v6647, %v6730
    %v6732 = vsub.f32 1.0, %v6731
    %v6733 = vmul.f32 %v6730, %v6732
    %v6734 = vadd.f32 %v6730, %v6733
    %vm6735 = vweird.f32 %v6647
    %vm6736 = vweird.f32 %v6730
    %vm6737 = vmor %vm6735, %vm6736
    %v6738 = vsel %vm6737, %v6730, %v6734
    %v6739 = vand.u32 2147483647, %v6647
    %vm6740 = vcmp.eq.f32.partialorder %v6739, 8.507059e+37
    %v6741 = vand.u32 %v6647, 2147483648
    %v6742 = vor.u32 1.1754944e-38, %v6741
    %v6743 = vsel %vm6740, %v6742, %v6738
    %v6744 = vrcp.pop %v6650
    %v6745 = vmul.f32 %v6650, %v6744
    %v6746 = vsub.f32 1.0, %v6745
    %v6747 = vmul.f32 %v6744, %v6746
    %v6748 = vadd.f32 %v6744, %v6747
    %vm6749 = vweird.f32 %v6650
    %vm6750 = vweird.f32 %v6744
    %vm6751 = vmor %vm6749, %vm6750
    %v6752 = vsel %vm6751, %v6744, %v6748
    %v6753 = vand.u32 2147483647, %v6650
    %vm6754 = vcmp.eq.f32.partialorder %v6753, 8.507059e+37
    %v6755 = vand.u32 %v6650, 2147483648
    %v6756 = vor.u32 1.1754944e-38, %v6755
    %v6757 = vsel %vm6754, %v6756, %v6752
    %v6758 = vrcp.pop %v6653
    %v6759 = vmul.f32 %v6653, %v6758
    %v6760 = vsub.f32 1.0, %v6759
    %v6761 = vmul.f32 %v6758, %v6760
    %v6762 = vadd.f32 %v6758, %v6761
    %vm6763 = vweird.f32 %v6653
    %vm6764 = vweird.f32 %v6758
    %vm6765 = vmor %vm6763, %vm6764
    %v6766 = vsel %vm6765, %v6758, %v6762
    %v6767 = vand.u32 2147483647, %v6653
    %vm6768 = vcmp.eq.f32.partialorder %v6767, 8.507059e+37
    %v6769 = vand.u32 %v6653, 2147483648
    %v6770 = vor.u32 1.1754944e-38, %v6769
    %v6771 = vsel %vm6768, %v6770, %v6766
    %v6772 = vrcp.pop %v6656
    %v6773 = vmul.f32 %v6656, %v6772
    %v6774 = vsub.f32 1.0, %v6773
    %v6775 = vmul.f32 %v6772, %v6774
    %v6776 = vadd.f32 %v6772, %v6775
    %vm6777 = vweird.f32 %v6656
    %vm6778 = vweird.f32 %v6772
    %vm6779 = vmor %vm6777, %vm6778
    %v6780 = vsel %vm6779, %v6772, %v6776
    %v6781 = vand.u32 2147483647, %v6656
    %vm6782 = vcmp.eq.f32.partialorder %v6781, 8.507059e+37
    %v6783 = vand.u32 %v6656, 2147483648
    %v6784 = vor.u32 1.1754944e-38, %v6783
    %v6785 = vsel %vm6782, %v6784, %v6780
    %v6786 = vrcp.pop %v6659
    %v6787 = vmul.f32 %v6659, %v6786
    %v6788 = vsub.f32 1.0, %v6787
    %v6789 = vmul.f32 %v6786, %v6788
    %v6790 = vadd.f32 %v6786, %v6789
    %vm6791 = vweird.f32 %v6659
    %vm6792 = vweird.f32 %v6786
    %vm6793 = vmor %vm6791, %vm6792
    %v6794 = vsel %vm6793, %v6786, %v6790
    %v6795 = vand.u32 2147483647, %v6659
    %vm6796 = vcmp.eq.f32.partialorder %v6795, 8.507059e+37
    %v6797 = vand.u32 %v6659, 2147483648
    %v6798 = vor.u32 1.1754944e-38, %v6797
    %v6799 = vsel %vm6796, %v6798, %v6794
    %v6800 = vrcp.pop %v6662
    %v6801 = vmul.f32 %v6662, %v6800
    %v6802 = vsub.f32 1.0, %v6801
    %v6803 = vmul.f32 %v6800, %v6802
    %v6804 = vadd.f32 %v6800, %v6803
    %vm6805 = vweird.f32 %v6662
    %vm6806 = vweird.f32 %v6800
    %vm6807 = vmor %vm6805, %vm6806
    %v6808 = vsel %vm6807, %v6800, %v6804
    %v6809 = vand.u32 2147483647, %v6662
    %vm6810 = vcmp.eq.f32.partialorder %v6809, 8.507059e+37
    %v6811 = vand.u32 %v6662, 2147483648
    %v6812 = vor.u32 1.1754944e-38, %v6811
    %v6813 = vsel %vm6810, %v6812, %v6808
    %v6814 = vrcp.pop %v6665
    %v6815 = vmul.f32 %v6665, %v6814
    %v6816 = vsub.f32 1.0, %v6815
    %v6817 = vmul.f32 %v6814, %v6816
    %v6818 = vadd.f32 %v6814, %v6817
    %vm6819 = vweird.f32 %v6665
    %vm6820 = vweird.f32 %v6814
    %vm6821 = vmor %vm6819, %vm6820
    %v6822 = vsel %vm6821, %v6814, %v6818
    %v6823 = vand.u32 2147483647, %v6665
    %vm6824 = vcmp.eq.f32.partialorder %v6823, 8.507059e+37
    %v6825 = vand.u32 %v6665, 2147483648
    %v6826 = vor.u32 1.1754944e-38, %v6825
    %v6827 = vsel %vm6824, %v6826, %v6822
    %v6828 = vrcp.pop %v6668
    %v6829 = vmul.f32 %v6668, %v6828
    %v6830 = vsub.f32 1.0, %v6829
    %v6831 = vmul.f32 %v6828, %v6830
    %v6832 = vadd.f32 %v6828, %v6831
    %vm6833 = vweird.f32 %v6668
    %vm6834 = vweird.f32 %v6828
    %vm6835 = vmor %vm6833, %vm6834
    %v6836 = vsel %vm6835, %v6828, %v6832
    %v6837 = vand.u32 2147483647, %v6668
    %vm6838 = vcmp.eq.f32.partialorder %v6837, 8.507059e+37
    %v6839 = vand.u32 %v6668, 2147483648
    %v6840 = vor.u32 1.1754944e-38, %v6839
    %v6841 = vsel %vm6838, %v6840, %v6836
    %v6842 = vrcp.pop %v6671
    %v6843 = vmul.f32 %v6671, %v6842
    %v6844 = vsub.f32 1.0, %v6843
    %v6845 = vmul.f32 %v6842, %v6844
    %v6846 = vadd.f32 %v6842, %v6845
    %vm6847 = vweird.f32 %v6671
    %vm6848 = vweird.f32 %v6842
    %vm6849 = vmor %vm6847, %vm6848
    %v6850 = vsel %vm6849, %v6842, %v6846
    %v6851 = vand.u32 2147483647, %v6671
    %vm6852 = vcmp.eq.f32.partialorder %v6851, 8.507059e+37
    %v6853 = vand.u32 %v6671, 2147483648
    %v6854 = vor.u32 1.1754944e-38, %v6853
    %v6855 = vsel %vm6852, %v6854, %v6850
    %v6856 = vrcp.pop %v6674
    %v6857 = vmul.f32 %v6674, %v6856
    %v6858 = vsub.f32 1.0, %v6857
    %v6859 = vmul.f32 %v6856, %v6858
    %v6860 = vadd.f32 %v6856, %v6859
    %vm6861 = vweird.f32 %v6674
    %vm6862 = vweird.f32 %v6856
    %vm6863 = vmor %vm6861, %vm6862
    %v6864 = vsel %vm6863, %v6856, %v6860
    %v6865 = vand.u32 2147483647, %v6674
    %vm6866 = vcmp.eq.f32.partialorder %v6865, 8.507059e+37
    %v6867 = vand.u32 %v6674, 2147483648
    %v6868 = vor.u32 1.1754944e-38, %v6867
    %v6869 = vsel %vm6866, %v6868, %v6864
    %v6870 = vrcp.pop %v6677
    %v6871 = vmul.f32 %v6677, %v6870
    %v6872 = vsub.f32 1.0, %v6871
    %v6873 = vmul.f32 %v6870, %v6872
    %v6874 = vadd.f32 %v6870, %v6873
    %vm6875 = vweird.f32 %v6677
    %vm6876 = vweird.f32 %v6870
    %vm6877 = vmor %vm6875, %vm6876
    %v6878 = vsel %vm6877, %v6870, %v6874
    %v6879 = vand.u32 2147483647, %v6677
    %vm6880 = vcmp.eq.f32.partialorder %v6879, 8.507059e+37
    %v6881 = vand.u32 %v6677, 2147483648
    %v6882 = vor.u32 1.1754944e-38, %v6881
    %v6883 = vsel %vm6880, %v6882, %v6878
    %v6884 = vrcp.pop %v6680
    %v6885 = vmul.f32 %v6680, %v6884
    %v6886 = vsub.f32 1.0, %v6885
    %v6887 = vmul.f32 %v6884, %v6886
    %v6888 = vadd.f32 %v6884, %v6887
    %vm6889 = vweird.f32 %v6680
    %vm6890 = vweird.f32 %v6884
    %vm6891 = vmor %vm6889, %vm6890
    %v6892 = vsel %vm6891, %v6884, %v6888
    %v6893 = vand.u32 2147483647, %v6680
    %vm6894 = vcmp.eq.f32.partialorder %v6893, 8.507059e+37
    %v6895 = vand.u32 %v6680, 2147483648
    %v6896 = vor.u32 1.1754944e-38, %v6895
    %v6897 = vsel %vm6894, %v6896, %v6892
    %v6898 = vrcp.pop %v6683
    %v6899 = vmul.f32 %v6683, %v6898
    %v6900 = vsub.f32 1.0, %v6899
    %v6901 = vmul.f32 %v6898, %v6900
    %v6902 = vadd.f32 %v6898, %v6901
    %vm6903 = vweird.f32 %v6683
    %vm6904 = vweird.f32 %v6898
    %vm6905 = vmor %vm6903, %vm6904
    %v6906 = vsel %vm6905, %v6898, %v6902
    %v6907 = vand.u32 2147483647, %v6683
    %vm6908 = vcmp.eq.f32.partialorder %v6907, 8.507059e+37
    %v6909 = vand.u32 %v6683, 2147483648
    %v6910 = vor.u32 1.1754944e-38, %v6909
    %v6911 = vsel %vm6908, %v6910, %v6906
    %v6912 = vrcp.pop %v6686
    %v6913 = vmul.f32 %v6686, %v6912
    %v6914 = vsub.f32 1.0, %v6913
    %v6915 = vmul.f32 %v6912, %v6914
    %v6916 = vadd.f32 %v6912, %v6915
    %vm6917 = vweird.f32 %v6686
    %vm6918 = vweird.f32 %v6912
    %vm6919 = vmor %vm6917, %vm6918
    %v6920 = vsel %vm6919, %v6912, %v6916
    %v6921 = vand.u32 2147483647, %v6686
    %vm6922 = vcmp.eq.f32.partialorder %v6921, 8.507059e+37
    %v6923 = vand.u32 %v6686, 2147483648
    %v6924 = vor.u32 1.1754944e-38, %v6923
    %v6925 = vsel %vm6922, %v6924, %v6920
    %v6926 = vrcp.pop %v6689
    %v6927 = vmul.f32 %v6689, %v6926
    %v6928 = vsub.f32 1.0, %v6927
    %v6929 = vmul.f32 %v6926, %v6928
    %v6930 = vadd.f32 %v6926, %v6929
    %vm6931 = vweird.f32 %v6689
    %vm6932 = vweird.f32 %v6926
    %vm6933 = vmor %vm6931, %vm6932
    %v6934 = vsel %vm6933, %v6926, %v6930
    %v6935 = vand.u32 2147483647, %v6689
    %vm6936 = vcmp.eq.f32.partialorder %v6935, 8.507059e+37
    %v6937 = vand.u32 %v6689, 2147483648
    %v6938 = vor.u32 1.1754944e-38, %v6937
    %v6939 = vsel %vm6936, %v6938, %v6934
    %v6940 = vrcp.pop %v6692
    %v6941 = vmul.f32 %v6692, %v6940
    %v6942 = vsub.f32 1.0, %v6941
    %v6943 = vmul.f32 %v6940, %v6942
    %v6944 = vadd.f32 %v6940, %v6943
    %vm6945 = vweird.f32 %v6692
    %vm6946 = vweird.f32 %v6940
    %vm6947 = vmor %vm6945, %vm6946
    %v6948 = vsel %vm6947, %v6940, %v6944
    %v6949 = vand.u32 2147483647, %v6692
    %vm6950 = vcmp.eq.f32.partialorder %v6949, 8.507059e+37
    %v6951 = vand.u32 %v6692, 2147483648
    %v6952 = vor.u32 1.1754944e-38, %v6951
    %v6953 = vsel %vm6950, %v6952, %v6948
    %v6954 = vrcp.pop %v6695
    %v6955 = vmul.f32 %v6695, %v6954
    %v6956 = vsub.f32 1.0, %v6955
    %v6957 = vmul.f32 %v6954, %v6956
    %v6958 = vadd.f32 %v6954, %v6957
    %vm6959 = vweird.f32 %v6695
    %vm6960 = vweird.f32 %v6954
    %vm6961 = vmor %vm6959, %vm6960
    %v6962 = vsel %vm6961, %v6954, %v6958
    %v6963 = vand.u32 2147483647, %v6695
    %vm6964 = vcmp.eq.f32.partialorder %v6963, 8.507059e+37
    %v6965 = vand.u32 %v6695, 2147483648
    %v6966 = vor.u32 1.1754944e-38, %v6965
    %v6967 = vsel %vm6964, %v6966, %v6962
    %v6968 = vrcp.pop %v6698
    %v6969 = vmul.f32 %v6698, %v6968
    %v6970 = vsub.f32 1.0, %v6969
    %v6971 = vmul.f32 %v6968, %v6970
    %v6972 = vadd.f32 %v6968, %v6971
    %vm6973 = vweird.f32 %v6698
    %vm6974 = vweird.f32 %v6968
    %vm6975 = vmor %vm6973, %vm6974
    %v6976 = vsel %vm6975, %v6968, %v6972
    %v6977 = vand.u32 2147483647, %v6698
    %vm6978 = vcmp.eq.f32.partialorder %v6977, 8.507059e+37
    %v6979 = vand.u32 %v6698, 2147483648
    %v6980 = vor.u32 1.1754944e-38, %v6979
    %v6981 = vsel %vm6978, %v6980, %v6976
    %v6982 = vrcp.pop %v6701
    %v6983 = vmul.f32 %v6701, %v6982
    %v6984 = vsub.f32 1.0, %v6983
    %v6985 = vmul.f32 %v6982, %v6984
    %v6986 = vadd.f32 %v6982, %v6985
    %vm6987 = vweird.f32 %v6701
    %vm6988 = vweird.f32 %v6982
    %vm6989 = vmor %vm6987, %vm6988
    %v6990 = vsel %vm6989, %v6982, %v6986
    %v6991 = vand.u32 2147483647, %v6701
    %vm6992 = vcmp.eq.f32.partialorder %v6991, 8.507059e+37
    %v6993 = vand.u32 %v6701, 2147483648
    %v6994 = vor.u32 1.1754944e-38, %v6993
    %v6995 = vsel %vm6992, %v6994, %v6990
    %v6996 = vmul.f32 %v6598, %v6715
    %v6997 = vmul.f32 %v6600, %v6729
    %v6998 = vmul.f32 %v6602, %v6743
    %v6999 = vmul.f32 %v6604, %v6757
    %v7000 = vmul.f32 %v6606, %v6771
    %v7001 = vmul.f32 %v6608, %v6785
    %v7002 = vmul.f32 %v6610, %v6799
    %v7003 = vmul.f32 %v6612, %v6813
    %v7004 = vmul.f32 %v6614, %v6827
    %v7005 = vmul.f32 %v6616, %v6841
    %v7006 = vmul.f32 %v6618, %v6855
    %v7007 = vmul.f32 %v6620, %v6869
    %v7008 = vmul.f32 %v6622, %v6883
    %v7009 = vmul.f32 %v6624, %v6897
    %v7010 = vmul.f32 %v6626, %v6911
    %v7011 = vmul.f32 %v6628, %v6925
    %v7012 = vmul.f32 %v6630, %v6939
    %v7013 = vmul.f32 %v6632, %v6953
    %v7014 = vmul.f32 %v6634, %v6967
    %v7015 = vmul.f32 %v6636, %v6981
    %v7016 = vmul.f32 %v6638, %v6995
    %7024 = vrot.lane.b32.xlu0 %v380, 96
    %v7025 = vpop.permute.xlu0 %7024
    %7026 = vrot.lane.b32.xlu0 %v383, 96
    %v7027 = vpop.permute.xlu0 %7026
    %7028 = vrot.lane.b32.xlu0 %v386, 96
    %v7029 = vpop.permute.xlu0 %7028
    %7030 = vrot.lane.b32.xlu0 %v389, 96
    %v7031 = vpop.permute.xlu0 %7030
    %7032 = vrot.lane.b32.xlu0 %v392, 96
    %v7033 = vpop.permute.xlu0 %7032
    %7034 = vrot.lane.b32.xlu0 %v395, 96
    %v7035 = vpop.permute.xlu0 %7034
    %7036 = vrot.lane.b32.xlu0 %v398, 96
    %v7037 = vpop.permute.xlu0 %7036
    %v7046 = vsel %vm2010, %v6996, 0
    %v7049 = vsel %vm2010, %v6997, 0
    %v7052 = vsel %vm2010, %v6998, 0
    %v7055 = vsel %vm2010, %v6999, 0
    %v7058 = vsel %vm2010, %v7000, 0
    %v7061 = vsel %vm2010, %v7001, 0
    %v7064 = vsel %vm2010, %v7002, 0
    %v7067 = vsel %vm2010, %v7003, 0
    %v7070 = vsel %vm2010, %v7004, 0
    %v7073 = vsel %vm2010, %v7005, 0
    %v7076 = vsel %vm2010, %v7006, 0
    %v7079 = vsel %vm2010, %v7007, 0
    %v7082 = vsel %vm2010, %v7008, 0
    %v7085 = vsel %vm2010, %v7009, 0
    %v7088 = vsel %vm2010, %v7010, 0
    %v7091 = vsel %vm2010, %v7011, 0
    %v7094 = vsel %vm2010, %v7012, 0
    %v7097 = vsel %vm2010, %v7013, 0
    %v7100 = vsel %vm2010, %v7014, 0
    %v7103 = vsel %vm2010, %v7015, 0
    %v7106 = vsel %vm2010, %v7016, 0
    %7108 = vmatpush.msra.mxu0 0.0
    %7109 = vmatpush.msra.mxu0 0.0
    %7110 = vmatpush.msra.mxu0 0.0
    %7111 = vmatpush.msra.mxu0 0.0
    %7112 = vmatpush.msra.mxu0 0.0
    %7113 = vmatpush.msra.mxu0 0.0
    %7114 = vmatpush.msra.mxu0 0.0
    %7115 = vmatpush.msra.mxu0 0.0
    %7116 = vmatpush.msra.mxu0 0.0
    %7117 = vmatpush.msra.mxu0 %v7037
    %7118 = vmatpush.msra.mxu0 %v7035
    %7119 = vmatpush.msra.mxu0 %v7033
    %7120 = vmatpush.msra.mxu0 %v7031
    %7121 = vmatpush.msra.mxu0 %v7029
    %7122 = vmatpush.msra.mxu0 %v7027
    %7123 = vmatpush.msra.mxu0 %v7025
    %7124 = vmatmul.f32.gmra.mxu0 %v7046
    %v7125 = vpop.f32.mrf.mxu0
    %v7126 = vadd.f32 0.0, %v7125
    %7127 = vmatmul.f32.gmra.mxu0 %v7049
    %v7128 = vpop.f32.mrf.mxu0
    %v7129 = vadd.f32 0.0, %v7128
    %7130 = vmatmul.f32.gmra.mxu0 %v7052
    %v7131 = vpop.f32.mrf.mxu0
    %v7132 = vadd.f32 0.0, %v7131
    %7133 = vmatmul.f32.gmra.mxu0 %v7055
    %v7134 = vpop.f32.mrf.mxu0
    %v7135 = vadd.f32 0.0, %v7134
    %7136 = vmatmul.f32.gmra.mxu0 %v7058
    %v7137 = vpop.f32.mrf.mxu0
    %v7138 = vadd.f32 0.0, %v7137
    %7139 = vmatmul.f32.gmra.mxu0 %v7061
    %v7140 = vpop.f32.mrf.mxu0
    %v7141 = vadd.f32 0.0, %v7140
    %7142 = vmatmul.f32.gmra.mxu0 %v7064
    %v7143 = vpop.f32.mrf.mxu0
    %v7144 = vadd.f32 0.0, %v7143
    %7145 = vmatmul.f32.gmra.mxu0 %v7067
    %v7146 = vpop.f32.mrf.mxu0
    %v7147 = vadd.f32 0.0, %v7146
    %7148 = vmatmul.f32.gmra.mxu0 %v7070
    %v7149 = vpop.f32.mrf.mxu0
    %v7150 = vadd.f32 0.0, %v7149
    %7151 = vmatmul.f32.gmra.mxu0 %v7073
    %v7152 = vpop.f32.mrf.mxu0
    %v7153 = vadd.f32 0.0, %v7152
    %7154 = vmatmul.f32.gmra.mxu0 %v7076
    %v7155 = vpop.f32.mrf.mxu0
    %v7156 = vadd.f32 0.0, %v7155
    %7157 = vmatmul.f32.gmra.mxu0 %v7079
    %v7158 = vpop.f32.mrf.mxu0
    %v7159 = vadd.f32 0.0, %v7158
    %7160 = vmatmul.f32.gmra.mxu0 %v7082
    %v7161 = vpop.f32.mrf.mxu0
    %v7162 = vadd.f32 0.0, %v7161
    %7163 = vmatmul.f32.gmra.mxu0 %v7085
    %v7164 = vpop.f32.mrf.mxu0
    %v7165 = vadd.f32 0.0, %v7164
    %7166 = vmatmul.f32.gmra.mxu0 %v7088
    %v7167 = vpop.f32.mrf.mxu0
    %v7168 = vadd.f32 0.0, %v7167
    %7169 = vmatmul.f32.gmra.mxu0 %v7091
    %v7170 = vpop.f32.mrf.mxu0
    %v7171 = vadd.f32 0.0, %v7170
    %7172 = vmatmul.f32.gmra.mxu0 %v7094
    %v7173 = vpop.f32.mrf.mxu0
    %v7174 = vadd.f32 0.0, %v7173
    %7175 = vmatmul.f32.gmra.mxu0 %v7097
    %v7176 = vpop.f32.mrf.mxu0
    %v7177 = vadd.f32 0.0, %v7176
    %7178 = vmatmul.f32.gmra.mxu0 %v7100
    %v7179 = vpop.f32.mrf.mxu0
    %v7180 = vadd.f32 0.0, %v7179
    %7181 = vmatmul.f32.gmra.mxu0 %v7103
    %v7182 = vpop.f32.mrf.mxu0
    %v7183 = vadd.f32 0.0, %v7182
    %7184 = vmatmul.f32.gmra.mxu0 %v7106
    %v7185 = vpop.f32.mrf.mxu0
    %v7186 = vadd.f32 0.0, %v7185
    %7187 = vdwg.mxu0
    %7209 = vrot.lane.b32.xlu0 %v7126, 32
    %v7210 = vpop.permute.xlu0 %7209
    %7211 = vrot.lane.b32.xlu0 %v7129, 32
    %v7212 = vpop.permute.xlu0 %7211
    %7213 = vrot.lane.b32.xlu0 %v7132, 32
    %v7214 = vpop.permute.xlu0 %7213
    %7215 = vrot.lane.b32.xlu0 %v7135, 32
    %v7216 = vpop.permute.xlu0 %7215
    %7217 = vrot.lane.b32.xlu0 %v7138, 32
    %v7218 = vpop.permute.xlu0 %7217
    %7219 = vrot.lane.b32.xlu0 %v7141, 32
    %v7220 = vpop.permute.xlu0 %7219
    %7221 = vrot.lane.b32.xlu0 %v7144, 32
    %v7222 = vpop.permute.xlu0 %7221
    %7223 = vrot.lane.b32.xlu0 %v7147, 32
    %v7224 = vpop.permute.xlu0 %7223
    %7225 = vrot.lane.b32.xlu0 %v7150, 32
    %v7226 = vpop.permute.xlu0 %7225
    %7227 = vrot.lane.b32.xlu0 %v7153, 32
    %v7228 = vpop.permute.xlu0 %7227
    %7229 = vrot.lane.b32.xlu0 %v7156, 32
    %v7230 = vpop.permute.xlu0 %7229
    %7231 = vrot.lane.b32.xlu0 %v7159, 32
    %v7232 = vpop.permute.xlu0 %7231
    %7233 = vrot.lane.b32.xlu0 %v7162, 32
    %v7234 = vpop.permute.xlu0 %7233
    %7235 = vrot.lane.b32.xlu0 %v7165, 32
    %v7236 = vpop.permute.xlu0 %7235
    %7237 = vrot.lane.b32.xlu0 %v7168, 32
    %v7238 = vpop.permute.xlu0 %7237
    %7239 = vrot.lane.b32.xlu0 %v7171, 32
    %v7240 = vpop.permute.xlu0 %7239
    %7241 = vrot.lane.b32.xlu0 %v7174, 32
    %v7242 = vpop.permute.xlu0 %7241
    %7243 = vrot.lane.b32.xlu0 %v7177, 32
    %v7244 = vpop.permute.xlu0 %7243
    %7245 = vrot.lane.b32.xlu0 %v7180, 32
    %v7246 = vpop.permute.xlu0 %7245
    %7247 = vrot.lane.b32.xlu0 %v7183, 32
    %v7248 = vpop.permute.xlu0 %7247
    %7249 = vrot.lane.b32.xlu0 %v7186, 32
    %v7250 = vpop.permute.xlu0 %7249
    %v7272 = vsub.f32 %v401, %v7210
    %v7273 = vsub.f32 %v404, %v7212
    %v7274 = vsub.f32 %v407, %v7214
    %v7275 = vsub.f32 %v410, %v7216
    %v7276 = vsub.f32 %v413, %v7218
    %v7277 = vsub.f32 %v416, %v7220
    %v7278 = vsub.f32 %v419, %v7222
    %v7279 = vsub.f32 %v422, %v7224
    %v7280 = vsub.f32 %v425, %v7226
    %v7281 = vsub.f32 %v428, %v7228
    %v7282 = vsub.f32 %v431, %v7230
    %v7283 = vsub.f32 %v434, %v7232
    %v7284 = vsub.f32 %v437, %v7234
    %v7285 = vsub.f32 %v440, %v7236
    %v7286 = vsub.f32 %v443, %v7238
    %v7287 = vsub.f32 %v446, %v7240
    %v7288 = vsub.f32 %v449, %v7242
    %v7289 = vsub.f32 %v452, %v7244
    %v7290 = vsub.f32 %v455, %v7246
    %v7291 = vsub.f32 %v458, %v7248
    %v7292 = vsub.f32 %v461, %v7250
    %v7293 = vmul.f32 %v7272, %v7272
    %v7294 = vmul.f32 %v7273, %v7273
    %v7295 = vmul.f32 %v7274, %v7274
    %v7296 = vmul.f32 %v7275, %v7275
    %v7297 = vmul.f32 %v7276, %v7276
    %v7298 = vmul.f32 %v7277, %v7277
    %v7299 = vmul.f32 %v7278, %v7278
    %v7300 = vmul.f32 %v7279, %v7279
    %v7301 = vmul.f32 %v7280, %v7280
    %v7302 = vmul.f32 %v7281, %v7281
    %v7303 = vmul.f32 %v7282, %v7282
    %v7304 = vmul.f32 %v7283, %v7283
    %v7305 = vmul.f32 %v7284, %v7284
    %v7306 = vmul.f32 %v7285, %v7285
    %v7307 = vmul.f32 %v7286, %v7286
    %v7308 = vmul.f32 %v7287, %v7287
    %v7309 = vmul.f32 %v7288, %v7288
    %v7310 = vmul.f32 %v7289, %v7289
    %v7311 = vmul.f32 %v7290, %v7290
    %v7312 = vmul.f32 %v7291, %v7291
    %v7313 = vmul.f32 %v7292, %v7292
    %7335 = vrot.lane.b32.xlu0 %v7293, 96
    %v7336 = vpop.permute.xlu0 %7335
    %7337 = vrot.lane.b32.xlu0 %v7294, 96
    %v7338 = vpop.permute.xlu0 %7337
    %7339 = vrot.lane.b32.xlu0 %v7295, 96
    %v7340 = vpop.permute.xlu0 %7339
    %7341 = vrot.lane.b32.xlu0 %v7296, 96
    %v7342 = vpop.permute.xlu0 %7341
    %7343 = vrot.lane.b32.xlu0 %v7297, 96
    %v7344 = vpop.permute.xlu0 %7343
    %7345 = vrot.lane.b32.xlu0 %v7298, 96
    %v7346 = vpop.permute.xlu0 %7345
    %7347 = vrot.lane.b32.xlu0 %v7299, 96
    %v7348 = vpop.permute.xlu0 %7347
    %7349 = vrot.lane.b32.xlu0 %v7300, 96
    %v7350 = vpop.permute.xlu0 %7349
    %7351 = vrot.lane.b32.xlu0 %v7301, 96
    %v7352 = vpop.permute.xlu0 %7351
    %7353 = vrot.lane.b32.xlu0 %v7302, 96
    %v7354 = vpop.permute.xlu0 %7353
    %7355 = vrot.lane.b32.xlu0 %v7303, 96
    %v7356 = vpop.permute.xlu0 %7355
    %7357 = vrot.lane.b32.xlu0 %v7304, 96
    %v7358 = vpop.permute.xlu0 %7357
    %7359 = vrot.lane.b32.xlu0 %v7305, 96
    %v7360 = vpop.permute.xlu0 %7359
    %7361 = vrot.lane.b32.xlu0 %v7306, 96
    %v7362 = vpop.permute.xlu0 %7361
    %7363 = vrot.lane.b32.xlu0 %v7307, 96
    %v7364 = vpop.permute.xlu0 %7363
    %7365 = vrot.lane.b32.xlu0 %v7308, 96
    %v7366 = vpop.permute.xlu0 %7365
    %7367 = vrot.lane.b32.xlu0 %v7309, 96
    %v7368 = vpop.permute.xlu0 %7367
    %7369 = vrot.lane.b32.xlu0 %v7310, 96
    %v7370 = vpop.permute.xlu0 %7369
    %7371 = vrot.lane.b32.xlu0 %v7311, 96
    %v7372 = vpop.permute.xlu0 %7371
    %7373 = vrot.lane.b32.xlu0 %v7312, 96
    %v7374 = vpop.permute.xlu0 %7373
    %7375 = vrot.lane.b32.xlu0 %v7313, 96
    %v7376 = vpop.permute.xlu0 %7375
    %v7398 = vsel %vm463, %v7336, 0.0
    %7399 = vadd.xlane.f32.xlu0 %v7398
    %v7400 = vpop.xlane.xlu0 %7399
    %v7401 = vsel %vm463, %v7338, 0.0
    %7402 = vadd.xlane.f32.xlu0 %v7401
    %v7403 = vpop.xlane.xlu0 %7402
    %v7404 = vsel %vm463, %v7340, 0.0
    %7405 = vadd.xlane.f32.xlu0 %v7404
    %v7406 = vpop.xlane.xlu0 %7405
    %v7407 = vsel %vm463, %v7342, 0.0
    %7408 = vadd.xlane.f32.xlu0 %v7407
    %v7409 = vpop.xlane.xlu0 %7408
    %v7410 = vsel %vm463, %v7344, 0.0
    %7411 = vadd.xlane.f32.xlu0 %v7410
    %v7412 = vpop.xlane.xlu0 %7411
    %v7413 = vsel %vm463, %v7346, 0.0
    %7414 = vadd.xlane.f32.xlu0 %v7413
    %v7415 = vpop.xlane.xlu0 %7414
    %v7416 = vsel %vm463, %v7348, 0.0
    %7417 = vadd.xlane.f32.xlu0 %v7416
    %v7418 = vpop.xlane.xlu0 %7417
    %v7419 = vsel %vm463, %v7350, 0.0
    %7420 = vadd.xlane.f32.xlu0 %v7419
    %v7421 = vpop.xlane.xlu0 %7420
    %v7422 = vsel %vm463, %v7352, 0.0
    %7423 = vadd.xlane.f32.xlu0 %v7422
    %v7424 = vpop.xlane.xlu0 %7423
    %v7425 = vsel %vm463, %v7354, 0.0
    %7426 = vadd.xlane.f32.xlu0 %v7425
    %v7427 = vpop.xlane.xlu0 %7426
    %v7428 = vsel %vm463, %v7356, 0.0
    %7429 = vadd.xlane.f32.xlu0 %v7428
    %v7430 = vpop.xlane.xlu0 %7429
    %v7431 = vsel %vm463, %v7358, 0.0
    %7432 = vadd.xlane.f32.xlu0 %v7431
    %v7433 = vpop.xlane.xlu0 %7432
    %v7434 = vsel %vm463, %v7360, 0.0
    %7435 = vadd.xlane.f32.xlu0 %v7434
    %v7436 = vpop.xlane.xlu0 %7435
    %v7437 = vsel %vm463, %v7362, 0.0
    %7438 = vadd.xlane.f32.xlu0 %v7437
    %v7439 = vpop.xlane.xlu0 %7438
    %v7440 = vsel %vm463, %v7364, 0.0
    %7441 = vadd.xlane.f32.xlu0 %v7440
    %v7442 = vpop.xlane.xlu0 %7441
    %v7443 = vsel %vm463, %v7366, 0.0
    %7444 = vadd.xlane.f32.xlu0 %v7443
    %v7445 = vpop.xlane.xlu0 %7444
    %v7446 = vsel %vm463, %v7368, 0.0
    %7447 = vadd.xlane.f32.xlu0 %v7446
    %v7448 = vpop.xlane.xlu0 %7447
    %v7449 = vsel %vm463, %v7370, 0.0
    %7450 = vadd.xlane.f32.xlu0 %v7449
    %v7451 = vpop.xlane.xlu0 %7450
    %v7452 = vsel %vm463, %v7372, 0.0
    %7453 = vadd.xlane.f32.xlu0 %v7452
    %v7454 = vpop.xlane.xlu0 %7453
    %v7455 = vsel %vm463, %v7374, 0.0
    %7456 = vadd.xlane.f32.xlu0 %v7455
    %v7457 = vpop.xlane.xlu0 %7456
    %v7458 = vsel %vm463, %v7376, 0.0
    %7459 = vadd.xlane.f32.xlu0 %v7458
    %v7460 = vpop.xlane.xlu0 %7459
    %v7482 = vperm.slane %v7400, %v1845
    %v7483 = vperm.slane %v7403, %v2981
    %v7484 = vsel %vm2983, %v7483, %v7482
    %v7485 = vperm.slane %v7406, %v2985
    %v7486 = vsel %vm2987, %v7485, %v7484
    %v7487 = vperm.slane %v7409, %v2989
    %v7488 = vsel %vm2991, %v7487, %v7486
    %v7489 = vperm.slane %v7412, %v2993
    %v7490 = vsel %vm2995, %v7489, %v7488
    %v7491 = vperm.slane %v7415, %v2997
    %v7492 = vsel %vm2999, %v7491, %v7490
    %v7493 = vperm.slane %v7418, %v3001
    %v7494 = vsel %vm3003, %v7493, %v7492
    %v7495 = vperm.slane %v7421, %v1845
    %v7496 = vperm.slane %v7424, %v2981
    %v7497 = vsel %vm2983, %v7496, %v7495
    %v7498 = vperm.slane %v7427, %v2985
    %v7499 = vsel %vm2987, %v7498, %v7497
    %v7500 = vperm.slane %v7430, %v2989
    %v7501 = vsel %vm2991, %v7500, %v7499
    %v7502 = vperm.slane %v7433, %v2993
    %v7503 = vsel %vm2995, %v7502, %v7501
    %v7504 = vperm.slane %v7436, %v2997
    %v7505 = vsel %vm2999, %v7504, %v7503
    %v7506 = vperm.slane %v7439, %v3001
    %v7507 = vsel %vm3003, %v7506, %v7505
    %v7508 = vperm.slane %v7442, %v1845
    %v7509 = vperm.slane %v7445, %v2981
    %v7510 = vsel %vm2983, %v7509, %v7508
    %v7511 = vperm.slane %v7448, %v2985
    %v7512 = vsel %vm2987, %v7511, %v7510
    %v7513 = vperm.slane %v7451, %v2989
    %v7514 = vsel %vm2991, %v7513, %v7512
    %v7515 = vperm.slane %v7454, %v2993
    %v7516 = vsel %vm2995, %v7515, %v7514
    %v7517 = vperm.slane %v7457, %v2997
    %v7518 = vsel %vm2999, %v7517, %v7516
    %v7519 = vperm.slane %v7460, %v3001
    %v7520 = vsel %vm3003, %v7519, %v7518
    %v7521 = vsel %vm3031, %v7507, %v7494
    %v7522 = vsel %vm3033, %v7520, %v7521
    %v7524 = vsel %vm3036, %v7522, 0.0
    %7525 = vadd.xlane.f32.xlu0 %v7524
    %v7526 = vpop.xlane.xlu0 %7525
    %v7527 = vsub.f32 0.0, %v7526
    %v7528 = vmul.f32 %v7527, %v3047
    %vm7529 = vcmp.eq.s32.totalorder %v1845, 4
    %v7530 = vsel %vm7529, %v7528, 0.0
    %v7531 = vadd.f32 %v6411, %v7530
    %vm7532 = vcmask 34816
    %7533 = vst.msk [vmem:[#allocation5] sm:$0x7] %vm7532, %v7531
    // Predicated region
    $region26: #{tpu_custom_call.1} parent=1 // pred_check
      _
    $region27: #{tpu_custom_call.1} parent=1 // pred_check_branch
      %7535 = sbr.rel (0) target = $region29
    $region28: #{tpu_custom_call.1} parent=1 // pred_region
      %7537 = vsyncadd [#allocation4], 0
      %s7539 = sshll.u32 [#allocation5], 4
      %s7540 = int_to_ptr.vmem [resolvable:$true] %s7539
      %s7541 = sshll.u32 %s5, 4
      %s7542 = int_to_ptr.hbm [resolvable:$true] %s7541
      %7544 = dma.vmem_to_hbm [thread:$0]  %s7540, 64, %s7542, [#allocation4]
    $region29: #{tpu_custom_call.1} parent=1 // pred_fallthru
      _
    // Predicated region
    $region30: #{tpu_custom_call.1} parent=1 // pred_check
      _
    $region31: #{tpu_custom_call.1} parent=1 // pred_check_branch
      %7546 = sbr.rel (0) target = $region33
    $region32: #{tpu_custom_call.1} parent=1 // pred_region
      %7548 = dma.done [#allocation4], 64
    $region33: #{tpu_custom_call.1} parent=1 // pred_fallthru
      _
    %7549 = vsyncpa [#allocation3], 1
    %7550 = vsyncpa [#allocation4], 1

</llo_original>
